<compile_context>
chip_gen: v6e
topology: v6e:2x2x1
jax: 0.10.0
libtpu: 0.0.40
codegen_flags: <defaults>
</compile_context>

<pallas_src>
import functools
import math

import jax
import jax.numpy as jnp
from jax.experimental import pallas as pl
from jax.experimental.pallas import tpu as pltpu

_EPS = 1e-12  # F.normalize default eps


# ---------------------------------------------------------------------------
# Small helpers
# ---------------------------------------------------------------------------
def _round_up(x, m):
    return ((x + m - 1) // m) * m


def _lcm(a, b):
    return a * b // math.gcd(a, b)


def _pad_to(x, rows, cols=None):
    r, c = x.shape
    pr = rows - r
    pc = 0 if cols is None else cols - c
    if pr or pc:
        x = jnp.pad(x, ((0, pr), (0, pc)))
    return x


def _vmem_capacity_bytes():
    """Generation-aware VMEM capacity (128 MiB on v5e/v6e, 64 MiB on v7x)."""
    try:
        info = pltpu.get_tpu_info()
        for name in ("vmem_capacity_bytes", "vmem_size_bytes", "vmem_bytes"):
            v = getattr(info, name, None)
            if v:
                return max(int(v), 64 << 20)
    except Exception:
        pass
    return 64 << 20  # conservative fallback (v7x per-core VMEM)


def _fused_vmem_estimate(n, nhid, adj_buffers):
    """Conservative live-set estimate of the fused branch kernel."""
    adj = adj_buffers * 2 * n * n                      # bf16 adjacency buffer(s)
    weights = 2 * (2 * n * nhid                        # gc1 (bf16)
                   + 5 * 2 * nhid * nhid               # gck stack (bf16)
                   + 2 * nhid * 2 * nhid               # mlp w1 (bf16)
                   + 2 * 2 * nhid * 2 * nhid           # mlp w2 (bf16)
                   + 3 * 4 * 2 * nhid + 64)            # w3 row + biases (f32)
    acts = 56 * n * nhid                               # x/resid/s/MLP hiddens + casts
    out = adj_buffers * 2 * 4 * n                      # (n,1) f32 output buffers
    return adj + weights + acts + out + (6 << 20)      # + Mosaic scratch margin


# ---------------------------------------------------------------------------
# Shared in-kernel math
# ---------------------------------------------------------------------------
def _relu_norm(h, normalize):
    h = jnp.maximum(h, 0.0)
    if normalize:
        ss = jnp.sum(h * h, axis=1, keepdims=True)
        # x / max(||x||, eps) == x * rsqrt(max(||x||^2, eps^2))   (EUP rsqrt)
        h = h * jax.lax.rsqrt(jnp.maximum(ss, _EPS * _EPS))
    return h


# ---------------------------------------------------------------------------
# Fully fused branch kernel (adjacency resident in VMEM, one DMA per branch)
# ---------------------------------------------------------------------------
def _fused_branch_kernel(adj_ref, w1_ref, wk_ref,
                         mw1_ref, mb1_ref, mw2_ref, mb2_ref, w3r_ref, mb3_ref,
                         o_ref):
    b1 = mb1_ref[...]
    b2 = mb2_ref[...]
    b3 = mb3_ref[...]
    w3r = w3r_ref[...]                                   # (1, 2*nhid) f32

    def score(x):
        h = jnp.dot(x.astype(jnp.bfloat16), mw1_ref[...],
                    preferred_element_type=jnp.float32) + b1
        h = jnp.maximum(h, 0.0)
        h = jnp.dot(h.astype(jnp.bfloat16), mw2_ref[...],
                    preferred_element_type=jnp.float32) + b2
        h = jnp.maximum(h, 0.0)
        # final (., 2*nhid) @ (2*nhid, 1) as VPU multiply + lane reduction
        return jnp.sum(h * w3r, axis=-1, keepdims=True) + b3

    # Layer 1: adj @ W1  (adj and W1 are both bf16; f32 accumulation)
    x = _relu_norm(
        jnp.dot(adj_ref[...], w1_ref[...], preferred_element_type=jnp.float32),
        normalize=True)
    resid = x
    total = score(x)

    # Layers 2..6: adj @ (x @ Wk); last layer is relu only (no normalize)
    for l in range(5):
        s = jnp.dot(x.astype(jnp.bfloat16), wk_ref[l],
                    preferred_element_type=jnp.float32)
        x = _relu_norm(
            jnp.dot(adj_ref[...], s.astype(jnp.bfloat16),
                    preferred_element_type=jnp.float32),
            normalize=(l < 4))
        resid = resid + x
        total = total + score(x)

    total = total + score(resid)              # x7 = x1 + ... + x6
    o_ref[...] = total * (1.0 / 7.0)          # mean over the 7 scores


def _fused_pair(adj_pair, dp, *, vmem_limit):
    """Both branches in one call; grid=(2,) 'parallel' -> one branch per TC on v7x."""
    _, n, _ = adj_pair.shape
    weights = (dp["gc1"], dp["gck"], dp["mw1"], dp["b1"], dp["mw2"], dp["b2"],
               dp["w3row"], dp["b3"])

    def full_spec(a):
        nd = a.ndim
        return pl.BlockSpec(a.shape, lambda b, _nd=nd: (0,) * _nd)

    return pl.pallas_call(
        _fused_branch_kernel,
        out_shape=jax.ShapeDtypeStruct((2, n, 1), jnp.float32),
        grid=(2,),
        in_specs=[pl.BlockSpec((None, n, n), lambda b: (b, 0, 0))]
                 + [full_spec(w) for w in weights],
        out_specs=pl.BlockSpec((None, n, 1), lambda b: (b, 0, 0)),
        compiler_params=pltpu.CompilerParams(
            dimension_semantics=("parallel",),
            vmem_limit_bytes=vmem_limit),
    )(adj_pair, *weights)


def _fused_single(adj_b, dp, *, vmem_limit):
    n = adj_b.shape[0]
    vspec = pl.BlockSpec(memory_space=pltpu.MemorySpace.VMEM)
    return pl.pallas_call(
        _fused_branch_kernel,
        out_shape=jax.ShapeDtypeStruct((n, 1), jnp.float32),
        in_specs=[vspec] * 9,
        out_specs=vspec,
        compiler_params=pltpu.CompilerParams(vmem_limit_bytes=vmem_limit),
    )(adj_b, dp["gc1"], dp["gck"], dp["mw1"], dp["b1"], dp["mw2"], dp["b2"],
      dp["w3row"], dp["b3"])


# ---------------------------------------------------------------------------
# Tiled GC layer (graphs whose adjacency does not fit VMEM)
#   grid = (rows // row_tile  [parallel],  cols // k_tile  [arbitrary])
#   Inputs : adj block (row_tile, k_tile) bf16, S (= x_{l-1} @ W_l) resident or
#            streamed, optional W_{l+1}.
#   Outputs: x_l (f32) and, fused into the epilogue, s_{l+1} = x_l @ W_{l+1} (bf16).
# ---------------------------------------------------------------------------
def _gc_layer_kernel(*refs, k_tile, normalize, s_resident, emit_s):
    if emit_s:
        adj_ref, s_ref, wn_ref, x_out, s_out, acc_ref = refs
    else:
        adj_ref, s_ref, x_out, acc_ref = refs

    k = pl.program_id(1)

    @pl.when(k == 0)
    def _():
        acc_ref[...] = jnp.zeros_like(acc_ref)

    if s_resident:
        start = pl.multiple_of(k * k_tile, k_tile)
        s_blk = s_ref[pl.ds(start, k_tile), :]
    else:
        s_blk = s_ref[...]

    acc_ref[...] += jnp.dot(adj_ref[...], s_blk,
                            preferred_element_type=jnp.float32)

    @pl.when(k == pl.num_programs(1) - 1)
    def _():
        x = _relu_norm(acc_ref[...], normalize)
        x_out[...] = x
        if emit_s:
            s_out[...] = jnp.dot(x.astype(jnp.bfloat16), wn_ref[...],
                                 preferred_element_type=jnp.float32
                                 ).astype(jnp.bfloat16)


def _gc_layer_tiled(adj_p, s_in, w_next, *, normalize, row_tile, k_tile,
                    s_resident, vmem_limit):
    npad = adj_p.shape[0]
    nhid = s_in.shape[1]
    grid = (npad // row_tile, npad // k_tile)
    emit_s = w_next is not None

    if s_resident:
        s_spec = pl.BlockSpec((npad, nhid), lambda i, k: (0, 0))
    else:
        s_spec = pl.BlockSpec((k_tile, nhid), lambda i, k: (k, 0))

    in_specs = [pl.BlockSpec((row_tile, k_tile), lambda i, k: (i, k)), s_spec]
    args = [adj_p, s_in]
    x_spec = pl.BlockSpec((row_tile, nhid), lambda i, k: (i, 0))

    if emit_s:
        in_specs.append(pl.BlockSpec((nhid, nhid), lambda i, k: (0, 0)))
        args.append(w_next)
        out_shape = (jax.ShapeDtypeStruct((npad, nhid), jnp.float32),
                     jax.ShapeDtypeStruct((npad, nhid), jnp.bfloat16))
        out_specs = (x_spec, pl.BlockSpec((row_tile, nhid), lambda i, k: (i, 0)))
    else:
        out_shape = jax.ShapeDtypeStruct((npad, nhid), jnp.float32)
        out_specs = x_spec

    result = pl.pallas_call(
        functools.partial(_gc_layer_kernel, k_tile=k_tile, normalize=normalize,
                          s_resident=s_resident, emit_s=emit_s),
        out_shape=out_shape,
        grid=grid,
        in_specs=in_specs,
        out_specs=out_specs,
        scratch_shapes=[pltpu.VMEM((row_tile, nhid), jnp.float32)],
        compiler_params=pltpu.CompilerParams(
            dimension_semantics=("parallel", "arbitrary"),
            vmem_limit_bytes=vmem_limit),
    )(*args)

    if emit_s:
        x, s_next = result
        return x, s_next
    return result, None


# Fused 7-way MLP score + mean, row-tiled, 7 inputs row-stacked into one matmul.
def _mlp_mean_tiled_kernel(x1, x2, x3, x4, x5, x6,
                           mw1, mb1, mw2, mb2, w3r, mb3, o_ref):
    xs = [x1[...], x2[...], x3[...], x4[...], x5[...], x6[...]]
    resid = xs[0] + xs[1] + xs[2] + xs[3] + xs[4] + xs[5]
    rt = xs[0].shape[0]
    stacked = jnp.concatenate(xs + [resid], axis=0)        # (7*rt, nhid) f32

    h = jnp.dot(stacked.astype(jnp.bfloat16), mw1[...],
                preferred_element_type=jnp.float32) + mb1[...]
    h = jnp.maximum(h, 0.0)
    h = jnp.dot(h.astype(jnp.bfloat16), mw2[...],
                preferred_element_type=jnp.float32) + mb2[...]
    h = jnp.maximum(h, 0.0)
    scores = jnp.sum(h * w3r[...], axis=-1, keepdims=True) + mb3[...]  # (7*rt, 1)

    total = scores[0:rt]
    for j in range(1, 7):
        total = total + scores[j * rt:(j + 1) * rt]
    o_ref[...] = total * (1.0 / 7.0)


def _mlp_mean_tiled(xs, dp, *, row_tile, vmem_limit):
    npad, nhid = xs[0].shape
    grid = (npad // row_tile,)

    def full(a):
        nd = a.ndim
        return pl.BlockSpec(a.shape, lambda i, _nd=nd: (0,) * _nd)

    return pl.pallas_call(
        _mlp_mean_tiled_kernel,
        out_shape=jax.ShapeDtypeStruct((npad, 1), jnp.float32),
        grid=grid,
        in_specs=[pl.BlockSpec((row_tile, nhid), lambda i: (i, 0))] * 6
                 + [full(dp["mw1"]), full(dp["b1"]), full(dp["mw2"]),
                    full(dp["b2"]), full(dp["w3row"]), full(dp["b3"])],
        out_specs=pl.BlockSpec((row_tile, 1), lambda i: (i, 0)),
        compiler_params=pltpu.CompilerParams(
            dimension_semantics=("parallel",),
            vmem_limit_bytes=vmem_limit),
    )(*xs, dp["mw1"], dp["b1"], dp["mw2"], dp["b2"], dp["w3row"], dp["b3"])


def _tiled_branch(adj_b, dp, *, row_tile, k_tile, budget, vmem_limit):
    n = adj_b.shape[0]
    nhid = dp["gc1"].shape[1]
    npad = _round_up(n, _lcm(row_tile, k_tile))
    adj_p = _pad_to(adj_b, npad, npad)
    # Layer-1 "S" is just W1 (padded rows are zero -> padded adj cols contribute 0).
    s = _pad_to(dp["gc1"], npad)
    # Keep the whole activation resident in VMEM when cheap (constant-index spec).
    s_resident = (8 * npad * nhid) <= (budget // 4)

    xs = []
    for l in range(6):
        w_next = dp["gck"][l] if l < 5 else None
        x, s = _gc_layer_tiled(adj_p, s, w_next, normalize=(l < 5),
                               row_tile=row_tile, k_tile=k_tile,
                               s_resident=s_resident, vmem_limit=vmem_limit)
        xs.append(x)

    score = _mlp_mean_tiled(xs, dp, row_tile=row_tile, vmem_limit=vmem_limit)
    return score[:n]


# ---------------------------------------------------------------------------
# Parameters (deterministic init; mirrors the shapes in GNN_Bet.__init__)
# ---------------------------------------------------------------------------
def init_params(key, ninput, nhid):
    ks = jax.random.split(key, 8)

    def uni(k, shape, fan_in):
        bound = 1.0 / jnp.sqrt(jnp.float32(fan_in))
        return jax.random.uniform(k, shape, jnp.float32, -bound, bound)

    return {
        "gc1": uni(ks[0], (ninput, nhid), nhid),            # GNN_Layer_Init
        "gck": uni(ks[1], (5, nhid, nhid), nhid),            # GNN_Layer x5 (stacked)
        # MLP(nhid): Linear(nhid,2nhid) -> Linear(2nhid,2nhid) -> Linear(2nhid,1)
        # (weights stored as (in, out); final weight stored as a (1, 2nhid) row)
        "mlp_w1": uni(ks[2], (nhid, 2 * nhid), nhid),
        "mlp_b1": uni(ks[3], (1, 2 * nhid), nhid),
        "mlp_w2": uni(ks[4], (2 * nhid, 2 * nhid), 2 * nhid),
        "mlp_b2": uni(ks[5], (1, 2 * nhid), 2 * nhid),
        "mlp_w3": uni(ks[6], (1, 2 * nhid), 2 * nhid),
        "mlp_b3": uni(ks[7], (1, 1), 2 * nhid),
    }


# ---------------------------------------------------------------------------
# GNN_Bet forward
# ---------------------------------------------------------------------------
def gnn_bet_forward(params, adj1, adj2, *, force_tiled=False,
                    row_tile=512, k_tile=2048):
    n = adj1.shape[0]
    nhid = params["gc1"].shape[1]

    cap = _vmem_capacity_bytes()
    budget = int(0.72 * cap)          # fused-path decision threshold
    vmem_limit = int(0.85 * cap)      # scoped VMEM limit handed to Mosaic

    # Pre-cast weights once in the wrapper (no in-kernel astype, bf16 MXU path).
    dp = {
        "gc1": params["gc1"].astype(jnp.bfloat16),
        "gck": params["gck"].astype(jnp.bfloat16),
        "mw1": params["mlp_w1"].astype(jnp.bfloat16),
        "b1": params["mlp_b1"],
        "mw2": params["mlp_w2"].astype(jnp.bfloat16),
        "b2": params["mlp_b2"],
        "w3row": params["mlp_w3"],
        "b3": params["mlp_b3"],
    }

    # Dominant HBM stream is the adjacency -> stream it as bf16.
    adj1_b = adj1.astype(jnp.bfloat16)
    adj2_b = adj2.astype(jnp.bfloat16)

    est_pair = _fused_vmem_estimate(n, nhid, adj_buffers=2)
    est_single = _fused_vmem_estimate(n, nhid, adj_buffers=1)

    if (not force_tiled) and est_pair <= budget:
        out = _fused_pair(jnp.stack([adj1_b, adj2_b], axis=0), dp,
                          vmem_limit=vmem_limit)
        score1, score2 = out[0], out[1]
    elif (not force_tiled) and est_single <= budget:
        score1 = _fused_single(adj1_b, dp, vmem_limit=vmem_limit)
        score2 = _fused_single(adj2_b, dp, vmem_limit=vmem_limit)
    else:
        score1 = _tiled_branch(adj1_b, dp, row_tile=row_tile, k_tile=k_tile,
                               budget=budget, vmem_limit=vmem_limit)
        score2 = _tiled_branch(adj2_b, dp, row_tile=row_tile, k_tile=k_tile,
                               budget=budget, vmem_limit=vmem_limit)

    return score1 * score2  # (N, 1)


# ---------------------------------------------------------------------------
# Pure-JAX f32 reference (matches the PyTorch forward, dropout = identity)
# ---------------------------------------------------------------------------
def reference_forward(params, adj1, adj2):
    def relu_norm(h, norm):
        h = jnp.maximum(h, 0.0)
        if norm:
            nrm = jnp.sqrt(jnp.sum(h * h, axis=1, keepdims=True))
            h = h / jnp.maximum(nrm, _EPS)
        return h

    def mlp(x):
        h = jnp.maximum(x @ params["mlp_w1"] + params["mlp_b1"], 0.0)
        h = jnp.maximum(h @ params["mlp_w2"] + params["mlp_b2"], 0.0)
        return jnp.sum(h * params["mlp_w3"], axis=1, keepdims=True) + params["mlp_b3"]

    def branch(adj):
        xs = [relu_norm(adj @ params["gc1"], True)]
        for l in range(5):
            xs.append(relu_norm(adj @ (xs[-1] @ params["gck"][l]), l < 4))
        resid = xs[0] + xs[1] + xs[2] + xs[3] + xs[4] + xs[5]
        total = mlp(resid)
        for v in xs:
            total = total + mlp(v)
        return total / 7.0

    return branch(adj1) * branch(adj2)


# ---------------------------------------------------------------------------
if __name__ == "__main__":
    N = 256        # number of nodes (== ninput, gc1 consumes adj directly)
    NHID = 32
    DROPOUT = 0.3  # unused at inference (identity)

    key = jax.random.PRNGKey(0)
    kp, ka1, ka2 = jax.random.split(key, 3)

    params = init_params(kp, ninput=N, nhid=NHID)

    # Dense synthetic "sparse" normalized adjacency matrices (entries 0 or 1/N).
    adj1 = (jax.random.uniform(ka1, (N, N)) < 0.1).astype(jnp.float32) / jnp.float32(N)
    adj2 = (jax.random.uniform(ka2, (N, N)) < 0.1).astype(jnp.float32) / jnp.float32(N)

    # Fused path (adjacency resident in VMEM, both branches in one pallas_call).
    out = jax.block_until_ready(jax.jit(gnn_bet_forward)(params, adj1, adj2))
    assert out.shape == (N, 1) and out.dtype == jnp.float32
    assert bool(jnp.all(jnp.isfinite(out)))

    # Check against a pure-JAX f32 reference of the same forward pass.
    ref = reference_forward(params, adj1, adj2)
    denom = float(jnp.sqrt(jnp.sum(ref * ref))) + 1e-6
    rel_ref = float(jnp.sqrt(jnp.sum((out - ref) ** 2))) / denom
    assert rel_ref < 0.15, f"pallas vs f32 reference relative error: {rel_ref}"

    # Tiled path (what large graphs use); cross-check against the fused result.
    out_tiled = jax.block_until_ready(
        jax.jit(functools.partial(gnn_bet_forward, force_tiled=True,
                                  row_tile=128, k_tile=256))(params, adj1, adj2))
    assert out_tiled.shape == (N, 1)
    rel_t = float(jnp.sqrt(jnp.sum((out - out_tiled) ** 2))) / denom
    assert rel_t < 0.05, f"fused vs tiled mismatch: {rel_t}"

    print("KERNEL_OK")
</pallas_src>

<mosaic_0001>
module attributes {stable_mosaic.version = 11 : i64} {
  func.func @_fused_branch_kernel(%arg0: i32, %arg1: memref<1x256x256xbf16, #tpu.memory_space<vmem>>, %arg2: memref<256x32xbf16, #tpu.memory_space<vmem>>, %arg3: memref<5x32x32xbf16, #tpu.memory_space<vmem>>, %arg4: memref<32x64xbf16, #tpu.memory_space<vmem>>, %arg5: memref<1x64xf32, #tpu.memory_space<vmem>>, %arg6: memref<64x64xbf16, #tpu.memory_space<vmem>>, %arg7: memref<1x64xf32, #tpu.memory_space<vmem>>, %arg8: memref<1x64xf32, #tpu.memory_space<vmem>>, %arg9: memref<1x1xf32, #tpu.memory_space<vmem>>, %arg10: memref<1x256x1xf32, #tpu.memory_space<vmem>>) attributes {dimension_semantics = [#tpu.dimension_semantics<parallel>], iteration_bounds = array<i64: 2>, scalar_prefetch = 0 : i64, scratch_operands = 0 : i64, tpu.core_type = #tpu.core_type<tc>, window_params = [{transform_indices = @transform_0, window_bounds = array<i64: 1, 256, 256>}, {pipeline_mode = #tpu.pipeline_mode<synchronous>, transform_indices = @transform_1, window_bounds = array<i64: 256, 32>}, {pipeline_mode = #tpu.pipeline_mode<synchronous>, transform_indices = @transform_2, window_bounds = array<i64: 5, 32, 32>}, {pipeline_mode = #tpu.pipeline_mode<synchronous>, transform_indices = @transform_3, window_bounds = array<i64: 32, 64>}, {pipeline_mode = #tpu.pipeline_mode<synchronous>, transform_indices = @transform_4, window_bounds = array<i64: 1, 64>}, {pipeline_mode = #tpu.pipeline_mode<synchronous>, transform_indices = @transform_5, window_bounds = array<i64: 64, 64>}, {pipeline_mode = #tpu.pipeline_mode<synchronous>, transform_indices = @transform_6, window_bounds = array<i64: 1, 64>}, {pipeline_mode = #tpu.pipeline_mode<synchronous>, transform_indices = @transform_7, window_bounds = array<i64: 1, 64>}, {pipeline_mode = #tpu.pipeline_mode<synchronous>, transform_indices = @transform_8, window_bounds = array<i64: 1, 1>}, {transform_indices = @transform_9, window_bounds = array<i64: 1, 256, 1>}]} {
    %c0 = arith.constant 0 : index
    %c0_0 = arith.constant 0 : index
    %0 = vector.load %arg5[%c0, %c0_0] : memref<1x64xf32, #tpu.memory_space<vmem>>, vector<1x64xf32>
    %c0_1 = arith.constant 0 : index
    %c0_2 = arith.constant 0 : index
    %1 = vector.load %arg7[%c0_1, %c0_2] : memref<1x64xf32, #tpu.memory_space<vmem>>, vector<1x64xf32>
    %c0_3 = arith.constant 0 : index
    %c0_4 = arith.constant 0 : index
    %2 = vector.load %arg9[%c0_3, %c0_4] : memref<1x1xf32, #tpu.memory_space<vmem>>, vector<1x1xf32>
    %c0_5 = arith.constant 0 : index
    %c0_6 = arith.constant 0 : index
    %3 = vector.load %arg8[%c0_5, %c0_6] : memref<1x64xf32, #tpu.memory_space<vmem>>, vector<1x64xf32>
    %c0_7 = arith.constant 0 : index
    %c0_8 = arith.constant 0 : index
    %c0_9 = arith.constant 0 : index
    %4 = vector.load %arg1[%c0_7, %c0_8, %c0_9] : memref<1x256x256xbf16, #tpu.memory_space<vmem>>, vector<1x256x256xbf16>
    %5 = vector.shape_cast %4 : vector<1x256x256xbf16> to vector<256x256xbf16>
    %c0_10 = arith.constant 0 : index
    %c0_11 = arith.constant 0 : index
    %6 = vector.load %arg2[%c0_10, %c0_11] : memref<256x32xbf16, #tpu.memory_space<vmem>>, vector<256x32xbf16>
    %cst = arith.constant dense<0.000000e+00> : vector<256x32xf32>
    %7 = tpu.matmul %5, %6, %cst {dimension_numbers = #tpu.dot_dimension_numbers<[1], [0], [0], [1], [0, 0, 1, 1], [], []>} : vector<256x256xbf16>, vector<256x32xbf16>, vector<256x32xf32> -> vector<256x32xf32>
    %cst_12 = arith.constant 0.000000e+00 : f32
    %8 = vector.broadcast %cst_12 : f32 to vector<256x32xf32>
    %9 = arith.maximumf %7, %8 : vector<256x32xf32>
    %10 = arith.mulf %9, %9 : vector<256x32xf32>
    %cst_13 = arith.constant dense<0.000000e+00> : vector<256xf32>
    %11 = vector.multi_reduction <add>, %10, %cst_13 [1] : vector<256x32xf32> to vector<256xf32>
    %12 = vector.shape_cast %11 : vector<256xf32> to vector<256x1xf32>
    %cst_14 = arith.constant 1.000000e-24 : f32
    %13 = vector.broadcast %cst_14 : f32 to vector<256x1xf32>
    %14 = arith.maximumf %12, %13 : vector<256x1xf32>
    %15 = math.rsqrt %14 : vector<256x1xf32>
    %16 = vector.broadcast %15 : vector<256x1xf32> to vector<256x32xf32>
    %17 = arith.mulf %9, %16 : vector<256x32xf32>
    %18 = arith.truncf %17 : vector<256x32xf32> to vector<256x32xbf16>
    %c0_15 = arith.constant 0 : index
    %c0_16 = arith.constant 0 : index
    %19 = vector.load %arg4[%c0_15, %c0_16] : memref<32x64xbf16, #tpu.memory_space<vmem>>, vector<32x64xbf16>
    %cst_17 = arith.constant dense<0.000000e+00> : vector<256x64xf32>
    %20 = tpu.matmul %18, %19, %cst_17 {dimension_numbers = #tpu.dot_dimension_numbers<[1], [0], [0], [1], [0, 0, 1, 1], [], []>} : vector<256x32xbf16>, vector<32x64xbf16>, vector<256x64xf32> -> vector<256x64xf32>
    %21 = vector.broadcast %0 : vector<1x64xf32> to vector<256x64xf32>
    %22 = arith.addf %20, %21 : vector<256x64xf32>
    %cst_18 = arith.constant 0.000000e+00 : f32
    %23 = vector.broadcast %cst_18 : f32 to vector<256x64xf32>
    %24 = arith.maximumf %22, %23 : vector<256x64xf32>
    %25 = arith.truncf %24 : vector<256x64xf32> to vector<256x64xbf16>
    %c0_19 = arith.constant 0 : index
    %c0_20 = arith.constant 0 : index
    %26 = vector.load %arg6[%c0_19, %c0_20] : memref<64x64xbf16, #tpu.memory_space<vmem>>, vector<64x64xbf16>
    %cst_21 = arith.constant dense<0.000000e+00> : vector<256x64xf32>
    %27 = tpu.matmul %25, %26, %cst_21 {dimension_numbers = #tpu.dot_dimension_numbers<[1], [0], [0], [1], [0, 0, 1, 1], [], []>} : vector<256x64xbf16>, vector<64x64xbf16>, vector<256x64xf32> -> vector<256x64xf32>
    %28 = vector.broadcast %1 : vector<1x64xf32> to vector<256x64xf32>
    %29 = arith.addf %27, %28 : vector<256x64xf32>
    %cst_22 = arith.constant 0.000000e+00 : f32
    %30 = vector.broadcast %cst_22 : f32 to vector<256x64xf32>
    %31 = arith.maximumf %29, %30 : vector<256x64xf32>
    %32 = vector.broadcast %3 : vector<1x64xf32> to vector<256x64xf32>
    %33 = arith.mulf %31, %32 : vector<256x64xf32>
    %cst_23 = arith.constant dense<0.000000e+00> : vector<256xf32>
    %34 = vector.multi_reduction <add>, %33, %cst_23 [1] : vector<256x64xf32> to vector<256xf32>
    %35 = vector.shape_cast %34 : vector<256xf32> to vector<256x1xf32>
    %36 = vector.broadcast %2 : vector<1x1xf32> to vector<256x1xf32>
    %37 = arith.addf %35, %36 : vector<256x1xf32>
    %38 = arith.truncf %17 : vector<256x32xf32> to vector<256x32xbf16>
    %c0_24 = arith.constant 0 : index
    %c0_25 = arith.constant 0 : index
    %c0_26 = arith.constant 0 : index
    %39 = vector.load %arg3[%c0_24, %c0_25, %c0_26] : memref<5x32x32xbf16, #tpu.memory_space<vmem>>, vector<1x32x32xbf16>
    %40 = vector.shape_cast %39 : vector<1x32x32xbf16> to vector<32x32xbf16>
    %cst_27 = arith.constant dense<0.000000e+00> : vector<256x32xf32>
    %41 = tpu.matmul %38, %40, %cst_27 {dimension_numbers = #tpu.dot_dimension_numbers<[1], [0], [0], [1], [0, 0, 1, 1], [], []>} : vector<256x32xbf16>, vector<32x32xbf16>, vector<256x32xf32> -> vector<256x32xf32>
    %c0_28 = arith.constant 0 : index
    %c0_29 = arith.constant 0 : index
    %c0_30 = arith.constant 0 : index
    %42 = vector.load %arg1[%c0_28, %c0_29, %c0_30] : memref<1x256x256xbf16, #tpu.memory_space<vmem>>, vector<1x256x256xbf16>
    %43 = vector.shape_cast %42 : vector<1x256x256xbf16> to vector<256x256xbf16>
    %44 = arith.truncf %41 : vector<256x32xf32> to vector<256x32xbf16>
    %cst_31 = arith.constant dense<0.000000e+00> : vector<256x32xf32>
    %45 = tpu.matmul %43, %44, %cst_31 {dimension_numbers = #tpu.dot_dimension_numbers<[1], [0], [0], [1], [0, 0, 1, 1], [], []>} : vector<256x256xbf16>, vector<256x32xbf16>, vector<256x32xf32> -> vector<256x32xf32>
    %cst_32 = arith.constant 0.000000e+00 : f32
    %46 = vector.broadcast %cst_32 : f32 to vector<256x32xf32>
    %47 = arith.maximumf %45, %46 : vector<256x32xf32>
    %48 = arith.mulf %47, %47 : vector<256x32xf32>
    %cst_33 = arith.constant dense<0.000000e+00> : vector<256xf32>
    %49 = vector.multi_reduction <add>, %48, %cst_33 [1] : vector<256x32xf32> to vector<256xf32>
    %50 = vector.shape_cast %49 : vector<256xf32> to vector<256x1xf32>
    %cst_34 = arith.constant 1.000000e-24 : f32
    %51 = vector.broadcast %cst_34 : f32 to vector<256x1xf32>
    %52 = arith.maximumf %50, %51 : vector<256x1xf32>
    %53 = math.rsqrt %52 : vector<256x1xf32>
    %54 = vector.broadcast %53 : vector<256x1xf32> to vector<256x32xf32>
    %55 = arith.mulf %47, %54 : vector<256x32xf32>
    %56 = arith.addf %17, %55 : vector<256x32xf32>
    %57 = arith.truncf %55 : vector<256x32xf32> to vector<256x32xbf16>
    %c0_35 = arith.constant 0 : index
    %c0_36 = arith.constant 0 : index
    %58 = vector.load %arg4[%c0_35, %c0_36] : memref<32x64xbf16, #tpu.memory_space<vmem>>, vector<32x64xbf16>
    %cst_37 = arith.constant dense<0.000000e+00> : vector<256x64xf32>
    %59 = tpu.matmul %57, %58, %cst_37 {dimension_numbers = #tpu.dot_dimension_numbers<[1], [0], [0], [1], [0, 0, 1, 1], [], []>} : vector<256x32xbf16>, vector<32x64xbf16>, vector<256x64xf32> -> vector<256x64xf32>
    %60 = vector.broadcast %0 : vector<1x64xf32> to vector<256x64xf32>
    %61 = arith.addf %59, %60 : vector<256x64xf32>
    %cst_38 = arith.constant 0.000000e+00 : f32
    %62 = vector.broadcast %cst_38 : f32 to vector<256x64xf32>
    %63 = arith.maximumf %61, %62 : vector<256x64xf32>
    %64 = arith.truncf %63 : vector<256x64xf32> to vector<256x64xbf16>
    %c0_39 = arith.constant 0 : index
    %c0_40 = arith.constant 0 : index
    %65 = vector.load %arg6[%c0_39, %c0_40] : memref<64x64xbf16, #tpu.memory_space<vmem>>, vector<64x64xbf16>
    %cst_41 = arith.constant dense<0.000000e+00> : vector<256x64xf32>
    %66 = tpu.matmul %64, %65, %cst_41 {dimension_numbers = #tpu.dot_dimension_numbers<[1], [0], [0], [1], [0, 0, 1, 1], [], []>} : vector<256x64xbf16>, vector<64x64xbf16>, vector<256x64xf32> -> vector<256x64xf32>
    %67 = vector.broadcast %1 : vector<1x64xf32> to vector<256x64xf32>
    %68 = arith.addf %66, %67 : vector<256x64xf32>
    %cst_42 = arith.constant 0.000000e+00 : f32
    %69 = vector.broadcast %cst_42 : f32 to vector<256x64xf32>
    %70 = arith.maximumf %68, %69 : vector<256x64xf32>
    %71 = vector.broadcast %3 : vector<1x64xf32> to vector<256x64xf32>
    %72 = arith.mulf %70, %71 : vector<256x64xf32>
    %cst_43 = arith.constant dense<0.000000e+00> : vector<256xf32>
    %73 = vector.multi_reduction <add>, %72, %cst_43 [1] : vector<256x64xf32> to vector<256xf32>
    %74 = vector.shape_cast %73 : vector<256xf32> to vector<256x1xf32>
    %75 = vector.broadcast %2 : vector<1x1xf32> to vector<256x1xf32>
    %76 = arith.addf %74, %75 : vector<256x1xf32>
    %77 = arith.addf %37, %76 : vector<256x1xf32>
    %78 = arith.truncf %55 : vector<256x32xf32> to vector<256x32xbf16>
    %c1 = arith.constant 1 : index
    %c0_44 = arith.constant 0 : index
    %c0_45 = arith.constant 0 : index
    %79 = vector.load %arg3[%c1, %c0_44, %c0_45] : memref<5x32x32xbf16, #tpu.memory_space<vmem>>, vector<1x32x32xbf16>
    %80 = vector.shape_cast %79 : vector<1x32x32xbf16> to vector<32x32xbf16>
    %cst_46 = arith.constant dense<0.000000e+00> : vector<256x32xf32>
    %81 = tpu.matmul %78, %80, %cst_46 {dimension_numbers = #tpu.dot_dimension_numbers<[1], [0], [0], [1], [0, 0, 1, 1], [], []>} : vector<256x32xbf16>, vector<32x32xbf16>, vector<256x32xf32> -> vector<256x32xf32>
    %c0_47 = arith.constant 0 : index
    %c0_48 = arith.constant 0 : index
    %c0_49 = arith.constant 0 : index
    %82 = vector.load %arg1[%c0_47, %c0_48, %c0_49] : memref<1x256x256xbf16, #tpu.memory_space<vmem>>, vector<1x256x256xbf16>
    %83 = vector.shape_cast %82 : vector<1x256x256xbf16> to vector<256x256xbf16>
    %84 = arith.truncf %81 : vector<256x32xf32> to vector<256x32xbf16>
    %cst_50 = arith.constant dense<0.000000e+00> : vector<256x32xf32>
    %85 = tpu.matmul %83, %84, %cst_50 {dimension_numbers = #tpu.dot_dimension_numbers<[1], [0], [0], [1], [0, 0, 1, 1], [], []>} : vector<256x256xbf16>, vector<256x32xbf16>, vector<256x32xf32> -> vector<256x32xf32>
    %cst_51 = arith.constant 0.000000e+00 : f32
    %86 = vector.broadcast %cst_51 : f32 to vector<256x32xf32>
    %87 = arith.maximumf %85, %86 : vector<256x32xf32>
    %88 = arith.mulf %87, %87 : vector<256x32xf32>
    %cst_52 = arith.constant dense<0.000000e+00> : vector<256xf32>
    %89 = vector.multi_reduction <add>, %88, %cst_52 [1] : vector<256x32xf32> to vector<256xf32>
    %90 = vector.shape_cast %89 : vector<256xf32> to vector<256x1xf32>
    %cst_53 = arith.constant 1.000000e-24 : f32
    %91 = vector.broadcast %cst_53 : f32 to vector<256x1xf32>
    %92 = arith.maximumf %90, %91 : vector<256x1xf32>
    %93 = math.rsqrt %92 : vector<256x1xf32>
    %94 = vector.broadcast %93 : vector<256x1xf32> to vector<256x32xf32>
    %95 = arith.mulf %87, %94 : vector<256x32xf32>
    %96 = arith.addf %56, %95 : vector<256x32xf32>
    %97 = arith.truncf %95 : vector<256x32xf32> to vector<256x32xbf16>
    %c0_54 = arith.constant 0 : index
    %c0_55 = arith.constant 0 : index
    %98 = vector.load %arg4[%c0_54, %c0_55] : memref<32x64xbf16, #tpu.memory_space<vmem>>, vector<32x64xbf16>
    %cst_56 = arith.constant dense<0.000000e+00> : vector<256x64xf32>
    %99 = tpu.matmul %97, %98, %cst_56 {dimension_numbers = #tpu.dot_dimension_numbers<[1], [0], [0], [1], [0, 0, 1, 1], [], []>} : vector<256x32xbf16>, vector<32x64xbf16>, vector<256x64xf32> -> vector<256x64xf32>
    %100 = vector.broadcast %0 : vector<1x64xf32> to vector<256x64xf32>
    %101 = arith.addf %99, %100 : vector<256x64xf32>
    %cst_57 = arith.constant 0.000000e+00 : f32
    %102 = vector.broadcast %cst_57 : f32 to vector<256x64xf32>
    %103 = arith.maximumf %101, %102 : vector<256x64xf32>
    %104 = arith.truncf %103 : vector<256x64xf32> to vector<256x64xbf16>
    %c0_58 = arith.constant 0 : index
    %c0_59 = arith.constant 0 : index
    %105 = vector.load %arg6[%c0_58, %c0_59] : memref<64x64xbf16, #tpu.memory_space<vmem>>, vector<64x64xbf16>
    %cst_60 = arith.constant dense<0.000000e+00> : vector<256x64xf32>
    %106 = tpu.matmul %104, %105, %cst_60 {dimension_numbers = #tpu.dot_dimension_numbers<[1], [0], [0], [1], [0, 0, 1, 1], [], []>} : vector<256x64xbf16>, vector<64x64xbf16>, vector<256x64xf32> -> vector<256x64xf32>
    %107 = vector.broadcast %1 : vector<1x64xf32> to vector<256x64xf32>
    %108 = arith.addf %106, %107 : vector<256x64xf32>
    %cst_61 = arith.constant 0.000000e+00 : f32
    %109 = vector.broadcast %cst_61 : f32 to vector<256x64xf32>
    %110 = arith.maximumf %108, %109 : vector<256x64xf32>
    %111 = vector.broadcast %3 : vector<1x64xf32> to vector<256x64xf32>
    %112 = arith.mulf %110, %111 : vector<256x64xf32>
    %cst_62 = arith.constant dense<0.000000e+00> : vector<256xf32>
    %113 = vector.multi_reduction <add>, %112, %cst_62 [1] : vector<256x64xf32> to vector<256xf32>
    %114 = vector.shape_cast %113 : vector<256xf32> to vector<256x1xf32>
    %115 = vector.broadcast %2 : vector<1x1xf32> to vector<256x1xf32>
    %116 = arith.addf %114, %115 : vector<256x1xf32>
    %117 = arith.addf %77, %116 : vector<256x1xf32>
    %118 = arith.truncf %95 : vector<256x32xf32> to vector<256x32xbf16>
    %c2 = arith.constant 2 : index
    %c0_63 = arith.constant 0 : index
    %c0_64 = arith.constant 0 : index
    %119 = vector.load %arg3[%c2, %c0_63, %c0_64] : memref<5x32x32xbf16, #tpu.memory_space<vmem>>, vector<1x32x32xbf16>
    %120 = vector.shape_cast %119 : vector<1x32x32xbf16> to vector<32x32xbf16>
    %cst_65 = arith.constant dense<0.000000e+00> : vector<256x32xf32>
    %121 = tpu.matmul %118, %120, %cst_65 {dimension_numbers = #tpu.dot_dimension_numbers<[1], [0], [0], [1], [0, 0, 1, 1], [], []>} : vector<256x32xbf16>, vector<32x32xbf16>, vector<256x32xf32> -> vector<256x32xf32>
    %c0_66 = arith.constant 0 : index
    %c0_67 = arith.constant 0 : index
    %c0_68 = arith.constant 0 : index
    %122 = vector.load %arg1[%c0_66, %c0_67, %c0_68] : memref<1x256x256xbf16, #tpu.memory_space<vmem>>, vector<1x256x256xbf16>
    %123 = vector.shape_cast %122 : vector<1x256x256xbf16> to vector<256x256xbf16>
    %124 = arith.truncf %121 : vector<256x32xf32> to vector<256x32xbf16>
    %cst_69 = arith.constant dense<0.000000e+00> : vector<256x32xf32>
    %125 = tpu.matmul %123, %124, %cst_69 {dimension_numbers = #tpu.dot_dimension_numbers<[1], [0], [0], [1], [0, 0, 1, 1], [], []>} : vector<256x256xbf16>, vector<256x32xbf16>, vector<256x32xf32> -> vector<256x32xf32>
    %cst_70 = arith.constant 0.000000e+00 : f32
    %126 = vector.broadcast %cst_70 : f32 to vector<256x32xf32>
    %127 = arith.maximumf %125, %126 : vector<256x32xf32>
    %128 = arith.mulf %127, %127 : vector<256x32xf32>
    %cst_71 = arith.constant dense<0.000000e+00> : vector<256xf32>
    %129 = vector.multi_reduction <add>, %128, %cst_71 [1] : vector<256x32xf32> to vector<256xf32>
    %130 = vector.shape_cast %129 : vector<256xf32> to vector<256x1xf32>
    %cst_72 = arith.constant 1.000000e-24 : f32
    %131 = vector.broadcast %cst_72 : f32 to vector<256x1xf32>
    %132 = arith.maximumf %130, %131 : vector<256x1xf32>
    %133 = math.rsqrt %132 : vector<256x1xf32>
    %134 = vector.broadcast %133 : vector<256x1xf32> to vector<256x32xf32>
    %135 = arith.mulf %127, %134 : vector<256x32xf32>
    %136 = arith.addf %96, %135 : vector<256x32xf32>
    %137 = arith.truncf %135 : vector<256x32xf32> to vector<256x32xbf16>
    %c0_73 = arith.constant 0 : index
    %c0_74 = arith.constant 0 : index
    %138 = vector.load %arg4[%c0_73, %c0_74] : memref<32x64xbf16, #tpu.memory_space<vmem>>, vector<32x64xbf16>
    %cst_75 = arith.constant dense<0.000000e+00> : vector<256x64xf32>
    %139 = tpu.matmul %137, %138, %cst_75 {dimension_numbers = #tpu.dot_dimension_numbers<[1], [0], [0], [1], [0, 0, 1, 1], [], []>} : vector<256x32xbf16>, vector<32x64xbf16>, vector<256x64xf32> -> vector<256x64xf32>
    %140 = vector.broadcast %0 : vector<1x64xf32> to vector<256x64xf32>
    %141 = arith.addf %139, %140 : vector<256x64xf32>
    %cst_76 = arith.constant 0.000000e+00 : f32
    %142 = vector.broadcast %cst_76 : f32 to vector<256x64xf32>
    %143 = arith.maximumf %141, %142 : vector<256x64xf32>
    %144 = arith.truncf %143 : vector<256x64xf32> to vector<256x64xbf16>
    %c0_77 = arith.constant 0 : index
    %c0_78 = arith.constant 0 : index
    %145 = vector.load %arg6[%c0_77, %c0_78] : memref<64x64xbf16, #tpu.memory_space<vmem>>, vector<64x64xbf16>
    %cst_79 = arith.constant dense<0.000000e+00> : vector<256x64xf32>
    %146 = tpu.matmul %144, %145, %cst_79 {dimension_numbers = #tpu.dot_dimension_numbers<[1], [0], [0], [1], [0, 0, 1, 1], [], []>} : vector<256x64xbf16>, vector<64x64xbf16>, vector<256x64xf32> -> vector<256x64xf32>
    %147 = vector.broadcast %1 : vector<1x64xf32> to vector<256x64xf32>
    %148 = arith.addf %146, %147 : vector<256x64xf32>
    %cst_80 = arith.constant 0.000000e+00 : f32
    %149 = vector.broadcast %cst_80 : f32 to vector<256x64xf32>
    %150 = arith.maximumf %148, %149 : vector<256x64xf32>
    %151 = vector.broadcast %3 : vector<1x64xf32> to vector<256x64xf32>
    %152 = arith.mulf %150, %151 : vector<256x64xf32>
    %cst_81 = arith.constant dense<0.000000e+00> : vector<256xf32>
    %153 = vector.multi_reduction <add>, %152, %cst_81 [1] : vector<256x64xf32> to vector<256xf32>
    %154 = vector.shape_cast %153 : vector<256xf32> to vector<256x1xf32>
    %155 = vector.broadcast %2 : vector<1x1xf32> to vector<256x1xf32>
    %156 = arith.addf %154, %155 : vector<256x1xf32>
    %157 = arith.addf %117, %156 : vector<256x1xf32>
    %158 = arith.truncf %135 : vector<256x32xf32> to vector<256x32xbf16>
    %c3 = arith.constant 3 : index
    %c0_82 = arith.constant 0 : index
    %c0_83 = arith.constant 0 : index
    %159 = vector.load %arg3[%c3, %c0_82, %c0_83] : memref<5x32x32xbf16, #tpu.memory_space<vmem>>, vector<1x32x32xbf16>
    %160 = vector.shape_cast %159 : vector<1x32x32xbf16> to vector<32x32xbf16>
    %cst_84 = arith.constant dense<0.000000e+00> : vector<256x32xf32>
    %161 = tpu.matmul %158, %160, %cst_84 {dimension_numbers = #tpu.dot_dimension_numbers<[1], [0], [0], [1], [0, 0, 1, 1], [], []>} : vector<256x32xbf16>, vector<32x32xbf16>, vector<256x32xf32> -> vector<256x32xf32>
    %c0_85 = arith.constant 0 : index
    %c0_86 = arith.constant 0 : index
    %c0_87 = arith.constant 0 : index
    %162 = vector.load %arg1[%c0_85, %c0_86, %c0_87] : memref<1x256x256xbf16, #tpu.memory_space<vmem>>, vector<1x256x256xbf16>
    %163 = vector.shape_cast %162 : vector<1x256x256xbf16> to vector<256x256xbf16>
    %164 = arith.truncf %161 : vector<256x32xf32> to vector<256x32xbf16>
    %cst_88 = arith.constant dense<0.000000e+00> : vector<256x32xf32>
    %165 = tpu.matmul %163, %164, %cst_88 {dimension_numbers = #tpu.dot_dimension_numbers<[1], [0], [0], [1], [0, 0, 1, 1], [], []>} : vector<256x256xbf16>, vector<256x32xbf16>, vector<256x32xf32> -> vector<256x32xf32>
    %cst_89 = arith.constant 0.000000e+00 : f32
    %166 = vector.broadcast %cst_89 : f32 to vector<256x32xf32>
    %167 = arith.maximumf %165, %166 : vector<256x32xf32>
    %168 = arith.mulf %167, %167 : vector<256x32xf32>
    %cst_90 = arith.constant dense<0.000000e+00> : vector<256xf32>
    %169 = vector.multi_reduction <add>, %168, %cst_90 [1] : vector<256x32xf32> to vector<256xf32>
    %170 = vector.shape_cast %169 : vector<256xf32> to vector<256x1xf32>
    %cst_91 = arith.constant 1.000000e-24 : f32
    %171 = vector.broadcast %cst_91 : f32 to vector<256x1xf32>
    %172 = arith.maximumf %170, %171 : vector<256x1xf32>
    %173 = math.rsqrt %172 : vector<256x1xf32>
    %174 = vector.broadcast %173 : vector<256x1xf32> to vector<256x32xf32>
    %175 = arith.mulf %167, %174 : vector<256x32xf32>
    %176 = arith.addf %136, %175 : vector<256x32xf32>
    %177 = arith.truncf %175 : vector<256x32xf32> to vector<256x32xbf16>
    %c0_92 = arith.constant 0 : index
    %c0_93 = arith.constant 0 : index
    %178 = vector.load %arg4[%c0_92, %c0_93] : memref<32x64xbf16, #tpu.memory_space<vmem>>, vector<32x64xbf16>
    %cst_94 = arith.constant dense<0.000000e+00> : vector<256x64xf32>
    %179 = tpu.matmul %177, %178, %cst_94 {dimension_numbers = #tpu.dot_dimension_numbers<[1], [0], [0], [1], [0, 0, 1, 1], [], []>} : vector<256x32xbf16>, vector<32x64xbf16>, vector<256x64xf32> -> vector<256x64xf32>
    %180 = vector.broadcast %0 : vector<1x64xf32> to vector<256x64xf32>
    %181 = arith.addf %179, %180 : vector<256x64xf32>
    %cst_95 = arith.constant 0.000000e+00 : f32
    %182 = vector.broadcast %cst_95 : f32 to vector<256x64xf32>
    %183 = arith.maximumf %181, %182 : vector<256x64xf32>
    %184 = arith.truncf %183 : vector<256x64xf32> to vector<256x64xbf16>
    %c0_96 = arith.constant 0 : index
    %c0_97 = arith.constant 0 : index
    %185 = vector.load %arg6[%c0_96, %c0_97] : memref<64x64xbf16, #tpu.memory_space<vmem>>, vector<64x64xbf16>
    %cst_98 = arith.constant dense<0.000000e+00> : vector<256x64xf32>
    %186 = tpu.matmul %184, %185, %cst_98 {dimension_numbers = #tpu.dot_dimension_numbers<[1], [0], [0], [1], [0, 0, 1, 1], [], []>} : vector<256x64xbf16>, vector<64x64xbf16>, vector<256x64xf32> -> vector<256x64xf32>
    %187 = vector.broadcast %1 : vector<1x64xf32> to vector<256x64xf32>
    %188 = arith.addf %186, %187 : vector<256x64xf32>
    %cst_99 = arith.constant 0.000000e+00 : f32
    %189 = vector.broadcast %cst_99 : f32 to vector<256x64xf32>
    %190 = arith.maximumf %188, %189 : vector<256x64xf32>
    %191 = vector.broadcast %3 : vector<1x64xf32> to vector<256x64xf32>
    %192 = arith.mulf %190, %191 : vector<256x64xf32>
    %cst_100 = arith.constant dense<0.000000e+00> : vector<256xf32>
    %193 = vector.multi_reduction <add>, %192, %cst_100 [1] : vector<256x64xf32> to vector<256xf32>
    %194 = vector.shape_cast %193 : vector<256xf32> to vector<256x1xf32>
    %195 = vector.broadcast %2 : vector<1x1xf32> to vector<256x1xf32>
    %196 = arith.addf %194, %195 : vector<256x1xf32>
    %197 = arith.addf %157, %196 : vector<256x1xf32>
    %198 = arith.truncf %175 : vector<256x32xf32> to vector<256x32xbf16>
    %c4 = arith.constant 4 : index
    %c0_101 = arith.constant 0 : index
    %c0_102 = arith.constant 0 : index
    %199 = vector.load %arg3[%c4, %c0_101, %c0_102] : memref<5x32x32xbf16, #tpu.memory_space<vmem>>, vector<1x32x32xbf16>
    %200 = vector.shape_cast %199 : vector<1x32x32xbf16> to vector<32x32xbf16>
    %cst_103 = arith.constant dense<0.000000e+00> : vector<256x32xf32>
    %201 = tpu.matmul %198, %200, %cst_103 {dimension_numbers = #tpu.dot_dimension_numbers<[1], [0], [0], [1], [0, 0, 1, 1], [], []>} : vector<256x32xbf16>, vector<32x32xbf16>, vector<256x32xf32> -> vector<256x32xf32>
    %c0_104 = arith.constant 0 : index
    %c0_105 = arith.constant 0 : index
    %c0_106 = arith.constant 0 : index
    %202 = vector.load %arg1[%c0_104, %c0_105, %c0_106] : memref<1x256x256xbf16, #tpu.memory_space<vmem>>, vector<1x256x256xbf16>
    %203 = vector.shape_cast %202 : vector<1x256x256xbf16> to vector<256x256xbf16>
    %204 = arith.truncf %201 : vector<256x32xf32> to vector<256x32xbf16>
    %cst_107 = arith.constant dense<0.000000e+00> : vector<256x32xf32>
    %205 = tpu.matmul %203, %204, %cst_107 {dimension_numbers = #tpu.dot_dimension_numbers<[1], [0], [0], [1], [0, 0, 1, 1], [], []>} : vector<256x256xbf16>, vector<256x32xbf16>, vector<256x32xf32> -> vector<256x32xf32>
    %cst_108 = arith.constant 0.000000e+00 : f32
    %206 = vector.broadcast %cst_108 : f32 to vector<256x32xf32>
    %207 = arith.maximumf %205, %206 : vector<256x32xf32>
    %208 = arith.addf %176, %207 : vector<256x32xf32>
    %209 = arith.truncf %207 : vector<256x32xf32> to vector<256x32xbf16>
    %c0_109 = arith.constant 0 : index
    %c0_110 = arith.constant 0 : index
    %210 = vector.load %arg4[%c0_109, %c0_110] : memref<32x64xbf16, #tpu.memory_space<vmem>>, vector<32x64xbf16>
    %cst_111 = arith.constant dense<0.000000e+00> : vector<256x64xf32>
    %211 = tpu.matmul %209, %210, %cst_111 {dimension_numbers = #tpu.dot_dimension_numbers<[1], [0], [0], [1], [0, 0, 1, 1], [], []>} : vector<256x32xbf16>, vector<32x64xbf16>, vector<256x64xf32> -> vector<256x64xf32>
    %212 = vector.broadcast %0 : vector<1x64xf32> to vector<256x64xf32>
    %213 = arith.addf %211, %212 : vector<256x64xf32>
    %cst_112 = arith.constant 0.000000e+00 : f32
    %214 = vector.broadcast %cst_112 : f32 to vector<256x64xf32>
    %215 = arith.maximumf %213, %214 : vector<256x64xf32>
    %216 = arith.truncf %215 : vector<256x64xf32> to vector<256x64xbf16>
    %c0_113 = arith.constant 0 : index
    %c0_114 = arith.constant 0 : index
    %217 = vector.load %arg6[%c0_113, %c0_114] : memref<64x64xbf16, #tpu.memory_space<vmem>>, vector<64x64xbf16>
    %cst_115 = arith.constant dense<0.000000e+00> : vector<256x64xf32>
    %218 = tpu.matmul %216, %217, %cst_115 {dimension_numbers = #tpu.dot_dimension_numbers<[1], [0], [0], [1], [0, 0, 1, 1], [], []>} : vector<256x64xbf16>, vector<64x64xbf16>, vector<256x64xf32> -> vector<256x64xf32>
    %219 = vector.broadcast %1 : vector<1x64xf32> to vector<256x64xf32>
    %220 = arith.addf %218, %219 : vector<256x64xf32>
    %cst_116 = arith.constant 0.000000e+00 : f32
    %221 = vector.broadcast %cst_116 : f32 to vector<256x64xf32>
    %222 = arith.maximumf %220, %221 : vector<256x64xf32>
    %223 = vector.broadcast %3 : vector<1x64xf32> to vector<256x64xf32>
    %224 = arith.mulf %222, %223 : vector<256x64xf32>
    %cst_117 = arith.constant dense<0.000000e+00> : vector<256xf32>
    %225 = vector.multi_reduction <add>, %224, %cst_117 [1] : vector<256x64xf32> to vector<256xf32>
    %226 = vector.shape_cast %225 : vector<256xf32> to vector<256x1xf32>
    %227 = vector.broadcast %2 : vector<1x1xf32> to vector<256x1xf32>
    %228 = arith.addf %226, %227 : vector<256x1xf32>
    %229 = arith.addf %197, %228 : vector<256x1xf32>
    %230 = arith.truncf %208 : vector<256x32xf32> to vector<256x32xbf16>
    %c0_118 = arith.constant 0 : index
    %c0_119 = arith.constant 0 : index
    %231 = vector.load %arg4[%c0_118, %c0_119] : memref<32x64xbf16, #tpu.memory_space<vmem>>, vector<32x64xbf16>
    %cst_120 = arith.constant dense<0.000000e+00> : vector<256x64xf32>
    %232 = tpu.matmul %230, %231, %cst_120 {dimension_numbers = #tpu.dot_dimension_numbers<[1], [0], [0], [1], [0, 0, 1, 1], [], []>} : vector<256x32xbf16>, vector<32x64xbf16>, vector<256x64xf32> -> vector<256x64xf32>
    %233 = vector.broadcast %0 : vector<1x64xf32> to vector<256x64xf32>
    %234 = arith.addf %232, %233 : vector<256x64xf32>
    %cst_121 = arith.constant 0.000000e+00 : f32
    %235 = vector.broadcast %cst_121 : f32 to vector<256x64xf32>
    %236 = arith.maximumf %234, %235 : vector<256x64xf32>
    %237 = arith.truncf %236 : vector<256x64xf32> to vector<256x64xbf16>
    %c0_122 = arith.constant 0 : index
    %c0_123 = arith.constant 0 : index
    %238 = vector.load %arg6[%c0_122, %c0_123] : memref<64x64xbf16, #tpu.memory_space<vmem>>, vector<64x64xbf16>
    %cst_124 = arith.constant dense<0.000000e+00> : vector<256x64xf32>
    %239 = tpu.matmul %237, %238, %cst_124 {dimension_numbers = #tpu.dot_dimension_numbers<[1], [0], [0], [1], [0, 0, 1, 1], [], []>} : vector<256x64xbf16>, vector<64x64xbf16>, vector<256x64xf32> -> vector<256x64xf32>
    %240 = vector.broadcast %1 : vector<1x64xf32> to vector<256x64xf32>
    %241 = arith.addf %239, %240 : vector<256x64xf32>
    %cst_125 = arith.constant 0.000000e+00 : f32
    %242 = vector.broadcast %cst_125 : f32 to vector<256x64xf32>
    %243 = arith.maximumf %241, %242 : vector<256x64xf32>
    %244 = vector.broadcast %3 : vector<1x64xf32> to vector<256x64xf32>
    %245 = arith.mulf %243, %244 : vector<256x64xf32>
    %cst_126 = arith.constant dense<0.000000e+00> : vector<256xf32>
    %246 = vector.multi_reduction <add>, %245, %cst_126 [1] : vector<256x64xf32> to vector<256xf32>
    %247 = vector.shape_cast %246 : vector<256xf32> to vector<256x1xf32>
    %248 = vector.broadcast %2 : vector<1x1xf32> to vector<256x1xf32>
    %249 = arith.addf %247, %248 : vector<256x1xf32>
    %250 = arith.addf %229, %249 : vector<256x1xf32>
    %cst_127 = arith.constant 0.142857149 : f32
    %251 = vector.broadcast %cst_127 : f32 to vector<256x1xf32>
    %252 = arith.mulf %250, %251 : vector<256x1xf32>
    %c0_128 = arith.constant 0 : index
    %c0_129 = arith.constant 0 : index
    %c0_130 = arith.constant 0 : index
    %253 = vector.load %arg10[%c0_128, %c0_129, %c0_130] : memref<1x256x1xf32, #tpu.memory_space<vmem>>, vector<1x256x1xf32>
    %254 = vector.shape_cast %253 : vector<1x256x1xf32> to vector<256x1xf32>
    %255 = vector.shape_cast %252 : vector<256x1xf32> to vector<1x256x1xf32>
    tpu.vector_store %arg10[%c0_128, %c0_129, %c0_130], %255 {strides = array<i32>} : memref<1x256x1xf32, #tpu.memory_space<vmem>>, vector<1x256x1xf32>,
    return
  }
  func.func @transform_0(%arg0: i32) -> (i32, i32, i32) {
    %c0_i32 = arith.constant 0 : i32
    %c0_i32_0 = arith.constant 0 : i32
    %c0_i32_1 = arith.constant 0 : i32
    return %arg0, %c0_i32, %c0_i32_0 : i32, i32, i32
  }
  func.func @transform_1(%arg0: i32) -> (i32, i32) {
    %c0_i32 = arith.constant 0 : i32
    %c0_i32_0 = arith.constant 0 : i32
    %c0_i32_1 = arith.constant 0 : i32
    return %c0_i32, %c0_i32_0 : i32, i32
  }
  func.func @transform_2(%arg0: i32) -> (i32, i32, i32) {
    %c0_i32 = arith.constant 0 : i32
    %c0_i32_0 = arith.constant 0 : i32
    %c0_i32_1 = arith.constant 0 : i32
    %c0_i32_2 = arith.constant 0 : i32
    return %c0_i32, %c0_i32_0, %c0_i32_1 : i32, i32, i32
  }
  func.func @transform_3(%arg0: i32) -> (i32, i32) {
    %c0_i32 = arith.constant 0 : i32
    %c0_i32_0 = arith.constant 0 : i32
    %c0_i32_1 = arith.constant 0 : i32
    return %c0_i32, %c0_i32_0 : i32, i32
  }
  func.func @transform_4(%arg0: i32) -> (i32, i32) {
    %c0_i32 = arith.constant 0 : i32
    %c0_i32_0 = arith.constant 0 : i32
    %c0_i32_1 = arith.constant 0 : i32
    return %c0_i32, %c0_i32_0 : i32, i32
  }
  func.func @transform_5(%arg0: i32) -> (i32, i32) {
    %c0_i32 = arith.constant 0 : i32
    %c0_i32_0 = arith.constant 0 : i32
    %c0_i32_1 = arith.constant 0 : i32
    return %c0_i32, %c0_i32_0 : i32, i32
  }
  func.func @transform_6(%arg0: i32) -> (i32, i32) {
    %c0_i32 = arith.constant 0 : i32
    %c0_i32_0 = arith.constant 0 : i32
    %c0_i32_1 = arith.constant 0 : i32
    return %c0_i32, %c0_i32_0 : i32, i32
  }
  func.func @transform_7(%arg0: i32) -> (i32, i32) {
    %c0_i32 = arith.constant 0 : i32
    %c0_i32_0 = arith.constant 0 : i32
    %c0_i32_1 = arith.constant 0 : i32
    return %c0_i32, %c0_i32_0 : i32, i32
  }
  func.func @transform_8(%arg0: i32) -> (i32, i32) {
    %c0_i32 = arith.constant 0 : i32
    %c0_i32_0 = arith.constant 0 : i32
    %c0_i32_1 = arith.constant 0 : i32
    return %c0_i32, %c0_i32_0 : i32, i32
  }
  func.func @transform_9(%arg0: i32) -> (i32, i32, i32) {
    %c0_i32 = arith.constant 0 : i32
    %c0_i32_0 = arith.constant 0 : i32
    %c0_i32_1 = arith.constant 0 : i32
    return %arg0, %c0_i32, %c0_i32_0 : i32, i32, i32
  }
}

</mosaic_0001>

<llo_original>
// kernel: gnn_bet_forward.1
$region0: #{gnn_bet_forward.1}
  #allocation0 [shape = 'u32[]', space=smem, size = 0x4, offset = 0x4, fixed_abs, tag = 'smem constant byte address 0x4 - core index']
  #allocation1 [shape = 'u32[144,128]{1,0:T(1,128)}', space=vmem, size = 0x12000, scoped, tag = 'internal scratch']
  #allocation2 [shape = 'f32[1,1]{1,0:T(1,128)S(1)}', space=vmem, size = 0x200, scoped, tag = 'scoped memory for gnn_bet_forward.1']
  %s0 = inlined_call_operand.vmem [shape: bf16[2,256,256], index: 0, kind: input, shape index: {}]
  %s1 = inlined_call_operand.vmem [shape: bf16[256,32], index: 1, kind: input, shape index: {}]
  %s2 = inlined_call_operand.vmem [shape: bf16[5,32,32], index: 2, kind: input, shape index: {}]
  %s3 = inlined_call_operand.vmem [shape: bf16[32,64], index: 3, kind: input, shape index: {}]
  %s4 = inlined_call_operand.vmem [shape: f32[1,64], index: 4, kind: input, shape index: {}]
  %s5 = inlined_call_operand.vmem [shape: bf16[64,64], index: 5, kind: input, shape index: {}]
  %s6 = inlined_call_operand.vmem [shape: f32[1,64], index: 6, kind: input, shape index: {}]
  %s7 = inlined_call_operand.vmem [shape: f32[1,64], index: 7, kind: input, shape index: {}]
  %s8 = inlined_call_operand.<no memory space> [shape: f32[1,1], index: 8, kind: input, shape index: {}]
  %s9 = inlined_call_operand.vmem [shape: f32[2,256,1], index: 9, kind: output, shape index: {}]
  %s10 = sld [smem:[#allocation0]]
  $region69: #{gnn_bet_forward.1} parent=0
    _
  %s12 = ssub.s32 1, %s10
  %s13 = scalar_select 0, %s12, %s10
  %v14 = vstv %s8
  %15 = vst [vmem:[#allocation2] sm:$0x1] %v14
  loop: start=0, step=1, limit=4
  $region2: #{gnn_bet_forward.1} parent=0 // loop_pre_header
    _
  $region3: #{gnn_bet_forward.1} parent=0 // loop_header
    %s17 = sphi 0, %s21
    %p18 = scmp.ge.s32.totalorder %s17, 4
    %s27 = sphi 0, %s29
    %s30 = sphi 0, %s27
    %s31 = sphi 0, %s30
    %s47 = sphi 0, %s31
    %s51 = sphi 0, %s51
    %s53 = sphi 0, %s51
    %s54 = sphi 0, %s53
    %s68 = sphi 0, %s54
    %s72 = sphi 0, %s72
    %s74 = sphi 0, %s72
    %s75 = sphi 0, %s74
    %s89 = sphi 0, %s75
    %s93 = sphi 0, %s93
    %s95 = sphi 0, %s93
    %s96 = sphi 0, %s95
    %s110 = sphi 0, %s96
    %s114 = sphi 0, %s114
    %s116 = sphi 0, %s114
    %s117 = sphi 0, %s116
    %s131 = sphi 0, %s117
    %s135 = sphi 0, %s135
    %s137 = sphi 0, %s135
    %s138 = sphi 0, %s137
    %s152 = sphi 0, %s138
    %s156 = sphi 0, %s156
    %s158 = sphi 0, %s156
    %s159 = sphi 0, %s158
    %s173 = sphi 0, %s159
    %s177 = sphi 0, %s177
    %s179 = sphi 0, %s177
    %s180 = sphi 0, %s179
    %s194 = sphi 0, %s180
    %s198 = sphi 0, %s198
    %s200 = sphi 0, %s198
    %s201 = sphi 0, %s200
    %s215 = sphi 0, %s201
    %s221 = sphi 0, %s223
    %s224 = sphi 0, %s221
    %s225 = sphi 0, %s224
    %s241 = sphi 0, %s225
  $region4: #{gnn_bet_forward.1} parent=0 // loop_header_branch
    %20 = sbr.rel (%p18) target = $region8
  $region5: #{gnn_bet_forward.1} parent=0 // loop_body
    %s22 = ssub.s32 %s17, 1
    %s23 = ssub.s32 %s17, 2
    %s24 = sadd.s32 %s17, 1
    %s25 = ssub.s32 %s17, %s24
    %p26 = scmp.eq.s32.totalorder %s25, 0
    %s28 = sadd.s32 %s27, 1
    %s29 = scalar_select %p26, %s27, %s28
    %p32 = pneg %p26
    %p33 = scmp.eq.s32.totalorder %s17, 1
    %p34 = por %p32, %p33
    %p35 = scmp.ne.s32.totalorder %s27, %s30
    %p36 = scmp.eq.s32.totalorder %s17, 0
    %p37 = por %p35, %p36
    %p38 = scmp.ne.s32.totalorder %s27, %s30
    %p39 = scmp.eq.s32.totalorder %s22, 1
    %p40 = por %p38, %p39
    %p41 = scmp.ne.s32.totalorder %s30, %s31
    %p42 = scmp.eq.s32.totalorder %s22, 0
    %p43 = por %p41, %p42
    %p44 = scmp.ne.s32.totalorder %s30, %s31
    %p45 = scmp.eq.s32.totalorder %s23, 1
    %p46 = por %p44, %p45
    %p48 = scmp.ne.s32.totalorder %s31, %s47
    %p49 = scmp.eq.s32.totalorder %s23, 0
    %p50 = por %p48, %p49
    %s52 = sadd.s32 %s51, 1
    %p55 = scmp.eq.s32.totalorder %s17, 1
    %p56 = scmp.ne.s32.totalorder %s51, %s53
    %p57 = scmp.eq.s32.totalorder %s17, 0
    %p58 = por %p56, %p57
    %p59 = scmp.ne.s32.totalorder %s51, %s53
    %p60 = scmp.eq.s32.totalorder %s22, 1
    %p61 = por %p59, %p60
    %p62 = scmp.ne.s32.totalorder %s53, %s54
    %p63 = scmp.eq.s32.totalorder %s22, 0
    %p64 = por %p62, %p63
    %p65 = scmp.ne.s32.totalorder %s53, %s54
    %p66 = scmp.eq.s32.totalorder %s23, 1
    %p67 = por %p65, %p66
    %p69 = scmp.ne.s32.totalorder %s54, %s68
    %p70 = scmp.eq.s32.totalorder %s23, 0
    %p71 = por %p69, %p70
    %s73 = sadd.s32 %s72, 1
    %p76 = scmp.eq.s32.totalorder %s17, 1
    %p77 = scmp.ne.s32.totalorder %s72, %s74
    %p78 = scmp.eq.s32.totalorder %s17, 0
    %p79 = por %p77, %p78
    %p80 = scmp.ne.s32.totalorder %s72, %s74
    %p81 = scmp.eq.s32.totalorder %s22, 1
    %p82 = por %p80, %p81
    %p83 = scmp.ne.s32.totalorder %s74, %s75
    %p84 = scmp.eq.s32.totalorder %s22, 0
    %p85 = por %p83, %p84
    %p86 = scmp.ne.s32.totalorder %s74, %s75
    %p87 = scmp.eq.s32.totalorder %s23, 1
    %p88 = por %p86, %p87
    %p90 = scmp.ne.s32.totalorder %s75, %s89
    %p91 = scmp.eq.s32.totalorder %s23, 0
    %p92 = por %p90, %p91
    %s94 = sadd.s32 %s93, 1
    %p97 = scmp.eq.s32.totalorder %s17, 1
    %p98 = scmp.ne.s32.totalorder %s93, %s95
    %p99 = scmp.eq.s32.totalorder %s17, 0
    %p100 = por %p98, %p99
    %p101 = scmp.ne.s32.totalorder %s93, %s95
    %p102 = scmp.eq.s32.totalorder %s22, 1
    %p103 = por %p101, %p102
    %p104 = scmp.ne.s32.totalorder %s95, %s96
    %p105 = scmp.eq.s32.totalorder %s22, 0
    %p106 = por %p104, %p105
    %p107 = scmp.ne.s32.totalorder %s95, %s96
    %p108 = scmp.eq.s32.totalorder %s23, 1
    %p109 = por %p107, %p108
    %p111 = scmp.ne.s32.totalorder %s96, %s110
    %p112 = scmp.eq.s32.totalorder %s23, 0
    %p113 = por %p111, %p112
    %s115 = sadd.s32 %s114, 1
    %p118 = scmp.eq.s32.totalorder %s17, 1
    %p119 = scmp.ne.s32.totalorder %s114, %s116
    %p120 = scmp.eq.s32.totalorder %s17, 0
    %p121 = por %p119, %p120
    %p122 = scmp.ne.s32.totalorder %s114, %s116
    %p123 = scmp.eq.s32.totalorder %s22, 1
    %p124 = por %p122, %p123
    %p125 = scmp.ne.s32.totalorder %s116, %s117
    %p126 = scmp.eq.s32.totalorder %s22, 0
    %p127 = por %p125, %p126
    %p128 = scmp.ne.s32.totalorder %s116, %s117
    %p129 = scmp.eq.s32.totalorder %s23, 1
    %p130 = por %p128, %p129
    %p132 = scmp.ne.s32.totalorder %s117, %s131
    %p133 = scmp.eq.s32.totalorder %s23, 0
    %p134 = por %p132, %p133
    %s136 = sadd.s32 %s135, 1
    %p139 = scmp.eq.s32.totalorder %s17, 1
    %p140 = scmp.ne.s32.totalorder %s135, %s137
    %p141 = scmp.eq.s32.totalorder %s17, 0
    %p142 = por %p140, %p141
    %p143 = scmp.ne.s32.totalorder %s135, %s137
    %p144 = scmp.eq.s32.totalorder %s22, 1
    %p145 = por %p143, %p144
    %p146 = scmp.ne.s32.totalorder %s137, %s138
    %p147 = scmp.eq.s32.totalorder %s22, 0
    %p148 = por %p146, %p147
    %p149 = scmp.ne.s32.totalorder %s137, %s138
    %p150 = scmp.eq.s32.totalorder %s23, 1
    %p151 = por %p149, %p150
    %p153 = scmp.ne.s32.totalorder %s138, %s152
    %p154 = scmp.eq.s32.totalorder %s23, 0
    %p155 = por %p153, %p154
    %s157 = sadd.s32 %s156, 1
    %p160 = scmp.eq.s32.totalorder %s17, 1
    %p161 = scmp.ne.s32.totalorder %s156, %s158
    %p162 = scmp.eq.s32.totalorder %s17, 0
    %p163 = por %p161, %p162
    %p164 = scmp.ne.s32.totalorder %s156, %s158
    %p165 = scmp.eq.s32.totalorder %s22, 1
    %p166 = por %p164, %p165
    %p167 = scmp.ne.s32.totalorder %s158, %s159
    %p168 = scmp.eq.s32.totalorder %s22, 0
    %p169 = por %p167, %p168
    %p170 = scmp.ne.s32.totalorder %s158, %s159
    %p171 = scmp.eq.s32.totalorder %s23, 1
    %p172 = por %p170, %p171
    %p174 = scmp.ne.s32.totalorder %s159, %s173
    %p175 = scmp.eq.s32.totalorder %s23, 0
    %p176 = por %p174, %p175
    %s178 = sadd.s32 %s177, 1
    %p181 = scmp.eq.s32.totalorder %s17, 1
    %p182 = scmp.ne.s32.totalorder %s177, %s179
    %p183 = scmp.eq.s32.totalorder %s17, 0
    %p184 = por %p182, %p183
    %p185 = scmp.ne.s32.totalorder %s177, %s179
    %p186 = scmp.eq.s32.totalorder %s22, 1
    %p187 = por %p185, %p186
    %p188 = scmp.ne.s32.totalorder %s179, %s180
    %p189 = scmp.eq.s32.totalorder %s22, 0
    %p190 = por %p188, %p189
    %p191 = scmp.ne.s32.totalorder %s179, %s180
    %p192 = scmp.eq.s32.totalorder %s23, 1
    %p193 = por %p191, %p192
    %p195 = scmp.ne.s32.totalorder %s180, %s194
    %p196 = scmp.eq.s32.totalorder %s23, 0
    %p197 = por %p195, %p196
    %s199 = sadd.s32 %s198, 1
    %p202 = scmp.eq.s32.totalorder %s17, 1
    %p203 = scmp.ne.s32.totalorder %s198, %s200
    %p204 = scmp.eq.s32.totalorder %s17, 0
    %p205 = por %p203, %p204
    %p206 = scmp.ne.s32.totalorder %s198, %s200
    %p207 = scmp.eq.s32.totalorder %s22, 1
    %p208 = por %p206, %p207
    %p209 = scmp.ne.s32.totalorder %s200, %s201
    %p210 = scmp.eq.s32.totalorder %s22, 0
    %p211 = por %p209, %p210
    %p212 = scmp.ne.s32.totalorder %s200, %s201
    %p213 = scmp.eq.s32.totalorder %s23, 1
    %p214 = por %p212, %p213
    %p216 = scmp.ne.s32.totalorder %s201, %s215
    %p217 = scmp.eq.s32.totalorder %s23, 0
    %p218 = por %p216, %p217
    %s219 = ssub.s32 %s17, %s24
    %p220 = scmp.eq.s32.totalorder %s219, 0
    %s222 = sadd.s32 %s221, 1
    %s223 = scalar_select %p220, %s221, %s222
    %p226 = pneg %p220
    %p227 = scmp.eq.s32.totalorder %s17, 1
    %p228 = por %p226, %p227
    %p229 = scmp.ne.s32.totalorder %s221, %s224
    %p230 = scmp.eq.s32.totalorder %s17, 0
    %p231 = por %p229, %p230
    %p232 = scmp.ne.s32.totalorder %s221, %s224
    %p233 = scmp.eq.s32.totalorder %s22, 1
    %p234 = por %p232, %p233
    %p235 = scmp.ne.s32.totalorder %s224, %s225
    %p236 = scmp.eq.s32.totalorder %s22, 0
    %p237 = por %p235, %p236
    %p238 = scmp.ne.s32.totalorder %s224, %s225
    %p239 = scmp.eq.s32.totalorder %s23, 1
    %p240 = por %p238, %p239
    %p242 = scmp.ne.s32.totalorder %s225, %s241
    %p243 = scmp.eq.s32.totalorder %s23, 0
    %p244 = por %p242, %p243
    %p245 = scmp.le.s32.totalorder 1, %s17
    %p246 = scmp.lt.s32.totalorder %s17, 3
    %p247 = pnand %p245, %p246
    %p248 = pneg %p247
    // Predicated region
    $region9: #{gnn_bet_forward.1} parent=5 // pred_check
      _
    $region10: #{gnn_bet_forward.1} parent=5 // pred_check_branch
      %250 = sbr.rel (%p247) target = $region12
    $region11: #{gnn_bet_forward.1} parent=5 // pred_region
      %s251 = ssub.s32 %s17, 1
      // Predicated region
      $region13: #{gnn_bet_forward.1} parent=11 // pred_check
        %p252 = pneg %p64
      $region14: #{gnn_bet_forward.1} parent=11 // pred_check_branch
        %254 = sbr.rel (%p252) target = $region16
      $region15: #{gnn_bet_forward.1} parent=11 // pred_region
        _
      $region16: #{gnn_bet_forward.1} parent=11 // pred_fallthru
        _
      // Predicated region
      $region17: #{gnn_bet_forward.1} parent=11 // pred_check
        %p255 = pneg %p85
      $region18: #{gnn_bet_forward.1} parent=11 // pred_check_branch
        %257 = sbr.rel (%p255) target = $region20
      $region19: #{gnn_bet_forward.1} parent=11 // pred_region
        _
      $region20: #{gnn_bet_forward.1} parent=11 // pred_fallthru
        _
      // Predicated region
      $region21: #{gnn_bet_forward.1} parent=11 // pred_check
        %p258 = pneg %p106
      $region22: #{gnn_bet_forward.1} parent=11 // pred_check_branch
        %260 = sbr.rel (%p258) target = $region24
      $region23: #{gnn_bet_forward.1} parent=11 // pred_region
        _
      $region24: #{gnn_bet_forward.1} parent=11 // pred_fallthru
        _
      // Predicated region
      $region25: #{gnn_bet_forward.1} parent=11 // pred_check
        %p261 = pneg %p127
      $region26: #{gnn_bet_forward.1} parent=11 // pred_check_branch
        %263 = sbr.rel (%p261) target = $region28
      $region27: #{gnn_bet_forward.1} parent=11 // pred_region
        _
      $region28: #{gnn_bet_forward.1} parent=11 // pred_fallthru
        _
      // Predicated region
      $region29: #{gnn_bet_forward.1} parent=11 // pred_check
        %p264 = pneg %p148
      $region30: #{gnn_bet_forward.1} parent=11 // pred_check_branch
        %266 = sbr.rel (%p264) target = $region32
      $region31: #{gnn_bet_forward.1} parent=11 // pred_region
        _
      $region32: #{gnn_bet_forward.1} parent=11 // pred_fallthru
        _
      // Predicated region
      $region33: #{gnn_bet_forward.1} parent=11 // pred_check
        %p267 = pneg %p169
      $region34: #{gnn_bet_forward.1} parent=11 // pred_check_branch
        %269 = sbr.rel (%p267) target = $region36
      $region35: #{gnn_bet_forward.1} parent=11 // pred_region
        _
      $region36: #{gnn_bet_forward.1} parent=11 // pred_fallthru
        _
      // Predicated region
      $region37: #{gnn_bet_forward.1} parent=11 // pred_check
        %p270 = pneg %p190
      $region38: #{gnn_bet_forward.1} parent=11 // pred_check_branch
        %272 = sbr.rel (%p270) target = $region40
      $region39: #{gnn_bet_forward.1} parent=11 // pred_region
        _
      $region40: #{gnn_bet_forward.1} parent=11 // pred_fallthru
        _
      // Predicated region
      $region41: #{gnn_bet_forward.1} parent=11 // pred_check
        %p273 = pneg %p211
      $region42: #{gnn_bet_forward.1} parent=11 // pred_check_branch
        %275 = sbr.rel (%p273) target = $region44
      $region43: #{gnn_bet_forward.1} parent=11 // pred_region
        _
      $region44: #{gnn_bet_forward.1} parent=11 // pred_fallthru
        _
    $region12: #{gnn_bet_forward.1} parent=5 // pred_fallthru
      _
    %p276 = scmp.lt.s32.totalorder %s17, 2
    // Predicated region
    $region45: #{gnn_bet_forward.1} parent=5 // pred_check
      %p277 = pneg %p276
    $region46: #{gnn_bet_forward.1} parent=5 // pred_check_branch
      %279 = sbr.rel (%p277) target = $region48
    $region47: #{gnn_bet_forward.1} parent=5 // pred_region
      // Predicated region
      $region49: #{gnn_bet_forward.1} parent=47 // pred_check
        %p280 = pneg %p37
      $region50: #{gnn_bet_forward.1} parent=47 // pred_check_branch
        %282 = sbr.rel (%p280) target = $region52
      $region51: #{gnn_bet_forward.1} parent=47 // pred_region
        %p283 = scmp.lt.s32.totalorder %s17, 1
        %s284 = scalar_select %p283, %s17, 1
        %s285 = smul.addr %s284, 64
        %s286 = smul.addr %s285, 4
        %s287 = scalar_lea.vmem %s0, %s286
      $region52: #{gnn_bet_forward.1} parent=47 // pred_fallthru
        _
    $region48: #{gnn_bet_forward.1} parent=5 // pred_fallthru
      _
    %p288 = scmp.le.s32.totalorder 1, %s17
    %p289 = scmp.lt.s32.totalorder %s17, 3
    %p290 = pnand %p288, %p289
    %p291 = pneg %p290
    // Predicated region
    $region53: #{gnn_bet_forward.1} parent=5 // pred_check
      _
    $region54: #{gnn_bet_forward.1} parent=5 // pred_check_branch
      %293 = sbr.rel (%p290) target = $region56
    $region55: #{gnn_bet_forward.1} parent=5 // pred_region
      %s294 = ssub.s32 %s17, 1
      %p295 = scmp.lt.s32.totalorder %s22, 1
      %s296 = scalar_select %p295, %s22, 1
      %s297 = smul.addr %s296, 64
      %s298 = smul.addr %s297, 4
      %s299 = scalar_lea.vmem %s0, %s298
      %p300 = pneg %p43
      %p301 = pneg %p40
      %p302 = pneg %p64
      %p303 = pneg %p61
      %p304 = pneg %p85
      %p305 = pneg %p82
      %p306 = pneg %p106
      %p307 = pneg %p103
      %p308 = pneg %p127
      %p309 = pneg %p124
      %p310 = pneg %p148
      %p311 = pneg %p145
      %p312 = pneg %p169
      %p313 = pneg %p166
      %p314 = pneg %p190
      %p315 = pneg %p187
      %p316 = pneg %p211
      %p317 = pneg %p208
      %p318 = pneg %p237
      %p319 = pneg %p234
      %p320 = scmp.lt.s32.totalorder %s22, 1
      %s321 = scalar_select %p320, %s22, 1
      %s322 = smul.addr %s321, 32
      %s323 = smul.addr %s322, 8
      %s324 = scalar_lea.vmem %s9, %s323
      %p325 = scmp.lt.s32.totalorder %s22, 1
      %s326 = scalar_select %p325, %s22, 1
      %s327 = smul.addr %s326, 64
      %s328 = smul.addr %s327, 4
      %s329 = scalar_lea.vmem %s0, %s328
      %p330 = scmp.lt.s32.totalorder %s22, 1
      %s331 = scalar_select %p330, %s22, 1
      %s332 = smul.addr %s331, 32
      %s333 = smul.addr %s332, 8
      %s334 = scalar_lea.vmem %s9, %s333
      %v336 = vld [vmem:[%s4] sm:$0x1]
      %v337 = vld [vmem:[%s6] sm:$0x1]
      %v338 = vld [vmem:[#allocation2] sm:$0x1]
      %v339 = vld [vmem:[%s7] sm:$0x1]
      %v340 = vld [vmem:[%s329] sm:$0xff]
      %v341 = vld [vmem:[%s329 + $0x8] sm:$0xff]
      %v342 = vld [vmem:[%s329 + $0x10] sm:$0xff]
      %v343 = vld [vmem:[%s329 + $0x18] sm:$0xff]
      %v344 = vld [vmem:[%s329 + $0x20] sm:$0xff]
      %v345 = vld [vmem:[%s329 + $0x28] sm:$0xff]
      %v346 = vld [vmem:[%s329 + $0x30] sm:$0xff]
      %v347 = vld [vmem:[%s329 + $0x38] sm:$0xff]
      %v348 = vld [vmem:[%s329 + $0x40] sm:$0xff]
      %v349 = vld [vmem:[%s329 + $0x48] sm:$0xff]
      %v350 = vld [vmem:[%s329 + $0x50] sm:$0xff]
      %v351 = vld [vmem:[%s329 + $0x58] sm:$0xff]
      %v352 = vld [vmem:[%s329 + $0x60] sm:$0xff]
      %v353 = vld [vmem:[%s329 + $0x68] sm:$0xff]
      %v354 = vld [vmem:[%s329 + $0x70] sm:$0xff]
      %v355 = vld [vmem:[%s329 + $0x78] sm:$0xff]
      %v356 = vld [vmem:[%s329 + $0x80] sm:$0xff]
      %v357 = vld [vmem:[%s329 + $0x88] sm:$0xff]
      %v358 = vld [vmem:[%s329 + $0x90] sm:$0xff]
      %v359 = vld [vmem:[%s329 + $0x98] sm:$0xff]
      %v360 = vld [vmem:[%s329 + $0xa0] sm:$0xff]
      %v361 = vld [vmem:[%s329 + $0xa8] sm:$0xff]
      %v362 = vld [vmem:[%s329 + $0xb0] sm:$0xff]
      %v363 = vld [vmem:[%s329 + $0xb8] sm:$0xff]
      %v364 = vld [vmem:[%s329 + $0xc0] sm:$0xff]
      %v365 = vld [vmem:[%s329 + $0xc8] sm:$0xff]
      %v366 = vld [vmem:[%s329 + $0xd0] sm:$0xff]
      %v367 = vld [vmem:[%s329 + $0xd8] sm:$0xff]
      %v368 = vld [vmem:[%s329 + $0xe0] sm:$0xff]
      %v369 = vld [vmem:[%s329 + $0xe8] sm:$0xff]
      %v370 = vld [vmem:[%s329 + $0xf0] sm:$0xff]
      %v371 = vld [vmem:[%s329 + $0xf8] sm:$0xff]
      %v372 = vld [vmem:[%s1] sm:$0xf]
      %v373 = vld [vmem:[%s1 + $0x4] sm:$0xf]
      %v374 = vld [vmem:[%s1 + $0x8] sm:$0xf]
      %v375 = vld [vmem:[%s1 + $0xc] sm:$0xf]
      %v376 = vld [vmem:[%s1 + $0x10] sm:$0xf]
      %v377 = vld [vmem:[%s1 + $0x14] sm:$0xf]
      %v378 = vld [vmem:[%s1 + $0x18] sm:$0xf]
      %v379 = vld [vmem:[%s1 + $0x1c] sm:$0xf]
      %v380 = vld [vmem:[%s1 + $0x20] sm:$0xf]
      %v381 = vld [vmem:[%s1 + $0x24] sm:$0xf]
      %v382 = vld [vmem:[%s1 + $0x28] sm:$0xf]
      %v383 = vld [vmem:[%s1 + $0x2c] sm:$0xf]
      %v384 = vld [vmem:[%s1 + $0x30] sm:$0xf]
      %v385 = vld [vmem:[%s1 + $0x34] sm:$0xf]
      %v386 = vld [vmem:[%s1 + $0x38] sm:$0xf]
      %v387 = vld [vmem:[%s1 + $0x3c] sm:$0xf]
      %v388 = vld [vmem:[%s1 + $0x40] sm:$0xf]
      %v389 = vld [vmem:[%s1 + $0x44] sm:$0xf]
      %v390 = vld [vmem:[%s1 + $0x48] sm:$0xf]
      %v391 = vld [vmem:[%s1 + $0x4c] sm:$0xf]
      %v392 = vld [vmem:[%s1 + $0x50] sm:$0xf]
      %v393 = vld [vmem:[%s1 + $0x54] sm:$0xf]
      %v394 = vld [vmem:[%s1 + $0x58] sm:$0xf]
      %v395 = vld [vmem:[%s1 + $0x5c] sm:$0xf]
      %v396 = vld [vmem:[%s1 + $0x60] sm:$0xf]
      %v397 = vld [vmem:[%s1 + $0x64] sm:$0xf]
      %v398 = vld [vmem:[%s1 + $0x68] sm:$0xf]
      %v399 = vld [vmem:[%s1 + $0x6c] sm:$0xf]
      %v400 = vld [vmem:[%s1 + $0x70] sm:$0xf]
      %v401 = vld [vmem:[%s1 + $0x74] sm:$0xf]
      %v402 = vld [vmem:[%s1 + $0x78] sm:$0xf]
      %v403 = vld [vmem:[%s1 + $0x7c] sm:$0xf]
      %v436 = vunpack.c.l.b16 %v340
      %v437 = vunpack.c.h.b16 %v340
      %v438 = vunpack.c.l.b16 %v341
      %v439 = vunpack.c.h.b16 %v341
      %v440 = vunpack.c.l.b16 %v342
      %v441 = vunpack.c.h.b16 %v342
      %v442 = vunpack.c.l.b16 %v343
      %v443 = vunpack.c.h.b16 %v343
      %v444 = vunpack.c.l.b16 %v344
      %v445 = vunpack.c.h.b16 %v344
      %v446 = vunpack.c.l.b16 %v345
      %v447 = vunpack.c.h.b16 %v345
      %v448 = vunpack.c.l.b16 %v346
      %v449 = vunpack.c.h.b16 %v346
      %v450 = vunpack.c.l.b16 %v347
      %v451 = vunpack.c.h.b16 %v347
      %v452 = vunpack.c.l.b16 %v348
      %v453 = vunpack.c.h.b16 %v348
      %v454 = vunpack.c.l.b16 %v349
      %v455 = vunpack.c.h.b16 %v349
      %v456 = vunpack.c.l.b16 %v350
      %v457 = vunpack.c.h.b16 %v350
      %v458 = vunpack.c.l.b16 %v351
      %v459 = vunpack.c.h.b16 %v351
      %v460 = vunpack.c.l.b16 %v352
      %v461 = vunpack.c.h.b16 %v352
      %v462 = vunpack.c.l.b16 %v353
      %v463 = vunpack.c.h.b16 %v353
      %v464 = vunpack.c.l.b16 %v354
      %v465 = vunpack.c.h.b16 %v354
      %v466 = vunpack.c.l.b16 %v355
      %v467 = vunpack.c.h.b16 %v355
      %v468 = vunpack.c.l.b16 %v356
      %v469 = vunpack.c.h.b16 %v356
      %v470 = vunpack.c.l.b16 %v357
      %v471 = vunpack.c.h.b16 %v357
      %v472 = vunpack.c.l.b16 %v358
      %v473 = vunpack.c.h.b16 %v358
      %v474 = vunpack.c.l.b16 %v359
      %v475 = vunpack.c.h.b16 %v359
      %v476 = vunpack.c.l.b16 %v360
      %v477 = vunpack.c.h.b16 %v360
      %v478 = vunpack.c.l.b16 %v361
      %v479 = vunpack.c.h.b16 %v361
      %v480 = vunpack.c.l.b16 %v362
      %v481 = vunpack.c.h.b16 %v362
      %v482 = vunpack.c.l.b16 %v363
      %v483 = vunpack.c.h.b16 %v363
      %v484 = vunpack.c.l.b16 %v364
      %v485 = vunpack.c.h.b16 %v364
      %v486 = vunpack.c.l.b16 %v365
      %v487 = vunpack.c.h.b16 %v365
      %v488 = vunpack.c.l.b16 %v366
      %v489 = vunpack.c.h.b16 %v366
      %v490 = vunpack.c.l.b16 %v367
      %v491 = vunpack.c.h.b16 %v367
      %v492 = vunpack.c.l.b16 %v368
      %v493 = vunpack.c.h.b16 %v368
      %v494 = vunpack.c.l.b16 %v369
      %v495 = vunpack.c.h.b16 %v369
      %v496 = vunpack.c.l.b16 %v370
      %v497 = vunpack.c.h.b16 %v370
      %v498 = vunpack.c.l.b16 %v371
      %v499 = vunpack.c.h.b16 %v371
      %v500 = vpack.c.b16 %v438, %v436
      %v501 = vpack.c.b16 %v439, %v437
      %v502 = vpack.c.b16 %v442, %v440
      %v503 = vpack.c.b16 %v443, %v441
      %v504 = vpack.c.b16 %v446, %v444
      %v505 = vpack.c.b16 %v447, %v445
      %v506 = vpack.c.b16 %v450, %v448
      %v507 = vpack.c.b16 %v451, %v449
      %v508 = vpack.c.b16 %v454, %v452
      %v509 = vpack.c.b16 %v455, %v453
      %v510 = vpack.c.b16 %v458, %v456
      %v511 = vpack.c.b16 %v459, %v457
      %v512 = vpack.c.b16 %v462, %v460
      %v513 = vpack.c.b16 %v463, %v461
      %v514 = vpack.c.b16 %v466, %v464
      %v515 = vpack.c.b16 %v467, %v465
      %v516 = vpack.c.b16 %v470, %v468
      %v517 = vpack.c.b16 %v471, %v469
      %v518 = vpack.c.b16 %v474, %v472
      %v519 = vpack.c.b16 %v475, %v473
      %v520 = vpack.c.b16 %v478, %v476
      %v521 = vpack.c.b16 %v479, %v477
      %v522 = vpack.c.b16 %v482, %v480
      %v523 = vpack.c.b16 %v483, %v481
      %v524 = vpack.c.b16 %v486, %v484
      %v525 = vpack.c.b16 %v487, %v485
      %v526 = vpack.c.b16 %v490, %v488
      %v527 = vpack.c.b16 %v491, %v489
      %v528 = vpack.c.b16 %v494, %v492
      %v529 = vpack.c.b16 %v495, %v493
      %v530 = vpack.c.b16 %v498, %v496
      %v531 = vpack.c.b16 %v499, %v497
      %v596 = vunpack.c.l.b16 %v372
      %v597 = vunpack.c.l.b16 %v373
      %v598 = vunpack.c.l.b16 %v374
      %v599 = vunpack.c.l.b16 %v375
      %v600 = vunpack.c.l.b16 %v376
      %v601 = vunpack.c.l.b16 %v377
      %v602 = vunpack.c.l.b16 %v378
      %v603 = vunpack.c.l.b16 %v379
      %v604 = vunpack.c.l.b16 %v380
      %v605 = vunpack.c.l.b16 %v381
      %v606 = vunpack.c.l.b16 %v382
      %v607 = vunpack.c.l.b16 %v383
      %v608 = vunpack.c.l.b16 %v384
      %v609 = vunpack.c.l.b16 %v385
      %v610 = vunpack.c.l.b16 %v386
      %v611 = vunpack.c.l.b16 %v387
      %v612 = vunpack.c.l.b16 %v388
      %v613 = vunpack.c.l.b16 %v389
      %v614 = vunpack.c.l.b16 %v390
      %v615 = vunpack.c.l.b16 %v391
      %v616 = vunpack.c.l.b16 %v392
      %v617 = vunpack.c.l.b16 %v393
      %v618 = vunpack.c.l.b16 %v394
      %v619 = vunpack.c.l.b16 %v395
      %v620 = vunpack.c.l.b16 %v396
      %v621 = vunpack.c.l.b16 %v397
      %v622 = vunpack.c.l.b16 %v398
      %v623 = vunpack.c.l.b16 %v399
      %v624 = vunpack.c.l.b16 %v400
      %v625 = vunpack.c.l.b16 %v401
      %v626 = vunpack.c.l.b16 %v402
      %v627 = vunpack.c.l.b16 %v403
      %v628 = vpack.c.b16 %v597, %v596
      %v629 = vpack.c.b16 %v599, %v598
      %v630 = vpack.c.b16 %v601, %v600
      %v631 = vpack.c.b16 %v603, %v602
      %v632 = vpack.c.b16 %v605, %v604
      %v633 = vpack.c.b16 %v607, %v606
      %v634 = vpack.c.b16 %v609, %v608
      %v635 = vpack.c.b16 %v611, %v610
      %v636 = vpack.c.b16 %v613, %v612
      %v637 = vpack.c.b16 %v615, %v614
      %v638 = vpack.c.b16 %v617, %v616
      %v639 = vpack.c.b16 %v619, %v618
      %v640 = vpack.c.b16 %v621, %v620
      %v641 = vpack.c.b16 %v623, %v622
      %v642 = vpack.c.b16 %v625, %v624
      %v643 = vpack.c.b16 %v627, %v626
      %660 = vmatprep.subr.bf16.mxu0 0
      %661 = vmatpush1.bf16.msra.mxu0 %v635
      %662 = vmatprep.subr.bf16.mxu0 0
      %663 = vmatpush1.bf16.msra.mxu0 %v634
      %664 = vmatprep.subr.bf16.mxu0 0
      %665 = vmatpush1.bf16.msra.mxu0 %v633
      %666 = vmatprep.subr.bf16.mxu0 0
      %667 = vmatpush1.bf16.msra.mxu0 %v632
      %668 = vmatprep.subr.bf16.mxu0 0
      %669 = vmatpush1.bf16.msra.mxu0 %v631
      %670 = vmatprep.subr.bf16.mxu0 0
      %671 = vmatpush1.bf16.msra.mxu0 %v630
      %672 = vmatprep.subr.bf16.mxu0 0
      %673 = vmatpush1.bf16.msra.mxu0 %v629
      %674 = vmatprep.subr.bf16.mxu0 0
      %675 = vmatpush1.bf16.msra.mxu0 %v628
      %676 = vmatprep.subr.bf16.mxu0 0
      %677 = vmatpush2.bf16.msra.mxu0 %v643
      %678 = vmatprep.subr.bf16.mxu0 0
      %679 = vmatpush2.bf16.msra.mxu0 %v642
      %680 = vmatprep.subr.bf16.mxu0 0
      %681 = vmatpush2.bf16.msra.mxu0 %v641
      %682 = vmatprep.subr.bf16.mxu0 0
      %683 = vmatpush2.bf16.msra.mxu0 %v640
      %684 = vmatprep.subr.bf16.mxu0 0
      %685 = vmatpush2.bf16.msra.mxu0 %v639
      %686 = vmatprep.subr.bf16.mxu0 0
      %687 = vmatpush2.bf16.msra.mxu0 %v638
      %688 = vmatprep.subr.bf16.mxu0 0
      %689 = vmatpush2.bf16.msra.mxu0 %v637
      %690 = vmatprep.subr.bf16.mxu0 0
      %691 = vmatpush2.bf16.msra.mxu0 %v636
      %692 = vmatprep.mubr.bf16.mxu0 %v501
      %693 = vmatmul.mubr.bf16.gmra.mxu0 %v500
      %v694 = vpop.f32.mrf.mxu0
      %v695 = vadd.f32 0.0, %v694
      %v696 = vpop.f32.mrf.mxu0
      %v697 = vpop.f32.mrf.mxu0
      %v698 = vadd.f32 0.0, %v697
      %v699 = vpop.f32.mrf.mxu0
      %700 = vmatprep.mubr.bf16.mxu0 %v503
      %701 = vmatmul.mubr.bf16.gmra.mxu0 %v502
      %v702 = vpop.f32.mrf.mxu0
      %v703 = vadd.f32 0.0, %v702
      %v704 = vpop.f32.mrf.mxu0
      %v705 = vpop.f32.mrf.mxu0
      %v706 = vadd.f32 0.0, %v705
      %v707 = vpop.f32.mrf.mxu0
      %708 = vmatprep.mubr.bf16.mxu0 %v505
      %709 = vmatmul.mubr.bf16.gmra.mxu0 %v504
      %v710 = vpop.f32.mrf.mxu0
      %v711 = vadd.f32 0.0, %v710
      %v712 = vpop.f32.mrf.mxu0
      %v713 = vpop.f32.mrf.mxu0
      %v714 = vadd.f32 0.0, %v713
      %v715 = vpop.f32.mrf.mxu0
      %716 = vmatprep.mubr.bf16.mxu0 %v507
      %717 = vmatmul.mubr.bf16.gmra.mxu0 %v506
      %v718 = vpop.f32.mrf.mxu0
      %v719 = vadd.f32 0.0, %v718
      %v720 = vpop.f32.mrf.mxu0
      %v721 = vpop.f32.mrf.mxu0
      %v722 = vadd.f32 0.0, %v721
      %v723 = vpop.f32.mrf.mxu0
      %724 = vmatprep.mubr.bf16.mxu0 %v509
      %725 = vmatmul.mubr.bf16.gmra.mxu0 %v508
      %v726 = vpop.f32.mrf.mxu0
      %v727 = vadd.f32 0.0, %v726
      %v728 = vpop.f32.mrf.mxu0
      %v729 = vpop.f32.mrf.mxu0
      %v730 = vadd.f32 0.0, %v729
      %v731 = vpop.f32.mrf.mxu0
      %732 = vmatprep.mubr.bf16.mxu0 %v511
      %733 = vmatmul.mubr.bf16.gmra.mxu0 %v510
      %v734 = vpop.f32.mrf.mxu0
      %v735 = vadd.f32 0.0, %v734
      %v736 = vpop.f32.mrf.mxu0
      %v737 = vpop.f32.mrf.mxu0
      %v738 = vadd.f32 0.0, %v737
      %v739 = vpop.f32.mrf.mxu0
      %740 = vmatprep.mubr.bf16.mxu0 %v513
      %741 = vmatmul.mubr.bf16.gmra.mxu0 %v512
      %v742 = vpop.f32.mrf.mxu0
      %v743 = vadd.f32 0.0, %v742
      %v744 = vpop.f32.mrf.mxu0
      %v745 = vpop.f32.mrf.mxu0
      %v746 = vadd.f32 0.0, %v745
      %v747 = vpop.f32.mrf.mxu0
      %748 = vmatprep.mubr.bf16.mxu0 %v515
      %749 = vmatmul.mubr.bf16.gmra.mxu0 %v514
      %v750 = vpop.f32.mrf.mxu0
      %v751 = vadd.f32 0.0, %v750
      %v752 = vpop.f32.mrf.mxu0
      %v753 = vpop.f32.mrf.mxu0
      %v754 = vadd.f32 0.0, %v753
      %v755 = vpop.f32.mrf.mxu0
      %756 = vmatprep.mubr.bf16.mxu0 %v517
      %757 = vmatmul.mubr.bf16.gmra.mxu0 %v516
      %v758 = vpop.f32.mrf.mxu0
      %v759 = vadd.f32 0.0, %v758
      %v760 = vpop.f32.mrf.mxu0
      %v761 = vpop.f32.mrf.mxu0
      %v762 = vadd.f32 0.0, %v761
      %v763 = vpop.f32.mrf.mxu0
      %764 = vmatprep.mubr.bf16.mxu0 %v519
      %765 = vmatmul.mubr.bf16.gmra.mxu0 %v518
      %v766 = vpop.f32.mrf.mxu0
      %v767 = vadd.f32 0.0, %v766
      %v768 = vpop.f32.mrf.mxu0
      %v769 = vpop.f32.mrf.mxu0
      %v770 = vadd.f32 0.0, %v769
      %v771 = vpop.f32.mrf.mxu0
      %772 = vmatprep.mubr.bf16.mxu0 %v521
      %773 = vmatmul.mubr.bf16.gmra.mxu0 %v520
      %v774 = vpop.f32.mrf.mxu0
      %v775 = vadd.f32 0.0, %v774
      %v776 = vpop.f32.mrf.mxu0
      %v777 = vpop.f32.mrf.mxu0
      %v778 = vadd.f32 0.0, %v777
      %v779 = vpop.f32.mrf.mxu0
      %780 = vmatprep.mubr.bf16.mxu0 %v523
      %781 = vmatmul.mubr.bf16.gmra.mxu0 %v522
      %v782 = vpop.f32.mrf.mxu0
      %v783 = vadd.f32 0.0, %v782
      %v784 = vpop.f32.mrf.mxu0
      %v785 = vpop.f32.mrf.mxu0
      %v786 = vadd.f32 0.0, %v785
      %v787 = vpop.f32.mrf.mxu0
      %788 = vmatprep.mubr.bf16.mxu0 %v525
      %789 = vmatmul.mubr.bf16.gmra.mxu0 %v524
      %v790 = vpop.f32.mrf.mxu0
      %v791 = vadd.f32 0.0, %v790
      %v792 = vpop.f32.mrf.mxu0
      %v793 = vpop.f32.mrf.mxu0
      %v794 = vadd.f32 0.0, %v793
      %v795 = vpop.f32.mrf.mxu0
      %796 = vmatprep.mubr.bf16.mxu0 %v527
      %797 = vmatmul.mubr.bf16.gmra.mxu0 %v526
      %v798 = vpop.f32.mrf.mxu0
      %v799 = vadd.f32 0.0, %v798
      %v800 = vpop.f32.mrf.mxu0
      %v801 = vpop.f32.mrf.mxu0
      %v802 = vadd.f32 0.0, %v801
      %v803 = vpop.f32.mrf.mxu0
      %804 = vmatprep.mubr.bf16.mxu0 %v529
      %805 = vmatmul.mubr.bf16.gmra.mxu0 %v528
      %v806 = vpop.f32.mrf.mxu0
      %v807 = vadd.f32 0.0, %v806
      %v808 = vpop.f32.mrf.mxu0
      %v809 = vpop.f32.mrf.mxu0
      %v810 = vadd.f32 0.0, %v809
      %v811 = vpop.f32.mrf.mxu0
      %812 = vmatprep.mubr.bf16.mxu0 %v531
      %813 = vmatmul.mubr.bf16.gmra.mxu0 %v530
      %v814 = vpop.f32.mrf.mxu0
      %v815 = vadd.f32 0.0, %v814
      %v816 = vpop.f32.mrf.mxu0
      %v817 = vpop.f32.mrf.mxu0
      %v818 = vadd.f32 0.0, %v817
      %v819 = vpop.f32.mrf.mxu0
      %820 = vdwg.mxu0
      %v821 = vmax.f32 %v695, 0.0
      %v822 = vmax.f32 %v698, 0.0
      %v823 = vmax.f32 %v703, 0.0
      %v824 = vmax.f32 %v706, 0.0
      %v825 = vmax.f32 %v711, 0.0
      %v826 = vmax.f32 %v714, 0.0
      %v827 = vmax.f32 %v719, 0.0
      %v828 = vmax.f32 %v722, 0.0
      %v829 = vmax.f32 %v727, 0.0
      %v830 = vmax.f32 %v730, 0.0
      %v831 = vmax.f32 %v735, 0.0
      %v832 = vmax.f32 %v738, 0.0
      %v833 = vmax.f32 %v743, 0.0
      %v834 = vmax.f32 %v746, 0.0
      %v835 = vmax.f32 %v751, 0.0
      %v836 = vmax.f32 %v754, 0.0
      %v837 = vmax.f32 %v759, 0.0
      %v838 = vmax.f32 %v762, 0.0
      %v839 = vmax.f32 %v767, 0.0
      %v840 = vmax.f32 %v770, 0.0
      %v841 = vmax.f32 %v775, 0.0
      %v842 = vmax.f32 %v778, 0.0
      %v843 = vmax.f32 %v783, 0.0
      %v844 = vmax.f32 %v786, 0.0
      %v845 = vmax.f32 %v791, 0.0
      %v846 = vmax.f32 %v794, 0.0
      %v847 = vmax.f32 %v799, 0.0
      %v848 = vmax.f32 %v802, 0.0
      %v849 = vmax.f32 %v807, 0.0
      %v850 = vmax.f32 %v810, 0.0
      %v851 = vmax.f32 %v815, 0.0
      %v852 = vmax.f32 %v818, 0.0
      %v853 = vmul.f32 %v821, %v821
      %v854 = vmul.f32 %v822, %v822
      %v855 = vmul.f32 %v823, %v823
      %v856 = vmul.f32 %v824, %v824
      %v857 = vmul.f32 %v825, %v825
      %v858 = vmul.f32 %v826, %v826
      %v859 = vmul.f32 %v827, %v827
      %v860 = vmul.f32 %v828, %v828
      %v861 = vmul.f32 %v829, %v829
      %v862 = vmul.f32 %v830, %v830
      %v863 = vmul.f32 %v831, %v831
      %v864 = vmul.f32 %v832, %v832
      %v865 = vmul.f32 %v833, %v833
      %v866 = vmul.f32 %v834, %v834
      %v867 = vmul.f32 %v835, %v835
      %v868 = vmul.f32 %v836, %v836
      %v869 = vmul.f32 %v837, %v837
      %v870 = vmul.f32 %v838, %v838
      %v871 = vmul.f32 %v839, %v839
      %v872 = vmul.f32 %v840, %v840
      %v873 = vmul.f32 %v841, %v841
      %v874 = vmul.f32 %v842, %v842
      %v875 = vmul.f32 %v843, %v843
      %v876 = vmul.f32 %v844, %v844
      %v877 = vmul.f32 %v845, %v845
      %v878 = vmul.f32 %v846, %v846
      %v879 = vmul.f32 %v847, %v847
      %v880 = vmul.f32 %v848, %v848
      %v881 = vmul.f32 %v849, %v849
      %v882 = vmul.f32 %v850, %v850
      %v883 = vmul.f32 %v851, %v851
      %v884 = vmul.f32 %v852, %v852
      %vm885 = vcmask 261120
      %v886 = vsel %vm885, %v853, 0.0
      %887 = vadd.xlane.f32.xlu0 %v886
      %v888 = vpop.xlane.xlu0 %887
      %v889 = vsel %vm885, %v854, 0.0
      %890 = vadd.xlane.f32.xlu0 %v889
      %v891 = vpop.xlane.xlu0 %890
      %v892 = vsel %vm885, %v855, 0.0
      %893 = vadd.xlane.f32.xlu0 %v892
      %v894 = vpop.xlane.xlu0 %893
      %v895 = vsel %vm885, %v856, 0.0
      %896 = vadd.xlane.f32.xlu0 %v895
      %v897 = vpop.xlane.xlu0 %896
      %v898 = vsel %vm885, %v857, 0.0
      %899 = vadd.xlane.f32.xlu0 %v898
      %v900 = vpop.xlane.xlu0 %899
      %v901 = vsel %vm885, %v858, 0.0
      %902 = vadd.xlane.f32.xlu0 %v901
      %v903 = vpop.xlane.xlu0 %902
      %v904 = vsel %vm885, %v859, 0.0
      %905 = vadd.xlane.f32.xlu0 %v904
      %v906 = vpop.xlane.xlu0 %905
      %v907 = vsel %vm885, %v860, 0.0
      %908 = vadd.xlane.f32.xlu0 %v907
      %v909 = vpop.xlane.xlu0 %908
      %v910 = vsel %vm885, %v861, 0.0
      %911 = vadd.xlane.f32.xlu0 %v910
      %v912 = vpop.xlane.xlu0 %911
      %v913 = vsel %vm885, %v862, 0.0
      %914 = vadd.xlane.f32.xlu0 %v913
      %v915 = vpop.xlane.xlu0 %914
      %v916 = vsel %vm885, %v863, 0.0
      %917 = vadd.xlane.f32.xlu0 %v916
      %v918 = vpop.xlane.xlu0 %917
      %v919 = vsel %vm885, %v864, 0.0
      %920 = vadd.xlane.f32.xlu0 %v919
      %v921 = vpop.xlane.xlu0 %920
      %v922 = vsel %vm885, %v865, 0.0
      %923 = vadd.xlane.f32.xlu0 %v922
      %v924 = vpop.xlane.xlu0 %923
      %v925 = vsel %vm885, %v866, 0.0
      %926 = vadd.xlane.f32.xlu0 %v925
      %v927 = vpop.xlane.xlu0 %926
      %v928 = vsel %vm885, %v867, 0.0
      %929 = vadd.xlane.f32.xlu0 %v928
      %v930 = vpop.xlane.xlu0 %929
      %v931 = vsel %vm885, %v868, 0.0
      %932 = vadd.xlane.f32.xlu0 %v931
      %v933 = vpop.xlane.xlu0 %932
      %v934 = vsel %vm885, %v869, 0.0
      %935 = vadd.xlane.f32.xlu0 %v934
      %v936 = vpop.xlane.xlu0 %935
      %v937 = vsel %vm885, %v870, 0.0
      %938 = vadd.xlane.f32.xlu0 %v937
      %v939 = vpop.xlane.xlu0 %938
      %v940 = vsel %vm885, %v871, 0.0
      %941 = vadd.xlane.f32.xlu0 %v940
      %v942 = vpop.xlane.xlu0 %941
      %v943 = vsel %vm885, %v872, 0.0
      %944 = vadd.xlane.f32.xlu0 %v943
      %v945 = vpop.xlane.xlu0 %944
      %v946 = vsel %vm885, %v873, 0.0
      %947 = vadd.xlane.f32.xlu0 %v946
      %v948 = vpop.xlane.xlu0 %947
      %v949 = vsel %vm885, %v874, 0.0
      %950 = vadd.xlane.f32.xlu0 %v949
      %v951 = vpop.xlane.xlu0 %950
      %v952 = vsel %vm885, %v875, 0.0
      %953 = vadd.xlane.f32.xlu0 %v952
      %v954 = vpop.xlane.xlu0 %953
      %v955 = vsel %vm885, %v876, 0.0
      %956 = vadd.xlane.f32.xlu0 %v955
      %v957 = vpop.xlane.xlu0 %956
      %v958 = vsel %vm885, %v877, 0.0
      %959 = vadd.xlane.f32.xlu0 %v958
      %v960 = vpop.xlane.xlu0 %959
      %v961 = vsel %vm885, %v878, 0.0
      %962 = vadd.xlane.f32.xlu0 %v961
      %v963 = vpop.xlane.xlu0 %962
      %v964 = vsel %vm885, %v879, 0.0
      %965 = vadd.xlane.f32.xlu0 %v964
      %v966 = vpop.xlane.xlu0 %965
      %v967 = vsel %vm885, %v880, 0.0
      %968 = vadd.xlane.f32.xlu0 %v967
      %v969 = vpop.xlane.xlu0 %968
      %v970 = vsel %vm885, %v881, 0.0
      %971 = vadd.xlane.f32.xlu0 %v970
      %v972 = vpop.xlane.xlu0 %971
      %v973 = vsel %vm885, %v882, 0.0
      %974 = vadd.xlane.f32.xlu0 %v973
      %v975 = vpop.xlane.xlu0 %974
      %v976 = vsel %vm885, %v883, 0.0
      %977 = vadd.xlane.f32.xlu0 %v976
      %v978 = vpop.xlane.xlu0 %977
      %v979 = vsel %vm885, %v884, 0.0
      %980 = vadd.xlane.f32.xlu0 %v979
      %v981 = vpop.xlane.xlu0 %980
      %v982 = vmax.f32 %v888, 1e-24
      %v983 = vmax.f32 %v891, 1e-24
      %v984 = vmax.f32 %v894, 1e-24
      %v985 = vmax.f32 %v897, 1e-24
      %v986 = vmax.f32 %v900, 1e-24
      %v987 = vmax.f32 %v903, 1e-24
      %v988 = vmax.f32 %v906, 1e-24
      %v989 = vmax.f32 %v909, 1e-24
      %v990 = vmax.f32 %v912, 1e-24
      %v991 = vmax.f32 %v915, 1e-24
      %v992 = vmax.f32 %v918, 1e-24
      %v993 = vmax.f32 %v921, 1e-24
      %v994 = vmax.f32 %v924, 1e-24
      %v995 = vmax.f32 %v927, 1e-24
      %v996 = vmax.f32 %v930, 1e-24
      %v997 = vmax.f32 %v933, 1e-24
      %v998 = vmax.f32 %v936, 1e-24
      %v999 = vmax.f32 %v939, 1e-24
      %v1000 = vmax.f32 %v942, 1e-24
      %v1001 = vmax.f32 %v945, 1e-24
      %v1002 = vmax.f32 %v948, 1e-24
      %v1003 = vmax.f32 %v951, 1e-24
      %v1004 = vmax.f32 %v954, 1e-24
      %v1005 = vmax.f32 %v957, 1e-24
      %v1006 = vmax.f32 %v960, 1e-24
      %v1007 = vmax.f32 %v963, 1e-24
      %v1008 = vmax.f32 %v966, 1e-24
      %v1009 = vmax.f32 %v969, 1e-24
      %v1010 = vmax.f32 %v972, 1e-24
      %v1011 = vmax.f32 %v975, 1e-24
      %v1012 = vmax.f32 %v978, 1e-24
      %v1013 = vmax.f32 %v981, 1e-24
      %v1014 = vrsqrt.pop %v982
      %v1015 = vrsqrt.pop %v983
      %v1016 = vrsqrt.pop %v984
      %v1017 = vrsqrt.pop %v985
      %v1018 = vrsqrt.pop %v986
      %v1019 = vrsqrt.pop %v987
      %v1020 = vrsqrt.pop %v988
      %v1021 = vrsqrt.pop %v989
      %v1022 = vrsqrt.pop %v990
      %v1023 = vrsqrt.pop %v991
      %v1024 = vrsqrt.pop %v992
      %v1025 = vrsqrt.pop %v993
      %v1026 = vrsqrt.pop %v994
      %v1027 = vrsqrt.pop %v995
      %v1028 = vrsqrt.pop %v996
      %v1029 = vrsqrt.pop %v997
      %v1030 = vrsqrt.pop %v998
      %v1031 = vrsqrt.pop %v999
      %v1032 = vrsqrt.pop %v1000
      %v1033 = vrsqrt.pop %v1001
      %v1034 = vrsqrt.pop %v1002
      %v1035 = vrsqrt.pop %v1003
      %v1036 = vrsqrt.pop %v1004
      %v1037 = vrsqrt.pop %v1005
      %v1038 = vrsqrt.pop %v1006
      %v1039 = vrsqrt.pop %v1007
      %v1040 = vrsqrt.pop %v1008
      %v1041 = vrsqrt.pop %v1009
      %v1042 = vrsqrt.pop %v1010
      %v1043 = vrsqrt.pop %v1011
      %v1044 = vrsqrt.pop %v1012
      %v1045 = vrsqrt.pop %v1013
      %v1046 = vmul.f32 %v821, %v1014
      %v1047 = vmul.f32 %v822, %v1015
      %v1048 = vmul.f32 %v823, %v1016
      %v1049 = vmul.f32 %v824, %v1017
      %v1050 = vmul.f32 %v825, %v1018
      %v1051 = vmul.f32 %v826, %v1019
      %v1052 = vmul.f32 %v827, %v1020
      %v1053 = vmul.f32 %v828, %v1021
      %v1054 = vmul.f32 %v829, %v1022
      %v1055 = vmul.f32 %v830, %v1023
      %v1056 = vmul.f32 %v831, %v1024
      %v1057 = vmul.f32 %v832, %v1025
      %v1058 = vmul.f32 %v833, %v1026
      %v1059 = vmul.f32 %v834, %v1027
      %v1060 = vmul.f32 %v835, %v1028
      %v1061 = vmul.f32 %v836, %v1029
      %v1062 = vmul.f32 %v837, %v1030
      %v1063 = vmul.f32 %v838, %v1031
      %v1064 = vmul.f32 %v839, %v1032
      %v1065 = vmul.f32 %v840, %v1033
      %v1066 = vmul.f32 %v841, %v1034
      %v1067 = vmul.f32 %v842, %v1035
      %v1068 = vmul.f32 %v843, %v1036
      %v1069 = vmul.f32 %v844, %v1037
      %v1070 = vmul.f32 %v845, %v1038
      %v1071 = vmul.f32 %v846, %v1039
      %v1072 = vmul.f32 %v847, %v1040
      %v1073 = vmul.f32 %v848, %v1041
      %v1074 = vmul.f32 %v849, %v1042
      %v1075 = vmul.f32 %v850, %v1043
      %v1076 = vmul.f32 %v851, %v1044
      %v1077 = vmul.f32 %v852, %v1045
      %v1078 = vpack.c.bf16 %v1047, %v1046
      %v1079 = vpack.c.bf16 %v1049, %v1048
      %v1080 = vpack.c.bf16 %v1051, %v1050
      %v1081 = vpack.c.bf16 %v1053, %v1052
      %v1082 = vpack.c.bf16 %v1055, %v1054
      %v1083 = vpack.c.bf16 %v1057, %v1056
      %v1084 = vpack.c.bf16 %v1059, %v1058
      %v1085 = vpack.c.bf16 %v1061, %v1060
      %v1086 = vpack.c.bf16 %v1063, %v1062
      %v1087 = vpack.c.bf16 %v1065, %v1064
      %v1088 = vpack.c.bf16 %v1067, %v1066
      %v1089 = vpack.c.bf16 %v1069, %v1068
      %v1090 = vpack.c.bf16 %v1071, %v1070
      %v1091 = vpack.c.bf16 %v1073, %v1072
      %v1092 = vpack.c.bf16 %v1075, %v1074
      %v1093 = vpack.c.bf16 %v1077, %v1076
      %v1094 = vld [vmem:[%s3] sm:$0xf]
      %v1095 = vld [vmem:[%s3 + $0x4] sm:$0xf]
      %v1096 = vld [vmem:[%s3 + $0x8] sm:$0xf]
      %v1097 = vld [vmem:[%s3 + $0xc] sm:$0xf]
      %v1099 = vlaneseq
      %v1100 = vshrl.u32 %v1099, 7
      %v1101 = vsub.s32 0, %v1100
      %v1102 = vrot.slane %v336, %v1101
      %v1108 = vunpack.c.l.b16 %v1094
      %v1109 = vunpack.c.l.b16 %v1095
      %v1110 = vunpack.c.l.b16 %v1096
      %v1111 = vunpack.c.l.b16 %v1097
      %v1112 = vpack.c.b16 %v1109, %v1108
      %v1113 = vpack.c.b16 %v1111, %v1110
      %v1117 = vsel %vm885, %v1078, 0
      %v1120 = vsel %vm885, %v1079, 0
      %v1123 = vsel %vm885, %v1080, 0
      %v1126 = vsel %vm885, %v1081, 0
      %v1129 = vsel %vm885, %v1082, 0
      %v1132 = vsel %vm885, %v1083, 0
      %v1135 = vsel %vm885, %v1084, 0
      %v1138 = vsel %vm885, %v1085, 0
      %v1141 = vsel %vm885, %v1086, 0
      %v1144 = vsel %vm885, %v1087, 0
      %v1147 = vsel %vm885, %v1088, 0
      %v1150 = vsel %vm885, %v1089, 0
      %v1153 = vsel %vm885, %v1090, 0
      %v1156 = vsel %vm885, %v1091, 0
      %v1159 = vsel %vm885, %v1092, 0
      %v1162 = vsel %vm885, %v1093, 0
      %1164 = vmatprep.subr.bf16.mxu0 0
      %1165 = vmatpush1.bf16.msra.mxu0 0
      %1166 = vmatprep.subr.bf16.mxu0 0
      %1167 = vmatpush1.bf16.msra.mxu0 0
      %1168 = vmatprep.subr.bf16.mxu0 0
      %1169 = vmatpush1.bf16.msra.mxu0 0
      %1170 = vmatprep.subr.bf16.mxu0 0
      %1171 = vmatpush1.bf16.msra.mxu0 0
      %1172 = vmatprep.subr.bf16.mxu0 0
      %1173 = vmatpush1.bf16.msra.mxu0 0
      %1174 = vmatprep.subr.bf16.mxu0 0
      %1175 = vmatpush1.bf16.msra.mxu0 0
      %1176 = vmatprep.subr.bf16.mxu0 0
      %1177 = vmatpush1.bf16.msra.mxu0 %v1113
      %1178 = vmatprep.subr.bf16.mxu0 0
      %1179 = vmatpush1.bf16.msra.mxu0 %v1112
      %1180 = vmatprep.subr.bf16.mxu0 0
      %1181 = vmatpush2.bf16.msra.mxu0 0
      %1182 = vmatprep.subr.bf16.mxu0 0
      %1183 = vmatpush2.bf16.msra.mxu0 0
      %1184 = vmatprep.subr.bf16.mxu0 0
      %1185 = vmatpush2.bf16.msra.mxu0 0
      %1186 = vmatprep.subr.bf16.mxu0 0
      %1187 = vmatpush2.bf16.msra.mxu0 0
      %1188 = vmatprep.subr.bf16.mxu0 0
      %1189 = vmatpush2.bf16.msra.mxu0 0
      %1190 = vmatprep.subr.bf16.mxu0 0
      %1191 = vmatpush2.bf16.msra.mxu0 0
      %1192 = vmatprep.subr.bf16.mxu0 0
      %1193 = vmatpush2.bf16.msra.mxu0 0
      %1194 = vmatprep.subr.bf16.mxu0 0
      %1195 = vmatpush2.bf16.msra.mxu0 0
      %1196 = vmatprep.mubr.bf16.mxu0 0
      %1197 = vmatmul.mubr.bf16.gmra.mxu0 %v1117
      %v1198 = vpop.f32.mrf.mxu0
      %v1199 = vadd.f32 %v1102, %v1198
      %v1200 = vpop.f32.mrf.mxu0
      %v1201 = vpop.f32.mrf.mxu0
      %v1202 = vadd.f32 %v1102, %v1201
      %v1203 = vpop.f32.mrf.mxu0
      %1204 = vmatprep.mubr.bf16.mxu0 0
      %1205 = vmatmul.mubr.bf16.gmra.mxu0 %v1120
      %v1206 = vpop.f32.mrf.mxu0
      %v1207 = vadd.f32 %v1102, %v1206
      %v1208 = vpop.f32.mrf.mxu0
      %v1209 = vpop.f32.mrf.mxu0
      %v1210 = vadd.f32 %v1102, %v1209
      %v1211 = vpop.f32.mrf.mxu0
      %1212 = vmatprep.mubr.bf16.mxu0 0
      %1213 = vmatmul.mubr.bf16.gmra.mxu0 %v1123
      %v1214 = vpop.f32.mrf.mxu0
      %v1215 = vadd.f32 %v1102, %v1214
      %v1216 = vpop.f32.mrf.mxu0
      %v1217 = vpop.f32.mrf.mxu0
      %v1218 = vadd.f32 %v1102, %v1217
      %v1219 = vpop.f32.mrf.mxu0
      %1220 = vmatprep.mubr.bf16.mxu0 0
      %1221 = vmatmul.mubr.bf16.gmra.mxu0 %v1126
      %v1222 = vpop.f32.mrf.mxu0
      %v1223 = vadd.f32 %v1102, %v1222
      %v1224 = vpop.f32.mrf.mxu0
      %v1225 = vpop.f32.mrf.mxu0
      %v1226 = vadd.f32 %v1102, %v1225
      %v1227 = vpop.f32.mrf.mxu0
      %1228 = vmatprep.mubr.bf16.mxu0 0
      %1229 = vmatmul.mubr.bf16.gmra.mxu0 %v1129
      %v1230 = vpop.f32.mrf.mxu0
      %v1231 = vadd.f32 %v1102, %v1230
      %v1232 = vpop.f32.mrf.mxu0
      %v1233 = vpop.f32.mrf.mxu0
      %v1234 = vadd.f32 %v1102, %v1233
      %v1235 = vpop.f32.mrf.mxu0
      %1236 = vmatprep.mubr.bf16.mxu0 0
      %1237 = vmatmul.mubr.bf16.gmra.mxu0 %v1132
      %v1238 = vpop.f32.mrf.mxu0
      %v1239 = vadd.f32 %v1102, %v1238
      %v1240 = vpop.f32.mrf.mxu0
      %v1241 = vpop.f32.mrf.mxu0
      %v1242 = vadd.f32 %v1102, %v1241
      %v1243 = vpop.f32.mrf.mxu0
      %1244 = vmatprep.mubr.bf16.mxu0 0
      %1245 = vmatmul.mubr.bf16.gmra.mxu0 %v1135
      %v1246 = vpop.f32.mrf.mxu0
      %v1247 = vadd.f32 %v1102, %v1246
      %v1248 = vpop.f32.mrf.mxu0
      %v1249 = vpop.f32.mrf.mxu0
      %v1250 = vadd.f32 %v1102, %v1249
      %v1251 = vpop.f32.mrf.mxu0
      %1252 = vmatprep.mubr.bf16.mxu0 0
      %1253 = vmatmul.mubr.bf16.gmra.mxu0 %v1138
      %v1254 = vpop.f32.mrf.mxu0
      %v1255 = vadd.f32 %v1102, %v1254
      %v1256 = vpop.f32.mrf.mxu0
      %v1257 = vpop.f32.mrf.mxu0
      %v1258 = vadd.f32 %v1102, %v1257
      %v1259 = vpop.f32.mrf.mxu0
      %1260 = vmatprep.mubr.bf16.mxu0 0
      %1261 = vmatmul.mubr.bf16.gmra.mxu0 %v1141
      %v1262 = vpop.f32.mrf.mxu0
      %v1263 = vadd.f32 %v1102, %v1262
      %v1264 = vpop.f32.mrf.mxu0
      %v1265 = vpop.f32.mrf.mxu0
      %v1266 = vadd.f32 %v1102, %v1265
      %v1267 = vpop.f32.mrf.mxu0
      %1268 = vmatprep.mubr.bf16.mxu0 0
      %1269 = vmatmul.mubr.bf16.gmra.mxu0 %v1144
      %v1270 = vpop.f32.mrf.mxu0
      %v1271 = vadd.f32 %v1102, %v1270
      %v1272 = vpop.f32.mrf.mxu0
      %v1273 = vpop.f32.mrf.mxu0
      %v1274 = vadd.f32 %v1102, %v1273
      %v1275 = vpop.f32.mrf.mxu0
      %1276 = vmatprep.mubr.bf16.mxu0 0
      %1277 = vmatmul.mubr.bf16.gmra.mxu0 %v1147
      %v1278 = vpop.f32.mrf.mxu0
      %v1279 = vadd.f32 %v1102, %v1278
      %v1280 = vpop.f32.mrf.mxu0
      %v1281 = vpop.f32.mrf.mxu0
      %v1282 = vadd.f32 %v1102, %v1281
      %v1283 = vpop.f32.mrf.mxu0
      %1284 = vmatprep.mubr.bf16.mxu0 0
      %1285 = vmatmul.mubr.bf16.gmra.mxu0 %v1150
      %v1286 = vpop.f32.mrf.mxu0
      %v1287 = vadd.f32 %v1102, %v1286
      %v1288 = vpop.f32.mrf.mxu0
      %v1289 = vpop.f32.mrf.mxu0
      %v1290 = vadd.f32 %v1102, %v1289
      %v1291 = vpop.f32.mrf.mxu0
      %1292 = vmatprep.mubr.bf16.mxu0 0
      %1293 = vmatmul.mubr.bf16.gmra.mxu0 %v1153
      %v1294 = vpop.f32.mrf.mxu0
      %v1295 = vadd.f32 %v1102, %v1294
      %v1296 = vpop.f32.mrf.mxu0
      %v1297 = vpop.f32.mrf.mxu0
      %v1298 = vadd.f32 %v1102, %v1297
      %v1299 = vpop.f32.mrf.mxu0
      %1300 = vmatprep.mubr.bf16.mxu0 0
      %1301 = vmatmul.mubr.bf16.gmra.mxu0 %v1156
      %v1302 = vpop.f32.mrf.mxu0
      %v1303 = vadd.f32 %v1102, %v1302
      %v1304 = vpop.f32.mrf.mxu0
      %v1305 = vpop.f32.mrf.mxu0
      %v1306 = vadd.f32 %v1102, %v1305
      %v1307 = vpop.f32.mrf.mxu0
      %1308 = vmatprep.mubr.bf16.mxu0 0
      %1309 = vmatmul.mubr.bf16.gmra.mxu0 %v1159
      %v1310 = vpop.f32.mrf.mxu0
      %v1311 = vadd.f32 %v1102, %v1310
      %v1312 = vpop.f32.mrf.mxu0
      %v1313 = vpop.f32.mrf.mxu0
      %v1314 = vadd.f32 %v1102, %v1313
      %v1315 = vpop.f32.mrf.mxu0
      %1316 = vmatprep.mubr.bf16.mxu0 0
      %1317 = vmatmul.mubr.bf16.gmra.mxu0 %v1162
      %v1318 = vpop.f32.mrf.mxu0
      %v1319 = vadd.f32 %v1102, %v1318
      %v1320 = vpop.f32.mrf.mxu0
      %v1321 = vpop.f32.mrf.mxu0
      %v1322 = vadd.f32 %v1102, %v1321
      %v1323 = vpop.f32.mrf.mxu0
      %1324 = vdwg.mxu0
      %v1325 = vmax.f32 %v1199, 0.0
      %v1326 = vmax.f32 %v1202, 0.0
      %v1327 = vmax.f32 %v1207, 0.0
      %v1328 = vmax.f32 %v1210, 0.0
      %v1329 = vmax.f32 %v1215, 0.0
      %v1330 = vmax.f32 %v1218, 0.0
      %v1331 = vmax.f32 %v1223, 0.0
      %v1332 = vmax.f32 %v1226, 0.0
      %v1333 = vmax.f32 %v1231, 0.0
      %v1334 = vmax.f32 %v1234, 0.0
      %v1335 = vmax.f32 %v1239, 0.0
      %v1336 = vmax.f32 %v1242, 0.0
      %v1337 = vmax.f32 %v1247, 0.0
      %v1338 = vmax.f32 %v1250, 0.0
      %v1339 = vmax.f32 %v1255, 0.0
      %v1340 = vmax.f32 %v1258, 0.0
      %v1341 = vmax.f32 %v1263, 0.0
      %v1342 = vmax.f32 %v1266, 0.0
      %v1343 = vmax.f32 %v1271, 0.0
      %v1344 = vmax.f32 %v1274, 0.0
      %v1345 = vmax.f32 %v1279, 0.0
      %v1346 = vmax.f32 %v1282, 0.0
      %v1347 = vmax.f32 %v1287, 0.0
      %v1348 = vmax.f32 %v1290, 0.0
      %v1349 = vmax.f32 %v1295, 0.0
      %v1350 = vmax.f32 %v1298, 0.0
      %v1351 = vmax.f32 %v1303, 0.0
      %v1352 = vmax.f32 %v1306, 0.0
      %v1353 = vmax.f32 %v1311, 0.0
      %v1354 = vmax.f32 %v1314, 0.0
      %v1355 = vmax.f32 %v1319, 0.0
      %v1356 = vmax.f32 %v1322, 0.0
      %v1357 = vpack.c.bf16 %v1326, %v1325
      %v1358 = vpack.c.bf16 %v1328, %v1327
      %v1359 = vpack.c.bf16 %v1330, %v1329
      %v1360 = vpack.c.bf16 %v1332, %v1331
      %v1361 = vpack.c.bf16 %v1334, %v1333
      %v1362 = vpack.c.bf16 %v1336, %v1335
      %v1363 = vpack.c.bf16 %v1338, %v1337
      %v1364 = vpack.c.bf16 %v1340, %v1339
      %v1365 = vpack.c.bf16 %v1342, %v1341
      %v1366 = vpack.c.bf16 %v1344, %v1343
      %v1367 = vpack.c.bf16 %v1346, %v1345
      %v1368 = vpack.c.bf16 %v1348, %v1347
      %v1369 = vpack.c.bf16 %v1350, %v1349
      %v1370 = vpack.c.bf16 %v1352, %v1351
      %v1371 = vpack.c.bf16 %v1354, %v1353
      %v1372 = vpack.c.bf16 %v1356, %v1355
      %v1373 = vld [vmem:[%s5] sm:$0xf]
      %v1374 = vld [vmem:[%s5 + $0x4] sm:$0xf]
      %v1375 = vld [vmem:[%s5 + $0x8] sm:$0xf]
      %v1376 = vld [vmem:[%s5 + $0xc] sm:$0xf]
      %v1377 = vld [vmem:[%s5 + $0x10] sm:$0xf]
      %v1378 = vld [vmem:[%s5 + $0x14] sm:$0xf]
      %v1379 = vld [vmem:[%s5 + $0x18] sm:$0xf]
      %v1380 = vld [vmem:[%s5 + $0x1c] sm:$0xf]
      %v1382 = vlaneseq
      %v1383 = vshrl.u32 %v1382, 7
      %v1384 = vsub.s32 0, %v1383
      %v1385 = vrot.slane %v337, %v1384
      %v1395 = vunpack.c.l.b16 %v1373
      %v1396 = vunpack.c.l.b16 %v1374
      %v1397 = vunpack.c.l.b16 %v1375
      %v1398 = vunpack.c.l.b16 %v1376
      %v1399 = vunpack.c.l.b16 %v1377
      %v1400 = vunpack.c.l.b16 %v1378
      %v1401 = vunpack.c.l.b16 %v1379
      %v1402 = vunpack.c.l.b16 %v1380
      %v1403 = vpack.c.b16 %v1396, %v1395
      %v1404 = vpack.c.b16 %v1398, %v1397
      %v1405 = vpack.c.b16 %v1400, %v1399
      %v1406 = vpack.c.b16 %v1402, %v1401
      %vm1411 = vcmask 523264
      %v1413 = vsel %vm1411, %v1357, 0
      %v1416 = vsel %vm1411, %v1358, 0
      %v1419 = vsel %vm1411, %v1359, 0
      %v1422 = vsel %vm1411, %v1360, 0
      %v1425 = vsel %vm1411, %v1361, 0
      %v1428 = vsel %vm1411, %v1362, 0
      %v1431 = vsel %vm1411, %v1363, 0
      %v1434 = vsel %vm1411, %v1364, 0
      %v1437 = vsel %vm1411, %v1365, 0
      %v1440 = vsel %vm1411, %v1366, 0
      %v1443 = vsel %vm1411, %v1367, 0
      %v1446 = vsel %vm1411, %v1368, 0
      %v1449 = vsel %vm1411, %v1369, 0
      %v1452 = vsel %vm1411, %v1370, 0
      %v1455 = vsel %vm1411, %v1371, 0
      %v1458 = vsel %vm1411, %v1372, 0
      %1460 = vmatprep.subr.bf16.mxu0 0
      %1461 = vmatpush1.bf16.msra.mxu0 0
      %1462 = vmatprep.subr.bf16.mxu0 0
      %1463 = vmatpush1.bf16.msra.mxu0 0
      %1464 = vmatprep.subr.bf16.mxu0 0
      %1465 = vmatpush1.bf16.msra.mxu0 0
      %1466 = vmatprep.subr.bf16.mxu0 0
      %1467 = vmatpush1.bf16.msra.mxu0 0
      %1468 = vmatprep.subr.bf16.mxu0 0
      %1469 = vmatpush1.bf16.msra.mxu0 %v1406
      %1470 = vmatprep.subr.bf16.mxu0 0
      %1471 = vmatpush1.bf16.msra.mxu0 %v1405
      %1472 = vmatprep.subr.bf16.mxu0 0
      %1473 = vmatpush1.bf16.msra.mxu0 %v1404
      %1474 = vmatprep.subr.bf16.mxu0 0
      %1475 = vmatpush1.bf16.msra.mxu0 %v1403
      %1476 = vmatprep.subr.bf16.mxu0 0
      %1477 = vmatpush2.bf16.msra.mxu0 0
      %1478 = vmatprep.subr.bf16.mxu0 0
      %1479 = vmatpush2.bf16.msra.mxu0 0
      %1480 = vmatprep.subr.bf16.mxu0 0
      %1481 = vmatpush2.bf16.msra.mxu0 0
      %1482 = vmatprep.subr.bf16.mxu0 0
      %1483 = vmatpush2.bf16.msra.mxu0 0
      %1484 = vmatprep.subr.bf16.mxu0 0
      %1485 = vmatpush2.bf16.msra.mxu0 0
      %1486 = vmatprep.subr.bf16.mxu0 0
      %1487 = vmatpush2.bf16.msra.mxu0 0
      %1488 = vmatprep.subr.bf16.mxu0 0
      %1489 = vmatpush2.bf16.msra.mxu0 0
      %1490 = vmatprep.subr.bf16.mxu0 0
      %1491 = vmatpush2.bf16.msra.mxu0 0
      %1492 = vmatprep.mubr.bf16.mxu0 0
      %1493 = vmatmul.mubr.bf16.gmra.mxu0 %v1413
      %v1494 = vpop.f32.mrf.mxu0
      %v1495 = vadd.f32 %v1385, %v1494
      %v1496 = vpop.f32.mrf.mxu0
      %v1497 = vpop.f32.mrf.mxu0
      %v1498 = vadd.f32 %v1385, %v1497
      %v1499 = vpop.f32.mrf.mxu0
      %1500 = vmatprep.mubr.bf16.mxu0 0
      %1501 = vmatmul.mubr.bf16.gmra.mxu0 %v1416
      %v1502 = vpop.f32.mrf.mxu0
      %v1503 = vadd.f32 %v1385, %v1502
      %v1504 = vpop.f32.mrf.mxu0
      %v1505 = vpop.f32.mrf.mxu0
      %v1506 = vadd.f32 %v1385, %v1505
      %v1507 = vpop.f32.mrf.mxu0
      %1508 = vmatprep.mubr.bf16.mxu0 0
      %1509 = vmatmul.mubr.bf16.gmra.mxu0 %v1419
      %v1510 = vpop.f32.mrf.mxu0
      %v1511 = vadd.f32 %v1385, %v1510
      %v1512 = vpop.f32.mrf.mxu0
      %v1513 = vpop.f32.mrf.mxu0
      %v1514 = vadd.f32 %v1385, %v1513
      %v1515 = vpop.f32.mrf.mxu0
      %1516 = vmatprep.mubr.bf16.mxu0 0
      %1517 = vmatmul.mubr.bf16.gmra.mxu0 %v1422
      %v1518 = vpop.f32.mrf.mxu0
      %v1519 = vadd.f32 %v1385, %v1518
      %v1520 = vpop.f32.mrf.mxu0
      %v1521 = vpop.f32.mrf.mxu0
      %v1522 = vadd.f32 %v1385, %v1521
      %v1523 = vpop.f32.mrf.mxu0
      %1524 = vmatprep.mubr.bf16.mxu0 0
      %1525 = vmatmul.mubr.bf16.gmra.mxu0 %v1425
      %v1526 = vpop.f32.mrf.mxu0
      %v1527 = vadd.f32 %v1385, %v1526
      %v1528 = vpop.f32.mrf.mxu0
      %v1529 = vpop.f32.mrf.mxu0
      %v1530 = vadd.f32 %v1385, %v1529
      %v1531 = vpop.f32.mrf.mxu0
      %1532 = vmatprep.mubr.bf16.mxu0 0
      %1533 = vmatmul.mubr.bf16.gmra.mxu0 %v1428
      %v1534 = vpop.f32.mrf.mxu0
      %v1535 = vadd.f32 %v1385, %v1534
      %v1536 = vpop.f32.mrf.mxu0
      %v1537 = vpop.f32.mrf.mxu0
      %v1538 = vadd.f32 %v1385, %v1537
      %v1539 = vpop.f32.mrf.mxu0
      %1540 = vmatprep.mubr.bf16.mxu0 0
      %1541 = vmatmul.mubr.bf16.gmra.mxu0 %v1431
      %v1542 = vpop.f32.mrf.mxu0
      %v1543 = vadd.f32 %v1385, %v1542
      %v1544 = vpop.f32.mrf.mxu0
      %v1545 = vpop.f32.mrf.mxu0
      %v1546 = vadd.f32 %v1385, %v1545
      %v1547 = vpop.f32.mrf.mxu0
      %1548 = vmatprep.mubr.bf16.mxu0 0
      %1549 = vmatmul.mubr.bf16.gmra.mxu0 %v1434
      %v1550 = vpop.f32.mrf.mxu0
      %v1551 = vadd.f32 %v1385, %v1550
      %v1552 = vpop.f32.mrf.mxu0
      %v1553 = vpop.f32.mrf.mxu0
      %v1554 = vadd.f32 %v1385, %v1553
      %v1555 = vpop.f32.mrf.mxu0
      %1556 = vmatprep.mubr.bf16.mxu0 0
      %1557 = vmatmul.mubr.bf16.gmra.mxu0 %v1437
      %v1558 = vpop.f32.mrf.mxu0
      %v1559 = vadd.f32 %v1385, %v1558
      %v1560 = vpop.f32.mrf.mxu0
      %v1561 = vpop.f32.mrf.mxu0
      %v1562 = vadd.f32 %v1385, %v1561
      %v1563 = vpop.f32.mrf.mxu0
      %1564 = vmatprep.mubr.bf16.mxu0 0
      %1565 = vmatmul.mubr.bf16.gmra.mxu0 %v1440
      %v1566 = vpop.f32.mrf.mxu0
      %v1567 = vadd.f32 %v1385, %v1566
      %v1568 = vpop.f32.mrf.mxu0
      %v1569 = vpop.f32.mrf.mxu0
      %v1570 = vadd.f32 %v1385, %v1569
      %v1571 = vpop.f32.mrf.mxu0
      %1572 = vmatprep.mubr.bf16.mxu0 0
      %1573 = vmatmul.mubr.bf16.gmra.mxu0 %v1443
      %v1574 = vpop.f32.mrf.mxu0
      %v1575 = vadd.f32 %v1385, %v1574
      %v1576 = vpop.f32.mrf.mxu0
      %v1577 = vpop.f32.mrf.mxu0
      %v1578 = vadd.f32 %v1385, %v1577
      %v1579 = vpop.f32.mrf.mxu0
      %1580 = vmatprep.mubr.bf16.mxu0 0
      %1581 = vmatmul.mubr.bf16.gmra.mxu0 %v1446
      %v1582 = vpop.f32.mrf.mxu0
      %v1583 = vadd.f32 %v1385, %v1582
      %v1584 = vpop.f32.mrf.mxu0
      %v1585 = vpop.f32.mrf.mxu0
      %v1586 = vadd.f32 %v1385, %v1585
      %v1587 = vpop.f32.mrf.mxu0
      %1588 = vmatprep.mubr.bf16.mxu0 0
      %1589 = vmatmul.mubr.bf16.gmra.mxu0 %v1449
      %v1590 = vpop.f32.mrf.mxu0
      %v1591 = vadd.f32 %v1385, %v1590
      %v1592 = vpop.f32.mrf.mxu0
      %v1593 = vpop.f32.mrf.mxu0
      %v1594 = vadd.f32 %v1385, %v1593
      %v1595 = vpop.f32.mrf.mxu0
      %1596 = vmatprep.mubr.bf16.mxu0 0
      %1597 = vmatmul.mubr.bf16.gmra.mxu0 %v1452
      %v1598 = vpop.f32.mrf.mxu0
      %v1599 = vadd.f32 %v1385, %v1598
      %v1600 = vpop.f32.mrf.mxu0
      %v1601 = vpop.f32.mrf.mxu0
      %v1602 = vadd.f32 %v1385, %v1601
      %v1603 = vpop.f32.mrf.mxu0
      %1604 = vmatprep.mubr.bf16.mxu0 0
      %1605 = vmatmul.mubr.bf16.gmra.mxu0 %v1455
      %v1606 = vpop.f32.mrf.mxu0
      %v1607 = vadd.f32 %v1385, %v1606
      %v1608 = vpop.f32.mrf.mxu0
      %v1609 = vpop.f32.mrf.mxu0
      %v1610 = vadd.f32 %v1385, %v1609
      %v1611 = vpop.f32.mrf.mxu0
      %1612 = vmatprep.mubr.bf16.mxu0 0
      %1613 = vmatmul.mubr.bf16.gmra.mxu0 %v1458
      %v1614 = vpop.f32.mrf.mxu0
      %v1615 = vadd.f32 %v1385, %v1614
      %v1616 = vpop.f32.mrf.mxu0
      %v1617 = vpop.f32.mrf.mxu0
      %v1618 = vadd.f32 %v1385, %v1617
      %v1619 = vpop.f32.mrf.mxu0
      %1620 = vdwg.mxu0
      %v1621 = vmax.f32 %v1495, 0.0
      %v1622 = vmax.f32 %v1498, 0.0
      %v1623 = vmax.f32 %v1503, 0.0
      %v1624 = vmax.f32 %v1506, 0.0
      %v1625 = vmax.f32 %v1511, 0.0
      %v1626 = vmax.f32 %v1514, 0.0
      %v1627 = vmax.f32 %v1519, 0.0
      %v1628 = vmax.f32 %v1522, 0.0
      %v1629 = vmax.f32 %v1527, 0.0
      %v1630 = vmax.f32 %v1530, 0.0
      %v1631 = vmax.f32 %v1535, 0.0
      %v1632 = vmax.f32 %v1538, 0.0
      %v1633 = vmax.f32 %v1543, 0.0
      %v1634 = vmax.f32 %v1546, 0.0
      %v1635 = vmax.f32 %v1551, 0.0
      %v1636 = vmax.f32 %v1554, 0.0
      %v1637 = vmax.f32 %v1559, 0.0
      %v1638 = vmax.f32 %v1562, 0.0
      %v1639 = vmax.f32 %v1567, 0.0
      %v1640 = vmax.f32 %v1570, 0.0
      %v1641 = vmax.f32 %v1575, 0.0
      %v1642 = vmax.f32 %v1578, 0.0
      %v1643 = vmax.f32 %v1583, 0.0
      %v1644 = vmax.f32 %v1586, 0.0
      %v1645 = vmax.f32 %v1591, 0.0
      %v1646 = vmax.f32 %v1594, 0.0
      %v1647 = vmax.f32 %v1599, 0.0
      %v1648 = vmax.f32 %v1602, 0.0
      %v1649 = vmax.f32 %v1607, 0.0
      %v1650 = vmax.f32 %v1610, 0.0
      %v1651 = vmax.f32 %v1615, 0.0
      %v1652 = vmax.f32 %v1618, 0.0
      %v1654 = vlaneseq
      %v1655 = vshrl.u32 %v1654, 7
      %v1656 = vsub.s32 0, %v1655
      %v1657 = vrot.slane %v339, %v1656
      %v1659 = vmul.f32 %v1621, %v1657
      %v1660 = vmul.f32 %v1622, %v1657
      %v1661 = vmul.f32 %v1623, %v1657
      %v1662 = vmul.f32 %v1624, %v1657
      %v1663 = vmul.f32 %v1625, %v1657
      %v1664 = vmul.f32 %v1626, %v1657
      %v1665 = vmul.f32 %v1627, %v1657
      %v1666 = vmul.f32 %v1628, %v1657
      %v1667 = vmul.f32 %v1629, %v1657
      %v1668 = vmul.f32 %v1630, %v1657
      %v1669 = vmul.f32 %v1631, %v1657
      %v1670 = vmul.f32 %v1632, %v1657
      %v1671 = vmul.f32 %v1633, %v1657
      %v1672 = vmul.f32 %v1634, %v1657
      %v1673 = vmul.f32 %v1635, %v1657
      %v1674 = vmul.f32 %v1636, %v1657
      %v1675 = vmul.f32 %v1637, %v1657
      %v1676 = vmul.f32 %v1638, %v1657
      %v1677 = vmul.f32 %v1639, %v1657
      %v1678 = vmul.f32 %v1640, %v1657
      %v1679 = vmul.f32 %v1641, %v1657
      %v1680 = vmul.f32 %v1642, %v1657
      %v1681 = vmul.f32 %v1643, %v1657
      %v1682 = vmul.f32 %v1644, %v1657
      %v1683 = vmul.f32 %v1645, %v1657
      %v1684 = vmul.f32 %v1646, %v1657
      %v1685 = vmul.f32 %v1647, %v1657
      %v1686 = vmul.f32 %v1648, %v1657
      %v1687 = vmul.f32 %v1649, %v1657
      %v1688 = vmul.f32 %v1650, %v1657
      %v1689 = vmul.f32 %v1651, %v1657
      %v1690 = vmul.f32 %v1652, %v1657
      %v1691 = vsel %vm1411, %v1659, 0.0
      %1692 = vadd.xlane.f32.xlu0 %v1691
      %v1693 = vpop.xlane.xlu0 %1692
      %v1694 = vsel %vm1411, %v1660, 0.0
      %1695 = vadd.xlane.f32.xlu0 %v1694
      %v1696 = vpop.xlane.xlu0 %1695
      %v1697 = vsel %vm1411, %v1661, 0.0
      %1698 = vadd.xlane.f32.xlu0 %v1697
      %v1699 = vpop.xlane.xlu0 %1698
      %v1700 = vsel %vm1411, %v1662, 0.0
      %1701 = vadd.xlane.f32.xlu0 %v1700
      %v1702 = vpop.xlane.xlu0 %1701
      %v1703 = vsel %vm1411, %v1663, 0.0
      %1704 = vadd.xlane.f32.xlu0 %v1703
      %v1705 = vpop.xlane.xlu0 %1704
      %v1706 = vsel %vm1411, %v1664, 0.0
      %1707 = vadd.xlane.f32.xlu0 %v1706
      %v1708 = vpop.xlane.xlu0 %1707
      %v1709 = vsel %vm1411, %v1665, 0.0
      %1710 = vadd.xlane.f32.xlu0 %v1709
      %v1711 = vpop.xlane.xlu0 %1710
      %v1712 = vsel %vm1411, %v1666, 0.0
      %1713 = vadd.xlane.f32.xlu0 %v1712
      %v1714 = vpop.xlane.xlu0 %1713
      %v1715 = vsel %vm1411, %v1667, 0.0
      %1716 = vadd.xlane.f32.xlu0 %v1715
      %v1717 = vpop.xlane.xlu0 %1716
      %v1718 = vsel %vm1411, %v1668, 0.0
      %1719 = vadd.xlane.f32.xlu0 %v1718
      %v1720 = vpop.xlane.xlu0 %1719
      %v1721 = vsel %vm1411, %v1669, 0.0
      %1722 = vadd.xlane.f32.xlu0 %v1721
      %v1723 = vpop.xlane.xlu0 %1722
      %v1724 = vsel %vm1411, %v1670, 0.0
      %1725 = vadd.xlane.f32.xlu0 %v1724
      %v1726 = vpop.xlane.xlu0 %1725
      %v1727 = vsel %vm1411, %v1671, 0.0
      %1728 = vadd.xlane.f32.xlu0 %v1727
      %v1729 = vpop.xlane.xlu0 %1728
      %v1730 = vsel %vm1411, %v1672, 0.0
      %1731 = vadd.xlane.f32.xlu0 %v1730
      %v1732 = vpop.xlane.xlu0 %1731
      %v1733 = vsel %vm1411, %v1673, 0.0
      %1734 = vadd.xlane.f32.xlu0 %v1733
      %v1735 = vpop.xlane.xlu0 %1734
      %v1736 = vsel %vm1411, %v1674, 0.0
      %1737 = vadd.xlane.f32.xlu0 %v1736
      %v1738 = vpop.xlane.xlu0 %1737
      %v1739 = vsel %vm1411, %v1675, 0.0
      %1740 = vadd.xlane.f32.xlu0 %v1739
      %v1741 = vpop.xlane.xlu0 %1740
      %v1742 = vsel %vm1411, %v1676, 0.0
      %1743 = vadd.xlane.f32.xlu0 %v1742
      %v1744 = vpop.xlane.xlu0 %1743
      %v1745 = vsel %vm1411, %v1677, 0.0
      %1746 = vadd.xlane.f32.xlu0 %v1745
      %v1747 = vpop.xlane.xlu0 %1746
      %v1748 = vsel %vm1411, %v1678, 0.0
      %1749 = vadd.xlane.f32.xlu0 %v1748
      %v1750 = vpop.xlane.xlu0 %1749
      %v1751 = vsel %vm1411, %v1679, 0.0
      %1752 = vadd.xlane.f32.xlu0 %v1751
      %v1753 = vpop.xlane.xlu0 %1752
      %v1754 = vsel %vm1411, %v1680, 0.0
      %1755 = vadd.xlane.f32.xlu0 %v1754
      %v1756 = vpop.xlane.xlu0 %1755
      %v1757 = vsel %vm1411, %v1681, 0.0
      %1758 = vadd.xlane.f32.xlu0 %v1757
      %v1759 = vpop.xlane.xlu0 %1758
      %v1760 = vsel %vm1411, %v1682, 0.0
      %1761 = vadd.xlane.f32.xlu0 %v1760
      %v1762 = vpop.xlane.xlu0 %1761
      %v1763 = vsel %vm1411, %v1683, 0.0
      %1764 = vadd.xlane.f32.xlu0 %v1763
      %v1765 = vpop.xlane.xlu0 %1764
      %v1766 = vsel %vm1411, %v1684, 0.0
      %1767 = vadd.xlane.f32.xlu0 %v1766
      %v1768 = vpop.xlane.xlu0 %1767
      %v1769 = vsel %vm1411, %v1685, 0.0
      %1770 = vadd.xlane.f32.xlu0 %v1769
      %v1771 = vpop.xlane.xlu0 %1770
      %v1772 = vsel %vm1411, %v1686, 0.0
      %1773 = vadd.xlane.f32.xlu0 %v1772
      %v1774 = vpop.xlane.xlu0 %1773
      %v1775 = vsel %vm1411, %v1687, 0.0
      %1776 = vadd.xlane.f32.xlu0 %v1775
      %v1777 = vpop.xlane.xlu0 %1776
      %v1778 = vsel %vm1411, %v1688, 0.0
      %1779 = vadd.xlane.f32.xlu0 %v1778
      %v1780 = vpop.xlane.xlu0 %1779
      %v1781 = vsel %vm1411, %v1689, 0.0
      %1782 = vadd.xlane.f32.xlu0 %v1781
      %v1783 = vpop.xlane.xlu0 %1782
      %v1784 = vsel %vm1411, %v1690, 0.0
      %1785 = vadd.xlane.f32.xlu0 %v1784
      %v1786 = vpop.xlane.xlu0 %1785
      %v1788 = vlaneseq
      %v1789 = vshrl.u32 %v1788, 7
      %v1790 = vsub.s32 0, %v1789
      %v1791 = vrot.slane %v338, %v1790
      %v1793 = vadd.f32 %v1693, %v1791
      %v1794 = vadd.f32 %v1696, %v1791
      %v1795 = vadd.f32 %v1699, %v1791
      %v1796 = vadd.f32 %v1702, %v1791
      %v1797 = vadd.f32 %v1705, %v1791
      %v1798 = vadd.f32 %v1708, %v1791
      %v1799 = vadd.f32 %v1711, %v1791
      %v1800 = vadd.f32 %v1714, %v1791
      %v1801 = vadd.f32 %v1717, %v1791
      %v1802 = vadd.f32 %v1720, %v1791
      %v1803 = vadd.f32 %v1723, %v1791
      %v1804 = vadd.f32 %v1726, %v1791
      %v1805 = vadd.f32 %v1729, %v1791
      %v1806 = vadd.f32 %v1732, %v1791
      %v1807 = vadd.f32 %v1735, %v1791
      %v1808 = vadd.f32 %v1738, %v1791
      %v1809 = vadd.f32 %v1741, %v1791
      %v1810 = vadd.f32 %v1744, %v1791
      %v1811 = vadd.f32 %v1747, %v1791
      %v1812 = vadd.f32 %v1750, %v1791
      %v1813 = vadd.f32 %v1753, %v1791
      %v1814 = vadd.f32 %v1756, %v1791
      %v1815 = vadd.f32 %v1759, %v1791
      %v1816 = vadd.f32 %v1762, %v1791
      %v1817 = vadd.f32 %v1765, %v1791
      %v1818 = vadd.f32 %v1768, %v1791
      %v1819 = vadd.f32 %v1771, %v1791
      %v1820 = vadd.f32 %v1774, %v1791
      %v1821 = vadd.f32 %v1777, %v1791
      %v1822 = vadd.f32 %v1780, %v1791
      %v1823 = vadd.f32 %v1783, %v1791
      %v1824 = vadd.f32 %v1786, %v1791
      %v1825 = vld [vmem:[%s2] sm:$0xf]
      %v1826 = vld [vmem:[%s2 + $0x4] sm:$0xf]
      %v1827 = vld [vmem:[%s2 + $0x8] sm:$0xf]
      %v1828 = vld [vmem:[%s2 + $0xc] sm:$0xf]
      %v1833 = vunpack.c.l.b16 %v1825
      %v1834 = vunpack.c.l.b16 %v1826
      %v1835 = vunpack.c.l.b16 %v1827
      %v1836 = vunpack.c.l.b16 %v1828
      %v1837 = vpack.c.b16 %v1834, %v1833
      %v1838 = vpack.c.b16 %v1836, %v1835
      %1841 = vmatprep.subr.bf16.mxu0 0
      %1842 = vmatpush1.bf16.msra.mxu0 0
      %1843 = vmatprep.subr.bf16.mxu0 0
      %1844 = vmatpush1.bf16.msra.mxu0 0
      %1845 = vmatprep.subr.bf16.mxu0 0
      %1846 = vmatpush1.bf16.msra.mxu0 0
      %1847 = vmatprep.subr.bf16.mxu0 0
      %1848 = vmatpush1.bf16.msra.mxu0 0
      %1849 = vmatprep.subr.bf16.mxu0 0
      %1850 = vmatpush1.bf16.msra.mxu0 0
      %1851 = vmatprep.subr.bf16.mxu0 0
      %1852 = vmatpush1.bf16.msra.mxu0 0
      %1853 = vmatprep.subr.bf16.mxu0 0
      %1854 = vmatpush1.bf16.msra.mxu0 %v1838
      %1855 = vmatprep.subr.bf16.mxu0 0
      %1856 = vmatpush1.bf16.msra.mxu0 %v1837
      %1857 = vmatprep.subr.bf16.mxu0 0
      %1858 = vmatpush2.bf16.msra.mxu0 0
      %1859 = vmatprep.subr.bf16.mxu0 0
      %1860 = vmatpush2.bf16.msra.mxu0 0
      %1861 = vmatprep.subr.bf16.mxu0 0
      %1862 = vmatpush2.bf16.msra.mxu0 0
      %1863 = vmatprep.subr.bf16.mxu0 0
      %1864 = vmatpush2.bf16.msra.mxu0 0
      %1865 = vmatprep.subr.bf16.mxu0 0
      %1866 = vmatpush2.bf16.msra.mxu0 0
      %1867 = vmatprep.subr.bf16.mxu0 0
      %1868 = vmatpush2.bf16.msra.mxu0 0
      %1869 = vmatprep.subr.bf16.mxu0 0
      %1870 = vmatpush2.bf16.msra.mxu0 0
      %1871 = vmatprep.subr.bf16.mxu0 0
      %1872 = vmatpush2.bf16.msra.mxu0 0
      %1873 = vmatprep.mubr.bf16.mxu0 0
      %1874 = vmatmul.mubr.bf16.gmra.mxu0 %v1117
      %v1875 = vpop.f32.mrf.mxu0
      %v1876 = vadd.f32 0.0, %v1875
      %v1877 = vpop.f32.mrf.mxu0
      %v1878 = vpop.f32.mrf.mxu0
      %v1879 = vadd.f32 0.0, %v1878
      %v1880 = vpop.f32.mrf.mxu0
      %1881 = vmatprep.mubr.bf16.mxu0 0
      %1882 = vmatmul.mubr.bf16.gmra.mxu0 %v1120
      %v1883 = vpop.f32.mrf.mxu0
      %v1884 = vadd.f32 0.0, %v1883
      %v1885 = vpop.f32.mrf.mxu0
      %v1886 = vpop.f32.mrf.mxu0
      %v1887 = vadd.f32 0.0, %v1886
      %v1888 = vpop.f32.mrf.mxu0
      %1889 = vmatprep.mubr.bf16.mxu0 0
      %1890 = vmatmul.mubr.bf16.gmra.mxu0 %v1123
      %v1891 = vpop.f32.mrf.mxu0
      %v1892 = vadd.f32 0.0, %v1891
      %v1893 = vpop.f32.mrf.mxu0
      %v1894 = vpop.f32.mrf.mxu0
      %v1895 = vadd.f32 0.0, %v1894
      %v1896 = vpop.f32.mrf.mxu0
      %1897 = vmatprep.mubr.bf16.mxu0 0
      %1898 = vmatmul.mubr.bf16.gmra.mxu0 %v1126
      %v1899 = vpop.f32.mrf.mxu0
      %v1900 = vadd.f32 0.0, %v1899
      %v1901 = vpop.f32.mrf.mxu0
      %v1902 = vpop.f32.mrf.mxu0
      %v1903 = vadd.f32 0.0, %v1902
      %v1904 = vpop.f32.mrf.mxu0
      %1905 = vmatprep.mubr.bf16.mxu0 0
      %1906 = vmatmul.mubr.bf16.gmra.mxu0 %v1129
      %v1907 = vpop.f32.mrf.mxu0
      %v1908 = vadd.f32 0.0, %v1907
      %v1909 = vpop.f32.mrf.mxu0
      %v1910 = vpop.f32.mrf.mxu0
      %v1911 = vadd.f32 0.0, %v1910
      %v1912 = vpop.f32.mrf.mxu0
      %1913 = vmatprep.mubr.bf16.mxu0 0
      %1914 = vmatmul.mubr.bf16.gmra.mxu0 %v1132
      %v1915 = vpop.f32.mrf.mxu0
      %v1916 = vadd.f32 0.0, %v1915
      %v1917 = vpop.f32.mrf.mxu0
      %v1918 = vpop.f32.mrf.mxu0
      %v1919 = vadd.f32 0.0, %v1918
      %v1920 = vpop.f32.mrf.mxu0
      %1921 = vmatprep.mubr.bf16.mxu0 0
      %1922 = vmatmul.mubr.bf16.gmra.mxu0 %v1135
      %v1923 = vpop.f32.mrf.mxu0
      %v1924 = vadd.f32 0.0, %v1923
      %v1925 = vpop.f32.mrf.mxu0
      %v1926 = vpop.f32.mrf.mxu0
      %v1927 = vadd.f32 0.0, %v1926
      %v1928 = vpop.f32.mrf.mxu0
      %1929 = vmatprep.mubr.bf16.mxu0 0
      %1930 = vmatmul.mubr.bf16.gmra.mxu0 %v1138
      %v1931 = vpop.f32.mrf.mxu0
      %v1932 = vadd.f32 0.0, %v1931
      %v1933 = vpop.f32.mrf.mxu0
      %v1934 = vpop.f32.mrf.mxu0
      %v1935 = vadd.f32 0.0, %v1934
      %v1936 = vpop.f32.mrf.mxu0
      %1937 = vmatprep.mubr.bf16.mxu0 0
      %1938 = vmatmul.mubr.bf16.gmra.mxu0 %v1141
      %v1939 = vpop.f32.mrf.mxu0
      %v1940 = vadd.f32 0.0, %v1939
      %v1941 = vpop.f32.mrf.mxu0
      %v1942 = vpop.f32.mrf.mxu0
      %v1943 = vadd.f32 0.0, %v1942
      %v1944 = vpop.f32.mrf.mxu0
      %1945 = vmatprep.mubr.bf16.mxu0 0
      %1946 = vmatmul.mubr.bf16.gmra.mxu0 %v1144
      %v1947 = vpop.f32.mrf.mxu0
      %v1948 = vadd.f32 0.0, %v1947
      %v1949 = vpop.f32.mrf.mxu0
      %v1950 = vpop.f32.mrf.mxu0
      %v1951 = vadd.f32 0.0, %v1950
      %v1952 = vpop.f32.mrf.mxu0
      %1953 = vmatprep.mubr.bf16.mxu0 0
      %1954 = vmatmul.mubr.bf16.gmra.mxu0 %v1147
      %v1955 = vpop.f32.mrf.mxu0
      %v1956 = vadd.f32 0.0, %v1955
      %v1957 = vpop.f32.mrf.mxu0
      %v1958 = vpop.f32.mrf.mxu0
      %v1959 = vadd.f32 0.0, %v1958
      %v1960 = vpop.f32.mrf.mxu0
      %1961 = vmatprep.mubr.bf16.mxu0 0
      %1962 = vmatmul.mubr.bf16.gmra.mxu0 %v1150
      %v1963 = vpop.f32.mrf.mxu0
      %v1964 = vadd.f32 0.0, %v1963
      %v1965 = vpop.f32.mrf.mxu0
      %v1966 = vpop.f32.mrf.mxu0
      %v1967 = vadd.f32 0.0, %v1966
      %v1968 = vpop.f32.mrf.mxu0
      %1969 = vmatprep.mubr.bf16.mxu0 0
      %1970 = vmatmul.mubr.bf16.gmra.mxu0 %v1153
      %v1971 = vpop.f32.mrf.mxu0
      %v1972 = vadd.f32 0.0, %v1971
      %v1973 = vpop.f32.mrf.mxu0
      %v1974 = vpop.f32.mrf.mxu0
      %v1975 = vadd.f32 0.0, %v1974
      %v1976 = vpop.f32.mrf.mxu0
      %1977 = vmatprep.mubr.bf16.mxu0 0
      %1978 = vmatmul.mubr.bf16.gmra.mxu0 %v1156
      %v1979 = vpop.f32.mrf.mxu0
      %v1980 = vadd.f32 0.0, %v1979
      %v1981 = vpop.f32.mrf.mxu0
      %v1982 = vpop.f32.mrf.mxu0
      %v1983 = vadd.f32 0.0, %v1982
      %v1984 = vpop.f32.mrf.mxu0
      %1985 = vmatprep.mubr.bf16.mxu0 0
      %1986 = vmatmul.mubr.bf16.gmra.mxu0 %v1159
      %v1987 = vpop.f32.mrf.mxu0
      %v1988 = vadd.f32 0.0, %v1987
      %v1989 = vpop.f32.mrf.mxu0
      %v1990 = vpop.f32.mrf.mxu0
      %v1991 = vadd.f32 0.0, %v1990
      %v1992 = vpop.f32.mrf.mxu0
      %1993 = vmatprep.mubr.bf16.mxu0 0
      %1994 = vmatmul.mubr.bf16.gmra.mxu0 %v1162
      %v1995 = vpop.f32.mrf.mxu0
      %v1996 = vadd.f32 0.0, %v1995
      %v1997 = vpop.f32.mrf.mxu0
      %v1998 = vpop.f32.mrf.mxu0
      %v1999 = vadd.f32 0.0, %v1998
      %v2000 = vpop.f32.mrf.mxu0
      %2001 = vdwg.mxu0
      %v2002 = vpack.c.bf16 %v1879, %v1876
      %v2003 = vpack.c.bf16 %v1887, %v1884
      %v2004 = vpack.c.bf16 %v1895, %v1892
      %v2005 = vpack.c.bf16 %v1903, %v1900
      %v2006 = vpack.c.bf16 %v1911, %v1908
      %v2007 = vpack.c.bf16 %v1919, %v1916
      %v2008 = vpack.c.bf16 %v1927, %v1924
      %v2009 = vpack.c.bf16 %v1935, %v1932
      %v2010 = vpack.c.bf16 %v1943, %v1940
      %v2011 = vpack.c.bf16 %v1951, %v1948
      %v2012 = vpack.c.bf16 %v1959, %v1956
      %v2013 = vpack.c.bf16 %v1967, %v1964
      %v2014 = vpack.c.bf16 %v1975, %v1972
      %v2015 = vpack.c.bf16 %v1983, %v1980
      %v2016 = vpack.c.bf16 %v1991, %v1988
      %v2017 = vpack.c.bf16 %v1999, %v1996
      %2018 = vmatprep.subr.bf16.mxu0 0
      %2019 = vmatpush1.bf16.msra.mxu0 %v2009
      %2020 = vmatprep.subr.bf16.mxu0 0
      %2021 = vmatpush1.bf16.msra.mxu0 %v2008
      %2022 = vmatprep.subr.bf16.mxu0 0
      %2023 = vmatpush1.bf16.msra.mxu0 %v2007
      %2024 = vmatprep.subr.bf16.mxu0 0
      %2025 = vmatpush1.bf16.msra.mxu0 %v2006
      %2026 = vmatprep.subr.bf16.mxu0 0
      %2027 = vmatpush1.bf16.msra.mxu0 %v2005
      %2028 = vmatprep.subr.bf16.mxu0 0
      %2029 = vmatpush1.bf16.msra.mxu0 %v2004
      %2030 = vmatprep.subr.bf16.mxu0 0
      %2031 = vmatpush1.bf16.msra.mxu0 %v2003
      %2032 = vmatprep.subr.bf16.mxu0 0
      %2033 = vmatpush1.bf16.msra.mxu0 %v2002
      %2034 = vmatprep.subr.bf16.mxu0 0
      %2035 = vmatpush2.bf16.msra.mxu0 %v2017
      %2036 = vmatprep.subr.bf16.mxu0 0
      %2037 = vmatpush2.bf16.msra.mxu0 %v2016
      %2038 = vmatprep.subr.bf16.mxu0 0
      %2039 = vmatpush2.bf16.msra.mxu0 %v2015
      %2040 = vmatprep.subr.bf16.mxu0 0
      %2041 = vmatpush2.bf16.msra.mxu0 %v2014
      %2042 = vmatprep.subr.bf16.mxu0 0
      %2043 = vmatpush2.bf16.msra.mxu0 %v2013
      %2044 = vmatprep.subr.bf16.mxu0 0
      %2045 = vmatpush2.bf16.msra.mxu0 %v2012
      %2046 = vmatprep.subr.bf16.mxu0 0
      %2047 = vmatpush2.bf16.msra.mxu0 %v2011
      %2048 = vmatprep.subr.bf16.mxu0 0
      %2049 = vmatpush2.bf16.msra.mxu0 %v2010
      %2050 = vmatprep.mubr.bf16.mxu0 %v501
      %2051 = vmatmul.mubr.bf16.gmra.mxu0 %v500
      %v2052 = vpop.f32.mrf.mxu0
      %v2053 = vadd.f32 0.0, %v2052
      %v2054 = vpop.f32.mrf.mxu0
      %v2055 = vpop.f32.mrf.mxu0
      %v2056 = vadd.f32 0.0, %v2055
      %v2057 = vpop.f32.mrf.mxu0
      %2058 = vmatprep.mubr.bf16.mxu0 %v503
      %2059 = vmatmul.mubr.bf16.gmra.mxu0 %v502
      %v2060 = vpop.f32.mrf.mxu0
      %v2061 = vadd.f32 0.0, %v2060
      %v2062 = vpop.f32.mrf.mxu0
      %v2063 = vpop.f32.mrf.mxu0
      %v2064 = vadd.f32 0.0, %v2063
      %v2065 = vpop.f32.mrf.mxu0
      %2066 = vmatprep.mubr.bf16.mxu0 %v505
      %2067 = vmatmul.mubr.bf16.gmra.mxu0 %v504
      %v2068 = vpop.f32.mrf.mxu0
      %v2069 = vadd.f32 0.0, %v2068
      %v2070 = vpop.f32.mrf.mxu0
      %v2071 = vpop.f32.mrf.mxu0
      %v2072 = vadd.f32 0.0, %v2071
      %v2073 = vpop.f32.mrf.mxu0
      %2074 = vmatprep.mubr.bf16.mxu0 %v507
      %2075 = vmatmul.mubr.bf16.gmra.mxu0 %v506
      %v2076 = vpop.f32.mrf.mxu0
      %v2077 = vadd.f32 0.0, %v2076
      %v2078 = vpop.f32.mrf.mxu0
      %v2079 = vpop.f32.mrf.mxu0
      %v2080 = vadd.f32 0.0, %v2079
      %v2081 = vpop.f32.mrf.mxu0
      %2082 = vmatprep.mubr.bf16.mxu0 %v509
      %2083 = vmatmul.mubr.bf16.gmra.mxu0 %v508
      %v2084 = vpop.f32.mrf.mxu0
      %v2085 = vadd.f32 0.0, %v2084
      %v2086 = vpop.f32.mrf.mxu0
      %v2087 = vpop.f32.mrf.mxu0
      %v2088 = vadd.f32 0.0, %v2087
      %v2089 = vpop.f32.mrf.mxu0
      %2090 = vmatprep.mubr.bf16.mxu0 %v511
      %2091 = vmatmul.mubr.bf16.gmra.mxu0 %v510
      %v2092 = vpop.f32.mrf.mxu0
      %v2093 = vadd.f32 0.0, %v2092
      %v2094 = vpop.f32.mrf.mxu0
      %v2095 = vpop.f32.mrf.mxu0
      %v2096 = vadd.f32 0.0, %v2095
      %v2097 = vpop.f32.mrf.mxu0
      %2098 = vmatprep.mubr.bf16.mxu0 %v513
      %2099 = vmatmul.mubr.bf16.gmra.mxu0 %v512
      %v2100 = vpop.f32.mrf.mxu0
      %v2101 = vadd.f32 0.0, %v2100
      %v2102 = vpop.f32.mrf.mxu0
      %v2103 = vpop.f32.mrf.mxu0
      %v2104 = vadd.f32 0.0, %v2103
      %v2105 = vpop.f32.mrf.mxu0
      %2106 = vmatprep.mubr.bf16.mxu0 %v515
      %2107 = vmatmul.mubr.bf16.gmra.mxu0 %v514
      %v2108 = vpop.f32.mrf.mxu0
      %v2109 = vadd.f32 0.0, %v2108
      %v2110 = vpop.f32.mrf.mxu0
      %v2111 = vpop.f32.mrf.mxu0
      %v2112 = vadd.f32 0.0, %v2111
      %v2113 = vpop.f32.mrf.mxu0
      %2114 = vmatprep.mubr.bf16.mxu0 %v517
      %2115 = vmatmul.mubr.bf16.gmra.mxu0 %v516
      %v2116 = vpop.f32.mrf.mxu0
      %v2117 = vadd.f32 0.0, %v2116
      %v2118 = vpop.f32.mrf.mxu0
      %v2119 = vpop.f32.mrf.mxu0
      %v2120 = vadd.f32 0.0, %v2119
      %v2121 = vpop.f32.mrf.mxu0
      %2122 = vmatprep.mubr.bf16.mxu0 %v519
      %2123 = vmatmul.mubr.bf16.gmra.mxu0 %v518
      %v2124 = vpop.f32.mrf.mxu0
      %v2125 = vadd.f32 0.0, %v2124
      %v2126 = vpop.f32.mrf.mxu0
      %v2127 = vpop.f32.mrf.mxu0
      %v2128 = vadd.f32 0.0, %v2127
      %v2129 = vpop.f32.mrf.mxu0
      %2130 = vmatprep.mubr.bf16.mxu0 %v521
      %2131 = vmatmul.mubr.bf16.gmra.mxu0 %v520
      %v2132 = vpop.f32.mrf.mxu0
      %v2133 = vadd.f32 0.0, %v2132
      %v2134 = vpop.f32.mrf.mxu0
      %v2135 = vpop.f32.mrf.mxu0
      %v2136 = vadd.f32 0.0, %v2135
      %v2137 = vpop.f32.mrf.mxu0
      %2138 = vmatprep.mubr.bf16.mxu0 %v523
      %2139 = vmatmul.mubr.bf16.gmra.mxu0 %v522
      %v2140 = vpop.f32.mrf.mxu0
      %v2141 = vadd.f32 0.0, %v2140
      %v2142 = vpop.f32.mrf.mxu0
      %v2143 = vpop.f32.mrf.mxu0
      %v2144 = vadd.f32 0.0, %v2143
      %v2145 = vpop.f32.mrf.mxu0
      %2146 = vmatprep.mubr.bf16.mxu0 %v525
      %2147 = vmatmul.mubr.bf16.gmra.mxu0 %v524
      %v2148 = vpop.f32.mrf.mxu0
      %v2149 = vadd.f32 0.0, %v2148
      %v2150 = vpop.f32.mrf.mxu0
      %v2151 = vpop.f32.mrf.mxu0
      %v2152 = vadd.f32 0.0, %v2151
      %v2153 = vpop.f32.mrf.mxu0
      %2154 = vmatprep.mubr.bf16.mxu0 %v527
      %2155 = vmatmul.mubr.bf16.gmra.mxu0 %v526
      %v2156 = vpop.f32.mrf.mxu0
      %v2157 = vadd.f32 0.0, %v2156
      %v2158 = vpop.f32.mrf.mxu0
      %v2159 = vpop.f32.mrf.mxu0
      %v2160 = vadd.f32 0.0, %v2159
      %v2161 = vpop.f32.mrf.mxu0
      %2162 = vmatprep.mubr.bf16.mxu0 %v529
      %2163 = vmatmul.mubr.bf16.gmra.mxu0 %v528
      %v2164 = vpop.f32.mrf.mxu0
      %v2165 = vadd.f32 0.0, %v2164
      %v2166 = vpop.f32.mrf.mxu0
      %v2167 = vpop.f32.mrf.mxu0
      %v2168 = vadd.f32 0.0, %v2167
      %v2169 = vpop.f32.mrf.mxu0
      %2170 = vmatprep.mubr.bf16.mxu0 %v531
      %2171 = vmatmul.mubr.bf16.gmra.mxu0 %v530
      %v2172 = vpop.f32.mrf.mxu0
      %v2173 = vadd.f32 0.0, %v2172
      %v2174 = vpop.f32.mrf.mxu0
      %v2175 = vpop.f32.mrf.mxu0
      %v2176 = vadd.f32 0.0, %v2175
      %v2177 = vpop.f32.mrf.mxu0
      %2178 = vdwg.mxu0
      %v2179 = vmax.f32 %v2053, 0.0
      %v2180 = vmax.f32 %v2056, 0.0
      %v2181 = vmax.f32 %v2061, 0.0
      %v2182 = vmax.f32 %v2064, 0.0
      %v2183 = vmax.f32 %v2069, 0.0
      %v2184 = vmax.f32 %v2072, 0.0
      %v2185 = vmax.f32 %v2077, 0.0
      %v2186 = vmax.f32 %v2080, 0.0
      %v2187 = vmax.f32 %v2085, 0.0
      %v2188 = vmax.f32 %v2088, 0.0
      %v2189 = vmax.f32 %v2093, 0.0
      %v2190 = vmax.f32 %v2096, 0.0
      %v2191 = vmax.f32 %v2101, 0.0
      %v2192 = vmax.f32 %v2104, 0.0
      %v2193 = vmax.f32 %v2109, 0.0
      %v2194 = vmax.f32 %v2112, 0.0
      %v2195 = vmax.f32 %v2117, 0.0
      %v2196 = vmax.f32 %v2120, 0.0
      %v2197 = vmax.f32 %v2125, 0.0
      %v2198 = vmax.f32 %v2128, 0.0
      %v2199 = vmax.f32 %v2133, 0.0
      %v2200 = vmax.f32 %v2136, 0.0
      %v2201 = vmax.f32 %v2141, 0.0
      %v2202 = vmax.f32 %v2144, 0.0
      %v2203 = vmax.f32 %v2149, 0.0
      %v2204 = vmax.f32 %v2152, 0.0
      %v2205 = vmax.f32 %v2157, 0.0
      %v2206 = vmax.f32 %v2160, 0.0
      %v2207 = vmax.f32 %v2165, 0.0
      %v2208 = vmax.f32 %v2168, 0.0
      %v2209 = vmax.f32 %v2173, 0.0
      %v2210 = vmax.f32 %v2176, 0.0
      %v2211 = vmul.f32 %v2179, %v2179
      %v2212 = vmul.f32 %v2180, %v2180
      %v2213 = vmul.f32 %v2181, %v2181
      %v2214 = vmul.f32 %v2182, %v2182
      %v2215 = vmul.f32 %v2183, %v2183
      %v2216 = vmul.f32 %v2184, %v2184
      %v2217 = vmul.f32 %v2185, %v2185
      %v2218 = vmul.f32 %v2186, %v2186
      %v2219 = vmul.f32 %v2187, %v2187
      %v2220 = vmul.f32 %v2188, %v2188
      %v2221 = vmul.f32 %v2189, %v2189
      %v2222 = vmul.f32 %v2190, %v2190
      %v2223 = vmul.f32 %v2191, %v2191
      %v2224 = vmul.f32 %v2192, %v2192
      %v2225 = vmul.f32 %v2193, %v2193
      %v2226 = vmul.f32 %v2194, %v2194
      %v2227 = vmul.f32 %v2195, %v2195
      %v2228 = vmul.f32 %v2196, %v2196
      %v2229 = vmul.f32 %v2197, %v2197
      %v2230 = vmul.f32 %v2198, %v2198
      %v2231 = vmul.f32 %v2199, %v2199
      %v2232 = vmul.f32 %v2200, %v2200
      %v2233 = vmul.f32 %v2201, %v2201
      %v2234 = vmul.f32 %v2202, %v2202
      %v2235 = vmul.f32 %v2203, %v2203
      %v2236 = vmul.f32 %v2204, %v2204
      %v2237 = vmul.f32 %v2205, %v2205
      %v2238 = vmul.f32 %v2206, %v2206
      %v2239 = vmul.f32 %v2207, %v2207
      %v2240 = vmul.f32 %v2208, %v2208
      %v2241 = vmul.f32 %v2209, %v2209
      %v2242 = vmul.f32 %v2210, %v2210
      %v2243 = vsel %vm885, %v2211, 0.0
      %2244 = vadd.xlane.f32.xlu0 %v2243
      %v2245 = vpop.xlane.xlu0 %2244
      %v2246 = vsel %vm885, %v2212, 0.0
      %2247 = vadd.xlane.f32.xlu0 %v2246
      %v2248 = vpop.xlane.xlu0 %2247
      %v2249 = vsel %vm885, %v2213, 0.0
      %2250 = vadd.xlane.f32.xlu0 %v2249
      %v2251 = vpop.xlane.xlu0 %2250
      %v2252 = vsel %vm885, %v2214, 0.0
      %2253 = vadd.xlane.f32.xlu0 %v2252
      %v2254 = vpop.xlane.xlu0 %2253
      %v2255 = vsel %vm885, %v2215, 0.0
      %2256 = vadd.xlane.f32.xlu0 %v2255
      %v2257 = vpop.xlane.xlu0 %2256
      %v2258 = vsel %vm885, %v2216, 0.0
      %2259 = vadd.xlane.f32.xlu0 %v2258
      %v2260 = vpop.xlane.xlu0 %2259
      %v2261 = vsel %vm885, %v2217, 0.0
      %2262 = vadd.xlane.f32.xlu0 %v2261
      %v2263 = vpop.xlane.xlu0 %2262
      %v2264 = vsel %vm885, %v2218, 0.0
      %2265 = vadd.xlane.f32.xlu0 %v2264
      %v2266 = vpop.xlane.xlu0 %2265
      %v2267 = vsel %vm885, %v2219, 0.0
      %2268 = vadd.xlane.f32.xlu0 %v2267
      %v2269 = vpop.xlane.xlu0 %2268
      %v2270 = vsel %vm885, %v2220, 0.0
      %2271 = vadd.xlane.f32.xlu0 %v2270
      %v2272 = vpop.xlane.xlu0 %2271
      %v2273 = vsel %vm885, %v2221, 0.0
      %2274 = vadd.xlane.f32.xlu0 %v2273
      %v2275 = vpop.xlane.xlu0 %2274
      %v2276 = vsel %vm885, %v2222, 0.0
      %2277 = vadd.xlane.f32.xlu0 %v2276
      %v2278 = vpop.xlane.xlu0 %2277
      %v2279 = vsel %vm885, %v2223, 0.0
      %2280 = vadd.xlane.f32.xlu0 %v2279
      %v2281 = vpop.xlane.xlu0 %2280
      %v2282 = vsel %vm885, %v2224, 0.0
      %2283 = vadd.xlane.f32.xlu0 %v2282
      %v2284 = vpop.xlane.xlu0 %2283
      %v2285 = vsel %vm885, %v2225, 0.0
      %2286 = vadd.xlane.f32.xlu0 %v2285
      %v2287 = vpop.xlane.xlu0 %2286
      %v2288 = vsel %vm885, %v2226, 0.0
      %2289 = vadd.xlane.f32.xlu0 %v2288
      %v2290 = vpop.xlane.xlu0 %2289
      %v2291 = vsel %vm885, %v2227, 0.0
      %2292 = vadd.xlane.f32.xlu0 %v2291
      %v2293 = vpop.xlane.xlu0 %2292
      %v2294 = vsel %vm885, %v2228, 0.0
      %2295 = vadd.xlane.f32.xlu0 %v2294
      %v2296 = vpop.xlane.xlu0 %2295
      %v2297 = vsel %vm885, %v2229, 0.0
      %2298 = vadd.xlane.f32.xlu0 %v2297
      %v2299 = vpop.xlane.xlu0 %2298
      %v2300 = vsel %vm885, %v2230, 0.0
      %2301 = vadd.xlane.f32.xlu0 %v2300
      %v2302 = vpop.xlane.xlu0 %2301
      %v2303 = vsel %vm885, %v2231, 0.0
      %2304 = vadd.xlane.f32.xlu0 %v2303
      %v2305 = vpop.xlane.xlu0 %2304
      %v2306 = vsel %vm885, %v2232, 0.0
      %2307 = vadd.xlane.f32.xlu0 %v2306
      %v2308 = vpop.xlane.xlu0 %2307
      %v2309 = vsel %vm885, %v2233, 0.0
      %2310 = vadd.xlane.f32.xlu0 %v2309
      %v2311 = vpop.xlane.xlu0 %2310
      %v2312 = vsel %vm885, %v2234, 0.0
      %2313 = vadd.xlane.f32.xlu0 %v2312
      %v2314 = vpop.xlane.xlu0 %2313
      %v2315 = vsel %vm885, %v2235, 0.0
      %2316 = vadd.xlane.f32.xlu0 %v2315
      %v2317 = vpop.xlane.xlu0 %2316
      %v2318 = vsel %vm885, %v2236, 0.0
      %2319 = vadd.xlane.f32.xlu0 %v2318
      %v2320 = vpop.xlane.xlu0 %2319
      %v2321 = vsel %vm885, %v2237, 0.0
      %2322 = vadd.xlane.f32.xlu0 %v2321
      %v2323 = vpop.xlane.xlu0 %2322
      %v2324 = vsel %vm885, %v2238, 0.0
      %2325 = vadd.xlane.f32.xlu0 %v2324
      %v2326 = vpop.xlane.xlu0 %2325
      %v2327 = vsel %vm885, %v2239, 0.0
      %2328 = vadd.xlane.f32.xlu0 %v2327
      %v2329 = vpop.xlane.xlu0 %2328
      %v2330 = vsel %vm885, %v2240, 0.0
      %2331 = vadd.xlane.f32.xlu0 %v2330
      %v2332 = vpop.xlane.xlu0 %2331
      %v2333 = vsel %vm885, %v2241, 0.0
      %2334 = vadd.xlane.f32.xlu0 %v2333
      %v2335 = vpop.xlane.xlu0 %2334
      %v2336 = vsel %vm885, %v2242, 0.0
      %2337 = vadd.xlane.f32.xlu0 %v2336
      %v2338 = vpop.xlane.xlu0 %2337
      %v2339 = vmax.f32 %v2245, 1e-24
      %v2340 = vmax.f32 %v2248, 1e-24
      %v2341 = vmax.f32 %v2251, 1e-24
      %v2342 = vmax.f32 %v2254, 1e-24
      %v2343 = vmax.f32 %v2257, 1e-24
      %v2344 = vmax.f32 %v2260, 1e-24
      %v2345 = vmax.f32 %v2263, 1e-24
      %v2346 = vmax.f32 %v2266, 1e-24
      %v2347 = vmax.f32 %v2269, 1e-24
      %v2348 = vmax.f32 %v2272, 1e-24
      %v2349 = vmax.f32 %v2275, 1e-24
      %v2350 = vmax.f32 %v2278, 1e-24
      %v2351 = vmax.f32 %v2281, 1e-24
      %v2352 = vmax.f32 %v2284, 1e-24
      %v2353 = vmax.f32 %v2287, 1e-24
      %v2354 = vmax.f32 %v2290, 1e-24
      %v2355 = vmax.f32 %v2293, 1e-24
      %v2356 = vmax.f32 %v2296, 1e-24
      %v2357 = vmax.f32 %v2299, 1e-24
      %v2358 = vmax.f32 %v2302, 1e-24
      %v2359 = vmax.f32 %v2305, 1e-24
      %v2360 = vmax.f32 %v2308, 1e-24
      %v2361 = vmax.f32 %v2311, 1e-24
      %v2362 = vmax.f32 %v2314, 1e-24
      %v2363 = vmax.f32 %v2317, 1e-24
      %v2364 = vmax.f32 %v2320, 1e-24
      %v2365 = vmax.f32 %v2323, 1e-24
      %v2366 = vmax.f32 %v2326, 1e-24
      %v2367 = vmax.f32 %v2329, 1e-24
      %v2368 = vmax.f32 %v2332, 1e-24
      %v2369 = vmax.f32 %v2335, 1e-24
      %v2370 = vmax.f32 %v2338, 1e-24
      %v2371 = vrsqrt.pop %v2339
      %v2372 = vrsqrt.pop %v2340
      %v2373 = vrsqrt.pop %v2341
      %v2374 = vrsqrt.pop %v2342
      %v2375 = vrsqrt.pop %v2343
      %v2376 = vrsqrt.pop %v2344
      %v2377 = vrsqrt.pop %v2345
      %v2378 = vrsqrt.pop %v2346
      %v2379 = vrsqrt.pop %v2347
      %v2380 = vrsqrt.pop %v2348
      %v2381 = vrsqrt.pop %v2349
      %v2382 = vrsqrt.pop %v2350
      %v2383 = vrsqrt.pop %v2351
      %v2384 = vrsqrt.pop %v2352
      %v2385 = vrsqrt.pop %v2353
      %v2386 = vrsqrt.pop %v2354
      %v2387 = vrsqrt.pop %v2355
      %v2388 = vrsqrt.pop %v2356
      %v2389 = vrsqrt.pop %v2357
      %v2390 = vrsqrt.pop %v2358
      %v2391 = vrsqrt.pop %v2359
      %v2392 = vrsqrt.pop %v2360
      %v2393 = vrsqrt.pop %v2361
      %v2394 = vrsqrt.pop %v2362
      %v2395 = vrsqrt.pop %v2363
      %v2396 = vrsqrt.pop %v2364
      %v2397 = vrsqrt.pop %v2365
      %v2398 = vrsqrt.pop %v2366
      %v2399 = vrsqrt.pop %v2367
      %v2400 = vrsqrt.pop %v2368
      %v2401 = vrsqrt.pop %v2369
      %v2402 = vrsqrt.pop %v2370
      %v2403 = vmul.f32 %v2179, %v2371
      %v2404 = vmul.f32 %v2180, %v2372
      %v2405 = vmul.f32 %v2181, %v2373
      %v2406 = vmul.f32 %v2182, %v2374
      %v2407 = vmul.f32 %v2183, %v2375
      %v2408 = vmul.f32 %v2184, %v2376
      %v2409 = vmul.f32 %v2185, %v2377
      %v2410 = vmul.f32 %v2186, %v2378
      %v2411 = vmul.f32 %v2187, %v2379
      %v2412 = vmul.f32 %v2188, %v2380
      %v2413 = vmul.f32 %v2189, %v2381
      %v2414 = vmul.f32 %v2190, %v2382
      %v2415 = vmul.f32 %v2191, %v2383
      %v2416 = vmul.f32 %v2192, %v2384
      %v2417 = vmul.f32 %v2193, %v2385
      %v2418 = vmul.f32 %v2194, %v2386
      %v2419 = vmul.f32 %v2195, %v2387
      %v2420 = vmul.f32 %v2196, %v2388
      %v2421 = vmul.f32 %v2197, %v2389
      %v2422 = vmul.f32 %v2198, %v2390
      %v2423 = vmul.f32 %v2199, %v2391
      %v2424 = vmul.f32 %v2200, %v2392
      %v2425 = vmul.f32 %v2201, %v2393
      %v2426 = vmul.f32 %v2202, %v2394
      %v2427 = vmul.f32 %v2203, %v2395
      %v2428 = vmul.f32 %v2204, %v2396
      %v2429 = vmul.f32 %v2205, %v2397
      %v2430 = vmul.f32 %v2206, %v2398
      %v2431 = vmul.f32 %v2207, %v2399
      %v2432 = vmul.f32 %v2208, %v2400
      %v2433 = vmul.f32 %v2209, %v2401
      %v2434 = vmul.f32 %v2210, %v2402
      %v2435 = vadd.f32 %v1046, %v2403
      %v2436 = vadd.f32 %v1047, %v2404
      %v2437 = vadd.f32 %v1048, %v2405
      %v2438 = vadd.f32 %v1049, %v2406
      %v2439 = vadd.f32 %v1050, %v2407
      %v2440 = vadd.f32 %v1051, %v2408
      %v2441 = vadd.f32 %v1052, %v2409
      %v2442 = vadd.f32 %v1053, %v2410
      %v2443 = vadd.f32 %v1054, %v2411
      %v2444 = vadd.f32 %v1055, %v2412
      %v2445 = vadd.f32 %v1056, %v2413
      %v2446 = vadd.f32 %v1057, %v2414
      %v2447 = vadd.f32 %v1058, %v2415
      %v2448 = vadd.f32 %v1059, %v2416
      %v2449 = vadd.f32 %v1060, %v2417
      %v2450 = vadd.f32 %v1061, %v2418
      %v2451 = vadd.f32 %v1062, %v2419
      %v2452 = vadd.f32 %v1063, %v2420
      %v2453 = vadd.f32 %v1064, %v2421
      %v2454 = vadd.f32 %v1065, %v2422
      %v2455 = vadd.f32 %v1066, %v2423
      %v2456 = vadd.f32 %v1067, %v2424
      %v2457 = vadd.f32 %v1068, %v2425
      %v2458 = vadd.f32 %v1069, %v2426
      %v2459 = vadd.f32 %v1070, %v2427
      %v2460 = vadd.f32 %v1071, %v2428
      %v2461 = vadd.f32 %v1072, %v2429
      %v2462 = vadd.f32 %v1073, %v2430
      %v2463 = vadd.f32 %v1074, %v2431
      %v2464 = vadd.f32 %v1075, %v2432
      %v2465 = vadd.f32 %v1076, %v2433
      %v2466 = vadd.f32 %v1077, %v2434
      %v2467 = vpack.c.bf16 %v2404, %v2403
      %v2468 = vpack.c.bf16 %v2406, %v2405
      %v2469 = vpack.c.bf16 %v2408, %v2407
      %v2470 = vpack.c.bf16 %v2410, %v2409
      %v2471 = vpack.c.bf16 %v2412, %v2411
      %v2472 = vpack.c.bf16 %v2414, %v2413
      %v2473 = vpack.c.bf16 %v2416, %v2415
      %v2474 = vpack.c.bf16 %v2418, %v2417
      %v2475 = vpack.c.bf16 %v2420, %v2419
      %v2476 = vpack.c.bf16 %v2422, %v2421
      %v2477 = vpack.c.bf16 %v2424, %v2423
      %v2478 = vpack.c.bf16 %v2426, %v2425
      %v2479 = vpack.c.bf16 %v2428, %v2427
      %v2480 = vpack.c.bf16 %v2430, %v2429
      %v2481 = vpack.c.bf16 %v2432, %v2431
      %v2482 = vpack.c.bf16 %v2434, %v2433
      %v2484 = vsel %vm885, %v2467, 0
      %v2487 = vsel %vm885, %v2468, 0
      %v2490 = vsel %vm885, %v2469, 0
      %v2493 = vsel %vm885, %v2470, 0
      %v2496 = vsel %vm885, %v2471, 0
      %v2499 = vsel %vm885, %v2472, 0
      %v2502 = vsel %vm885, %v2473, 0
      %v2505 = vsel %vm885, %v2474, 0
      %v2508 = vsel %vm885, %v2475, 0
      %v2511 = vsel %vm885, %v2476, 0
      %v2514 = vsel %vm885, %v2477, 0
      %v2517 = vsel %vm885, %v2478, 0
      %v2520 = vsel %vm885, %v2479, 0
      %v2523 = vsel %vm885, %v2480, 0
      %v2526 = vsel %vm885, %v2481, 0
      %v2529 = vsel %vm885, %v2482, 0
      %2531 = vmatprep.subr.bf16.mxu0 0
      %2532 = vmatpush1.bf16.msra.mxu0 0
      %2533 = vmatprep.subr.bf16.mxu0 0
      %2534 = vmatpush1.bf16.msra.mxu0 0
      %2535 = vmatprep.subr.bf16.mxu0 0
      %2536 = vmatpush1.bf16.msra.mxu0 0
      %2537 = vmatprep.subr.bf16.mxu0 0
      %2538 = vmatpush1.bf16.msra.mxu0 0
      %2539 = vmatprep.subr.bf16.mxu0 0
      %2540 = vmatpush1.bf16.msra.mxu0 0
      %2541 = vmatprep.subr.bf16.mxu0 0
      %2542 = vmatpush1.bf16.msra.mxu0 0
      %2543 = vmatprep.subr.bf16.mxu0 0
      %2544 = vmatpush1.bf16.msra.mxu0 %v1113
      %2545 = vmatprep.subr.bf16.mxu0 0
      %2546 = vmatpush1.bf16.msra.mxu0 %v1112
      %2547 = vmatprep.subr.bf16.mxu0 0
      %2548 = vmatpush2.bf16.msra.mxu0 0
      %2549 = vmatprep.subr.bf16.mxu0 0
      %2550 = vmatpush2.bf16.msra.mxu0 0
      %2551 = vmatprep.subr.bf16.mxu0 0
      %2552 = vmatpush2.bf16.msra.mxu0 0
      %2553 = vmatprep.subr.bf16.mxu0 0
      %2554 = vmatpush2.bf16.msra.mxu0 0
      %2555 = vmatprep.subr.bf16.mxu0 0
      %2556 = vmatpush2.bf16.msra.mxu0 0
      %2557 = vmatprep.subr.bf16.mxu0 0
      %2558 = vmatpush2.bf16.msra.mxu0 0
      %2559 = vmatprep.subr.bf16.mxu0 0
      %2560 = vmatpush2.bf16.msra.mxu0 0
      %2561 = vmatprep.subr.bf16.mxu0 0
      %2562 = vmatpush2.bf16.msra.mxu0 0
      %2563 = vmatprep.mubr.bf16.mxu0 0
      %2564 = vmatmul.mubr.bf16.gmra.mxu0 %v2484
      %v2565 = vpop.f32.mrf.mxu0
      %v2566 = vadd.f32 %v1102, %v2565
      %v2567 = vpop.f32.mrf.mxu0
      %v2568 = vpop.f32.mrf.mxu0
      %v2569 = vadd.f32 %v1102, %v2568
      %v2570 = vpop.f32.mrf.mxu0
      %2571 = vmatprep.mubr.bf16.mxu0 0
      %2572 = vmatmul.mubr.bf16.gmra.mxu0 %v2487
      %v2573 = vpop.f32.mrf.mxu0
      %v2574 = vadd.f32 %v1102, %v2573
      %v2575 = vpop.f32.mrf.mxu0
      %v2576 = vpop.f32.mrf.mxu0
      %v2577 = vadd.f32 %v1102, %v2576
      %v2578 = vpop.f32.mrf.mxu0
      %2579 = vmatprep.mubr.bf16.mxu0 0
      %2580 = vmatmul.mubr.bf16.gmra.mxu0 %v2490
      %v2581 = vpop.f32.mrf.mxu0
      %v2582 = vadd.f32 %v1102, %v2581
      %v2583 = vpop.f32.mrf.mxu0
      %v2584 = vpop.f32.mrf.mxu0
      %v2585 = vadd.f32 %v1102, %v2584
      %v2586 = vpop.f32.mrf.mxu0
      %2587 = vmatprep.mubr.bf16.mxu0 0
      %2588 = vmatmul.mubr.bf16.gmra.mxu0 %v2493
      %v2589 = vpop.f32.mrf.mxu0
      %v2590 = vadd.f32 %v1102, %v2589
      %v2591 = vpop.f32.mrf.mxu0
      %v2592 = vpop.f32.mrf.mxu0
      %v2593 = vadd.f32 %v1102, %v2592
      %v2594 = vpop.f32.mrf.mxu0
      %2595 = vmatprep.mubr.bf16.mxu0 0
      %2596 = vmatmul.mubr.bf16.gmra.mxu0 %v2496
      %v2597 = vpop.f32.mrf.mxu0
      %v2598 = vadd.f32 %v1102, %v2597
      %v2599 = vpop.f32.mrf.mxu0
      %v2600 = vpop.f32.mrf.mxu0
      %v2601 = vadd.f32 %v1102, %v2600
      %v2602 = vpop.f32.mrf.mxu0
      %2603 = vmatprep.mubr.bf16.mxu0 0
      %2604 = vmatmul.mubr.bf16.gmra.mxu0 %v2499
      %v2605 = vpop.f32.mrf.mxu0
      %v2606 = vadd.f32 %v1102, %v2605
      %v2607 = vpop.f32.mrf.mxu0
      %v2608 = vpop.f32.mrf.mxu0
      %v2609 = vadd.f32 %v1102, %v2608
      %v2610 = vpop.f32.mrf.mxu0
      %2611 = vmatprep.mubr.bf16.mxu0 0
      %2612 = vmatmul.mubr.bf16.gmra.mxu0 %v2502
      %v2613 = vpop.f32.mrf.mxu0
      %v2614 = vadd.f32 %v1102, %v2613
      %v2615 = vpop.f32.mrf.mxu0
      %v2616 = vpop.f32.mrf.mxu0
      %v2617 = vadd.f32 %v1102, %v2616
      %v2618 = vpop.f32.mrf.mxu0
      %2619 = vmatprep.mubr.bf16.mxu0 0
      %2620 = vmatmul.mubr.bf16.gmra.mxu0 %v2505
      %v2621 = vpop.f32.mrf.mxu0
      %v2622 = vadd.f32 %v1102, %v2621
      %v2623 = vpop.f32.mrf.mxu0
      %v2624 = vpop.f32.mrf.mxu0
      %v2625 = vadd.f32 %v1102, %v2624
      %v2626 = vpop.f32.mrf.mxu0
      %2627 = vmatprep.mubr.bf16.mxu0 0
      %2628 = vmatmul.mubr.bf16.gmra.mxu0 %v2508
      %v2629 = vpop.f32.mrf.mxu0
      %v2630 = vadd.f32 %v1102, %v2629
      %v2631 = vpop.f32.mrf.mxu0
      %v2632 = vpop.f32.mrf.mxu0
      %v2633 = vadd.f32 %v1102, %v2632
      %v2634 = vpop.f32.mrf.mxu0
      %2635 = vmatprep.mubr.bf16.mxu0 0
      %2636 = vmatmul.mubr.bf16.gmra.mxu0 %v2511
      %v2637 = vpop.f32.mrf.mxu0
      %v2638 = vadd.f32 %v1102, %v2637
      %v2639 = vpop.f32.mrf.mxu0
      %v2640 = vpop.f32.mrf.mxu0
      %v2641 = vadd.f32 %v1102, %v2640
      %v2642 = vpop.f32.mrf.mxu0
      %2643 = vmatprep.mubr.bf16.mxu0 0
      %2644 = vmatmul.mubr.bf16.gmra.mxu0 %v2514
      %v2645 = vpop.f32.mrf.mxu0
      %v2646 = vadd.f32 %v1102, %v2645
      %v2647 = vpop.f32.mrf.mxu0
      %v2648 = vpop.f32.mrf.mxu0
      %v2649 = vadd.f32 %v1102, %v2648
      %v2650 = vpop.f32.mrf.mxu0
      %2651 = vmatprep.mubr.bf16.mxu0 0
      %2652 = vmatmul.mubr.bf16.gmra.mxu0 %v2517
      %v2653 = vpop.f32.mrf.mxu0
      %v2654 = vadd.f32 %v1102, %v2653
      %v2655 = vpop.f32.mrf.mxu0
      %v2656 = vpop.f32.mrf.mxu0
      %v2657 = vadd.f32 %v1102, %v2656
      %v2658 = vpop.f32.mrf.mxu0
      %2659 = vmatprep.mubr.bf16.mxu0 0
      %2660 = vmatmul.mubr.bf16.gmra.mxu0 %v2520
      %v2661 = vpop.f32.mrf.mxu0
      %v2662 = vadd.f32 %v1102, %v2661
      %v2663 = vpop.f32.mrf.mxu0
      %v2664 = vpop.f32.mrf.mxu0
      %v2665 = vadd.f32 %v1102, %v2664
      %v2666 = vpop.f32.mrf.mxu0
      %2667 = vmatprep.mubr.bf16.mxu0 0
      %2668 = vmatmul.mubr.bf16.gmra.mxu0 %v2523
      %v2669 = vpop.f32.mrf.mxu0
      %v2670 = vadd.f32 %v1102, %v2669
      %v2671 = vpop.f32.mrf.mxu0
      %v2672 = vpop.f32.mrf.mxu0
      %v2673 = vadd.f32 %v1102, %v2672
      %v2674 = vpop.f32.mrf.mxu0
      %2675 = vmatprep.mubr.bf16.mxu0 0
      %2676 = vmatmul.mubr.bf16.gmra.mxu0 %v2526
      %v2677 = vpop.f32.mrf.mxu0
      %v2678 = vadd.f32 %v1102, %v2677
      %v2679 = vpop.f32.mrf.mxu0
      %v2680 = vpop.f32.mrf.mxu0
      %v2681 = vadd.f32 %v1102, %v2680
      %v2682 = vpop.f32.mrf.mxu0
      %2683 = vmatprep.mubr.bf16.mxu0 0
      %2684 = vmatmul.mubr.bf16.gmra.mxu0 %v2529
      %v2685 = vpop.f32.mrf.mxu0
      %v2686 = vadd.f32 %v1102, %v2685
      %v2687 = vpop.f32.mrf.mxu0
      %v2688 = vpop.f32.mrf.mxu0
      %v2689 = vadd.f32 %v1102, %v2688
      %v2690 = vpop.f32.mrf.mxu0
      %2691 = vdwg.mxu0
      %v2692 = vmax.f32 %v2566, 0.0
      %v2693 = vmax.f32 %v2569, 0.0
      %v2694 = vmax.f32 %v2574, 0.0
      %v2695 = vmax.f32 %v2577, 0.0
      %v2696 = vmax.f32 %v2582, 0.0
      %v2697 = vmax.f32 %v2585, 0.0
      %v2698 = vmax.f32 %v2590, 0.0
      %v2699 = vmax.f32 %v2593, 0.0
      %v2700 = vmax.f32 %v2598, 0.0
      %v2701 = vmax.f32 %v2601, 0.0
      %v2702 = vmax.f32 %v2606, 0.0
      %v2703 = vmax.f32 %v2609, 0.0
      %v2704 = vmax.f32 %v2614, 0.0
      %v2705 = vmax.f32 %v2617, 0.0
      %v2706 = vmax.f32 %v2622, 0.0
      %v2707 = vmax.f32 %v2625, 0.0
      %v2708 = vmax.f32 %v2630, 0.0
      %v2709 = vmax.f32 %v2633, 0.0
      %v2710 = vmax.f32 %v2638, 0.0
      %v2711 = vmax.f32 %v2641, 0.0
      %v2712 = vmax.f32 %v2646, 0.0
      %v2713 = vmax.f32 %v2649, 0.0
      %v2714 = vmax.f32 %v2654, 0.0
      %v2715 = vmax.f32 %v2657, 0.0
      %v2716 = vmax.f32 %v2662, 0.0
      %v2717 = vmax.f32 %v2665, 0.0
      %v2718 = vmax.f32 %v2670, 0.0
      %v2719 = vmax.f32 %v2673, 0.0
      %v2720 = vmax.f32 %v2678, 0.0
      %v2721 = vmax.f32 %v2681, 0.0
      %v2722 = vmax.f32 %v2686, 0.0
      %v2723 = vmax.f32 %v2689, 0.0
      %v2724 = vpack.c.bf16 %v2693, %v2692
      %v2725 = vpack.c.bf16 %v2695, %v2694
      %v2726 = vpack.c.bf16 %v2697, %v2696
      %v2727 = vpack.c.bf16 %v2699, %v2698
      %v2728 = vpack.c.bf16 %v2701, %v2700
      %v2729 = vpack.c.bf16 %v2703, %v2702
      %v2730 = vpack.c.bf16 %v2705, %v2704
      %v2731 = vpack.c.bf16 %v2707, %v2706
      %v2732 = vpack.c.bf16 %v2709, %v2708
      %v2733 = vpack.c.bf16 %v2711, %v2710
      %v2734 = vpack.c.bf16 %v2713, %v2712
      %v2735 = vpack.c.bf16 %v2715, %v2714
      %v2736 = vpack.c.bf16 %v2717, %v2716
      %v2737 = vpack.c.bf16 %v2719, %v2718
      %v2738 = vpack.c.bf16 %v2721, %v2720
      %v2739 = vpack.c.bf16 %v2723, %v2722
      %v2741 = vsel %vm1411, %v2724, 0
      %v2744 = vsel %vm1411, %v2725, 0
      %v2747 = vsel %vm1411, %v2726, 0
      %v2750 = vsel %vm1411, %v2727, 0
      %v2753 = vsel %vm1411, %v2728, 0
      %v2756 = vsel %vm1411, %v2729, 0
      %v2759 = vsel %vm1411, %v2730, 0
      %v2762 = vsel %vm1411, %v2731, 0
      %v2765 = vsel %vm1411, %v2732, 0
      %v2768 = vsel %vm1411, %v2733, 0
      %v2771 = vsel %vm1411, %v2734, 0
      %v2774 = vsel %vm1411, %v2735, 0
      %v2777 = vsel %vm1411, %v2736, 0
      %v2780 = vsel %vm1411, %v2737, 0
      %v2783 = vsel %vm1411, %v2738, 0
      %v2786 = vsel %vm1411, %v2739, 0
      %2788 = vmatprep.subr.bf16.mxu0 0
      %2789 = vmatpush1.bf16.msra.mxu0 0
      %2790 = vmatprep.subr.bf16.mxu0 0
      %2791 = vmatpush1.bf16.msra.mxu0 0
      %2792 = vmatprep.subr.bf16.mxu0 0
      %2793 = vmatpush1.bf16.msra.mxu0 0
      %2794 = vmatprep.subr.bf16.mxu0 0
      %2795 = vmatpush1.bf16.msra.mxu0 0
      %2796 = vmatprep.subr.bf16.mxu0 0
      %2797 = vmatpush1.bf16.msra.mxu0 %v1406
      %2798 = vmatprep.subr.bf16.mxu0 0
      %2799 = vmatpush1.bf16.msra.mxu0 %v1405
      %2800 = vmatprep.subr.bf16.mxu0 0
      %2801 = vmatpush1.bf16.msra.mxu0 %v1404
      %2802 = vmatprep.subr.bf16.mxu0 0
      %2803 = vmatpush1.bf16.msra.mxu0 %v1403
      %2804 = vmatprep.subr.bf16.mxu0 0
      %2805 = vmatpush2.bf16.msra.mxu0 0
      %2806 = vmatprep.subr.bf16.mxu0 0
      %2807 = vmatpush2.bf16.msra.mxu0 0
      %2808 = vmatprep.subr.bf16.mxu0 0
      %2809 = vmatpush2.bf16.msra.mxu0 0
      %2810 = vmatprep.subr.bf16.mxu0 0
      %2811 = vmatpush2.bf16.msra.mxu0 0
      %2812 = vmatprep.subr.bf16.mxu0 0
      %2813 = vmatpush2.bf16.msra.mxu0 0
      %2814 = vmatprep.subr.bf16.mxu0 0
      %2815 = vmatpush2.bf16.msra.mxu0 0
      %2816 = vmatprep.subr.bf16.mxu0 0
      %2817 = vmatpush2.bf16.msra.mxu0 0
      %2818 = vmatprep.subr.bf16.mxu0 0
      %2819 = vmatpush2.bf16.msra.mxu0 0
      %2820 = vmatprep.mubr.bf16.mxu0 0
      %2821 = vmatmul.mubr.bf16.gmra.mxu0 %v2741
      %v2822 = vpop.f32.mrf.mxu0
      %v2823 = vadd.f32 %v1385, %v2822
      %v2824 = vpop.f32.mrf.mxu0
      %v2825 = vpop.f32.mrf.mxu0
      %v2826 = vadd.f32 %v1385, %v2825
      %v2827 = vpop.f32.mrf.mxu0
      %2828 = vmatprep.mubr.bf16.mxu0 0
      %2829 = vmatmul.mubr.bf16.gmra.mxu0 %v2744
      %v2830 = vpop.f32.mrf.mxu0
      %v2831 = vadd.f32 %v1385, %v2830
      %v2832 = vpop.f32.mrf.mxu0
      %v2833 = vpop.f32.mrf.mxu0
      %v2834 = vadd.f32 %v1385, %v2833
      %v2835 = vpop.f32.mrf.mxu0
      %2836 = vmatprep.mubr.bf16.mxu0 0
      %2837 = vmatmul.mubr.bf16.gmra.mxu0 %v2747
      %v2838 = vpop.f32.mrf.mxu0
      %v2839 = vadd.f32 %v1385, %v2838
      %v2840 = vpop.f32.mrf.mxu0
      %v2841 = vpop.f32.mrf.mxu0
      %v2842 = vadd.f32 %v1385, %v2841
      %v2843 = vpop.f32.mrf.mxu0
      %2844 = vmatprep.mubr.bf16.mxu0 0
      %2845 = vmatmul.mubr.bf16.gmra.mxu0 %v2750
      %v2846 = vpop.f32.mrf.mxu0
      %v2847 = vadd.f32 %v1385, %v2846
      %v2848 = vpop.f32.mrf.mxu0
      %v2849 = vpop.f32.mrf.mxu0
      %v2850 = vadd.f32 %v1385, %v2849
      %v2851 = vpop.f32.mrf.mxu0
      %2852 = vmatprep.mubr.bf16.mxu0 0
      %2853 = vmatmul.mubr.bf16.gmra.mxu0 %v2753
      %v2854 = vpop.f32.mrf.mxu0
      %v2855 = vadd.f32 %v1385, %v2854
      %v2856 = vpop.f32.mrf.mxu0
      %v2857 = vpop.f32.mrf.mxu0
      %v2858 = vadd.f32 %v1385, %v2857
      %v2859 = vpop.f32.mrf.mxu0
      %2860 = vmatprep.mubr.bf16.mxu0 0
      %2861 = vmatmul.mubr.bf16.gmra.mxu0 %v2756
      %v2862 = vpop.f32.mrf.mxu0
      %v2863 = vadd.f32 %v1385, %v2862
      %v2864 = vpop.f32.mrf.mxu0
      %v2865 = vpop.f32.mrf.mxu0
      %v2866 = vadd.f32 %v1385, %v2865
      %v2867 = vpop.f32.mrf.mxu0
      %2868 = vmatprep.mubr.bf16.mxu0 0
      %2869 = vmatmul.mubr.bf16.gmra.mxu0 %v2759
      %v2870 = vpop.f32.mrf.mxu0
      %v2871 = vadd.f32 %v1385, %v2870
      %v2872 = vpop.f32.mrf.mxu0
      %v2873 = vpop.f32.mrf.mxu0
      %v2874 = vadd.f32 %v1385, %v2873
      %v2875 = vpop.f32.mrf.mxu0
      %2876 = vmatprep.mubr.bf16.mxu0 0
      %2877 = vmatmul.mubr.bf16.gmra.mxu0 %v2762
      %v2878 = vpop.f32.mrf.mxu0
      %v2879 = vadd.f32 %v1385, %v2878
      %v2880 = vpop.f32.mrf.mxu0
      %v2881 = vpop.f32.mrf.mxu0
      %v2882 = vadd.f32 %v1385, %v2881
      %v2883 = vpop.f32.mrf.mxu0
      %2884 = vmatprep.mubr.bf16.mxu0 0
      %2885 = vmatmul.mubr.bf16.gmra.mxu0 %v2765
      %v2886 = vpop.f32.mrf.mxu0
      %v2887 = vadd.f32 %v1385, %v2886
      %v2888 = vpop.f32.mrf.mxu0
      %v2889 = vpop.f32.mrf.mxu0
      %v2890 = vadd.f32 %v1385, %v2889
      %v2891 = vpop.f32.mrf.mxu0
      %2892 = vmatprep.mubr.bf16.mxu0 0
      %2893 = vmatmul.mubr.bf16.gmra.mxu0 %v2768
      %v2894 = vpop.f32.mrf.mxu0
      %v2895 = vadd.f32 %v1385, %v2894
      %v2896 = vpop.f32.mrf.mxu0
      %v2897 = vpop.f32.mrf.mxu0
      %v2898 = vadd.f32 %v1385, %v2897
      %v2899 = vpop.f32.mrf.mxu0
      %2900 = vmatprep.mubr.bf16.mxu0 0
      %2901 = vmatmul.mubr.bf16.gmra.mxu0 %v2771
      %v2902 = vpop.f32.mrf.mxu0
      %v2903 = vadd.f32 %v1385, %v2902
      %v2904 = vpop.f32.mrf.mxu0
      %v2905 = vpop.f32.mrf.mxu0
      %v2906 = vadd.f32 %v1385, %v2905
      %v2907 = vpop.f32.mrf.mxu0
      %2908 = vmatprep.mubr.bf16.mxu0 0
      %2909 = vmatmul.mubr.bf16.gmra.mxu0 %v2774
      %v2910 = vpop.f32.mrf.mxu0
      %v2911 = vadd.f32 %v1385, %v2910
      %v2912 = vpop.f32.mrf.mxu0
      %v2913 = vpop.f32.mrf.mxu0
      %v2914 = vadd.f32 %v1385, %v2913
      %v2915 = vpop.f32.mrf.mxu0
      %2916 = vmatprep.mubr.bf16.mxu0 0
      %2917 = vmatmul.mubr.bf16.gmra.mxu0 %v2777
      %v2918 = vpop.f32.mrf.mxu0
      %v2919 = vadd.f32 %v1385, %v2918
      %v2920 = vpop.f32.mrf.mxu0
      %v2921 = vpop.f32.mrf.mxu0
      %v2922 = vadd.f32 %v1385, %v2921
      %v2923 = vpop.f32.mrf.mxu0
      %2924 = vmatprep.mubr.bf16.mxu0 0
      %2925 = vmatmul.mubr.bf16.gmra.mxu0 %v2780
      %v2926 = vpop.f32.mrf.mxu0
      %v2927 = vadd.f32 %v1385, %v2926
      %v2928 = vpop.f32.mrf.mxu0
      %v2929 = vpop.f32.mrf.mxu0
      %v2930 = vadd.f32 %v1385, %v2929
      %v2931 = vpop.f32.mrf.mxu0
      %2932 = vmatprep.mubr.bf16.mxu0 0
      %2933 = vmatmul.mubr.bf16.gmra.mxu0 %v2783
      %v2934 = vpop.f32.mrf.mxu0
      %v2935 = vadd.f32 %v1385, %v2934
      %v2936 = vpop.f32.mrf.mxu0
      %v2937 = vpop.f32.mrf.mxu0
      %v2938 = vadd.f32 %v1385, %v2937
      %v2939 = vpop.f32.mrf.mxu0
      %2940 = vmatprep.mubr.bf16.mxu0 0
      %2941 = vmatmul.mubr.bf16.gmra.mxu0 %v2786
      %v2942 = vpop.f32.mrf.mxu0
      %v2943 = vadd.f32 %v1385, %v2942
      %v2944 = vpop.f32.mrf.mxu0
      %v2945 = vpop.f32.mrf.mxu0
      %v2946 = vadd.f32 %v1385, %v2945
      %v2947 = vpop.f32.mrf.mxu0
      %2948 = vdwg.mxu0
      %v2949 = vmax.f32 %v2823, 0.0
      %v2950 = vmax.f32 %v2826, 0.0
      %v2951 = vmax.f32 %v2831, 0.0
      %v2952 = vmax.f32 %v2834, 0.0
      %v2953 = vmax.f32 %v2839, 0.0
      %v2954 = vmax.f32 %v2842, 0.0
      %v2955 = vmax.f32 %v2847, 0.0
      %v2956 = vmax.f32 %v2850, 0.0
      %v2957 = vmax.f32 %v2855, 0.0
      %v2958 = vmax.f32 %v2858, 0.0
      %v2959 = vmax.f32 %v2863, 0.0
      %v2960 = vmax.f32 %v2866, 0.0
      %v2961 = vmax.f32 %v2871, 0.0
      %v2962 = vmax.f32 %v2874, 0.0
      %v2963 = vmax.f32 %v2879, 0.0
      %v2964 = vmax.f32 %v2882, 0.0
      %v2965 = vmax.f32 %v2887, 0.0
      %v2966 = vmax.f32 %v2890, 0.0
      %v2967 = vmax.f32 %v2895, 0.0
      %v2968 = vmax.f32 %v2898, 0.0
      %v2969 = vmax.f32 %v2903, 0.0
      %v2970 = vmax.f32 %v2906, 0.0
      %v2971 = vmax.f32 %v2911, 0.0
      %v2972 = vmax.f32 %v2914, 0.0
      %v2973 = vmax.f32 %v2919, 0.0
      %v2974 = vmax.f32 %v2922, 0.0
      %v2975 = vmax.f32 %v2927, 0.0
      %v2976 = vmax.f32 %v2930, 0.0
      %v2977 = vmax.f32 %v2935, 0.0
      %v2978 = vmax.f32 %v2938, 0.0
      %v2979 = vmax.f32 %v2943, 0.0
      %v2980 = vmax.f32 %v2946, 0.0
      %v2981 = vmul.f32 %v2949, %v1657
      %v2982 = vmul.f32 %v2950, %v1657
      %v2983 = vmul.f32 %v2951, %v1657
      %v2984 = vmul.f32 %v2952, %v1657
      %v2985 = vmul.f32 %v2953, %v1657
      %v2986 = vmul.f32 %v2954, %v1657
      %v2987 = vmul.f32 %v2955, %v1657
      %v2988 = vmul.f32 %v2956, %v1657
      %v2989 = vmul.f32 %v2957, %v1657
      %v2990 = vmul.f32 %v2958, %v1657
      %v2991 = vmul.f32 %v2959, %v1657
      %v2992 = vmul.f32 %v2960, %v1657
      %v2993 = vmul.f32 %v2961, %v1657
      %v2994 = vmul.f32 %v2962, %v1657
      %v2995 = vmul.f32 %v2963, %v1657
      %v2996 = vmul.f32 %v2964, %v1657
      %v2997 = vmul.f32 %v2965, %v1657
      %v2998 = vmul.f32 %v2966, %v1657
      %v2999 = vmul.f32 %v2967, %v1657
      %v3000 = vmul.f32 %v2968, %v1657
      %v3001 = vmul.f32 %v2969, %v1657
      %v3002 = vmul.f32 %v2970, %v1657
      %v3003 = vmul.f32 %v2971, %v1657
      %v3004 = vmul.f32 %v2972, %v1657
      %v3005 = vmul.f32 %v2973, %v1657
      %v3006 = vmul.f32 %v2974, %v1657
      %v3007 = vmul.f32 %v2975, %v1657
      %v3008 = vmul.f32 %v2976, %v1657
      %v3009 = vmul.f32 %v2977, %v1657
      %v3010 = vmul.f32 %v2978, %v1657
      %v3011 = vmul.f32 %v2979, %v1657
      %v3012 = vmul.f32 %v2980, %v1657
      %v3013 = vsel %vm1411, %v2981, 0.0
      %3014 = vadd.xlane.f32.xlu0 %v3013
      %v3015 = vpop.xlane.xlu0 %3014
      %v3016 = vsel %vm1411, %v2982, 0.0
      %3017 = vadd.xlane.f32.xlu0 %v3016
      %v3018 = vpop.xlane.xlu0 %3017
      %v3019 = vsel %vm1411, %v2983, 0.0
      %3020 = vadd.xlane.f32.xlu0 %v3019
      %v3021 = vpop.xlane.xlu0 %3020
      %v3022 = vsel %vm1411, %v2984, 0.0
      %3023 = vadd.xlane.f32.xlu0 %v3022
      %v3024 = vpop.xlane.xlu0 %3023
      %v3025 = vsel %vm1411, %v2985, 0.0
      %3026 = vadd.xlane.f32.xlu0 %v3025
      %v3027 = vpop.xlane.xlu0 %3026
      %v3028 = vsel %vm1411, %v2986, 0.0
      %3029 = vadd.xlane.f32.xlu0 %v3028
      %v3030 = vpop.xlane.xlu0 %3029
      %v3031 = vsel %vm1411, %v2987, 0.0
      %3032 = vadd.xlane.f32.xlu0 %v3031
      %v3033 = vpop.xlane.xlu0 %3032
      %v3034 = vsel %vm1411, %v2988, 0.0
      %3035 = vadd.xlane.f32.xlu0 %v3034
      %v3036 = vpop.xlane.xlu0 %3035
      %v3037 = vsel %vm1411, %v2989, 0.0
      %3038 = vadd.xlane.f32.xlu0 %v3037
      %v3039 = vpop.xlane.xlu0 %3038
      %v3040 = vsel %vm1411, %v2990, 0.0
      %3041 = vadd.xlane.f32.xlu0 %v3040
      %v3042 = vpop.xlane.xlu0 %3041
      %v3043 = vsel %vm1411, %v2991, 0.0
      %3044 = vadd.xlane.f32.xlu0 %v3043
      %v3045 = vpop.xlane.xlu0 %3044
      %v3046 = vsel %vm1411, %v2992, 0.0
      %3047 = vadd.xlane.f32.xlu0 %v3046
      %v3048 = vpop.xlane.xlu0 %3047
      %v3049 = vsel %vm1411, %v2993, 0.0
      %3050 = vadd.xlane.f32.xlu0 %v3049
      %v3051 = vpop.xlane.xlu0 %3050
      %v3052 = vsel %vm1411, %v2994, 0.0
      %3053 = vadd.xlane.f32.xlu0 %v3052
      %v3054 = vpop.xlane.xlu0 %3053
      %v3055 = vsel %vm1411, %v2995, 0.0
      %3056 = vadd.xlane.f32.xlu0 %v3055
      %v3057 = vpop.xlane.xlu0 %3056
      %v3058 = vsel %vm1411, %v2996, 0.0
      %3059 = vadd.xlane.f32.xlu0 %v3058
      %v3060 = vpop.xlane.xlu0 %3059
      %v3061 = vsel %vm1411, %v2997, 0.0
      %3062 = vadd.xlane.f32.xlu0 %v3061
      %v3063 = vpop.xlane.xlu0 %3062
      %v3064 = vsel %vm1411, %v2998, 0.0
      %3065 = vadd.xlane.f32.xlu0 %v3064
      %v3066 = vpop.xlane.xlu0 %3065
      %v3067 = vsel %vm1411, %v2999, 0.0
      %3068 = vadd.xlane.f32.xlu0 %v3067
      %v3069 = vpop.xlane.xlu0 %3068
      %v3070 = vsel %vm1411, %v3000, 0.0
      %3071 = vadd.xlane.f32.xlu0 %v3070
      %v3072 = vpop.xlane.xlu0 %3071
      %v3073 = vsel %vm1411, %v3001, 0.0
      %3074 = vadd.xlane.f32.xlu0 %v3073
      %v3075 = vpop.xlane.xlu0 %3074
      %v3076 = vsel %vm1411, %v3002, 0.0
      %3077 = vadd.xlane.f32.xlu0 %v3076
      %v3078 = vpop.xlane.xlu0 %3077
      %v3079 = vsel %vm1411, %v3003, 0.0
      %3080 = vadd.xlane.f32.xlu0 %v3079
      %v3081 = vpop.xlane.xlu0 %3080
      %v3082 = vsel %vm1411, %v3004, 0.0
      %3083 = vadd.xlane.f32.xlu0 %v3082
      %v3084 = vpop.xlane.xlu0 %3083
      %v3085 = vsel %vm1411, %v3005, 0.0
      %3086 = vadd.xlane.f32.xlu0 %v3085
      %v3087 = vpop.xlane.xlu0 %3086
      %v3088 = vsel %vm1411, %v3006, 0.0
      %3089 = vadd.xlane.f32.xlu0 %v3088
      %v3090 = vpop.xlane.xlu0 %3089
      %v3091 = vsel %vm1411, %v3007, 0.0
      %3092 = vadd.xlane.f32.xlu0 %v3091
      %v3093 = vpop.xlane.xlu0 %3092
      %v3094 = vsel %vm1411, %v3008, 0.0
      %3095 = vadd.xlane.f32.xlu0 %v3094
      %v3096 = vpop.xlane.xlu0 %3095
      %v3097 = vsel %vm1411, %v3009, 0.0
      %3098 = vadd.xlane.f32.xlu0 %v3097
      %v3099 = vpop.xlane.xlu0 %3098
      %v3100 = vsel %vm1411, %v3010, 0.0
      %3101 = vadd.xlane.f32.xlu0 %v3100
      %v3102 = vpop.xlane.xlu0 %3101
      %v3103 = vsel %vm1411, %v3011, 0.0
      %3104 = vadd.xlane.f32.xlu0 %v3103
      %v3105 = vpop.xlane.xlu0 %3104
      %v3106 = vsel %vm1411, %v3012, 0.0
      %3107 = vadd.xlane.f32.xlu0 %v3106
      %v3108 = vpop.xlane.xlu0 %3107
      %v3109 = vadd.f32 %v3015, %v1791
      %v3110 = vadd.f32 %v3018, %v1791
      %v3111 = vadd.f32 %v3021, %v1791
      %v3112 = vadd.f32 %v3024, %v1791
      %v3113 = vadd.f32 %v3027, %v1791
      %v3114 = vadd.f32 %v3030, %v1791
      %v3115 = vadd.f32 %v3033, %v1791
      %v3116 = vadd.f32 %v3036, %v1791
      %v3117 = vadd.f32 %v3039, %v1791
      %v3118 = vadd.f32 %v3042, %v1791
      %v3119 = vadd.f32 %v3045, %v1791
      %v3120 = vadd.f32 %v3048, %v1791
      %v3121 = vadd.f32 %v3051, %v1791
      %v3122 = vadd.f32 %v3054, %v1791
      %v3123 = vadd.f32 %v3057, %v1791
      %v3124 = vadd.f32 %v3060, %v1791
      %v3125 = vadd.f32 %v3063, %v1791
      %v3126 = vadd.f32 %v3066, %v1791
      %v3127 = vadd.f32 %v3069, %v1791
      %v3128 = vadd.f32 %v3072, %v1791
      %v3129 = vadd.f32 %v3075, %v1791
      %v3130 = vadd.f32 %v3078, %v1791
      %v3131 = vadd.f32 %v3081, %v1791
      %v3132 = vadd.f32 %v3084, %v1791
      %v3133 = vadd.f32 %v3087, %v1791
      %v3134 = vadd.f32 %v3090, %v1791
      %v3135 = vadd.f32 %v3093, %v1791
      %v3136 = vadd.f32 %v3096, %v1791
      %v3137 = vadd.f32 %v3099, %v1791
      %v3138 = vadd.f32 %v3102, %v1791
      %v3139 = vadd.f32 %v3105, %v1791
      %v3140 = vadd.f32 %v3108, %v1791
      %v3141 = vadd.f32 %v1793, %v3109
      %v3142 = vadd.f32 %v1794, %v3110
      %v3143 = vadd.f32 %v1795, %v3111
      %v3144 = vadd.f32 %v1796, %v3112
      %v3145 = vadd.f32 %v1797, %v3113
      %v3146 = vadd.f32 %v1798, %v3114
      %v3147 = vadd.f32 %v1799, %v3115
      %v3148 = vadd.f32 %v1800, %v3116
      %v3149 = vadd.f32 %v1801, %v3117
      %v3150 = vadd.f32 %v1802, %v3118
      %v3151 = vadd.f32 %v1803, %v3119
      %v3152 = vadd.f32 %v1804, %v3120
      %v3153 = vadd.f32 %v1805, %v3121
      %v3154 = vadd.f32 %v1806, %v3122
      %v3155 = vadd.f32 %v1807, %v3123
      %v3156 = vadd.f32 %v1808, %v3124
      %v3157 = vadd.f32 %v1809, %v3125
      %v3158 = vadd.f32 %v1810, %v3126
      %v3159 = vadd.f32 %v1811, %v3127
      %v3160 = vadd.f32 %v1812, %v3128
      %v3161 = vadd.f32 %v1813, %v3129
      %v3162 = vadd.f32 %v1814, %v3130
      %v3163 = vadd.f32 %v1815, %v3131
      %v3164 = vadd.f32 %v1816, %v3132
      %v3165 = vadd.f32 %v1817, %v3133
      %v3166 = vadd.f32 %v1818, %v3134
      %v3167 = vadd.f32 %v1819, %v3135
      %v3168 = vadd.f32 %v1820, %v3136
      %v3169 = vadd.f32 %v1821, %v3137
      %v3170 = vadd.f32 %v1822, %v3138
      %v3171 = vadd.f32 %v1823, %v3139
      %v3172 = vadd.f32 %v1824, %v3140
      %s3173 = scalar_lea.vmem %s2, 16
      %v3174 = vld [vmem:[%s3173] sm:$0xf]
      %v3175 = vld [vmem:[%s3173 + $0x4] sm:$0xf]
      %v3176 = vld [vmem:[%s3173 + $0x8] sm:$0xf]
      %v3177 = vld [vmem:[%s3173 + $0xc] sm:$0xf]
      %v3182 = vunpack.c.l.b16 %v3174
      %v3183 = vunpack.c.l.b16 %v3175
      %v3184 = vunpack.c.l.b16 %v3176
      %v3185 = vunpack.c.l.b16 %v3177
      %v3186 = vpack.c.b16 %v3183, %v3182
      %v3187 = vpack.c.b16 %v3185, %v3184
      %3190 = vmatprep.subr.bf16.mxu0 0
      %3191 = vmatpush1.bf16.msra.mxu0 0
      %3192 = vmatprep.subr.bf16.mxu0 0
      %3193 = vmatpush1.bf16.msra.mxu0 0
      %3194 = vmatprep.subr.bf16.mxu0 0
      %3195 = vmatpush1.bf16.msra.mxu0 0
      %3196 = vmatprep.subr.bf16.mxu0 0
      %3197 = vmatpush1.bf16.msra.mxu0 0
      %3198 = vmatprep.subr.bf16.mxu0 0
      %3199 = vmatpush1.bf16.msra.mxu0 0
      %3200 = vmatprep.subr.bf16.mxu0 0
      %3201 = vmatpush1.bf16.msra.mxu0 0
      %3202 = vmatprep.subr.bf16.mxu0 0
      %3203 = vmatpush1.bf16.msra.mxu0 %v3187
      %3204 = vmatprep.subr.bf16.mxu0 0
      %3205 = vmatpush1.bf16.msra.mxu0 %v3186
      %3206 = vmatprep.subr.bf16.mxu0 0
      %3207 = vmatpush2.bf16.msra.mxu0 0
      %3208 = vmatprep.subr.bf16.mxu0 0
      %3209 = vmatpush2.bf16.msra.mxu0 0
      %3210 = vmatprep.subr.bf16.mxu0 0
      %3211 = vmatpush2.bf16.msra.mxu0 0
      %3212 = vmatprep.subr.bf16.mxu0 0
      %3213 = vmatpush2.bf16.msra.mxu0 0
      %3214 = vmatprep.subr.bf16.mxu0 0
      %3215 = vmatpush2.bf16.msra.mxu0 0
      %3216 = vmatprep.subr.bf16.mxu0 0
      %3217 = vmatpush2.bf16.msra.mxu0 0
      %3218 = vmatprep.subr.bf16.mxu0 0
      %3219 = vmatpush2.bf16.msra.mxu0 0
      %3220 = vmatprep.subr.bf16.mxu0 0
      %3221 = vmatpush2.bf16.msra.mxu0 0
      %3222 = vmatprep.mubr.bf16.mxu0 0
      %3223 = vmatmul.mubr.bf16.gmra.mxu0 %v2484
      %v3224 = vpop.f32.mrf.mxu0
      %v3225 = vadd.f32 0.0, %v3224
      %v3226 = vpop.f32.mrf.mxu0
      %v3227 = vpop.f32.mrf.mxu0
      %v3228 = vadd.f32 0.0, %v3227
      %v3229 = vpop.f32.mrf.mxu0
      %3230 = vmatprep.mubr.bf16.mxu0 0
      %3231 = vmatmul.mubr.bf16.gmra.mxu0 %v2487
      %v3232 = vpop.f32.mrf.mxu0
      %v3233 = vadd.f32 0.0, %v3232
      %v3234 = vpop.f32.mrf.mxu0
      %v3235 = vpop.f32.mrf.mxu0
      %v3236 = vadd.f32 0.0, %v3235
      %v3237 = vpop.f32.mrf.mxu0
      %3238 = vmatprep.mubr.bf16.mxu0 0
      %3239 = vmatmul.mubr.bf16.gmra.mxu0 %v2490
      %v3240 = vpop.f32.mrf.mxu0
      %v3241 = vadd.f32 0.0, %v3240
      %v3242 = vpop.f32.mrf.mxu0
      %v3243 = vpop.f32.mrf.mxu0
      %v3244 = vadd.f32 0.0, %v3243
      %v3245 = vpop.f32.mrf.mxu0
      %3246 = vmatprep.mubr.bf16.mxu0 0
      %3247 = vmatmul.mubr.bf16.gmra.mxu0 %v2493
      %v3248 = vpop.f32.mrf.mxu0
      %v3249 = vadd.f32 0.0, %v3248
      %v3250 = vpop.f32.mrf.mxu0
      %v3251 = vpop.f32.mrf.mxu0
      %v3252 = vadd.f32 0.0, %v3251
      %v3253 = vpop.f32.mrf.mxu0
      %3254 = vmatprep.mubr.bf16.mxu0 0
      %3255 = vmatmul.mubr.bf16.gmra.mxu0 %v2496
      %v3256 = vpop.f32.mrf.mxu0
      %v3257 = vadd.f32 0.0, %v3256
      %v3258 = vpop.f32.mrf.mxu0
      %v3259 = vpop.f32.mrf.mxu0
      %v3260 = vadd.f32 0.0, %v3259
      %v3261 = vpop.f32.mrf.mxu0
      %3262 = vmatprep.mubr.bf16.mxu0 0
      %3263 = vmatmul.mubr.bf16.gmra.mxu0 %v2499
      %v3264 = vpop.f32.mrf.mxu0
      %v3265 = vadd.f32 0.0, %v3264
      %v3266 = vpop.f32.mrf.mxu0
      %v3267 = vpop.f32.mrf.mxu0
      %v3268 = vadd.f32 0.0, %v3267
      %v3269 = vpop.f32.mrf.mxu0
      %3270 = vmatprep.mubr.bf16.mxu0 0
      %3271 = vmatmul.mubr.bf16.gmra.mxu0 %v2502
      %v3272 = vpop.f32.mrf.mxu0
      %v3273 = vadd.f32 0.0, %v3272
      %v3274 = vpop.f32.mrf.mxu0
      %v3275 = vpop.f32.mrf.mxu0
      %v3276 = vadd.f32 0.0, %v3275
      %v3277 = vpop.f32.mrf.mxu0
      %3278 = vmatprep.mubr.bf16.mxu0 0
      %3279 = vmatmul.mubr.bf16.gmra.mxu0 %v2505
      %v3280 = vpop.f32.mrf.mxu0
      %v3281 = vadd.f32 0.0, %v3280
      %v3282 = vpop.f32.mrf.mxu0
      %v3283 = vpop.f32.mrf.mxu0
      %v3284 = vadd.f32 0.0, %v3283
      %v3285 = vpop.f32.mrf.mxu0
      %3286 = vmatprep.mubr.bf16.mxu0 0
      %3287 = vmatmul.mubr.bf16.gmra.mxu0 %v2508
      %v3288 = vpop.f32.mrf.mxu0
      %v3289 = vadd.f32 0.0, %v3288
      %v3290 = vpop.f32.mrf.mxu0
      %v3291 = vpop.f32.mrf.mxu0
      %v3292 = vadd.f32 0.0, %v3291
      %v3293 = vpop.f32.mrf.mxu0
      %3294 = vmatprep.mubr.bf16.mxu0 0
      %3295 = vmatmul.mubr.bf16.gmra.mxu0 %v2511
      %v3296 = vpop.f32.mrf.mxu0
      %v3297 = vadd.f32 0.0, %v3296
      %v3298 = vpop.f32.mrf.mxu0
      %v3299 = vpop.f32.mrf.mxu0
      %v3300 = vadd.f32 0.0, %v3299
      %v3301 = vpop.f32.mrf.mxu0
      %3302 = vmatprep.mubr.bf16.mxu0 0
      %3303 = vmatmul.mubr.bf16.gmra.mxu0 %v2514
      %v3304 = vpop.f32.mrf.mxu0
      %v3305 = vadd.f32 0.0, %v3304
      %v3306 = vpop.f32.mrf.mxu0
      %v3307 = vpop.f32.mrf.mxu0
      %v3308 = vadd.f32 0.0, %v3307
      %v3309 = vpop.f32.mrf.mxu0
      %3310 = vmatprep.mubr.bf16.mxu0 0
      %3311 = vmatmul.mubr.bf16.gmra.mxu0 %v2517
      %v3312 = vpop.f32.mrf.mxu0
      %v3313 = vadd.f32 0.0, %v3312
      %v3314 = vpop.f32.mrf.mxu0
      %v3315 = vpop.f32.mrf.mxu0
      %v3316 = vadd.f32 0.0, %v3315
      %v3317 = vpop.f32.mrf.mxu0
      %3318 = vmatprep.mubr.bf16.mxu0 0
      %3319 = vmatmul.mubr.bf16.gmra.mxu0 %v2520
      %v3320 = vpop.f32.mrf.mxu0
      %v3321 = vadd.f32 0.0, %v3320
      %v3322 = vpop.f32.mrf.mxu0
      %v3323 = vpop.f32.mrf.mxu0
      %v3324 = vadd.f32 0.0, %v3323
      %v3325 = vpop.f32.mrf.mxu0
      %3326 = vmatprep.mubr.bf16.mxu0 0
      %3327 = vmatmul.mubr.bf16.gmra.mxu0 %v2523
      %v3328 = vpop.f32.mrf.mxu0
      %v3329 = vadd.f32 0.0, %v3328
      %v3330 = vpop.f32.mrf.mxu0
      %v3331 = vpop.f32.mrf.mxu0
      %v3332 = vadd.f32 0.0, %v3331
      %v3333 = vpop.f32.mrf.mxu0
      %3334 = vmatprep.mubr.bf16.mxu0 0
      %3335 = vmatmul.mubr.bf16.gmra.mxu0 %v2526
      %v3336 = vpop.f32.mrf.mxu0
      %v3337 = vadd.f32 0.0, %v3336
      %v3338 = vpop.f32.mrf.mxu0
      %v3339 = vpop.f32.mrf.mxu0
      %v3340 = vadd.f32 0.0, %v3339
      %v3341 = vpop.f32.mrf.mxu0
      %3342 = vmatprep.mubr.bf16.mxu0 0
      %3343 = vmatmul.mubr.bf16.gmra.mxu0 %v2529
      %v3344 = vpop.f32.mrf.mxu0
      %v3345 = vadd.f32 0.0, %v3344
      %v3346 = vpop.f32.mrf.mxu0
      %v3347 = vpop.f32.mrf.mxu0
      %v3348 = vadd.f32 0.0, %v3347
      %v3349 = vpop.f32.mrf.mxu0
      %3350 = vdwg.mxu0
      %v3351 = vpack.c.bf16 %v3228, %v3225
      %v3352 = vpack.c.bf16 %v3236, %v3233
      %v3353 = vpack.c.bf16 %v3244, %v3241
      %v3354 = vpack.c.bf16 %v3252, %v3249
      %v3355 = vpack.c.bf16 %v3260, %v3257
      %v3356 = vpack.c.bf16 %v3268, %v3265
      %v3357 = vpack.c.bf16 %v3276, %v3273
      %v3358 = vpack.c.bf16 %v3284, %v3281
      %v3359 = vpack.c.bf16 %v3292, %v3289
      %v3360 = vpack.c.bf16 %v3300, %v3297
      %v3361 = vpack.c.bf16 %v3308, %v3305
      %v3362 = vpack.c.bf16 %v3316, %v3313
      %v3363 = vpack.c.bf16 %v3324, %v3321
      %v3364 = vpack.c.bf16 %v3332, %v3329
      %v3365 = vpack.c.bf16 %v3340, %v3337
      %v3366 = vpack.c.bf16 %v3348, %v3345
      %3367 = vmatprep.subr.bf16.mxu0 0
      %3368 = vmatpush1.bf16.msra.mxu0 %v3358
      %3369 = vmatprep.subr.bf16.mxu0 0
      %3370 = vmatpush1.bf16.msra.mxu0 %v3357
      %3371 = vmatprep.subr.bf16.mxu0 0
      %3372 = vmatpush1.bf16.msra.mxu0 %v3356
      %3373 = vmatprep.subr.bf16.mxu0 0
      %3374 = vmatpush1.bf16.msra.mxu0 %v3355
      %3375 = vmatprep.subr.bf16.mxu0 0
      %3376 = vmatpush1.bf16.msra.mxu0 %v3354
      %3377 = vmatprep.subr.bf16.mxu0 0
      %3378 = vmatpush1.bf16.msra.mxu0 %v3353
      %3379 = vmatprep.subr.bf16.mxu0 0
      %3380 = vmatpush1.bf16.msra.mxu0 %v3352
      %3381 = vmatprep.subr.bf16.mxu0 0
      %3382 = vmatpush1.bf16.msra.mxu0 %v3351
      %3383 = vmatprep.subr.bf16.mxu0 0
      %3384 = vmatpush2.bf16.msra.mxu0 %v3366
      %3385 = vmatprep.subr.bf16.mxu0 0
      %3386 = vmatpush2.bf16.msra.mxu0 %v3365
      %3387 = vmatprep.subr.bf16.mxu0 0
      %3388 = vmatpush2.bf16.msra.mxu0 %v3364
      %3389 = vmatprep.subr.bf16.mxu0 0
      %3390 = vmatpush2.bf16.msra.mxu0 %v3363
      %3391 = vmatprep.subr.bf16.mxu0 0
      %3392 = vmatpush2.bf16.msra.mxu0 %v3362
      %3393 = vmatprep.subr.bf16.mxu0 0
      %3394 = vmatpush2.bf16.msra.mxu0 %v3361
      %3395 = vmatprep.subr.bf16.mxu0 0
      %3396 = vmatpush2.bf16.msra.mxu0 %v3360
      %3397 = vmatprep.subr.bf16.mxu0 0
      %3398 = vmatpush2.bf16.msra.mxu0 %v3359
      %3399 = vmatprep.mubr.bf16.mxu0 %v501
      %3400 = vmatmul.mubr.bf16.gmra.mxu0 %v500
      %v3401 = vpop.f32.mrf.mxu0
      %v3402 = vadd.f32 0.0, %v3401
      %v3403 = vpop.f32.mrf.mxu0
      %v3404 = vpop.f32.mrf.mxu0
      %v3405 = vadd.f32 0.0, %v3404
      %v3406 = vpop.f32.mrf.mxu0
      %3407 = vmatprep.mubr.bf16.mxu0 %v503
      %3408 = vmatmul.mubr.bf16.gmra.mxu0 %v502
      %v3409 = vpop.f32.mrf.mxu0
      %v3410 = vadd.f32 0.0, %v3409
      %v3411 = vpop.f32.mrf.mxu0
      %v3412 = vpop.f32.mrf.mxu0
      %v3413 = vadd.f32 0.0, %v3412
      %v3414 = vpop.f32.mrf.mxu0
      %3415 = vmatprep.mubr.bf16.mxu0 %v505
      %3416 = vmatmul.mubr.bf16.gmra.mxu0 %v504
      %v3417 = vpop.f32.mrf.mxu0
      %v3418 = vadd.f32 0.0, %v3417
      %v3419 = vpop.f32.mrf.mxu0
      %v3420 = vpop.f32.mrf.mxu0
      %v3421 = vadd.f32 0.0, %v3420
      %v3422 = vpop.f32.mrf.mxu0
      %3423 = vmatprep.mubr.bf16.mxu0 %v507
      %3424 = vmatmul.mubr.bf16.gmra.mxu0 %v506
      %v3425 = vpop.f32.mrf.mxu0
      %v3426 = vadd.f32 0.0, %v3425
      %v3427 = vpop.f32.mrf.mxu0
      %v3428 = vpop.f32.mrf.mxu0
      %v3429 = vadd.f32 0.0, %v3428
      %v3430 = vpop.f32.mrf.mxu0
      %3431 = vmatprep.mubr.bf16.mxu0 %v509
      %3432 = vmatmul.mubr.bf16.gmra.mxu0 %v508
      %v3433 = vpop.f32.mrf.mxu0
      %v3434 = vadd.f32 0.0, %v3433
      %v3435 = vpop.f32.mrf.mxu0
      %v3436 = vpop.f32.mrf.mxu0
      %v3437 = vadd.f32 0.0, %v3436
      %v3438 = vpop.f32.mrf.mxu0
      %3439 = vmatprep.mubr.bf16.mxu0 %v511
      %3440 = vmatmul.mubr.bf16.gmra.mxu0 %v510
      %v3441 = vpop.f32.mrf.mxu0
      %v3442 = vadd.f32 0.0, %v3441
      %v3443 = vpop.f32.mrf.mxu0
      %v3444 = vpop.f32.mrf.mxu0
      %v3445 = vadd.f32 0.0, %v3444
      %v3446 = vpop.f32.mrf.mxu0
      %3447 = vmatprep.mubr.bf16.mxu0 %v513
      %3448 = vmatmul.mubr.bf16.gmra.mxu0 %v512
      %v3449 = vpop.f32.mrf.mxu0
      %v3450 = vadd.f32 0.0, %v3449
      %v3451 = vpop.f32.mrf.mxu0
      %v3452 = vpop.f32.mrf.mxu0
      %v3453 = vadd.f32 0.0, %v3452
      %v3454 = vpop.f32.mrf.mxu0
      %3455 = vmatprep.mubr.bf16.mxu0 %v515
      %3456 = vmatmul.mubr.bf16.gmra.mxu0 %v514
      %v3457 = vpop.f32.mrf.mxu0
      %v3458 = vadd.f32 0.0, %v3457
      %v3459 = vpop.f32.mrf.mxu0
      %v3460 = vpop.f32.mrf.mxu0
      %v3461 = vadd.f32 0.0, %v3460
      %v3462 = vpop.f32.mrf.mxu0
      %3463 = vmatprep.mubr.bf16.mxu0 %v517
      %3464 = vmatmul.mubr.bf16.gmra.mxu0 %v516
      %v3465 = vpop.f32.mrf.mxu0
      %v3466 = vadd.f32 0.0, %v3465
      %v3467 = vpop.f32.mrf.mxu0
      %v3468 = vpop.f32.mrf.mxu0
      %v3469 = vadd.f32 0.0, %v3468
      %v3470 = vpop.f32.mrf.mxu0
      %3471 = vmatprep.mubr.bf16.mxu0 %v519
      %3472 = vmatmul.mubr.bf16.gmra.mxu0 %v518
      %v3473 = vpop.f32.mrf.mxu0
      %v3474 = vadd.f32 0.0, %v3473
      %v3475 = vpop.f32.mrf.mxu0
      %v3476 = vpop.f32.mrf.mxu0
      %v3477 = vadd.f32 0.0, %v3476
      %v3478 = vpop.f32.mrf.mxu0
      %3479 = vmatprep.mubr.bf16.mxu0 %v521
      %3480 = vmatmul.mubr.bf16.gmra.mxu0 %v520
      %v3481 = vpop.f32.mrf.mxu0
      %v3482 = vadd.f32 0.0, %v3481
      %v3483 = vpop.f32.mrf.mxu0
      %v3484 = vpop.f32.mrf.mxu0
      %v3485 = vadd.f32 0.0, %v3484
      %v3486 = vpop.f32.mrf.mxu0
      %3487 = vmatprep.mubr.bf16.mxu0 %v523
      %3488 = vmatmul.mubr.bf16.gmra.mxu0 %v522
      %v3489 = vpop.f32.mrf.mxu0
      %v3490 = vadd.f32 0.0, %v3489
      %v3491 = vpop.f32.mrf.mxu0
      %v3492 = vpop.f32.mrf.mxu0
      %v3493 = vadd.f32 0.0, %v3492
      %v3494 = vpop.f32.mrf.mxu0
      %3495 = vmatprep.mubr.bf16.mxu0 %v525
      %3496 = vmatmul.mubr.bf16.gmra.mxu0 %v524
      %v3497 = vpop.f32.mrf.mxu0
      %v3498 = vadd.f32 0.0, %v3497
      %v3499 = vpop.f32.mrf.mxu0
      %v3500 = vpop.f32.mrf.mxu0
      %v3501 = vadd.f32 0.0, %v3500
      %v3502 = vpop.f32.mrf.mxu0
      %3503 = vmatprep.mubr.bf16.mxu0 %v527
      %3504 = vmatmul.mubr.bf16.gmra.mxu0 %v526
      %v3505 = vpop.f32.mrf.mxu0
      %v3506 = vadd.f32 0.0, %v3505
      %v3507 = vpop.f32.mrf.mxu0
      %v3508 = vpop.f32.mrf.mxu0
      %v3509 = vadd.f32 0.0, %v3508
      %v3510 = vpop.f32.mrf.mxu0
      %3511 = vmatprep.mubr.bf16.mxu0 %v529
      %3512 = vmatmul.mubr.bf16.gmra.mxu0 %v528
      %v3513 = vpop.f32.mrf.mxu0
      %v3514 = vadd.f32 0.0, %v3513
      %v3515 = vpop.f32.mrf.mxu0
      %v3516 = vpop.f32.mrf.mxu0
      %v3517 = vadd.f32 0.0, %v3516
      %v3518 = vpop.f32.mrf.mxu0
      %3519 = vmatprep.mubr.bf16.mxu0 %v531
      %3520 = vmatmul.mubr.bf16.gmra.mxu0 %v530
      %v3521 = vpop.f32.mrf.mxu0
      %v3522 = vadd.f32 0.0, %v3521
      %v3523 = vpop.f32.mrf.mxu0
      %v3524 = vpop.f32.mrf.mxu0
      %v3525 = vadd.f32 0.0, %v3524
      %v3526 = vpop.f32.mrf.mxu0
      %3527 = vdwg.mxu0
      %v3528 = vmax.f32 %v3402, 0.0
      %v3529 = vmax.f32 %v3405, 0.0
      %v3530 = vmax.f32 %v3410, 0.0
      %v3531 = vmax.f32 %v3413, 0.0
      %v3532 = vmax.f32 %v3418, 0.0
      %v3533 = vmax.f32 %v3421, 0.0
      %v3534 = vmax.f32 %v3426, 0.0
      %v3535 = vmax.f32 %v3429, 0.0
      %v3536 = vmax.f32 %v3434, 0.0
      %v3537 = vmax.f32 %v3437, 0.0
      %v3538 = vmax.f32 %v3442, 0.0
      %v3539 = vmax.f32 %v3445, 0.0
      %v3540 = vmax.f32 %v3450, 0.0
      %v3541 = vmax.f32 %v3453, 0.0
      %v3542 = vmax.f32 %v3458, 0.0
      %v3543 = vmax.f32 %v3461, 0.0
      %v3544 = vmax.f32 %v3466, 0.0
      %v3545 = vmax.f32 %v3469, 0.0
      %v3546 = vmax.f32 %v3474, 0.0
      %v3547 = vmax.f32 %v3477, 0.0
      %v3548 = vmax.f32 %v3482, 0.0
      %v3549 = vmax.f32 %v3485, 0.0
      %v3550 = vmax.f32 %v3490, 0.0
      %v3551 = vmax.f32 %v3493, 0.0
      %v3552 = vmax.f32 %v3498, 0.0
      %v3553 = vmax.f32 %v3501, 0.0
      %v3554 = vmax.f32 %v3506, 0.0
      %v3555 = vmax.f32 %v3509, 0.0
      %v3556 = vmax.f32 %v3514, 0.0
      %v3557 = vmax.f32 %v3517, 0.0
      %v3558 = vmax.f32 %v3522, 0.0
      %v3559 = vmax.f32 %v3525, 0.0
      %v3560 = vmul.f32 %v3528, %v3528
      %v3561 = vmul.f32 %v3529, %v3529
      %v3562 = vmul.f32 %v3530, %v3530
      %v3563 = vmul.f32 %v3531, %v3531
      %v3564 = vmul.f32 %v3532, %v3532
      %v3565 = vmul.f32 %v3533, %v3533
      %v3566 = vmul.f32 %v3534, %v3534
      %v3567 = vmul.f32 %v3535, %v3535
      %v3568 = vmul.f32 %v3536, %v3536
      %v3569 = vmul.f32 %v3537, %v3537
      %v3570 = vmul.f32 %v3538, %v3538
      %v3571 = vmul.f32 %v3539, %v3539
      %v3572 = vmul.f32 %v3540, %v3540
      %v3573 = vmul.f32 %v3541, %v3541
      %v3574 = vmul.f32 %v3542, %v3542
      %v3575 = vmul.f32 %v3543, %v3543
      %v3576 = vmul.f32 %v3544, %v3544
      %v3577 = vmul.f32 %v3545, %v3545
      %v3578 = vmul.f32 %v3546, %v3546
      %v3579 = vmul.f32 %v3547, %v3547
      %v3580 = vmul.f32 %v3548, %v3548
      %v3581 = vmul.f32 %v3549, %v3549
      %v3582 = vmul.f32 %v3550, %v3550
      %v3583 = vmul.f32 %v3551, %v3551
      %v3584 = vmul.f32 %v3552, %v3552
      %v3585 = vmul.f32 %v3553, %v3553
      %v3586 = vmul.f32 %v3554, %v3554
      %v3587 = vmul.f32 %v3555, %v3555
      %v3588 = vmul.f32 %v3556, %v3556
      %v3589 = vmul.f32 %v3557, %v3557
      %v3590 = vmul.f32 %v3558, %v3558
      %v3591 = vmul.f32 %v3559, %v3559
      %v3592 = vsel %vm885, %v3560, 0.0
      %3593 = vadd.xlane.f32.xlu0 %v3592
      %v3594 = vpop.xlane.xlu0 %3593
      %v3595 = vsel %vm885, %v3561, 0.0
      %3596 = vadd.xlane.f32.xlu0 %v3595
      %v3597 = vpop.xlane.xlu0 %3596
      %v3598 = vsel %vm885, %v3562, 0.0
      %3599 = vadd.xlane.f32.xlu0 %v3598
      %v3600 = vpop.xlane.xlu0 %3599
      %v3601 = vsel %vm885, %v3563, 0.0
      %3602 = vadd.xlane.f32.xlu0 %v3601
      %v3603 = vpop.xlane.xlu0 %3602
      %v3604 = vsel %vm885, %v3564, 0.0
      %3605 = vadd.xlane.f32.xlu0 %v3604
      %v3606 = vpop.xlane.xlu0 %3605
      %v3607 = vsel %vm885, %v3565, 0.0
      %3608 = vadd.xlane.f32.xlu0 %v3607
      %v3609 = vpop.xlane.xlu0 %3608
      %v3610 = vsel %vm885, %v3566, 0.0
      %3611 = vadd.xlane.f32.xlu0 %v3610
      %v3612 = vpop.xlane.xlu0 %3611
      %v3613 = vsel %vm885, %v3567, 0.0
      %3614 = vadd.xlane.f32.xlu0 %v3613
      %v3615 = vpop.xlane.xlu0 %3614
      %v3616 = vsel %vm885, %v3568, 0.0
      %3617 = vadd.xlane.f32.xlu0 %v3616
      %v3618 = vpop.xlane.xlu0 %3617
      %v3619 = vsel %vm885, %v3569, 0.0
      %3620 = vadd.xlane.f32.xlu0 %v3619
      %v3621 = vpop.xlane.xlu0 %3620
      %v3622 = vsel %vm885, %v3570, 0.0
      %3623 = vadd.xlane.f32.xlu0 %v3622
      %v3624 = vpop.xlane.xlu0 %3623
      %v3625 = vsel %vm885, %v3571, 0.0
      %3626 = vadd.xlane.f32.xlu0 %v3625
      %v3627 = vpop.xlane.xlu0 %3626
      %v3628 = vsel %vm885, %v3572, 0.0
      %3629 = vadd.xlane.f32.xlu0 %v3628
      %v3630 = vpop.xlane.xlu0 %3629
      %v3631 = vsel %vm885, %v3573, 0.0
      %3632 = vadd.xlane.f32.xlu0 %v3631
      %v3633 = vpop.xlane.xlu0 %3632
      %v3634 = vsel %vm885, %v3574, 0.0
      %3635 = vadd.xlane.f32.xlu0 %v3634
      %v3636 = vpop.xlane.xlu0 %3635
      %v3637 = vsel %vm885, %v3575, 0.0
      %3638 = vadd.xlane.f32.xlu0 %v3637
      %v3639 = vpop.xlane.xlu0 %3638
      %v3640 = vsel %vm885, %v3576, 0.0
      %3641 = vadd.xlane.f32.xlu0 %v3640
      %v3642 = vpop.xlane.xlu0 %3641
      %v3643 = vsel %vm885, %v3577, 0.0
      %3644 = vadd.xlane.f32.xlu0 %v3643
      %v3645 = vpop.xlane.xlu0 %3644
      %v3646 = vsel %vm885, %v3578, 0.0
      %3647 = vadd.xlane.f32.xlu0 %v3646
      %v3648 = vpop.xlane.xlu0 %3647
      %v3649 = vsel %vm885, %v3579, 0.0
      %3650 = vadd.xlane.f32.xlu0 %v3649
      %v3651 = vpop.xlane.xlu0 %3650
      %v3652 = vsel %vm885, %v3580, 0.0
      %3653 = vadd.xlane.f32.xlu0 %v3652
      %v3654 = vpop.xlane.xlu0 %3653
      %v3655 = vsel %vm885, %v3581, 0.0
      %3656 = vadd.xlane.f32.xlu0 %v3655
      %v3657 = vpop.xlane.xlu0 %3656
      %v3658 = vsel %vm885, %v3582, 0.0
      %3659 = vadd.xlane.f32.xlu0 %v3658
      %v3660 = vpop.xlane.xlu0 %3659
      %v3661 = vsel %vm885, %v3583, 0.0
      %3662 = vadd.xlane.f32.xlu0 %v3661
      %v3663 = vpop.xlane.xlu0 %3662
      %v3664 = vsel %vm885, %v3584, 0.0
      %3665 = vadd.xlane.f32.xlu0 %v3664
      %v3666 = vpop.xlane.xlu0 %3665
      %v3667 = vsel %vm885, %v3585, 0.0
      %3668 = vadd.xlane.f32.xlu0 %v3667
      %v3669 = vpop.xlane.xlu0 %3668
      %v3670 = vsel %vm885, %v3586, 0.0
      %3671 = vadd.xlane.f32.xlu0 %v3670
      %v3672 = vpop.xlane.xlu0 %3671
      %v3673 = vsel %vm885, %v3587, 0.0
      %3674 = vadd.xlane.f32.xlu0 %v3673
      %v3675 = vpop.xlane.xlu0 %3674
      %v3676 = vsel %vm885, %v3588, 0.0
      %3677 = vadd.xlane.f32.xlu0 %v3676
      %v3678 = vpop.xlane.xlu0 %3677
      %v3679 = vsel %vm885, %v3589, 0.0
      %3680 = vadd.xlane.f32.xlu0 %v3679
      %v3681 = vpop.xlane.xlu0 %3680
      %v3682 = vsel %vm885, %v3590, 0.0
      %3683 = vadd.xlane.f32.xlu0 %v3682
      %v3684 = vpop.xlane.xlu0 %3683
      %v3685 = vsel %vm885, %v3591, 0.0
      %3686 = vadd.xlane.f32.xlu0 %v3685
      %v3687 = vpop.xlane.xlu0 %3686
      %v3688 = vmax.f32 %v3594, 1e-24
      %v3689 = vmax.f32 %v3597, 1e-24
      %v3690 = vmax.f32 %v3600, 1e-24
      %v3691 = vmax.f32 %v3603, 1e-24
      %v3692 = vmax.f32 %v3606, 1e-24
      %v3693 = vmax.f32 %v3609, 1e-24
      %v3694 = vmax.f32 %v3612, 1e-24
      %v3695 = vmax.f32 %v3615, 1e-24
      %v3696 = vmax.f32 %v3618, 1e-24
      %v3697 = vmax.f32 %v3621, 1e-24
      %v3698 = vmax.f32 %v3624, 1e-24
      %v3699 = vmax.f32 %v3627, 1e-24
      %v3700 = vmax.f32 %v3630, 1e-24
      %v3701 = vmax.f32 %v3633, 1e-24
      %v3702 = vmax.f32 %v3636, 1e-24
      %v3703 = vmax.f32 %v3639, 1e-24
      %v3704 = vmax.f32 %v3642, 1e-24
      %v3705 = vmax.f32 %v3645, 1e-24
      %v3706 = vmax.f32 %v3648, 1e-24
      %v3707 = vmax.f32 %v3651, 1e-24
      %v3708 = vmax.f32 %v3654, 1e-24
      %v3709 = vmax.f32 %v3657, 1e-24
      %v3710 = vmax.f32 %v3660, 1e-24
      %v3711 = vmax.f32 %v3663, 1e-24
      %v3712 = vmax.f32 %v3666, 1e-24
      %v3713 = vmax.f32 %v3669, 1e-24
      %v3714 = vmax.f32 %v3672, 1e-24
      %v3715 = vmax.f32 %v3675, 1e-24
      %v3716 = vmax.f32 %v3678, 1e-24
      %v3717 = vmax.f32 %v3681, 1e-24
      %v3718 = vmax.f32 %v3684, 1e-24
      %v3719 = vmax.f32 %v3687, 1e-24
      %v3720 = vrsqrt.pop %v3688
      %v3721 = vrsqrt.pop %v3689
      %v3722 = vrsqrt.pop %v3690
      %v3723 = vrsqrt.pop %v3691
      %v3724 = vrsqrt.pop %v3692
      %v3725 = vrsqrt.pop %v3693
      %v3726 = vrsqrt.pop %v3694
      %v3727 = vrsqrt.pop %v3695
      %v3728 = vrsqrt.pop %v3696
      %v3729 = vrsqrt.pop %v3697
      %v3730 = vrsqrt.pop %v3698
      %v3731 = vrsqrt.pop %v3699
      %v3732 = vrsqrt.pop %v3700
      %v3733 = vrsqrt.pop %v3701
      %v3734 = vrsqrt.pop %v3702
      %v3735 = vrsqrt.pop %v3703
      %v3736 = vrsqrt.pop %v3704
      %v3737 = vrsqrt.pop %v3705
      %v3738 = vrsqrt.pop %v3706
      %v3739 = vrsqrt.pop %v3707
      %v3740 = vrsqrt.pop %v3708
      %v3741 = vrsqrt.pop %v3709
      %v3742 = vrsqrt.pop %v3710
      %v3743 = vrsqrt.pop %v3711
      %v3744 = vrsqrt.pop %v3712
      %v3745 = vrsqrt.pop %v3713
      %v3746 = vrsqrt.pop %v3714
      %v3747 = vrsqrt.pop %v3715
      %v3748 = vrsqrt.pop %v3716
      %v3749 = vrsqrt.pop %v3717
      %v3750 = vrsqrt.pop %v3718
      %v3751 = vrsqrt.pop %v3719
      %v3752 = vmul.f32 %v3528, %v3720
      %v3753 = vmul.f32 %v3529, %v3721
      %v3754 = vmul.f32 %v3530, %v3722
      %v3755 = vmul.f32 %v3531, %v3723
      %v3756 = vmul.f32 %v3532, %v3724
      %v3757 = vmul.f32 %v3533, %v3725
      %v3758 = vmul.f32 %v3534, %v3726
      %v3759 = vmul.f32 %v3535, %v3727
      %v3760 = vmul.f32 %v3536, %v3728
      %v3761 = vmul.f32 %v3537, %v3729
      %v3762 = vmul.f32 %v3538, %v3730
      %v3763 = vmul.f32 %v3539, %v3731
      %v3764 = vmul.f32 %v3540, %v3732
      %v3765 = vmul.f32 %v3541, %v3733
      %v3766 = vmul.f32 %v3542, %v3734
      %v3767 = vmul.f32 %v3543, %v3735
      %v3768 = vmul.f32 %v3544, %v3736
      %v3769 = vmul.f32 %v3545, %v3737
      %v3770 = vmul.f32 %v3546, %v3738
      %v3771 = vmul.f32 %v3547, %v3739
      %v3772 = vmul.f32 %v3548, %v3740
      %v3773 = vmul.f32 %v3549, %v3741
      %v3774 = vmul.f32 %v3550, %v3742
      %v3775 = vmul.f32 %v3551, %v3743
      %v3776 = vmul.f32 %v3552, %v3744
      %v3777 = vmul.f32 %v3553, %v3745
      %v3778 = vmul.f32 %v3554, %v3746
      %v3779 = vmul.f32 %v3555, %v3747
      %v3780 = vmul.f32 %v3556, %v3748
      %v3781 = vmul.f32 %v3557, %v3749
      %v3782 = vmul.f32 %v3558, %v3750
      %v3783 = vmul.f32 %v3559, %v3751
      %v3784 = vadd.f32 %v2435, %v3752
      %v3785 = vadd.f32 %v2436, %v3753
      %v3786 = vadd.f32 %v2437, %v3754
      %v3787 = vadd.f32 %v2438, %v3755
      %v3788 = vadd.f32 %v2439, %v3756
      %v3789 = vadd.f32 %v2440, %v3757
      %v3790 = vadd.f32 %v2441, %v3758
      %v3791 = vadd.f32 %v2442, %v3759
      %v3792 = vadd.f32 %v2443, %v3760
      %v3793 = vadd.f32 %v2444, %v3761
      %v3794 = vadd.f32 %v2445, %v3762
      %v3795 = vadd.f32 %v2446, %v3763
      %v3796 = vadd.f32 %v2447, %v3764
      %v3797 = vadd.f32 %v2448, %v3765
      %v3798 = vadd.f32 %v2449, %v3766
      %v3799 = vadd.f32 %v2450, %v3767
      %v3800 = vadd.f32 %v2451, %v3768
      %v3801 = vadd.f32 %v2452, %v3769
      %v3802 = vadd.f32 %v2453, %v3770
      %v3803 = vadd.f32 %v2454, %v3771
      %v3804 = vadd.f32 %v2455, %v3772
      %v3805 = vadd.f32 %v2456, %v3773
      %v3806 = vadd.f32 %v2457, %v3774
      %v3807 = vadd.f32 %v2458, %v3775
      %v3808 = vadd.f32 %v2459, %v3776
      %v3809 = vadd.f32 %v2460, %v3777
      %v3810 = vadd.f32 %v2461, %v3778
      %v3811 = vadd.f32 %v2462, %v3779
      %v3812 = vadd.f32 %v2463, %v3780
      %v3813 = vadd.f32 %v2464, %v3781
      %v3814 = vadd.f32 %v2465, %v3782
      %v3815 = vadd.f32 %v2466, %v3783
      %v3816 = vpack.c.bf16 %v3753, %v3752
      %v3817 = vpack.c.bf16 %v3755, %v3754
      %v3818 = vpack.c.bf16 %v3757, %v3756
      %v3819 = vpack.c.bf16 %v3759, %v3758
      %v3820 = vpack.c.bf16 %v3761, %v3760
      %v3821 = vpack.c.bf16 %v3763, %v3762
      %v3822 = vpack.c.bf16 %v3765, %v3764
      %v3823 = vpack.c.bf16 %v3767, %v3766
      %v3824 = vpack.c.bf16 %v3769, %v3768
      %v3825 = vpack.c.bf16 %v3771, %v3770
      %v3826 = vpack.c.bf16 %v3773, %v3772
      %v3827 = vpack.c.bf16 %v3775, %v3774
      %v3828 = vpack.c.bf16 %v3777, %v3776
      %v3829 = vpack.c.bf16 %v3779, %v3778
      %v3830 = vpack.c.bf16 %v3781, %v3780
      %v3831 = vpack.c.bf16 %v3783, %v3782
      %v3833 = vsel %vm885, %v3816, 0
      %v3836 = vsel %vm885, %v3817, 0
      %v3839 = vsel %vm885, %v3818, 0
      %v3842 = vsel %vm885, %v3819, 0
      %v3845 = vsel %vm885, %v3820, 0
      %v3848 = vsel %vm885, %v3821, 0
      %v3851 = vsel %vm885, %v3822, 0
      %v3854 = vsel %vm885, %v3823, 0
      %v3857 = vsel %vm885, %v3824, 0
      %v3860 = vsel %vm885, %v3825, 0
      %v3863 = vsel %vm885, %v3826, 0
      %v3866 = vsel %vm885, %v3827, 0
      %v3869 = vsel %vm885, %v3828, 0
      %v3872 = vsel %vm885, %v3829, 0
      %v3875 = vsel %vm885, %v3830, 0
      %v3878 = vsel %vm885, %v3831, 0
      %3880 = vmatprep.subr.bf16.mxu0 0
      %3881 = vmatpush1.bf16.msra.mxu0 0
      %3882 = vmatprep.subr.bf16.mxu0 0
      %3883 = vmatpush1.bf16.msra.mxu0 0
      %3884 = vmatprep.subr.bf16.mxu0 0
      %3885 = vmatpush1.bf16.msra.mxu0 0
      %3886 = vmatprep.subr.bf16.mxu0 0
      %3887 = vmatpush1.bf16.msra.mxu0 0
      %3888 = vmatprep.subr.bf16.mxu0 0
      %3889 = vmatpush1.bf16.msra.mxu0 0
      %3890 = vmatprep.subr.bf16.mxu0 0
      %3891 = vmatpush1.bf16.msra.mxu0 0
      %3892 = vmatprep.subr.bf16.mxu0 0
      %3893 = vmatpush1.bf16.msra.mxu0 %v1113
      %3894 = vmatprep.subr.bf16.mxu0 0
      %3895 = vmatpush1.bf16.msra.mxu0 %v1112
      %3896 = vmatprep.subr.bf16.mxu0 0
      %3897 = vmatpush2.bf16.msra.mxu0 0
      %3898 = vmatprep.subr.bf16.mxu0 0
      %3899 = vmatpush2.bf16.msra.mxu0 0
      %3900 = vmatprep.subr.bf16.mxu0 0
      %3901 = vmatpush2.bf16.msra.mxu0 0
      %3902 = vmatprep.subr.bf16.mxu0 0
      %3903 = vmatpush2.bf16.msra.mxu0 0
      %3904 = vmatprep.subr.bf16.mxu0 0
      %3905 = vmatpush2.bf16.msra.mxu0 0
      %3906 = vmatprep.subr.bf16.mxu0 0
      %3907 = vmatpush2.bf16.msra.mxu0 0
      %3908 = vmatprep.subr.bf16.mxu0 0
      %3909 = vmatpush2.bf16.msra.mxu0 0
      %3910 = vmatprep.subr.bf16.mxu0 0
      %3911 = vmatpush2.bf16.msra.mxu0 0
      %3912 = vmatprep.mubr.bf16.mxu0 0
      %3913 = vmatmul.mubr.bf16.gmra.mxu0 %v3833
      %v3914 = vpop.f32.mrf.mxu0
      %v3915 = vadd.f32 %v1102, %v3914
      %v3916 = vpop.f32.mrf.mxu0
      %v3917 = vpop.f32.mrf.mxu0
      %v3918 = vadd.f32 %v1102, %v3917
      %v3919 = vpop.f32.mrf.mxu0
      %3920 = vmatprep.mubr.bf16.mxu0 0
      %3921 = vmatmul.mubr.bf16.gmra.mxu0 %v3836
      %v3922 = vpop.f32.mrf.mxu0
      %v3923 = vadd.f32 %v1102, %v3922
      %v3924 = vpop.f32.mrf.mxu0
      %v3925 = vpop.f32.mrf.mxu0
      %v3926 = vadd.f32 %v1102, %v3925
      %v3927 = vpop.f32.mrf.mxu0
      %3928 = vmatprep.mubr.bf16.mxu0 0
      %3929 = vmatmul.mubr.bf16.gmra.mxu0 %v3839
      %v3930 = vpop.f32.mrf.mxu0
      %v3931 = vadd.f32 %v1102, %v3930
      %v3932 = vpop.f32.mrf.mxu0
      %v3933 = vpop.f32.mrf.mxu0
      %v3934 = vadd.f32 %v1102, %v3933
      %v3935 = vpop.f32.mrf.mxu0
      %3936 = vmatprep.mubr.bf16.mxu0 0
      %3937 = vmatmul.mubr.bf16.gmra.mxu0 %v3842
      %v3938 = vpop.f32.mrf.mxu0
      %v3939 = vadd.f32 %v1102, %v3938
      %v3940 = vpop.f32.mrf.mxu0
      %v3941 = vpop.f32.mrf.mxu0
      %v3942 = vadd.f32 %v1102, %v3941
      %v3943 = vpop.f32.mrf.mxu0
      %3944 = vmatprep.mubr.bf16.mxu0 0
      %3945 = vmatmul.mubr.bf16.gmra.mxu0 %v3845
      %v3946 = vpop.f32.mrf.mxu0
      %v3947 = vadd.f32 %v1102, %v3946
      %v3948 = vpop.f32.mrf.mxu0
      %v3949 = vpop.f32.mrf.mxu0
      %v3950 = vadd.f32 %v1102, %v3949
      %v3951 = vpop.f32.mrf.mxu0
      %3952 = vmatprep.mubr.bf16.mxu0 0
      %3953 = vmatmul.mubr.bf16.gmra.mxu0 %v3848
      %v3954 = vpop.f32.mrf.mxu0
      %v3955 = vadd.f32 %v1102, %v3954
      %v3956 = vpop.f32.mrf.mxu0
      %v3957 = vpop.f32.mrf.mxu0
      %v3958 = vadd.f32 %v1102, %v3957
      %v3959 = vpop.f32.mrf.mxu0
      %3960 = vmatprep.mubr.bf16.mxu0 0
      %3961 = vmatmul.mubr.bf16.gmra.mxu0 %v3851
      %v3962 = vpop.f32.mrf.mxu0
      %v3963 = vadd.f32 %v1102, %v3962
      %v3964 = vpop.f32.mrf.mxu0
      %v3965 = vpop.f32.mrf.mxu0
      %v3966 = vadd.f32 %v1102, %v3965
      %v3967 = vpop.f32.mrf.mxu0
      %3968 = vmatprep.mubr.bf16.mxu0 0
      %3969 = vmatmul.mubr.bf16.gmra.mxu0 %v3854
      %v3970 = vpop.f32.mrf.mxu0
      %v3971 = vadd.f32 %v1102, %v3970
      %v3972 = vpop.f32.mrf.mxu0
      %v3973 = vpop.f32.mrf.mxu0
      %v3974 = vadd.f32 %v1102, %v3973
      %v3975 = vpop.f32.mrf.mxu0
      %3976 = vmatprep.mubr.bf16.mxu0 0
      %3977 = vmatmul.mubr.bf16.gmra.mxu0 %v3857
      %v3978 = vpop.f32.mrf.mxu0
      %v3979 = vadd.f32 %v1102, %v3978
      %v3980 = vpop.f32.mrf.mxu0
      %v3981 = vpop.f32.mrf.mxu0
      %v3982 = vadd.f32 %v1102, %v3981
      %v3983 = vpop.f32.mrf.mxu0
      %3984 = vmatprep.mubr.bf16.mxu0 0
      %3985 = vmatmul.mubr.bf16.gmra.mxu0 %v3860
      %v3986 = vpop.f32.mrf.mxu0
      %v3987 = vadd.f32 %v1102, %v3986
      %v3988 = vpop.f32.mrf.mxu0
      %v3989 = vpop.f32.mrf.mxu0
      %v3990 = vadd.f32 %v1102, %v3989
      %v3991 = vpop.f32.mrf.mxu0
      %3992 = vmatprep.mubr.bf16.mxu0 0
      %3993 = vmatmul.mubr.bf16.gmra.mxu0 %v3863
      %v3994 = vpop.f32.mrf.mxu0
      %v3995 = vadd.f32 %v1102, %v3994
      %v3996 = vpop.f32.mrf.mxu0
      %v3997 = vpop.f32.mrf.mxu0
      %v3998 = vadd.f32 %v1102, %v3997
      %v3999 = vpop.f32.mrf.mxu0
      %4000 = vmatprep.mubr.bf16.mxu0 0
      %4001 = vmatmul.mubr.bf16.gmra.mxu0 %v3866
      %v4002 = vpop.f32.mrf.mxu0
      %v4003 = vadd.f32 %v1102, %v4002
      %v4004 = vpop.f32.mrf.mxu0
      %v4005 = vpop.f32.mrf.mxu0
      %v4006 = vadd.f32 %v1102, %v4005
      %v4007 = vpop.f32.mrf.mxu0
      %4008 = vmatprep.mubr.bf16.mxu0 0
      %4009 = vmatmul.mubr.bf16.gmra.mxu0 %v3869
      %v4010 = vpop.f32.mrf.mxu0
      %v4011 = vadd.f32 %v1102, %v4010
      %v4012 = vpop.f32.mrf.mxu0
      %v4013 = vpop.f32.mrf.mxu0
      %v4014 = vadd.f32 %v1102, %v4013
      %v4015 = vpop.f32.mrf.mxu0
      %4016 = vmatprep.mubr.bf16.mxu0 0
      %4017 = vmatmul.mubr.bf16.gmra.mxu0 %v3872
      %v4018 = vpop.f32.mrf.mxu0
      %v4019 = vadd.f32 %v1102, %v4018
      %v4020 = vpop.f32.mrf.mxu0
      %v4021 = vpop.f32.mrf.mxu0
      %v4022 = vadd.f32 %v1102, %v4021
      %v4023 = vpop.f32.mrf.mxu0
      %4024 = vmatprep.mubr.bf16.mxu0 0
      %4025 = vmatmul.mubr.bf16.gmra.mxu0 %v3875
      %v4026 = vpop.f32.mrf.mxu0
      %v4027 = vadd.f32 %v1102, %v4026
      %v4028 = vpop.f32.mrf.mxu0
      %v4029 = vpop.f32.mrf.mxu0
      %v4030 = vadd.f32 %v1102, %v4029
      %v4031 = vpop.f32.mrf.mxu0
      %4032 = vmatprep.mubr.bf16.mxu0 0
      %4033 = vmatmul.mubr.bf16.gmra.mxu0 %v3878
      %v4034 = vpop.f32.mrf.mxu0
      %v4035 = vadd.f32 %v1102, %v4034
      %v4036 = vpop.f32.mrf.mxu0
      %v4037 = vpop.f32.mrf.mxu0
      %v4038 = vadd.f32 %v1102, %v4037
      %v4039 = vpop.f32.mrf.mxu0
      %4040 = vdwg.mxu0
      %v4041 = vmax.f32 %v3915, 0.0
      %v4042 = vmax.f32 %v3918, 0.0
      %v4043 = vmax.f32 %v3923, 0.0
      %v4044 = vmax.f32 %v3926, 0.0
      %v4045 = vmax.f32 %v3931, 0.0
      %v4046 = vmax.f32 %v3934, 0.0
      %v4047 = vmax.f32 %v3939, 0.0
      %v4048 = vmax.f32 %v3942, 0.0
      %v4049 = vmax.f32 %v3947, 0.0
      %v4050 = vmax.f32 %v3950, 0.0
      %v4051 = vmax.f32 %v3955, 0.0
      %v4052 = vmax.f32 %v3958, 0.0
      %v4053 = vmax.f32 %v3963, 0.0
      %v4054 = vmax.f32 %v3966, 0.0
      %v4055 = vmax.f32 %v3971, 0.0
      %v4056 = vmax.f32 %v3974, 0.0
      %v4057 = vmax.f32 %v3979, 0.0
      %v4058 = vmax.f32 %v3982, 0.0
      %v4059 = vmax.f32 %v3987, 0.0
      %v4060 = vmax.f32 %v3990, 0.0
      %v4061 = vmax.f32 %v3995, 0.0
      %v4062 = vmax.f32 %v3998, 0.0
      %v4063 = vmax.f32 %v4003, 0.0
      %v4064 = vmax.f32 %v4006, 0.0
      %v4065 = vmax.f32 %v4011, 0.0
      %v4066 = vmax.f32 %v4014, 0.0
      %v4067 = vmax.f32 %v4019, 0.0
      %v4068 = vmax.f32 %v4022, 0.0
      %v4069 = vmax.f32 %v4027, 0.0
      %v4070 = vmax.f32 %v4030, 0.0
      %v4071 = vmax.f32 %v4035, 0.0
      %v4072 = vmax.f32 %v4038, 0.0
      %v4073 = vpack.c.bf16 %v4042, %v4041
      %v4074 = vpack.c.bf16 %v4044, %v4043
      %v4075 = vpack.c.bf16 %v4046, %v4045
      %v4076 = vpack.c.bf16 %v4048, %v4047
      %v4077 = vpack.c.bf16 %v4050, %v4049
      %v4078 = vpack.c.bf16 %v4052, %v4051
      %v4079 = vpack.c.bf16 %v4054, %v4053
      %v4080 = vpack.c.bf16 %v4056, %v4055
      %v4081 = vpack.c.bf16 %v4058, %v4057
      %v4082 = vpack.c.bf16 %v4060, %v4059
      %v4083 = vpack.c.bf16 %v4062, %v4061
      %v4084 = vpack.c.bf16 %v4064, %v4063
      %v4085 = vpack.c.bf16 %v4066, %v4065
      %v4086 = vpack.c.bf16 %v4068, %v4067
      %v4087 = vpack.c.bf16 %v4070, %v4069
      %v4088 = vpack.c.bf16 %v4072, %v4071
      %v4090 = vsel %vm1411, %v4073, 0
      %v4093 = vsel %vm1411, %v4074, 0
      %v4096 = vsel %vm1411, %v4075, 0
      %v4099 = vsel %vm1411, %v4076, 0
      %v4102 = vsel %vm1411, %v4077, 0
      %v4105 = vsel %vm1411, %v4078, 0
      %v4108 = vsel %vm1411, %v4079, 0
      %v4111 = vsel %vm1411, %v4080, 0
      %v4114 = vsel %vm1411, %v4081, 0
      %v4117 = vsel %vm1411, %v4082, 0
      %v4120 = vsel %vm1411, %v4083, 0
      %v4123 = vsel %vm1411, %v4084, 0
      %v4126 = vsel %vm1411, %v4085, 0
      %v4129 = vsel %vm1411, %v4086, 0
      %v4132 = vsel %vm1411, %v4087, 0
      %v4135 = vsel %vm1411, %v4088, 0
      %4137 = vmatprep.subr.bf16.mxu0 0
      %4138 = vmatpush1.bf16.msra.mxu0 0
      %4139 = vmatprep.subr.bf16.mxu0 0
      %4140 = vmatpush1.bf16.msra.mxu0 0
      %4141 = vmatprep.subr.bf16.mxu0 0
      %4142 = vmatpush1.bf16.msra.mxu0 0
      %4143 = vmatprep.subr.bf16.mxu0 0
      %4144 = vmatpush1.bf16.msra.mxu0 0
      %4145 = vmatprep.subr.bf16.mxu0 0
      %4146 = vmatpush1.bf16.msra.mxu0 %v1406
      %4147 = vmatprep.subr.bf16.mxu0 0
      %4148 = vmatpush1.bf16.msra.mxu0 %v1405
      %4149 = vmatprep.subr.bf16.mxu0 0
      %4150 = vmatpush1.bf16.msra.mxu0 %v1404
      %4151 = vmatprep.subr.bf16.mxu0 0
      %4152 = vmatpush1.bf16.msra.mxu0 %v1403
      %4153 = vmatprep.subr.bf16.mxu0 0
      %4154 = vmatpush2.bf16.msra.mxu0 0
      %4155 = vmatprep.subr.bf16.mxu0 0
      %4156 = vmatpush2.bf16.msra.mxu0 0
      %4157 = vmatprep.subr.bf16.mxu0 0
      %4158 = vmatpush2.bf16.msra.mxu0 0
      %4159 = vmatprep.subr.bf16.mxu0 0
      %4160 = vmatpush2.bf16.msra.mxu0 0
      %4161 = vmatprep.subr.bf16.mxu0 0
      %4162 = vmatpush2.bf16.msra.mxu0 0
      %4163 = vmatprep.subr.bf16.mxu0 0
      %4164 = vmatpush2.bf16.msra.mxu0 0
      %4165 = vmatprep.subr.bf16.mxu0 0
      %4166 = vmatpush2.bf16.msra.mxu0 0
      %4167 = vmatprep.subr.bf16.mxu0 0
      %4168 = vmatpush2.bf16.msra.mxu0 0
      %4169 = vmatprep.mubr.bf16.mxu0 0
      %4170 = vmatmul.mubr.bf16.gmra.mxu0 %v4090
      %v4171 = vpop.f32.mrf.mxu0
      %v4172 = vadd.f32 %v1385, %v4171
      %v4173 = vpop.f32.mrf.mxu0
      %v4174 = vpop.f32.mrf.mxu0
      %v4175 = vadd.f32 %v1385, %v4174
      %v4176 = vpop.f32.mrf.mxu0
      %4177 = vmatprep.mubr.bf16.mxu0 0
      %4178 = vmatmul.mubr.bf16.gmra.mxu0 %v4093
      %v4179 = vpop.f32.mrf.mxu0
      %v4180 = vadd.f32 %v1385, %v4179
      %v4181 = vpop.f32.mrf.mxu0
      %v4182 = vpop.f32.mrf.mxu0
      %v4183 = vadd.f32 %v1385, %v4182
      %v4184 = vpop.f32.mrf.mxu0
      %4185 = vmatprep.mubr.bf16.mxu0 0
      %4186 = vmatmul.mubr.bf16.gmra.mxu0 %v4096
      %v4187 = vpop.f32.mrf.mxu0
      %v4188 = vadd.f32 %v1385, %v4187
      %v4189 = vpop.f32.mrf.mxu0
      %v4190 = vpop.f32.mrf.mxu0
      %v4191 = vadd.f32 %v1385, %v4190
      %v4192 = vpop.f32.mrf.mxu0
      %4193 = vmatprep.mubr.bf16.mxu0 0
      %4194 = vmatmul.mubr.bf16.gmra.mxu0 %v4099
      %v4195 = vpop.f32.mrf.mxu0
      %v4196 = vadd.f32 %v1385, %v4195
      %v4197 = vpop.f32.mrf.mxu0
      %v4198 = vpop.f32.mrf.mxu0
      %v4199 = vadd.f32 %v1385, %v4198
      %v4200 = vpop.f32.mrf.mxu0
      %4201 = vmatprep.mubr.bf16.mxu0 0
      %4202 = vmatmul.mubr.bf16.gmra.mxu0 %v4102
      %v4203 = vpop.f32.mrf.mxu0
      %v4204 = vadd.f32 %v1385, %v4203
      %v4205 = vpop.f32.mrf.mxu0
      %v4206 = vpop.f32.mrf.mxu0
      %v4207 = vadd.f32 %v1385, %v4206
      %v4208 = vpop.f32.mrf.mxu0
      %4209 = vmatprep.mubr.bf16.mxu0 0
      %4210 = vmatmul.mubr.bf16.gmra.mxu0 %v4105
      %v4211 = vpop.f32.mrf.mxu0
      %v4212 = vadd.f32 %v1385, %v4211
      %v4213 = vpop.f32.mrf.mxu0
      %v4214 = vpop.f32.mrf.mxu0
      %v4215 = vadd.f32 %v1385, %v4214
      %v4216 = vpop.f32.mrf.mxu0
      %4217 = vmatprep.mubr.bf16.mxu0 0
      %4218 = vmatmul.mubr.bf16.gmra.mxu0 %v4108
      %v4219 = vpop.f32.mrf.mxu0
      %v4220 = vadd.f32 %v1385, %v4219
      %v4221 = vpop.f32.mrf.mxu0
      %v4222 = vpop.f32.mrf.mxu0
      %v4223 = vadd.f32 %v1385, %v4222
      %v4224 = vpop.f32.mrf.mxu0
      %4225 = vmatprep.mubr.bf16.mxu0 0
      %4226 = vmatmul.mubr.bf16.gmra.mxu0 %v4111
      %v4227 = vpop.f32.mrf.mxu0
      %v4228 = vadd.f32 %v1385, %v4227
      %v4229 = vpop.f32.mrf.mxu0
      %v4230 = vpop.f32.mrf.mxu0
      %v4231 = vadd.f32 %v1385, %v4230
      %v4232 = vpop.f32.mrf.mxu0
      %4233 = vmatprep.mubr.bf16.mxu0 0
      %4234 = vmatmul.mubr.bf16.gmra.mxu0 %v4114
      %v4235 = vpop.f32.mrf.mxu0
      %v4236 = vadd.f32 %v1385, %v4235
      %v4237 = vpop.f32.mrf.mxu0
      %v4238 = vpop.f32.mrf.mxu0
      %v4239 = vadd.f32 %v1385, %v4238
      %v4240 = vpop.f32.mrf.mxu0
      %4241 = vmatprep.mubr.bf16.mxu0 0
      %4242 = vmatmul.mubr.bf16.gmra.mxu0 %v4117
      %v4243 = vpop.f32.mrf.mxu0
      %v4244 = vadd.f32 %v1385, %v4243
      %v4245 = vpop.f32.mrf.mxu0
      %v4246 = vpop.f32.mrf.mxu0
      %v4247 = vadd.f32 %v1385, %v4246
      %v4248 = vpop.f32.mrf.mxu0
      %4249 = vmatprep.mubr.bf16.mxu0 0
      %4250 = vmatmul.mubr.bf16.gmra.mxu0 %v4120
      %v4251 = vpop.f32.mrf.mxu0
      %v4252 = vadd.f32 %v1385, %v4251
      %v4253 = vpop.f32.mrf.mxu0
      %v4254 = vpop.f32.mrf.mxu0
      %v4255 = vadd.f32 %v1385, %v4254
      %v4256 = vpop.f32.mrf.mxu0
      %4257 = vmatprep.mubr.bf16.mxu0 0
      %4258 = vmatmul.mubr.bf16.gmra.mxu0 %v4123
      %v4259 = vpop.f32.mrf.mxu0
      %v4260 = vadd.f32 %v1385, %v4259
      %v4261 = vpop.f32.mrf.mxu0
      %v4262 = vpop.f32.mrf.mxu0
      %v4263 = vadd.f32 %v1385, %v4262
      %v4264 = vpop.f32.mrf.mxu0
      %4265 = vmatprep.mubr.bf16.mxu0 0
      %4266 = vmatmul.mubr.bf16.gmra.mxu0 %v4126
      %v4267 = vpop.f32.mrf.mxu0
      %v4268 = vadd.f32 %v1385, %v4267
      %v4269 = vpop.f32.mrf.mxu0
      %v4270 = vpop.f32.mrf.mxu0
      %v4271 = vadd.f32 %v1385, %v4270
      %v4272 = vpop.f32.mrf.mxu0
      %4273 = vmatprep.mubr.bf16.mxu0 0
      %4274 = vmatmul.mubr.bf16.gmra.mxu0 %v4129
      %v4275 = vpop.f32.mrf.mxu0
      %v4276 = vadd.f32 %v1385, %v4275
      %v4277 = vpop.f32.mrf.mxu0
      %v4278 = vpop.f32.mrf.mxu0
      %v4279 = vadd.f32 %v1385, %v4278
      %v4280 = vpop.f32.mrf.mxu0
      %4281 = vmatprep.mubr.bf16.mxu0 0
      %4282 = vmatmul.mubr.bf16.gmra.mxu0 %v4132
      %v4283 = vpop.f32.mrf.mxu0
      %v4284 = vadd.f32 %v1385, %v4283
      %v4285 = vpop.f32.mrf.mxu0
      %v4286 = vpop.f32.mrf.mxu0
      %v4287 = vadd.f32 %v1385, %v4286
      %v4288 = vpop.f32.mrf.mxu0
      %4289 = vmatprep.mubr.bf16.mxu0 0
      %4290 = vmatmul.mubr.bf16.gmra.mxu0 %v4135
      %v4291 = vpop.f32.mrf.mxu0
      %v4292 = vadd.f32 %v1385, %v4291
      %v4293 = vpop.f32.mrf.mxu0
      %v4294 = vpop.f32.mrf.mxu0
      %v4295 = vadd.f32 %v1385, %v4294
      %v4296 = vpop.f32.mrf.mxu0
      %4297 = vdwg.mxu0
      %v4298 = vmax.f32 %v4172, 0.0
      %v4299 = vmax.f32 %v4175, 0.0
      %v4300 = vmax.f32 %v4180, 0.0
      %v4301 = vmax.f32 %v4183, 0.0
      %v4302 = vmax.f32 %v4188, 0.0
      %v4303 = vmax.f32 %v4191, 0.0
      %v4304 = vmax.f32 %v4196, 0.0
      %v4305 = vmax.f32 %v4199, 0.0
      %v4306 = vmax.f32 %v4204, 0.0
      %v4307 = vmax.f32 %v4207, 0.0
      %v4308 = vmax.f32 %v4212, 0.0
      %v4309 = vmax.f32 %v4215, 0.0
      %v4310 = vmax.f32 %v4220, 0.0
      %v4311 = vmax.f32 %v4223, 0.0
      %v4312 = vmax.f32 %v4228, 0.0
      %v4313 = vmax.f32 %v4231, 0.0
      %v4314 = vmax.f32 %v4236, 0.0
      %v4315 = vmax.f32 %v4239, 0.0
      %v4316 = vmax.f32 %v4244, 0.0
      %v4317 = vmax.f32 %v4247, 0.0
      %v4318 = vmax.f32 %v4252, 0.0
      %v4319 = vmax.f32 %v4255, 0.0
      %v4320 = vmax.f32 %v4260, 0.0
      %v4321 = vmax.f32 %v4263, 0.0
      %v4322 = vmax.f32 %v4268, 0.0
      %v4323 = vmax.f32 %v4271, 0.0
      %v4324 = vmax.f32 %v4276, 0.0
      %v4325 = vmax.f32 %v4279, 0.0
      %v4326 = vmax.f32 %v4284, 0.0
      %v4327 = vmax.f32 %v4287, 0.0
      %v4328 = vmax.f32 %v4292, 0.0
      %v4329 = vmax.f32 %v4295, 0.0
      %v4330 = vmul.f32 %v4298, %v1657
      %v4331 = vmul.f32 %v4299, %v1657
      %v4332 = vmul.f32 %v4300, %v1657
      %v4333 = vmul.f32 %v4301, %v1657
      %v4334 = vmul.f32 %v4302, %v1657
      %v4335 = vmul.f32 %v4303, %v1657
      %v4336 = vmul.f32 %v4304, %v1657
      %v4337 = vmul.f32 %v4305, %v1657
      %v4338 = vmul.f32 %v4306, %v1657
      %v4339 = vmul.f32 %v4307, %v1657
      %v4340 = vmul.f32 %v4308, %v1657
      %v4341 = vmul.f32 %v4309, %v1657
      %v4342 = vmul.f32 %v4310, %v1657
      %v4343 = vmul.f32 %v4311, %v1657
      %v4344 = vmul.f32 %v4312, %v1657
      %v4345 = vmul.f32 %v4313, %v1657
      %v4346 = vmul.f32 %v4314, %v1657
      %v4347 = vmul.f32 %v4315, %v1657
      %v4348 = vmul.f32 %v4316, %v1657
      %v4349 = vmul.f32 %v4317, %v1657
      %v4350 = vmul.f32 %v4318, %v1657
      %v4351 = vmul.f32 %v4319, %v1657
      %v4352 = vmul.f32 %v4320, %v1657
      %v4353 = vmul.f32 %v4321, %v1657
      %v4354 = vmul.f32 %v4322, %v1657
      %v4355 = vmul.f32 %v4323, %v1657
      %v4356 = vmul.f32 %v4324, %v1657
      %v4357 = vmul.f32 %v4325, %v1657
      %v4358 = vmul.f32 %v4326, %v1657
      %v4359 = vmul.f32 %v4327, %v1657
      %v4360 = vmul.f32 %v4328, %v1657
      %v4361 = vmul.f32 %v4329, %v1657
      %v4362 = vsel %vm1411, %v4330, 0.0
      %4363 = vadd.xlane.f32.xlu0 %v4362
      %v4364 = vpop.xlane.xlu0 %4363
      %v4365 = vsel %vm1411, %v4331, 0.0
      %4366 = vadd.xlane.f32.xlu0 %v4365
      %v4367 = vpop.xlane.xlu0 %4366
      %v4368 = vsel %vm1411, %v4332, 0.0
      %4369 = vadd.xlane.f32.xlu0 %v4368
      %v4370 = vpop.xlane.xlu0 %4369
      %v4371 = vsel %vm1411, %v4333, 0.0
      %4372 = vadd.xlane.f32.xlu0 %v4371
      %v4373 = vpop.xlane.xlu0 %4372
      %v4374 = vsel %vm1411, %v4334, 0.0
      %4375 = vadd.xlane.f32.xlu0 %v4374
      %v4376 = vpop.xlane.xlu0 %4375
      %v4377 = vsel %vm1411, %v4335, 0.0
      %4378 = vadd.xlane.f32.xlu0 %v4377
      %v4379 = vpop.xlane.xlu0 %4378
      %v4380 = vsel %vm1411, %v4336, 0.0
      %4381 = vadd.xlane.f32.xlu0 %v4380
      %v4382 = vpop.xlane.xlu0 %4381
      %v4383 = vsel %vm1411, %v4337, 0.0
      %4384 = vadd.xlane.f32.xlu0 %v4383
      %v4385 = vpop.xlane.xlu0 %4384
      %v4386 = vsel %vm1411, %v4338, 0.0
      %4387 = vadd.xlane.f32.xlu0 %v4386
      %v4388 = vpop.xlane.xlu0 %4387
      %v4389 = vsel %vm1411, %v4339, 0.0
      %4390 = vadd.xlane.f32.xlu0 %v4389
      %v4391 = vpop.xlane.xlu0 %4390
      %v4392 = vsel %vm1411, %v4340, 0.0
      %4393 = vadd.xlane.f32.xlu0 %v4392
      %v4394 = vpop.xlane.xlu0 %4393
      %v4395 = vsel %vm1411, %v4341, 0.0
      %4396 = vadd.xlane.f32.xlu0 %v4395
      %v4397 = vpop.xlane.xlu0 %4396
      %v4398 = vsel %vm1411, %v4342, 0.0
      %4399 = vadd.xlane.f32.xlu0 %v4398
      %v4400 = vpop.xlane.xlu0 %4399
      %v4401 = vsel %vm1411, %v4343, 0.0
      %4402 = vadd.xlane.f32.xlu0 %v4401
      %v4403 = vpop.xlane.xlu0 %4402
      %v4404 = vsel %vm1411, %v4344, 0.0
      %4405 = vadd.xlane.f32.xlu0 %v4404
      %v4406 = vpop.xlane.xlu0 %4405
      %v4407 = vsel %vm1411, %v4345, 0.0
      %4408 = vadd.xlane.f32.xlu0 %v4407
      %v4409 = vpop.xlane.xlu0 %4408
      %v4410 = vsel %vm1411, %v4346, 0.0
      %4411 = vadd.xlane.f32.xlu0 %v4410
      %v4412 = vpop.xlane.xlu0 %4411
      %v4413 = vsel %vm1411, %v4347, 0.0
      %4414 = vadd.xlane.f32.xlu0 %v4413
      %v4415 = vpop.xlane.xlu0 %4414
      %v4416 = vsel %vm1411, %v4348, 0.0
      %4417 = vadd.xlane.f32.xlu0 %v4416
      %v4418 = vpop.xlane.xlu0 %4417
      %v4419 = vsel %vm1411, %v4349, 0.0
      %4420 = vadd.xlane.f32.xlu0 %v4419
      %v4421 = vpop.xlane.xlu0 %4420
      %v4422 = vsel %vm1411, %v4350, 0.0
      %4423 = vadd.xlane.f32.xlu0 %v4422
      %v4424 = vpop.xlane.xlu0 %4423
      %v4425 = vsel %vm1411, %v4351, 0.0
      %4426 = vadd.xlane.f32.xlu0 %v4425
      %v4427 = vpop.xlane.xlu0 %4426
      %v4428 = vsel %vm1411, %v4352, 0.0
      %4429 = vadd.xlane.f32.xlu0 %v4428
      %v4430 = vpop.xlane.xlu0 %4429
      %v4431 = vsel %vm1411, %v4353, 0.0
      %4432 = vadd.xlane.f32.xlu0 %v4431
      %v4433 = vpop.xlane.xlu0 %4432
      %v4434 = vsel %vm1411, %v4354, 0.0
      %4435 = vadd.xlane.f32.xlu0 %v4434
      %v4436 = vpop.xlane.xlu0 %4435
      %v4437 = vsel %vm1411, %v4355, 0.0
      %4438 = vadd.xlane.f32.xlu0 %v4437
      %v4439 = vpop.xlane.xlu0 %4438
      %v4440 = vsel %vm1411, %v4356, 0.0
      %4441 = vadd.xlane.f32.xlu0 %v4440
      %v4442 = vpop.xlane.xlu0 %4441
      %v4443 = vsel %vm1411, %v4357, 0.0
      %4444 = vadd.xlane.f32.xlu0 %v4443
      %v4445 = vpop.xlane.xlu0 %4444
      %v4446 = vsel %vm1411, %v4358, 0.0
      %4447 = vadd.xlane.f32.xlu0 %v4446
      %v4448 = vpop.xlane.xlu0 %4447
      %v4449 = vsel %vm1411, %v4359, 0.0
      %4450 = vadd.xlane.f32.xlu0 %v4449
      %v4451 = vpop.xlane.xlu0 %4450
      %v4452 = vsel %vm1411, %v4360, 0.0
      %4453 = vadd.xlane.f32.xlu0 %v4452
      %v4454 = vpop.xlane.xlu0 %4453
      %v4455 = vsel %vm1411, %v4361, 0.0
      %4456 = vadd.xlane.f32.xlu0 %v4455
      %v4457 = vpop.xlane.xlu0 %4456
      %v4458 = vadd.f32 %v4364, %v1791
      %v4459 = vadd.f32 %v4367, %v1791
      %v4460 = vadd.f32 %v4370, %v1791
      %v4461 = vadd.f32 %v4373, %v1791
      %v4462 = vadd.f32 %v4376, %v1791
      %v4463 = vadd.f32 %v4379, %v1791
      %v4464 = vadd.f32 %v4382, %v1791
      %v4465 = vadd.f32 %v4385, %v1791
      %v4466 = vadd.f32 %v4388, %v1791
      %v4467 = vadd.f32 %v4391, %v1791
      %v4468 = vadd.f32 %v4394, %v1791
      %v4469 = vadd.f32 %v4397, %v1791
      %v4470 = vadd.f32 %v4400, %v1791
      %v4471 = vadd.f32 %v4403, %v1791
      %v4472 = vadd.f32 %v4406, %v1791
      %v4473 = vadd.f32 %v4409, %v1791
      %v4474 = vadd.f32 %v4412, %v1791
      %v4475 = vadd.f32 %v4415, %v1791
      %v4476 = vadd.f32 %v4418, %v1791
      %v4477 = vadd.f32 %v4421, %v1791
      %v4478 = vadd.f32 %v4424, %v1791
      %v4479 = vadd.f32 %v4427, %v1791
      %v4480 = vadd.f32 %v4430, %v1791
      %v4481 = vadd.f32 %v4433, %v1791
      %v4482 = vadd.f32 %v4436, %v1791
      %v4483 = vadd.f32 %v4439, %v1791
      %v4484 = vadd.f32 %v4442, %v1791
      %v4485 = vadd.f32 %v4445, %v1791
      %v4486 = vadd.f32 %v4448, %v1791
      %v4487 = vadd.f32 %v4451, %v1791
      %v4488 = vadd.f32 %v4454, %v1791
      %v4489 = vadd.f32 %v4457, %v1791
      %v4490 = vadd.f32 %v3141, %v4458
      %v4491 = vadd.f32 %v3142, %v4459
      %v4492 = vadd.f32 %v3143, %v4460
      %v4493 = vadd.f32 %v3144, %v4461
      %v4494 = vadd.f32 %v3145, %v4462
      %v4495 = vadd.f32 %v3146, %v4463
      %v4496 = vadd.f32 %v3147, %v4464
      %v4497 = vadd.f32 %v3148, %v4465
      %v4498 = vadd.f32 %v3149, %v4466
      %v4499 = vadd.f32 %v3150, %v4467
      %v4500 = vadd.f32 %v3151, %v4468
      %v4501 = vadd.f32 %v3152, %v4469
      %v4502 = vadd.f32 %v3153, %v4470
      %v4503 = vadd.f32 %v3154, %v4471
      %v4504 = vadd.f32 %v3155, %v4472
      %v4505 = vadd.f32 %v3156, %v4473
      %v4506 = vadd.f32 %v3157, %v4474
      %v4507 = vadd.f32 %v3158, %v4475
      %v4508 = vadd.f32 %v3159, %v4476
      %v4509 = vadd.f32 %v3160, %v4477
      %v4510 = vadd.f32 %v3161, %v4478
      %v4511 = vadd.f32 %v3162, %v4479
      %v4512 = vadd.f32 %v3163, %v4480
      %v4513 = vadd.f32 %v3164, %v4481
      %v4514 = vadd.f32 %v3165, %v4482
      %v4515 = vadd.f32 %v3166, %v4483
      %v4516 = vadd.f32 %v3167, %v4484
      %v4517 = vadd.f32 %v3168, %v4485
      %v4518 = vadd.f32 %v3169, %v4486
      %v4519 = vadd.f32 %v3170, %v4487
      %v4520 = vadd.f32 %v3171, %v4488
      %v4521 = vadd.f32 %v3172, %v4489
      %s4522 = scalar_lea.vmem %s2, 32
      %v4523 = vld [vmem:[%s4522] sm:$0xf]
      %v4524 = vld [vmem:[%s4522 + $0x4] sm:$0xf]
      %v4525 = vld [vmem:[%s4522 + $0x8] sm:$0xf]
      %v4526 = vld [vmem:[%s4522 + $0xc] sm:$0xf]
      %v4531 = vunpack.c.l.b16 %v4523
      %v4532 = vunpack.c.l.b16 %v4524
      %v4533 = vunpack.c.l.b16 %v4525
      %v4534 = vunpack.c.l.b16 %v4526
      %v4535 = vpack.c.b16 %v4532, %v4531
      %v4536 = vpack.c.b16 %v4534, %v4533
      %4539 = vmatprep.subr.bf16.mxu0 0
      %4540 = vmatpush1.bf16.msra.mxu0 0
      %4541 = vmatprep.subr.bf16.mxu0 0
      %4542 = vmatpush1.bf16.msra.mxu0 0
      %4543 = vmatprep.subr.bf16.mxu0 0
      %4544 = vmatpush1.bf16.msra.mxu0 0
      %4545 = vmatprep.subr.bf16.mxu0 0
      %4546 = vmatpush1.bf16.msra.mxu0 0
      %4547 = vmatprep.subr.bf16.mxu0 0
      %4548 = vmatpush1.bf16.msra.mxu0 0
      %4549 = vmatprep.subr.bf16.mxu0 0
      %4550 = vmatpush1.bf16.msra.mxu0 0
      %4551 = vmatprep.subr.bf16.mxu0 0
      %4552 = vmatpush1.bf16.msra.mxu0 %v4536
      %4553 = vmatprep.subr.bf16.mxu0 0
      %4554 = vmatpush1.bf16.msra.mxu0 %v4535
      %4555 = vmatprep.subr.bf16.mxu0 0
      %4556 = vmatpush2.bf16.msra.mxu0 0
      %4557 = vmatprep.subr.bf16.mxu0 0
      %4558 = vmatpush2.bf16.msra.mxu0 0
      %4559 = vmatprep.subr.bf16.mxu0 0
      %4560 = vmatpush2.bf16.msra.mxu0 0
      %4561 = vmatprep.subr.bf16.mxu0 0
      %4562 = vmatpush2.bf16.msra.mxu0 0
      %4563 = vmatprep.subr.bf16.mxu0 0
      %4564 = vmatpush2.bf16.msra.mxu0 0
      %4565 = vmatprep.subr.bf16.mxu0 0
      %4566 = vmatpush2.bf16.msra.mxu0 0
      %4567 = vmatprep.subr.bf16.mxu0 0
      %4568 = vmatpush2.bf16.msra.mxu0 0
      %4569 = vmatprep.subr.bf16.mxu0 0
      %4570 = vmatpush2.bf16.msra.mxu0 0
      %4571 = vmatprep.mubr.bf16.mxu0 0
      %4572 = vmatmul.mubr.bf16.gmra.mxu0 %v3833
      %v4573 = vpop.f32.mrf.mxu0
      %v4574 = vadd.f32 0.0, %v4573
      %v4575 = vpop.f32.mrf.mxu0
      %v4576 = vpop.f32.mrf.mxu0
      %v4577 = vadd.f32 0.0, %v4576
      %v4578 = vpop.f32.mrf.mxu0
      %4579 = vmatprep.mubr.bf16.mxu0 0
      %4580 = vmatmul.mubr.bf16.gmra.mxu0 %v3836
      %v4581 = vpop.f32.mrf.mxu0
      %v4582 = vadd.f32 0.0, %v4581
      %v4583 = vpop.f32.mrf.mxu0
      %v4584 = vpop.f32.mrf.mxu0
      %v4585 = vadd.f32 0.0, %v4584
      %v4586 = vpop.f32.mrf.mxu0
      %4587 = vmatprep.mubr.bf16.mxu0 0
      %4588 = vmatmul.mubr.bf16.gmra.mxu0 %v3839
      %v4589 = vpop.f32.mrf.mxu0
      %v4590 = vadd.f32 0.0, %v4589
      %v4591 = vpop.f32.mrf.mxu0
      %v4592 = vpop.f32.mrf.mxu0
      %v4593 = vadd.f32 0.0, %v4592
      %v4594 = vpop.f32.mrf.mxu0
      %4595 = vmatprep.mubr.bf16.mxu0 0
      %4596 = vmatmul.mubr.bf16.gmra.mxu0 %v3842
      %v4597 = vpop.f32.mrf.mxu0
      %v4598 = vadd.f32 0.0, %v4597
      %v4599 = vpop.f32.mrf.mxu0
      %v4600 = vpop.f32.mrf.mxu0
      %v4601 = vadd.f32 0.0, %v4600
      %v4602 = vpop.f32.mrf.mxu0
      %4603 = vmatprep.mubr.bf16.mxu0 0
      %4604 = vmatmul.mubr.bf16.gmra.mxu0 %v3845
      %v4605 = vpop.f32.mrf.mxu0
      %v4606 = vadd.f32 0.0, %v4605
      %v4607 = vpop.f32.mrf.mxu0
      %v4608 = vpop.f32.mrf.mxu0
      %v4609 = vadd.f32 0.0, %v4608
      %v4610 = vpop.f32.mrf.mxu0
      %4611 = vmatprep.mubr.bf16.mxu0 0
      %4612 = vmatmul.mubr.bf16.gmra.mxu0 %v3848
      %v4613 = vpop.f32.mrf.mxu0
      %v4614 = vadd.f32 0.0, %v4613
      %v4615 = vpop.f32.mrf.mxu0
      %v4616 = vpop.f32.mrf.mxu0
      %v4617 = vadd.f32 0.0, %v4616
      %v4618 = vpop.f32.mrf.mxu0
      %4619 = vmatprep.mubr.bf16.mxu0 0
      %4620 = vmatmul.mubr.bf16.gmra.mxu0 %v3851
      %v4621 = vpop.f32.mrf.mxu0
      %v4622 = vadd.f32 0.0, %v4621
      %v4623 = vpop.f32.mrf.mxu0
      %v4624 = vpop.f32.mrf.mxu0
      %v4625 = vadd.f32 0.0, %v4624
      %v4626 = vpop.f32.mrf.mxu0
      %4627 = vmatprep.mubr.bf16.mxu0 0
      %4628 = vmatmul.mubr.bf16.gmra.mxu0 %v3854
      %v4629 = vpop.f32.mrf.mxu0
      %v4630 = vadd.f32 0.0, %v4629
      %v4631 = vpop.f32.mrf.mxu0
      %v4632 = vpop.f32.mrf.mxu0
      %v4633 = vadd.f32 0.0, %v4632
      %v4634 = vpop.f32.mrf.mxu0
      %4635 = vmatprep.mubr.bf16.mxu0 0
      %4636 = vmatmul.mubr.bf16.gmra.mxu0 %v3857
      %v4637 = vpop.f32.mrf.mxu0
      %v4638 = vadd.f32 0.0, %v4637
      %v4639 = vpop.f32.mrf.mxu0
      %v4640 = vpop.f32.mrf.mxu0
      %v4641 = vadd.f32 0.0, %v4640
      %v4642 = vpop.f32.mrf.mxu0
      %4643 = vmatprep.mubr.bf16.mxu0 0
      %4644 = vmatmul.mubr.bf16.gmra.mxu0 %v3860
      %v4645 = vpop.f32.mrf.mxu0
      %v4646 = vadd.f32 0.0, %v4645
      %v4647 = vpop.f32.mrf.mxu0
      %v4648 = vpop.f32.mrf.mxu0
      %v4649 = vadd.f32 0.0, %v4648
      %v4650 = vpop.f32.mrf.mxu0
      %4651 = vmatprep.mubr.bf16.mxu0 0
      %4652 = vmatmul.mubr.bf16.gmra.mxu0 %v3863
      %v4653 = vpop.f32.mrf.mxu0
      %v4654 = vadd.f32 0.0, %v4653
      %v4655 = vpop.f32.mrf.mxu0
      %v4656 = vpop.f32.mrf.mxu0
      %v4657 = vadd.f32 0.0, %v4656
      %v4658 = vpop.f32.mrf.mxu0
      %4659 = vmatprep.mubr.bf16.mxu0 0
      %4660 = vmatmul.mubr.bf16.gmra.mxu0 %v3866
      %v4661 = vpop.f32.mrf.mxu0
      %v4662 = vadd.f32 0.0, %v4661
      %v4663 = vpop.f32.mrf.mxu0
      %v4664 = vpop.f32.mrf.mxu0
      %v4665 = vadd.f32 0.0, %v4664
      %v4666 = vpop.f32.mrf.mxu0
      %4667 = vmatprep.mubr.bf16.mxu0 0
      %4668 = vmatmul.mubr.bf16.gmra.mxu0 %v3869
      %v4669 = vpop.f32.mrf.mxu0
      %v4670 = vadd.f32 0.0, %v4669
      %v4671 = vpop.f32.mrf.mxu0
      %v4672 = vpop.f32.mrf.mxu0
      %v4673 = vadd.f32 0.0, %v4672
      %v4674 = vpop.f32.mrf.mxu0
      %4675 = vmatprep.mubr.bf16.mxu0 0
      %4676 = vmatmul.mubr.bf16.gmra.mxu0 %v3872
      %v4677 = vpop.f32.mrf.mxu0
      %v4678 = vadd.f32 0.0, %v4677
      %v4679 = vpop.f32.mrf.mxu0
      %v4680 = vpop.f32.mrf.mxu0
      %v4681 = vadd.f32 0.0, %v4680
      %v4682 = vpop.f32.mrf.mxu0
      %4683 = vmatprep.mubr.bf16.mxu0 0
      %4684 = vmatmul.mubr.bf16.gmra.mxu0 %v3875
      %v4685 = vpop.f32.mrf.mxu0
      %v4686 = vadd.f32 0.0, %v4685
      %v4687 = vpop.f32.mrf.mxu0
      %v4688 = vpop.f32.mrf.mxu0
      %v4689 = vadd.f32 0.0, %v4688
      %v4690 = vpop.f32.mrf.mxu0
      %4691 = vmatprep.mubr.bf16.mxu0 0
      %4692 = vmatmul.mubr.bf16.gmra.mxu0 %v3878
      %v4693 = vpop.f32.mrf.mxu0
      %v4694 = vadd.f32 0.0, %v4693
      %v4695 = vpop.f32.mrf.mxu0
      %v4696 = vpop.f32.mrf.mxu0
      %v4697 = vadd.f32 0.0, %v4696
      %v4698 = vpop.f32.mrf.mxu0
      %4699 = vdwg.mxu0
      %v4700 = vpack.c.bf16 %v4577, %v4574
      %v4701 = vpack.c.bf16 %v4585, %v4582
      %v4702 = vpack.c.bf16 %v4593, %v4590
      %v4703 = vpack.c.bf16 %v4601, %v4598
      %v4704 = vpack.c.bf16 %v4609, %v4606
      %v4705 = vpack.c.bf16 %v4617, %v4614
      %v4706 = vpack.c.bf16 %v4625, %v4622
      %v4707 = vpack.c.bf16 %v4633, %v4630
      %v4708 = vpack.c.bf16 %v4641, %v4638
      %v4709 = vpack.c.bf16 %v4649, %v4646
      %v4710 = vpack.c.bf16 %v4657, %v4654
      %v4711 = vpack.c.bf16 %v4665, %v4662
      %v4712 = vpack.c.bf16 %v4673, %v4670
      %v4713 = vpack.c.bf16 %v4681, %v4678
      %v4714 = vpack.c.bf16 %v4689, %v4686
      %v4715 = vpack.c.bf16 %v4697, %v4694
      %4716 = vmatprep.subr.bf16.mxu0 0
      %4717 = vmatpush1.bf16.msra.mxu0 %v4707
      %4718 = vmatprep.subr.bf16.mxu0 0
      %4719 = vmatpush1.bf16.msra.mxu0 %v4706
      %4720 = vmatprep.subr.bf16.mxu0 0
      %4721 = vmatpush1.bf16.msra.mxu0 %v4705
      %4722 = vmatprep.subr.bf16.mxu0 0
      %4723 = vmatpush1.bf16.msra.mxu0 %v4704
      %4724 = vmatprep.subr.bf16.mxu0 0
      %4725 = vmatpush1.bf16.msra.mxu0 %v4703
      %4726 = vmatprep.subr.bf16.mxu0 0
      %4727 = vmatpush1.bf16.msra.mxu0 %v4702
      %4728 = vmatprep.subr.bf16.mxu0 0
      %4729 = vmatpush1.bf16.msra.mxu0 %v4701
      %4730 = vmatprep.subr.bf16.mxu0 0
      %4731 = vmatpush1.bf16.msra.mxu0 %v4700
      %4732 = vmatprep.subr.bf16.mxu0 0
      %4733 = vmatpush2.bf16.msra.mxu0 %v4715
      %4734 = vmatprep.subr.bf16.mxu0 0
      %4735 = vmatpush2.bf16.msra.mxu0 %v4714
      %4736 = vmatprep.subr.bf16.mxu0 0
      %4737 = vmatpush2.bf16.msra.mxu0 %v4713
      %4738 = vmatprep.subr.bf16.mxu0 0
      %4739 = vmatpush2.bf16.msra.mxu0 %v4712
      %4740 = vmatprep.subr.bf16.mxu0 0
      %4741 = vmatpush2.bf16.msra.mxu0 %v4711
      %4742 = vmatprep.subr.bf16.mxu0 0
      %4743 = vmatpush2.bf16.msra.mxu0 %v4710
      %4744 = vmatprep.subr.bf16.mxu0 0
      %4745 = vmatpush2.bf16.msra.mxu0 %v4709
      %4746 = vmatprep.subr.bf16.mxu0 0
      %4747 = vmatpush2.bf16.msra.mxu0 %v4708
      %4748 = vmatprep.mubr.bf16.mxu0 %v501
      %4749 = vmatmul.mubr.bf16.gmra.mxu0 %v500
      %v4750 = vpop.f32.mrf.mxu0
      %v4751 = vadd.f32 0.0, %v4750
      %v4752 = vpop.f32.mrf.mxu0
      %v4753 = vpop.f32.mrf.mxu0
      %v4754 = vadd.f32 0.0, %v4753
      %v4755 = vpop.f32.mrf.mxu0
      %4756 = vmatprep.mubr.bf16.mxu0 %v503
      %4757 = vmatmul.mubr.bf16.gmra.mxu0 %v502
      %v4758 = vpop.f32.mrf.mxu0
      %v4759 = vadd.f32 0.0, %v4758
      %v4760 = vpop.f32.mrf.mxu0
      %v4761 = vpop.f32.mrf.mxu0
      %v4762 = vadd.f32 0.0, %v4761
      %v4763 = vpop.f32.mrf.mxu0
      %4764 = vmatprep.mubr.bf16.mxu0 %v505
      %4765 = vmatmul.mubr.bf16.gmra.mxu0 %v504
      %v4766 = vpop.f32.mrf.mxu0
      %v4767 = vadd.f32 0.0, %v4766
      %v4768 = vpop.f32.mrf.mxu0
      %v4769 = vpop.f32.mrf.mxu0
      %v4770 = vadd.f32 0.0, %v4769
      %v4771 = vpop.f32.mrf.mxu0
      %4772 = vmatprep.mubr.bf16.mxu0 %v507
      %4773 = vmatmul.mubr.bf16.gmra.mxu0 %v506
      %v4774 = vpop.f32.mrf.mxu0
      %v4775 = vadd.f32 0.0, %v4774
      %v4776 = vpop.f32.mrf.mxu0
      %v4777 = vpop.f32.mrf.mxu0
      %v4778 = vadd.f32 0.0, %v4777
      %v4779 = vpop.f32.mrf.mxu0
      %4780 = vmatprep.mubr.bf16.mxu0 %v509
      %4781 = vmatmul.mubr.bf16.gmra.mxu0 %v508
      %v4782 = vpop.f32.mrf.mxu0
      %v4783 = vadd.f32 0.0, %v4782
      %v4784 = vpop.f32.mrf.mxu0
      %v4785 = vpop.f32.mrf.mxu0
      %v4786 = vadd.f32 0.0, %v4785
      %v4787 = vpop.f32.mrf.mxu0
      %4788 = vmatprep.mubr.bf16.mxu0 %v511
      %4789 = vmatmul.mubr.bf16.gmra.mxu0 %v510
      %v4790 = vpop.f32.mrf.mxu0
      %v4791 = vadd.f32 0.0, %v4790
      %v4792 = vpop.f32.mrf.mxu0
      %v4793 = vpop.f32.mrf.mxu0
      %v4794 = vadd.f32 0.0, %v4793
      %v4795 = vpop.f32.mrf.mxu0
      %4796 = vmatprep.mubr.bf16.mxu0 %v513
      %4797 = vmatmul.mubr.bf16.gmra.mxu0 %v512
      %v4798 = vpop.f32.mrf.mxu0
      %v4799 = vadd.f32 0.0, %v4798
      %v4800 = vpop.f32.mrf.mxu0
      %v4801 = vpop.f32.mrf.mxu0
      %v4802 = vadd.f32 0.0, %v4801
      %v4803 = vpop.f32.mrf.mxu0
      %4804 = vmatprep.mubr.bf16.mxu0 %v515
      %4805 = vmatmul.mubr.bf16.gmra.mxu0 %v514
      %v4806 = vpop.f32.mrf.mxu0
      %v4807 = vadd.f32 0.0, %v4806
      %v4808 = vpop.f32.mrf.mxu0
      %v4809 = vpop.f32.mrf.mxu0
      %v4810 = vadd.f32 0.0, %v4809
      %v4811 = vpop.f32.mrf.mxu0
      %4812 = vmatprep.mubr.bf16.mxu0 %v517
      %4813 = vmatmul.mubr.bf16.gmra.mxu0 %v516
      %v4814 = vpop.f32.mrf.mxu0
      %v4815 = vadd.f32 0.0, %v4814
      %v4816 = vpop.f32.mrf.mxu0
      %v4817 = vpop.f32.mrf.mxu0
      %v4818 = vadd.f32 0.0, %v4817
      %v4819 = vpop.f32.mrf.mxu0
      %4820 = vmatprep.mubr.bf16.mxu0 %v519
      %4821 = vmatmul.mubr.bf16.gmra.mxu0 %v518
      %v4822 = vpop.f32.mrf.mxu0
      %v4823 = vadd.f32 0.0, %v4822
      %v4824 = vpop.f32.mrf.mxu0
      %v4825 = vpop.f32.mrf.mxu0
      %v4826 = vadd.f32 0.0, %v4825
      %v4827 = vpop.f32.mrf.mxu0
      %4828 = vmatprep.mubr.bf16.mxu0 %v521
      %4829 = vmatmul.mubr.bf16.gmra.mxu0 %v520
      %v4830 = vpop.f32.mrf.mxu0
      %v4831 = vadd.f32 0.0, %v4830
      %v4832 = vpop.f32.mrf.mxu0
      %v4833 = vpop.f32.mrf.mxu0
      %v4834 = vadd.f32 0.0, %v4833
      %v4835 = vpop.f32.mrf.mxu0
      %4836 = vmatprep.mubr.bf16.mxu0 %v523
      %4837 = vmatmul.mubr.bf16.gmra.mxu0 %v522
      %v4838 = vpop.f32.mrf.mxu0
      %v4839 = vadd.f32 0.0, %v4838
      %v4840 = vpop.f32.mrf.mxu0
      %v4841 = vpop.f32.mrf.mxu0
      %v4842 = vadd.f32 0.0, %v4841
      %v4843 = vpop.f32.mrf.mxu0
      %4844 = vmatprep.mubr.bf16.mxu0 %v525
      %4845 = vmatmul.mubr.bf16.gmra.mxu0 %v524
      %v4846 = vpop.f32.mrf.mxu0
      %v4847 = vadd.f32 0.0, %v4846
      %v4848 = vpop.f32.mrf.mxu0
      %v4849 = vpop.f32.mrf.mxu0
      %v4850 = vadd.f32 0.0, %v4849
      %v4851 = vpop.f32.mrf.mxu0
      %4852 = vmatprep.mubr.bf16.mxu0 %v527
      %4853 = vmatmul.mubr.bf16.gmra.mxu0 %v526
      %v4854 = vpop.f32.mrf.mxu0
      %v4855 = vadd.f32 0.0, %v4854
      %v4856 = vpop.f32.mrf.mxu0
      %v4857 = vpop.f32.mrf.mxu0
      %v4858 = vadd.f32 0.0, %v4857
      %v4859 = vpop.f32.mrf.mxu0
      %4860 = vmatprep.mubr.bf16.mxu0 %v529
      %4861 = vmatmul.mubr.bf16.gmra.mxu0 %v528
      %v4862 = vpop.f32.mrf.mxu0
      %v4863 = vadd.f32 0.0, %v4862
      %v4864 = vpop.f32.mrf.mxu0
      %v4865 = vpop.f32.mrf.mxu0
      %v4866 = vadd.f32 0.0, %v4865
      %v4867 = vpop.f32.mrf.mxu0
      %4868 = vmatprep.mubr.bf16.mxu0 %v531
      %4869 = vmatmul.mubr.bf16.gmra.mxu0 %v530
      %v4870 = vpop.f32.mrf.mxu0
      %v4871 = vadd.f32 0.0, %v4870
      %v4872 = vpop.f32.mrf.mxu0
      %v4873 = vpop.f32.mrf.mxu0
      %v4874 = vadd.f32 0.0, %v4873
      %v4875 = vpop.f32.mrf.mxu0
      %4876 = vdwg.mxu0
      %v4877 = vmax.f32 %v4751, 0.0
      %v4878 = vmax.f32 %v4754, 0.0
      %v4879 = vmax.f32 %v4759, 0.0
      %v4880 = vmax.f32 %v4762, 0.0
      %v4881 = vmax.f32 %v4767, 0.0
      %v4882 = vmax.f32 %v4770, 0.0
      %v4883 = vmax.f32 %v4775, 0.0
      %v4884 = vmax.f32 %v4778, 0.0
      %v4885 = vmax.f32 %v4783, 0.0
      %v4886 = vmax.f32 %v4786, 0.0
      %v4887 = vmax.f32 %v4791, 0.0
      %v4888 = vmax.f32 %v4794, 0.0
      %v4889 = vmax.f32 %v4799, 0.0
      %v4890 = vmax.f32 %v4802, 0.0
      %v4891 = vmax.f32 %v4807, 0.0
      %v4892 = vmax.f32 %v4810, 0.0
      %v4893 = vmax.f32 %v4815, 0.0
      %v4894 = vmax.f32 %v4818, 0.0
      %v4895 = vmax.f32 %v4823, 0.0
      %v4896 = vmax.f32 %v4826, 0.0
      %v4897 = vmax.f32 %v4831, 0.0
      %v4898 = vmax.f32 %v4834, 0.0
      %v4899 = vmax.f32 %v4839, 0.0
      %v4900 = vmax.f32 %v4842, 0.0
      %v4901 = vmax.f32 %v4847, 0.0
      %v4902 = vmax.f32 %v4850, 0.0
      %v4903 = vmax.f32 %v4855, 0.0
      %v4904 = vmax.f32 %v4858, 0.0
      %v4905 = vmax.f32 %v4863, 0.0
      %v4906 = vmax.f32 %v4866, 0.0
      %v4907 = vmax.f32 %v4871, 0.0
      %v4908 = vmax.f32 %v4874, 0.0
      %v4909 = vmul.f32 %v4877, %v4877
      %v4910 = vmul.f32 %v4878, %v4878
      %v4911 = vmul.f32 %v4879, %v4879
      %v4912 = vmul.f32 %v4880, %v4880
      %v4913 = vmul.f32 %v4881, %v4881
      %v4914 = vmul.f32 %v4882, %v4882
      %v4915 = vmul.f32 %v4883, %v4883
      %v4916 = vmul.f32 %v4884, %v4884
      %v4917 = vmul.f32 %v4885, %v4885
      %v4918 = vmul.f32 %v4886, %v4886
      %v4919 = vmul.f32 %v4887, %v4887
      %v4920 = vmul.f32 %v4888, %v4888
      %v4921 = vmul.f32 %v4889, %v4889
      %v4922 = vmul.f32 %v4890, %v4890
      %v4923 = vmul.f32 %v4891, %v4891
      %v4924 = vmul.f32 %v4892, %v4892
      %v4925 = vmul.f32 %v4893, %v4893
      %v4926 = vmul.f32 %v4894, %v4894
      %v4927 = vmul.f32 %v4895, %v4895
      %v4928 = vmul.f32 %v4896, %v4896
      %v4929 = vmul.f32 %v4897, %v4897
      %v4930 = vmul.f32 %v4898, %v4898
      %v4931 = vmul.f32 %v4899, %v4899
      %v4932 = vmul.f32 %v4900, %v4900
      %v4933 = vmul.f32 %v4901, %v4901
      %v4934 = vmul.f32 %v4902, %v4902
      %v4935 = vmul.f32 %v4903, %v4903
      %v4936 = vmul.f32 %v4904, %v4904
      %v4937 = vmul.f32 %v4905, %v4905
      %v4938 = vmul.f32 %v4906, %v4906
      %v4939 = vmul.f32 %v4907, %v4907
      %v4940 = vmul.f32 %v4908, %v4908
      %v4941 = vsel %vm885, %v4909, 0.0
      %4942 = vadd.xlane.f32.xlu0 %v4941
      %v4943 = vpop.xlane.xlu0 %4942
      %v4944 = vsel %vm885, %v4910, 0.0
      %4945 = vadd.xlane.f32.xlu0 %v4944
      %v4946 = vpop.xlane.xlu0 %4945
      %v4947 = vsel %vm885, %v4911, 0.0
      %4948 = vadd.xlane.f32.xlu0 %v4947
      %v4949 = vpop.xlane.xlu0 %4948
      %v4950 = vsel %vm885, %v4912, 0.0
      %4951 = vadd.xlane.f32.xlu0 %v4950
      %v4952 = vpop.xlane.xlu0 %4951
      %v4953 = vsel %vm885, %v4913, 0.0
      %4954 = vadd.xlane.f32.xlu0 %v4953
      %v4955 = vpop.xlane.xlu0 %4954
      %v4956 = vsel %vm885, %v4914, 0.0
      %4957 = vadd.xlane.f32.xlu0 %v4956
      %v4958 = vpop.xlane.xlu0 %4957
      %v4959 = vsel %vm885, %v4915, 0.0
      %4960 = vadd.xlane.f32.xlu0 %v4959
      %v4961 = vpop.xlane.xlu0 %4960
      %v4962 = vsel %vm885, %v4916, 0.0
      %4963 = vadd.xlane.f32.xlu0 %v4962
      %v4964 = vpop.xlane.xlu0 %4963
      %v4965 = vsel %vm885, %v4917, 0.0
      %4966 = vadd.xlane.f32.xlu0 %v4965
      %v4967 = vpop.xlane.xlu0 %4966
      %v4968 = vsel %vm885, %v4918, 0.0
      %4969 = vadd.xlane.f32.xlu0 %v4968
      %v4970 = vpop.xlane.xlu0 %4969
      %v4971 = vsel %vm885, %v4919, 0.0
      %4972 = vadd.xlane.f32.xlu0 %v4971
      %v4973 = vpop.xlane.xlu0 %4972
      %v4974 = vsel %vm885, %v4920, 0.0
      %4975 = vadd.xlane.f32.xlu0 %v4974
      %v4976 = vpop.xlane.xlu0 %4975
      %v4977 = vsel %vm885, %v4921, 0.0
      %4978 = vadd.xlane.f32.xlu0 %v4977
      %v4979 = vpop.xlane.xlu0 %4978
      %v4980 = vsel %vm885, %v4922, 0.0
      %4981 = vadd.xlane.f32.xlu0 %v4980
      %v4982 = vpop.xlane.xlu0 %4981
      %v4983 = vsel %vm885, %v4923, 0.0
      %4984 = vadd.xlane.f32.xlu0 %v4983
      %v4985 = vpop.xlane.xlu0 %4984
      %v4986 = vsel %vm885, %v4924, 0.0
      %4987 = vadd.xlane.f32.xlu0 %v4986
      %v4988 = vpop.xlane.xlu0 %4987
      %v4989 = vsel %vm885, %v4925, 0.0
      %4990 = vadd.xlane.f32.xlu0 %v4989
      %v4991 = vpop.xlane.xlu0 %4990
      %v4992 = vsel %vm885, %v4926, 0.0
      %4993 = vadd.xlane.f32.xlu0 %v4992
      %v4994 = vpop.xlane.xlu0 %4993
      %v4995 = vsel %vm885, %v4927, 0.0
      %4996 = vadd.xlane.f32.xlu0 %v4995
      %v4997 = vpop.xlane.xlu0 %4996
      %v4998 = vsel %vm885, %v4928, 0.0
      %4999 = vadd.xlane.f32.xlu0 %v4998
      %v5000 = vpop.xlane.xlu0 %4999
      %v5001 = vsel %vm885, %v4929, 0.0
      %5002 = vadd.xlane.f32.xlu0 %v5001
      %v5003 = vpop.xlane.xlu0 %5002
      %v5004 = vsel %vm885, %v4930, 0.0
      %5005 = vadd.xlane.f32.xlu0 %v5004
      %v5006 = vpop.xlane.xlu0 %5005
      %v5007 = vsel %vm885, %v4931, 0.0
      %5008 = vadd.xlane.f32.xlu0 %v5007
      %v5009 = vpop.xlane.xlu0 %5008
      %v5010 = vsel %vm885, %v4932, 0.0
      %5011 = vadd.xlane.f32.xlu0 %v5010
      %v5012 = vpop.xlane.xlu0 %5011
      %v5013 = vsel %vm885, %v4933, 0.0
      %5014 = vadd.xlane.f32.xlu0 %v5013
      %v5015 = vpop.xlane.xlu0 %5014
      %v5016 = vsel %vm885, %v4934, 0.0
      %5017 = vadd.xlane.f32.xlu0 %v5016
      %v5018 = vpop.xlane.xlu0 %5017
      %v5019 = vsel %vm885, %v4935, 0.0
      %5020 = vadd.xlane.f32.xlu0 %v5019
      %v5021 = vpop.xlane.xlu0 %5020
      %v5022 = vsel %vm885, %v4936, 0.0
      %5023 = vadd.xlane.f32.xlu0 %v5022
      %v5024 = vpop.xlane.xlu0 %5023
      %v5025 = vsel %vm885, %v4937, 0.0
      %5026 = vadd.xlane.f32.xlu0 %v5025
      %v5027 = vpop.xlane.xlu0 %5026
      %v5028 = vsel %vm885, %v4938, 0.0
      %5029 = vadd.xlane.f32.xlu0 %v5028
      %v5030 = vpop.xlane.xlu0 %5029
      %v5031 = vsel %vm885, %v4939, 0.0
      %5032 = vadd.xlane.f32.xlu0 %v5031
      %v5033 = vpop.xlane.xlu0 %5032
      %v5034 = vsel %vm885, %v4940, 0.0
      %5035 = vadd.xlane.f32.xlu0 %v5034
      %v5036 = vpop.xlane.xlu0 %5035
      %v5037 = vmax.f32 %v4943, 1e-24
      %v5038 = vmax.f32 %v4946, 1e-24
      %v5039 = vmax.f32 %v4949, 1e-24
      %v5040 = vmax.f32 %v4952, 1e-24
      %v5041 = vmax.f32 %v4955, 1e-24
      %v5042 = vmax.f32 %v4958, 1e-24
      %v5043 = vmax.f32 %v4961, 1e-24
      %v5044 = vmax.f32 %v4964, 1e-24
      %v5045 = vmax.f32 %v4967, 1e-24
      %v5046 = vmax.f32 %v4970, 1e-24
      %v5047 = vmax.f32 %v4973, 1e-24
      %v5048 = vmax.f32 %v4976, 1e-24
      %v5049 = vmax.f32 %v4979, 1e-24
      %v5050 = vmax.f32 %v4982, 1e-24
      %v5051 = vmax.f32 %v4985, 1e-24
      %v5052 = vmax.f32 %v4988, 1e-24
      %v5053 = vmax.f32 %v4991, 1e-24
      %v5054 = vmax.f32 %v4994, 1e-24
      %v5055 = vmax.f32 %v4997, 1e-24
      %v5056 = vmax.f32 %v5000, 1e-24
      %v5057 = vmax.f32 %v5003, 1e-24
      %v5058 = vmax.f32 %v5006, 1e-24
      %v5059 = vmax.f32 %v5009, 1e-24
      %v5060 = vmax.f32 %v5012, 1e-24
      %v5061 = vmax.f32 %v5015, 1e-24
      %v5062 = vmax.f32 %v5018, 1e-24
      %v5063 = vmax.f32 %v5021, 1e-24
      %v5064 = vmax.f32 %v5024, 1e-24
      %v5065 = vmax.f32 %v5027, 1e-24
      %v5066 = vmax.f32 %v5030, 1e-24
      %v5067 = vmax.f32 %v5033, 1e-24
      %v5068 = vmax.f32 %v5036, 1e-24
      %v5069 = vrsqrt.pop %v5037
      %v5070 = vrsqrt.pop %v5038
      %v5071 = vrsqrt.pop %v5039
      %v5072 = vrsqrt.pop %v5040
      %v5073 = vrsqrt.pop %v5041
      %v5074 = vrsqrt.pop %v5042
      %v5075 = vrsqrt.pop %v5043
      %v5076 = vrsqrt.pop %v5044
      %v5077 = vrsqrt.pop %v5045
      %v5078 = vrsqrt.pop %v5046
      %v5079 = vrsqrt.pop %v5047
      %v5080 = vrsqrt.pop %v5048
      %v5081 = vrsqrt.pop %v5049
      %v5082 = vrsqrt.pop %v5050
      %v5083 = vrsqrt.pop %v5051
      %v5084 = vrsqrt.pop %v5052
      %v5085 = vrsqrt.pop %v5053
      %v5086 = vrsqrt.pop %v5054
      %v5087 = vrsqrt.pop %v5055
      %v5088 = vrsqrt.pop %v5056
      %v5089 = vrsqrt.pop %v5057
      %v5090 = vrsqrt.pop %v5058
      %v5091 = vrsqrt.pop %v5059
      %v5092 = vrsqrt.pop %v5060
      %v5093 = vrsqrt.pop %v5061
      %v5094 = vrsqrt.pop %v5062
      %v5095 = vrsqrt.pop %v5063
      %v5096 = vrsqrt.pop %v5064
      %v5097 = vrsqrt.pop %v5065
      %v5098 = vrsqrt.pop %v5066
      %v5099 = vrsqrt.pop %v5067
      %v5100 = vrsqrt.pop %v5068
      %v5101 = vmul.f32 %v4877, %v5069
      %v5102 = vmul.f32 %v4878, %v5070
      %v5103 = vmul.f32 %v4879, %v5071
      %v5104 = vmul.f32 %v4880, %v5072
      %v5105 = vmul.f32 %v4881, %v5073
      %v5106 = vmul.f32 %v4882, %v5074
      %v5107 = vmul.f32 %v4883, %v5075
      %v5108 = vmul.f32 %v4884, %v5076
      %v5109 = vmul.f32 %v4885, %v5077
      %v5110 = vmul.f32 %v4886, %v5078
      %v5111 = vmul.f32 %v4887, %v5079
      %v5112 = vmul.f32 %v4888, %v5080
      %v5113 = vmul.f32 %v4889, %v5081
      %v5114 = vmul.f32 %v4890, %v5082
      %v5115 = vmul.f32 %v4891, %v5083
      %v5116 = vmul.f32 %v4892, %v5084
      %v5117 = vmul.f32 %v4893, %v5085
      %v5118 = vmul.f32 %v4894, %v5086
      %v5119 = vmul.f32 %v4895, %v5087
      %v5120 = vmul.f32 %v4896, %v5088
      %v5121 = vmul.f32 %v4897, %v5089
      %v5122 = vmul.f32 %v4898, %v5090
      %v5123 = vmul.f32 %v4899, %v5091
      %v5124 = vmul.f32 %v4900, %v5092
      %v5125 = vmul.f32 %v4901, %v5093
      %v5126 = vmul.f32 %v4902, %v5094
      %v5127 = vmul.f32 %v4903, %v5095
      %v5128 = vmul.f32 %v4904, %v5096
      %v5129 = vmul.f32 %v4905, %v5097
      %v5130 = vmul.f32 %v4906, %v5098
      %v5131 = vmul.f32 %v4907, %v5099
      %v5132 = vmul.f32 %v4908, %v5100
      %v5133 = vadd.f32 %v3784, %v5101
      %v5134 = vadd.f32 %v3785, %v5102
      %v5135 = vadd.f32 %v3786, %v5103
      %v5136 = vadd.f32 %v3787, %v5104
      %v5137 = vadd.f32 %v3788, %v5105
      %v5138 = vadd.f32 %v3789, %v5106
      %v5139 = vadd.f32 %v3790, %v5107
      %v5140 = vadd.f32 %v3791, %v5108
      %v5141 = vadd.f32 %v3792, %v5109
      %v5142 = vadd.f32 %v3793, %v5110
      %v5143 = vadd.f32 %v3794, %v5111
      %v5144 = vadd.f32 %v3795, %v5112
      %v5145 = vadd.f32 %v3796, %v5113
      %v5146 = vadd.f32 %v3797, %v5114
      %v5147 = vadd.f32 %v3798, %v5115
      %v5148 = vadd.f32 %v3799, %v5116
      %v5149 = vadd.f32 %v3800, %v5117
      %v5150 = vadd.f32 %v3801, %v5118
      %v5151 = vadd.f32 %v3802, %v5119
      %v5152 = vadd.f32 %v3803, %v5120
      %v5153 = vadd.f32 %v3804, %v5121
      %v5154 = vadd.f32 %v3805, %v5122
      %v5155 = vadd.f32 %v3806, %v5123
      %v5156 = vadd.f32 %v3807, %v5124
      %v5157 = vadd.f32 %v3808, %v5125
      %v5158 = vadd.f32 %v3809, %v5126
      %v5159 = vadd.f32 %v3810, %v5127
      %v5160 = vadd.f32 %v3811, %v5128
      %v5161 = vadd.f32 %v3812, %v5129
      %v5162 = vadd.f32 %v3813, %v5130
      %v5163 = vadd.f32 %v3814, %v5131
      %v5164 = vadd.f32 %v3815, %v5132
      %v5165 = vpack.c.bf16 %v5102, %v5101
      %v5166 = vpack.c.bf16 %v5104, %v5103
      %v5167 = vpack.c.bf16 %v5106, %v5105
      %v5168 = vpack.c.bf16 %v5108, %v5107
      %v5169 = vpack.c.bf16 %v5110, %v5109
      %v5170 = vpack.c.bf16 %v5112, %v5111
      %v5171 = vpack.c.bf16 %v5114, %v5113
      %v5172 = vpack.c.bf16 %v5116, %v5115
      %v5173 = vpack.c.bf16 %v5118, %v5117
      %v5174 = vpack.c.bf16 %v5120, %v5119
      %v5175 = vpack.c.bf16 %v5122, %v5121
      %v5176 = vpack.c.bf16 %v5124, %v5123
      %v5177 = vpack.c.bf16 %v5126, %v5125
      %v5178 = vpack.c.bf16 %v5128, %v5127
      %v5179 = vpack.c.bf16 %v5130, %v5129
      %v5180 = vpack.c.bf16 %v5132, %v5131
      %v5182 = vsel %vm885, %v5165, 0
      %v5185 = vsel %vm885, %v5166, 0
      %v5188 = vsel %vm885, %v5167, 0
      %v5191 = vsel %vm885, %v5168, 0
      %v5194 = vsel %vm885, %v5169, 0
      %v5197 = vsel %vm885, %v5170, 0
      %v5200 = vsel %vm885, %v5171, 0
      %v5203 = vsel %vm885, %v5172, 0
      %v5206 = vsel %vm885, %v5173, 0
      %v5209 = vsel %vm885, %v5174, 0
      %v5212 = vsel %vm885, %v5175, 0
      %v5215 = vsel %vm885, %v5176, 0
      %v5218 = vsel %vm885, %v5177, 0
      %v5221 = vsel %vm885, %v5178, 0
      %v5224 = vsel %vm885, %v5179, 0
      %v5227 = vsel %vm885, %v5180, 0
      %5229 = vmatprep.subr.bf16.mxu0 0
      %5230 = vmatpush1.bf16.msra.mxu0 0
      %5231 = vmatprep.subr.bf16.mxu0 0
      %5232 = vmatpush1.bf16.msra.mxu0 0
      %5233 = vmatprep.subr.bf16.mxu0 0
      %5234 = vmatpush1.bf16.msra.mxu0 0
      %5235 = vmatprep.subr.bf16.mxu0 0
      %5236 = vmatpush1.bf16.msra.mxu0 0
      %5237 = vmatprep.subr.bf16.mxu0 0
      %5238 = vmatpush1.bf16.msra.mxu0 0
      %5239 = vmatprep.subr.bf16.mxu0 0
      %5240 = vmatpush1.bf16.msra.mxu0 0
      %5241 = vmatprep.subr.bf16.mxu0 0
      %5242 = vmatpush1.bf16.msra.mxu0 %v1113
      %5243 = vmatprep.subr.bf16.mxu0 0
      %5244 = vmatpush1.bf16.msra.mxu0 %v1112
      %5245 = vmatprep.subr.bf16.mxu0 0
      %5246 = vmatpush2.bf16.msra.mxu0 0
      %5247 = vmatprep.subr.bf16.mxu0 0
      %5248 = vmatpush2.bf16.msra.mxu0 0
      %5249 = vmatprep.subr.bf16.mxu0 0
      %5250 = vmatpush2.bf16.msra.mxu0 0
      %5251 = vmatprep.subr.bf16.mxu0 0
      %5252 = vmatpush2.bf16.msra.mxu0 0
      %5253 = vmatprep.subr.bf16.mxu0 0
      %5254 = vmatpush2.bf16.msra.mxu0 0
      %5255 = vmatprep.subr.bf16.mxu0 0
      %5256 = vmatpush2.bf16.msra.mxu0 0
      %5257 = vmatprep.subr.bf16.mxu0 0
      %5258 = vmatpush2.bf16.msra.mxu0 0
      %5259 = vmatprep.subr.bf16.mxu0 0
      %5260 = vmatpush2.bf16.msra.mxu0 0
      %5261 = vmatprep.mubr.bf16.mxu0 0
      %5262 = vmatmul.mubr.bf16.gmra.mxu0 %v5182
      %v5263 = vpop.f32.mrf.mxu0
      %v5264 = vadd.f32 %v1102, %v5263
      %v5265 = vpop.f32.mrf.mxu0
      %v5266 = vpop.f32.mrf.mxu0
      %v5267 = vadd.f32 %v1102, %v5266
      %v5268 = vpop.f32.mrf.mxu0
      %5269 = vmatprep.mubr.bf16.mxu0 0
      %5270 = vmatmul.mubr.bf16.gmra.mxu0 %v5185
      %v5271 = vpop.f32.mrf.mxu0
      %v5272 = vadd.f32 %v1102, %v5271
      %v5273 = vpop.f32.mrf.mxu0
      %v5274 = vpop.f32.mrf.mxu0
      %v5275 = vadd.f32 %v1102, %v5274
      %v5276 = vpop.f32.mrf.mxu0
      %5277 = vmatprep.mubr.bf16.mxu0 0
      %5278 = vmatmul.mubr.bf16.gmra.mxu0 %v5188
      %v5279 = vpop.f32.mrf.mxu0
      %v5280 = vadd.f32 %v1102, %v5279
      %v5281 = vpop.f32.mrf.mxu0
      %v5282 = vpop.f32.mrf.mxu0
      %v5283 = vadd.f32 %v1102, %v5282
      %v5284 = vpop.f32.mrf.mxu0
      %5285 = vmatprep.mubr.bf16.mxu0 0
      %5286 = vmatmul.mubr.bf16.gmra.mxu0 %v5191
      %v5287 = vpop.f32.mrf.mxu0
      %v5288 = vadd.f32 %v1102, %v5287
      %v5289 = vpop.f32.mrf.mxu0
      %v5290 = vpop.f32.mrf.mxu0
      %v5291 = vadd.f32 %v1102, %v5290
      %v5292 = vpop.f32.mrf.mxu0
      %5293 = vmatprep.mubr.bf16.mxu0 0
      %5294 = vmatmul.mubr.bf16.gmra.mxu0 %v5194
      %v5295 = vpop.f32.mrf.mxu0
      %v5296 = vadd.f32 %v1102, %v5295
      %v5297 = vpop.f32.mrf.mxu0
      %v5298 = vpop.f32.mrf.mxu0
      %v5299 = vadd.f32 %v1102, %v5298
      %v5300 = vpop.f32.mrf.mxu0
      %5301 = vmatprep.mubr.bf16.mxu0 0
      %5302 = vmatmul.mubr.bf16.gmra.mxu0 %v5197
      %v5303 = vpop.f32.mrf.mxu0
      %v5304 = vadd.f32 %v1102, %v5303
      %v5305 = vpop.f32.mrf.mxu0
      %v5306 = vpop.f32.mrf.mxu0
      %v5307 = vadd.f32 %v1102, %v5306
      %v5308 = vpop.f32.mrf.mxu0
      %5309 = vmatprep.mubr.bf16.mxu0 0
      %5310 = vmatmul.mubr.bf16.gmra.mxu0 %v5200
      %v5311 = vpop.f32.mrf.mxu0
      %v5312 = vadd.f32 %v1102, %v5311
      %v5313 = vpop.f32.mrf.mxu0
      %v5314 = vpop.f32.mrf.mxu0
      %v5315 = vadd.f32 %v1102, %v5314
      %v5316 = vpop.f32.mrf.mxu0
      %5317 = vmatprep.mubr.bf16.mxu0 0
      %5318 = vmatmul.mubr.bf16.gmra.mxu0 %v5203
      %v5319 = vpop.f32.mrf.mxu0
      %v5320 = vadd.f32 %v1102, %v5319
      %v5321 = vpop.f32.mrf.mxu0
      %v5322 = vpop.f32.mrf.mxu0
      %v5323 = vadd.f32 %v1102, %v5322
      %v5324 = vpop.f32.mrf.mxu0
      %5325 = vmatprep.mubr.bf16.mxu0 0
      %5326 = vmatmul.mubr.bf16.gmra.mxu0 %v5206
      %v5327 = vpop.f32.mrf.mxu0
      %v5328 = vadd.f32 %v1102, %v5327
      %v5329 = vpop.f32.mrf.mxu0
      %v5330 = vpop.f32.mrf.mxu0
      %v5331 = vadd.f32 %v1102, %v5330
      %v5332 = vpop.f32.mrf.mxu0
      %5333 = vmatprep.mubr.bf16.mxu0 0
      %5334 = vmatmul.mubr.bf16.gmra.mxu0 %v5209
      %v5335 = vpop.f32.mrf.mxu0
      %v5336 = vadd.f32 %v1102, %v5335
      %v5337 = vpop.f32.mrf.mxu0
      %v5338 = vpop.f32.mrf.mxu0
      %v5339 = vadd.f32 %v1102, %v5338
      %v5340 = vpop.f32.mrf.mxu0
      %5341 = vmatprep.mubr.bf16.mxu0 0
      %5342 = vmatmul.mubr.bf16.gmra.mxu0 %v5212
      %v5343 = vpop.f32.mrf.mxu0
      %v5344 = vadd.f32 %v1102, %v5343
      %v5345 = vpop.f32.mrf.mxu0
      %v5346 = vpop.f32.mrf.mxu0
      %v5347 = vadd.f32 %v1102, %v5346
      %v5348 = vpop.f32.mrf.mxu0
      %5349 = vmatprep.mubr.bf16.mxu0 0
      %5350 = vmatmul.mubr.bf16.gmra.mxu0 %v5215
      %v5351 = vpop.f32.mrf.mxu0
      %v5352 = vadd.f32 %v1102, %v5351
      %v5353 = vpop.f32.mrf.mxu0
      %v5354 = vpop.f32.mrf.mxu0
      %v5355 = vadd.f32 %v1102, %v5354
      %v5356 = vpop.f32.mrf.mxu0
      %5357 = vmatprep.mubr.bf16.mxu0 0
      %5358 = vmatmul.mubr.bf16.gmra.mxu0 %v5218
      %v5359 = vpop.f32.mrf.mxu0
      %v5360 = vadd.f32 %v1102, %v5359
      %v5361 = vpop.f32.mrf.mxu0
      %v5362 = vpop.f32.mrf.mxu0
      %v5363 = vadd.f32 %v1102, %v5362
      %v5364 = vpop.f32.mrf.mxu0
      %5365 = vmatprep.mubr.bf16.mxu0 0
      %5366 = vmatmul.mubr.bf16.gmra.mxu0 %v5221
      %v5367 = vpop.f32.mrf.mxu0
      %v5368 = vadd.f32 %v1102, %v5367
      %v5369 = vpop.f32.mrf.mxu0
      %v5370 = vpop.f32.mrf.mxu0
      %v5371 = vadd.f32 %v1102, %v5370
      %v5372 = vpop.f32.mrf.mxu0
      %5373 = vmatprep.mubr.bf16.mxu0 0
      %5374 = vmatmul.mubr.bf16.gmra.mxu0 %v5224
      %v5375 = vpop.f32.mrf.mxu0
      %v5376 = vadd.f32 %v1102, %v5375
      %v5377 = vpop.f32.mrf.mxu0
      %v5378 = vpop.f32.mrf.mxu0
      %v5379 = vadd.f32 %v1102, %v5378
      %v5380 = vpop.f32.mrf.mxu0
      %5381 = vmatprep.mubr.bf16.mxu0 0
      %5382 = vmatmul.mubr.bf16.gmra.mxu0 %v5227
      %v5383 = vpop.f32.mrf.mxu0
      %v5384 = vadd.f32 %v1102, %v5383
      %v5385 = vpop.f32.mrf.mxu0
      %v5386 = vpop.f32.mrf.mxu0
      %v5387 = vadd.f32 %v1102, %v5386
      %v5388 = vpop.f32.mrf.mxu0
      %5389 = vdwg.mxu0
      %v5390 = vmax.f32 %v5264, 0.0
      %v5391 = vmax.f32 %v5267, 0.0
      %v5392 = vmax.f32 %v5272, 0.0
      %v5393 = vmax.f32 %v5275, 0.0
      %v5394 = vmax.f32 %v5280, 0.0
      %v5395 = vmax.f32 %v5283, 0.0
      %v5396 = vmax.f32 %v5288, 0.0
      %v5397 = vmax.f32 %v5291, 0.0
      %v5398 = vmax.f32 %v5296, 0.0
      %v5399 = vmax.f32 %v5299, 0.0
      %v5400 = vmax.f32 %v5304, 0.0
      %v5401 = vmax.f32 %v5307, 0.0
      %v5402 = vmax.f32 %v5312, 0.0
      %v5403 = vmax.f32 %v5315, 0.0
      %v5404 = vmax.f32 %v5320, 0.0
      %v5405 = vmax.f32 %v5323, 0.0
      %v5406 = vmax.f32 %v5328, 0.0
      %v5407 = vmax.f32 %v5331, 0.0
      %v5408 = vmax.f32 %v5336, 0.0
      %v5409 = vmax.f32 %v5339, 0.0
      %v5410 = vmax.f32 %v5344, 0.0
      %v5411 = vmax.f32 %v5347, 0.0
      %v5412 = vmax.f32 %v5352, 0.0
      %v5413 = vmax.f32 %v5355, 0.0
      %v5414 = vmax.f32 %v5360, 0.0
      %v5415 = vmax.f32 %v5363, 0.0
      %v5416 = vmax.f32 %v5368, 0.0
      %v5417 = vmax.f32 %v5371, 0.0
      %v5418 = vmax.f32 %v5376, 0.0
      %v5419 = vmax.f32 %v5379, 0.0
      %v5420 = vmax.f32 %v5384, 0.0
      %v5421 = vmax.f32 %v5387, 0.0
      %v5422 = vpack.c.bf16 %v5391, %v5390
      %v5423 = vpack.c.bf16 %v5393, %v5392
      %v5424 = vpack.c.bf16 %v5395, %v5394
      %v5425 = vpack.c.bf16 %v5397, %v5396
      %v5426 = vpack.c.bf16 %v5399, %v5398
      %v5427 = vpack.c.bf16 %v5401, %v5400
      %v5428 = vpack.c.bf16 %v5403, %v5402
      %v5429 = vpack.c.bf16 %v5405, %v5404
      %v5430 = vpack.c.bf16 %v5407, %v5406
      %v5431 = vpack.c.bf16 %v5409, %v5408
      %v5432 = vpack.c.bf16 %v5411, %v5410
      %v5433 = vpack.c.bf16 %v5413, %v5412
      %v5434 = vpack.c.bf16 %v5415, %v5414
      %v5435 = vpack.c.bf16 %v5417, %v5416
      %v5436 = vpack.c.bf16 %v5419, %v5418
      %v5437 = vpack.c.bf16 %v5421, %v5420
      %v5439 = vsel %vm1411, %v5422, 0
      %v5442 = vsel %vm1411, %v5423, 0
      %v5445 = vsel %vm1411, %v5424, 0
      %v5448 = vsel %vm1411, %v5425, 0
      %v5451 = vsel %vm1411, %v5426, 0
      %v5454 = vsel %vm1411, %v5427, 0
      %v5457 = vsel %vm1411, %v5428, 0
      %v5460 = vsel %vm1411, %v5429, 0
      %v5463 = vsel %vm1411, %v5430, 0
      %v5466 = vsel %vm1411, %v5431, 0
      %v5469 = vsel %vm1411, %v5432, 0
      %v5472 = vsel %vm1411, %v5433, 0
      %v5475 = vsel %vm1411, %v5434, 0
      %v5478 = vsel %vm1411, %v5435, 0
      %v5481 = vsel %vm1411, %v5436, 0
      %v5484 = vsel %vm1411, %v5437, 0
      %5486 = vmatprep.subr.bf16.mxu0 0
      %5487 = vmatpush1.bf16.msra.mxu0 0
      %5488 = vmatprep.subr.bf16.mxu0 0
      %5489 = vmatpush1.bf16.msra.mxu0 0
      %5490 = vmatprep.subr.bf16.mxu0 0
      %5491 = vmatpush1.bf16.msra.mxu0 0
      %5492 = vmatprep.subr.bf16.mxu0 0
      %5493 = vmatpush1.bf16.msra.mxu0 0
      %5494 = vmatprep.subr.bf16.mxu0 0
      %5495 = vmatpush1.bf16.msra.mxu0 %v1406
      %5496 = vmatprep.subr.bf16.mxu0 0
      %5497 = vmatpush1.bf16.msra.mxu0 %v1405
      %5498 = vmatprep.subr.bf16.mxu0 0
      %5499 = vmatpush1.bf16.msra.mxu0 %v1404
      %5500 = vmatprep.subr.bf16.mxu0 0
      %5501 = vmatpush1.bf16.msra.mxu0 %v1403
      %5502 = vmatprep.subr.bf16.mxu0 0
      %5503 = vmatpush2.bf16.msra.mxu0 0
      %5504 = vmatprep.subr.bf16.mxu0 0
      %5505 = vmatpush2.bf16.msra.mxu0 0
      %5506 = vmatprep.subr.bf16.mxu0 0
      %5507 = vmatpush2.bf16.msra.mxu0 0
      %5508 = vmatprep.subr.bf16.mxu0 0
      %5509 = vmatpush2.bf16.msra.mxu0 0
      %5510 = vmatprep.subr.bf16.mxu0 0
      %5511 = vmatpush2.bf16.msra.mxu0 0
      %5512 = vmatprep.subr.bf16.mxu0 0
      %5513 = vmatpush2.bf16.msra.mxu0 0
      %5514 = vmatprep.subr.bf16.mxu0 0
      %5515 = vmatpush2.bf16.msra.mxu0 0
      %5516 = vmatprep.subr.bf16.mxu0 0
      %5517 = vmatpush2.bf16.msra.mxu0 0
      %5518 = vmatprep.mubr.bf16.mxu0 0
      %5519 = vmatmul.mubr.bf16.gmra.mxu0 %v5439
      %v5520 = vpop.f32.mrf.mxu0
      %v5521 = vadd.f32 %v1385, %v5520
      %v5522 = vpop.f32.mrf.mxu0
      %v5523 = vpop.f32.mrf.mxu0
      %v5524 = vadd.f32 %v1385, %v5523
      %v5525 = vpop.f32.mrf.mxu0
      %5526 = vmatprep.mubr.bf16.mxu0 0
      %5527 = vmatmul.mubr.bf16.gmra.mxu0 %v5442
      %v5528 = vpop.f32.mrf.mxu0
      %v5529 = vadd.f32 %v1385, %v5528
      %v5530 = vpop.f32.mrf.mxu0
      %v5531 = vpop.f32.mrf.mxu0
      %v5532 = vadd.f32 %v1385, %v5531
      %v5533 = vpop.f32.mrf.mxu0
      %5534 = vmatprep.mubr.bf16.mxu0 0
      %5535 = vmatmul.mubr.bf16.gmra.mxu0 %v5445
      %v5536 = vpop.f32.mrf.mxu0
      %v5537 = vadd.f32 %v1385, %v5536
      %v5538 = vpop.f32.mrf.mxu0
      %v5539 = vpop.f32.mrf.mxu0
      %v5540 = vadd.f32 %v1385, %v5539
      %v5541 = vpop.f32.mrf.mxu0
      %5542 = vmatprep.mubr.bf16.mxu0 0
      %5543 = vmatmul.mubr.bf16.gmra.mxu0 %v5448
      %v5544 = vpop.f32.mrf.mxu0
      %v5545 = vadd.f32 %v1385, %v5544
      %v5546 = vpop.f32.mrf.mxu0
      %v5547 = vpop.f32.mrf.mxu0
      %v5548 = vadd.f32 %v1385, %v5547
      %v5549 = vpop.f32.mrf.mxu0
      %5550 = vmatprep.mubr.bf16.mxu0 0
      %5551 = vmatmul.mubr.bf16.gmra.mxu0 %v5451
      %v5552 = vpop.f32.mrf.mxu0
      %v5553 = vadd.f32 %v1385, %v5552
      %v5554 = vpop.f32.mrf.mxu0
      %v5555 = vpop.f32.mrf.mxu0
      %v5556 = vadd.f32 %v1385, %v5555
      %v5557 = vpop.f32.mrf.mxu0
      %5558 = vmatprep.mubr.bf16.mxu0 0
      %5559 = vmatmul.mubr.bf16.gmra.mxu0 %v5454
      %v5560 = vpop.f32.mrf.mxu0
      %v5561 = vadd.f32 %v1385, %v5560
      %v5562 = vpop.f32.mrf.mxu0
      %v5563 = vpop.f32.mrf.mxu0
      %v5564 = vadd.f32 %v1385, %v5563
      %v5565 = vpop.f32.mrf.mxu0
      %5566 = vmatprep.mubr.bf16.mxu0 0
      %5567 = vmatmul.mubr.bf16.gmra.mxu0 %v5457
      %v5568 = vpop.f32.mrf.mxu0
      %v5569 = vadd.f32 %v1385, %v5568
      %v5570 = vpop.f32.mrf.mxu0
      %v5571 = vpop.f32.mrf.mxu0
      %v5572 = vadd.f32 %v1385, %v5571
      %v5573 = vpop.f32.mrf.mxu0
      %5574 = vmatprep.mubr.bf16.mxu0 0
      %5575 = vmatmul.mubr.bf16.gmra.mxu0 %v5460
      %v5576 = vpop.f32.mrf.mxu0
      %v5577 = vadd.f32 %v1385, %v5576
      %v5578 = vpop.f32.mrf.mxu0
      %v5579 = vpop.f32.mrf.mxu0
      %v5580 = vadd.f32 %v1385, %v5579
      %v5581 = vpop.f32.mrf.mxu0
      %5582 = vmatprep.mubr.bf16.mxu0 0
      %5583 = vmatmul.mubr.bf16.gmra.mxu0 %v5463
      %v5584 = vpop.f32.mrf.mxu0
      %v5585 = vadd.f32 %v1385, %v5584
      %v5586 = vpop.f32.mrf.mxu0
      %v5587 = vpop.f32.mrf.mxu0
      %v5588 = vadd.f32 %v1385, %v5587
      %v5589 = vpop.f32.mrf.mxu0
      %5590 = vmatprep.mubr.bf16.mxu0 0
      %5591 = vmatmul.mubr.bf16.gmra.mxu0 %v5466
      %v5592 = vpop.f32.mrf.mxu0
      %v5593 = vadd.f32 %v1385, %v5592
      %v5594 = vpop.f32.mrf.mxu0
      %v5595 = vpop.f32.mrf.mxu0
      %v5596 = vadd.f32 %v1385, %v5595
      %v5597 = vpop.f32.mrf.mxu0
      %5598 = vmatprep.mubr.bf16.mxu0 0
      %5599 = vmatmul.mubr.bf16.gmra.mxu0 %v5469
      %v5600 = vpop.f32.mrf.mxu0
      %v5601 = vadd.f32 %v1385, %v5600
      %v5602 = vpop.f32.mrf.mxu0
      %v5603 = vpop.f32.mrf.mxu0
      %v5604 = vadd.f32 %v1385, %v5603
      %v5605 = vpop.f32.mrf.mxu0
      %5606 = vmatprep.mubr.bf16.mxu0 0
      %5607 = vmatmul.mubr.bf16.gmra.mxu0 %v5472
      %v5608 = vpop.f32.mrf.mxu0
      %v5609 = vadd.f32 %v1385, %v5608
      %v5610 = vpop.f32.mrf.mxu0
      %v5611 = vpop.f32.mrf.mxu0
      %v5612 = vadd.f32 %v1385, %v5611
      %v5613 = vpop.f32.mrf.mxu0
      %5614 = vmatprep.mubr.bf16.mxu0 0
      %5615 = vmatmul.mubr.bf16.gmra.mxu0 %v5475
      %v5616 = vpop.f32.mrf.mxu0
      %v5617 = vadd.f32 %v1385, %v5616
      %v5618 = vpop.f32.mrf.mxu0
      %v5619 = vpop.f32.mrf.mxu0
      %v5620 = vadd.f32 %v1385, %v5619
      %v5621 = vpop.f32.mrf.mxu0
      %5622 = vmatprep.mubr.bf16.mxu0 0
      %5623 = vmatmul.mubr.bf16.gmra.mxu0 %v5478
      %v5624 = vpop.f32.mrf.mxu0
      %v5625 = vadd.f32 %v1385, %v5624
      %v5626 = vpop.f32.mrf.mxu0
      %v5627 = vpop.f32.mrf.mxu0
      %v5628 = vadd.f32 %v1385, %v5627
      %v5629 = vpop.f32.mrf.mxu0
      %5630 = vmatprep.mubr.bf16.mxu0 0
      %5631 = vmatmul.mubr.bf16.gmra.mxu0 %v5481
      %v5632 = vpop.f32.mrf.mxu0
      %v5633 = vadd.f32 %v1385, %v5632
      %v5634 = vpop.f32.mrf.mxu0
      %v5635 = vpop.f32.mrf.mxu0
      %v5636 = vadd.f32 %v1385, %v5635
      %v5637 = vpop.f32.mrf.mxu0
      %5638 = vmatprep.mubr.bf16.mxu0 0
      %5639 = vmatmul.mubr.bf16.gmra.mxu0 %v5484
      %v5640 = vpop.f32.mrf.mxu0
      %v5641 = vadd.f32 %v1385, %v5640
      %v5642 = vpop.f32.mrf.mxu0
      %v5643 = vpop.f32.mrf.mxu0
      %v5644 = vadd.f32 %v1385, %v5643
      %v5645 = vpop.f32.mrf.mxu0
      %5646 = vdwg.mxu0
      %v5647 = vmax.f32 %v5521, 0.0
      %v5648 = vmax.f32 %v5524, 0.0
      %v5649 = vmax.f32 %v5529, 0.0
      %v5650 = vmax.f32 %v5532, 0.0
      %v5651 = vmax.f32 %v5537, 0.0
      %v5652 = vmax.f32 %v5540, 0.0
      %v5653 = vmax.f32 %v5545, 0.0
      %v5654 = vmax.f32 %v5548, 0.0
      %v5655 = vmax.f32 %v5553, 0.0
      %v5656 = vmax.f32 %v5556, 0.0
      %v5657 = vmax.f32 %v5561, 0.0
      %v5658 = vmax.f32 %v5564, 0.0
      %v5659 = vmax.f32 %v5569, 0.0
      %v5660 = vmax.f32 %v5572, 0.0
      %v5661 = vmax.f32 %v5577, 0.0
      %v5662 = vmax.f32 %v5580, 0.0
      %v5663 = vmax.f32 %v5585, 0.0
      %v5664 = vmax.f32 %v5588, 0.0
      %v5665 = vmax.f32 %v5593, 0.0
      %v5666 = vmax.f32 %v5596, 0.0
      %v5667 = vmax.f32 %v5601, 0.0
      %v5668 = vmax.f32 %v5604, 0.0
      %v5669 = vmax.f32 %v5609, 0.0
      %v5670 = vmax.f32 %v5612, 0.0
      %v5671 = vmax.f32 %v5617, 0.0
      %v5672 = vmax.f32 %v5620, 0.0
      %v5673 = vmax.f32 %v5625, 0.0
      %v5674 = vmax.f32 %v5628, 0.0
      %v5675 = vmax.f32 %v5633, 0.0
      %v5676 = vmax.f32 %v5636, 0.0
      %v5677 = vmax.f32 %v5641, 0.0
      %v5678 = vmax.f32 %v5644, 0.0
      %v5679 = vmul.f32 %v5647, %v1657
      %v5680 = vmul.f32 %v5648, %v1657
      %v5681 = vmul.f32 %v5649, %v1657
      %v5682 = vmul.f32 %v5650, %v1657
      %v5683 = vmul.f32 %v5651, %v1657
      %v5684 = vmul.f32 %v5652, %v1657
      %v5685 = vmul.f32 %v5653, %v1657
      %v5686 = vmul.f32 %v5654, %v1657
      %v5687 = vmul.f32 %v5655, %v1657
      %v5688 = vmul.f32 %v5656, %v1657
      %v5689 = vmul.f32 %v5657, %v1657
      %v5690 = vmul.f32 %v5658, %v1657
      %v5691 = vmul.f32 %v5659, %v1657
      %v5692 = vmul.f32 %v5660, %v1657
      %v5693 = vmul.f32 %v5661, %v1657
      %v5694 = vmul.f32 %v5662, %v1657
      %v5695 = vmul.f32 %v5663, %v1657
      %v5696 = vmul.f32 %v5664, %v1657
      %v5697 = vmul.f32 %v5665, %v1657
      %v5698 = vmul.f32 %v5666, %v1657
      %v5699 = vmul.f32 %v5667, %v1657
      %v5700 = vmul.f32 %v5668, %v1657
      %v5701 = vmul.f32 %v5669, %v1657
      %v5702 = vmul.f32 %v5670, %v1657
      %v5703 = vmul.f32 %v5671, %v1657
      %v5704 = vmul.f32 %v5672, %v1657
      %v5705 = vmul.f32 %v5673, %v1657
      %v5706 = vmul.f32 %v5674, %v1657
      %v5707 = vmul.f32 %v5675, %v1657
      %v5708 = vmul.f32 %v5676, %v1657
      %v5709 = vmul.f32 %v5677, %v1657
      %v5710 = vmul.f32 %v5678, %v1657
      %v5711 = vsel %vm1411, %v5679, 0.0
      %5712 = vadd.xlane.f32.xlu0 %v5711
      %v5713 = vpop.xlane.xlu0 %5712
      %v5714 = vsel %vm1411, %v5680, 0.0
      %5715 = vadd.xlane.f32.xlu0 %v5714
      %v5716 = vpop.xlane.xlu0 %5715
      %v5717 = vsel %vm1411, %v5681, 0.0
      %5718 = vadd.xlane.f32.xlu0 %v5717
      %v5719 = vpop.xlane.xlu0 %5718
      %v5720 = vsel %vm1411, %v5682, 0.0
      %5721 = vadd.xlane.f32.xlu0 %v5720
      %v5722 = vpop.xlane.xlu0 %5721
      %v5723 = vsel %vm1411, %v5683, 0.0
      %5724 = vadd.xlane.f32.xlu0 %v5723
      %v5725 = vpop.xlane.xlu0 %5724
      %v5726 = vsel %vm1411, %v5684, 0.0
      %5727 = vadd.xlane.f32.xlu0 %v5726
      %v5728 = vpop.xlane.xlu0 %5727
      %v5729 = vsel %vm1411, %v5685, 0.0
      %5730 = vadd.xlane.f32.xlu0 %v5729
      %v5731 = vpop.xlane.xlu0 %5730
      %v5732 = vsel %vm1411, %v5686, 0.0
      %5733 = vadd.xlane.f32.xlu0 %v5732
      %v5734 = vpop.xlane.xlu0 %5733
      %v5735 = vsel %vm1411, %v5687, 0.0
      %5736 = vadd.xlane.f32.xlu0 %v5735
      %v5737 = vpop.xlane.xlu0 %5736
      %v5738 = vsel %vm1411, %v5688, 0.0
      %5739 = vadd.xlane.f32.xlu0 %v5738
      %v5740 = vpop.xlane.xlu0 %5739
      %v5741 = vsel %vm1411, %v5689, 0.0
      %5742 = vadd.xlane.f32.xlu0 %v5741
      %v5743 = vpop.xlane.xlu0 %5742
      %v5744 = vsel %vm1411, %v5690, 0.0
      %5745 = vadd.xlane.f32.xlu0 %v5744
      %v5746 = vpop.xlane.xlu0 %5745
      %v5747 = vsel %vm1411, %v5691, 0.0
      %5748 = vadd.xlane.f32.xlu0 %v5747
      %v5749 = vpop.xlane.xlu0 %5748
      %v5750 = vsel %vm1411, %v5692, 0.0
      %5751 = vadd.xlane.f32.xlu0 %v5750
      %v5752 = vpop.xlane.xlu0 %5751
      %v5753 = vsel %vm1411, %v5693, 0.0
      %5754 = vadd.xlane.f32.xlu0 %v5753
      %v5755 = vpop.xlane.xlu0 %5754
      %v5756 = vsel %vm1411, %v5694, 0.0
      %5757 = vadd.xlane.f32.xlu0 %v5756
      %v5758 = vpop.xlane.xlu0 %5757
      %v5759 = vsel %vm1411, %v5695, 0.0
      %5760 = vadd.xlane.f32.xlu0 %v5759
      %v5761 = vpop.xlane.xlu0 %5760
      %v5762 = vsel %vm1411, %v5696, 0.0
      %5763 = vadd.xlane.f32.xlu0 %v5762
      %v5764 = vpop.xlane.xlu0 %5763
      %v5765 = vsel %vm1411, %v5697, 0.0
      %5766 = vadd.xlane.f32.xlu0 %v5765
      %v5767 = vpop.xlane.xlu0 %5766
      %v5768 = vsel %vm1411, %v5698, 0.0
      %5769 = vadd.xlane.f32.xlu0 %v5768
      %v5770 = vpop.xlane.xlu0 %5769
      %v5771 = vsel %vm1411, %v5699, 0.0
      %5772 = vadd.xlane.f32.xlu0 %v5771
      %v5773 = vpop.xlane.xlu0 %5772
      %v5774 = vsel %vm1411, %v5700, 0.0
      %5775 = vadd.xlane.f32.xlu0 %v5774
      %v5776 = vpop.xlane.xlu0 %5775
      %v5777 = vsel %vm1411, %v5701, 0.0
      %5778 = vadd.xlane.f32.xlu0 %v5777
      %v5779 = vpop.xlane.xlu0 %5778
      %v5780 = vsel %vm1411, %v5702, 0.0
      %5781 = vadd.xlane.f32.xlu0 %v5780
      %v5782 = vpop.xlane.xlu0 %5781
      %v5783 = vsel %vm1411, %v5703, 0.0
      %5784 = vadd.xlane.f32.xlu0 %v5783
      %v5785 = vpop.xlane.xlu0 %5784
      %v5786 = vsel %vm1411, %v5704, 0.0
      %5787 = vadd.xlane.f32.xlu0 %v5786
      %v5788 = vpop.xlane.xlu0 %5787
      %v5789 = vsel %vm1411, %v5705, 0.0
      %5790 = vadd.xlane.f32.xlu0 %v5789
      %v5791 = vpop.xlane.xlu0 %5790
      %v5792 = vsel %vm1411, %v5706, 0.0
      %5793 = vadd.xlane.f32.xlu0 %v5792
      %v5794 = vpop.xlane.xlu0 %5793
      %v5795 = vsel %vm1411, %v5707, 0.0
      %5796 = vadd.xlane.f32.xlu0 %v5795
      %v5797 = vpop.xlane.xlu0 %5796
      %v5798 = vsel %vm1411, %v5708, 0.0
      %5799 = vadd.xlane.f32.xlu0 %v5798
      %v5800 = vpop.xlane.xlu0 %5799
      %v5801 = vsel %vm1411, %v5709, 0.0
      %5802 = vadd.xlane.f32.xlu0 %v5801
      %v5803 = vpop.xlane.xlu0 %5802
      %v5804 = vsel %vm1411, %v5710, 0.0
      %5805 = vadd.xlane.f32.xlu0 %v5804
      %v5806 = vpop.xlane.xlu0 %5805
      %v5807 = vadd.f32 %v5713, %v1791
      %v5808 = vadd.f32 %v5716, %v1791
      %v5809 = vadd.f32 %v5719, %v1791
      %v5810 = vadd.f32 %v5722, %v1791
      %v5811 = vadd.f32 %v5725, %v1791
      %v5812 = vadd.f32 %v5728, %v1791
      %v5813 = vadd.f32 %v5731, %v1791
      %v5814 = vadd.f32 %v5734, %v1791
      %v5815 = vadd.f32 %v5737, %v1791
      %v5816 = vadd.f32 %v5740, %v1791
      %v5817 = vadd.f32 %v5743, %v1791
      %v5818 = vadd.f32 %v5746, %v1791
      %v5819 = vadd.f32 %v5749, %v1791
      %v5820 = vadd.f32 %v5752, %v1791
      %v5821 = vadd.f32 %v5755, %v1791
      %v5822 = vadd.f32 %v5758, %v1791
      %v5823 = vadd.f32 %v5761, %v1791
      %v5824 = vadd.f32 %v5764, %v1791
      %v5825 = vadd.f32 %v5767, %v1791
      %v5826 = vadd.f32 %v5770, %v1791
      %v5827 = vadd.f32 %v5773, %v1791
      %v5828 = vadd.f32 %v5776, %v1791
      %v5829 = vadd.f32 %v5779, %v1791
      %v5830 = vadd.f32 %v5782, %v1791
      %v5831 = vadd.f32 %v5785, %v1791
      %v5832 = vadd.f32 %v5788, %v1791
      %v5833 = vadd.f32 %v5791, %v1791
      %v5834 = vadd.f32 %v5794, %v1791
      %v5835 = vadd.f32 %v5797, %v1791
      %v5836 = vadd.f32 %v5800, %v1791
      %v5837 = vadd.f32 %v5803, %v1791
      %v5838 = vadd.f32 %v5806, %v1791
      %v5839 = vadd.f32 %v4490, %v5807
      %v5840 = vadd.f32 %v4491, %v5808
      %v5841 = vadd.f32 %v4492, %v5809
      %v5842 = vadd.f32 %v4493, %v5810
      %v5843 = vadd.f32 %v4494, %v5811
      %v5844 = vadd.f32 %v4495, %v5812
      %v5845 = vadd.f32 %v4496, %v5813
      %v5846 = vadd.f32 %v4497, %v5814
      %v5847 = vadd.f32 %v4498, %v5815
      %v5848 = vadd.f32 %v4499, %v5816
      %v5849 = vadd.f32 %v4500, %v5817
      %v5850 = vadd.f32 %v4501, %v5818
      %v5851 = vadd.f32 %v4502, %v5819
      %v5852 = vadd.f32 %v4503, %v5820
      %v5853 = vadd.f32 %v4504, %v5821
      %v5854 = vadd.f32 %v4505, %v5822
      %v5855 = vadd.f32 %v4506, %v5823
      %v5856 = vadd.f32 %v4507, %v5824
      %v5857 = vadd.f32 %v4508, %v5825
      %v5858 = vadd.f32 %v4509, %v5826
      %v5859 = vadd.f32 %v4510, %v5827
      %v5860 = vadd.f32 %v4511, %v5828
      %v5861 = vadd.f32 %v4512, %v5829
      %v5862 = vadd.f32 %v4513, %v5830
      %v5863 = vadd.f32 %v4514, %v5831
      %v5864 = vadd.f32 %v4515, %v5832
      %v5865 = vadd.f32 %v4516, %v5833
      %v5866 = vadd.f32 %v4517, %v5834
      %v5867 = vadd.f32 %v4518, %v5835
      %v5868 = vadd.f32 %v4519, %v5836
      %v5869 = vadd.f32 %v4520, %v5837
      %v5870 = vadd.f32 %v4521, %v5838
      %s5871 = scalar_lea.vmem %s2, 48
      %v5872 = vld [vmem:[%s5871] sm:$0xf]
      %v5873 = vld [vmem:[%s5871 + $0x4] sm:$0xf]
      %v5874 = vld [vmem:[%s5871 + $0x8] sm:$0xf]
      %v5875 = vld [vmem:[%s5871 + $0xc] sm:$0xf]
      %v5880 = vunpack.c.l.b16 %v5872
      %v5881 = vunpack.c.l.b16 %v5873
      %v5882 = vunpack.c.l.b16 %v5874
      %v5883 = vunpack.c.l.b16 %v5875
      %v5884 = vpack.c.b16 %v5881, %v5880
      %v5885 = vpack.c.b16 %v5883, %v5882
      %5888 = vmatprep.subr.bf16.mxu0 0
      %5889 = vmatpush1.bf16.msra.mxu0 0
      %5890 = vmatprep.subr.bf16.mxu0 0
      %5891 = vmatpush1.bf16.msra.mxu0 0
      %5892 = vmatprep.subr.bf16.mxu0 0
      %5893 = vmatpush1.bf16.msra.mxu0 0
      %5894 = vmatprep.subr.bf16.mxu0 0
      %5895 = vmatpush1.bf16.msra.mxu0 0
      %5896 = vmatprep.subr.bf16.mxu0 0
      %5897 = vmatpush1.bf16.msra.mxu0 0
      %5898 = vmatprep.subr.bf16.mxu0 0
      %5899 = vmatpush1.bf16.msra.mxu0 0
      %5900 = vmatprep.subr.bf16.mxu0 0
      %5901 = vmatpush1.bf16.msra.mxu0 %v5885
      %5902 = vmatprep.subr.bf16.mxu0 0
      %5903 = vmatpush1.bf16.msra.mxu0 %v5884
      %5904 = vmatprep.subr.bf16.mxu0 0
      %5905 = vmatpush2.bf16.msra.mxu0 0
      %5906 = vmatprep.subr.bf16.mxu0 0
      %5907 = vmatpush2.bf16.msra.mxu0 0
      %5908 = vmatprep.subr.bf16.mxu0 0
      %5909 = vmatpush2.bf16.msra.mxu0 0
      %5910 = vmatprep.subr.bf16.mxu0 0
      %5911 = vmatpush2.bf16.msra.mxu0 0
      %5912 = vmatprep.subr.bf16.mxu0 0
      %5913 = vmatpush2.bf16.msra.mxu0 0
      %5914 = vmatprep.subr.bf16.mxu0 0
      %5915 = vmatpush2.bf16.msra.mxu0 0
      %5916 = vmatprep.subr.bf16.mxu0 0
      %5917 = vmatpush2.bf16.msra.mxu0 0
      %5918 = vmatprep.subr.bf16.mxu0 0
      %5919 = vmatpush2.bf16.msra.mxu0 0
      %5920 = vmatprep.mubr.bf16.mxu0 0
      %5921 = vmatmul.mubr.bf16.gmra.mxu0 %v5182
      %v5922 = vpop.f32.mrf.mxu0
      %v5923 = vadd.f32 0.0, %v5922
      %v5924 = vpop.f32.mrf.mxu0
      %v5925 = vpop.f32.mrf.mxu0
      %v5926 = vadd.f32 0.0, %v5925
      %v5927 = vpop.f32.mrf.mxu0
      %5928 = vmatprep.mubr.bf16.mxu0 0
      %5929 = vmatmul.mubr.bf16.gmra.mxu0 %v5185
      %v5930 = vpop.f32.mrf.mxu0
      %v5931 = vadd.f32 0.0, %v5930
      %v5932 = vpop.f32.mrf.mxu0
      %v5933 = vpop.f32.mrf.mxu0
      %v5934 = vadd.f32 0.0, %v5933
      %v5935 = vpop.f32.mrf.mxu0
      %5936 = vmatprep.mubr.bf16.mxu0 0
      %5937 = vmatmul.mubr.bf16.gmra.mxu0 %v5188
      %v5938 = vpop.f32.mrf.mxu0
      %v5939 = vadd.f32 0.0, %v5938
      %v5940 = vpop.f32.mrf.mxu0
      %v5941 = vpop.f32.mrf.mxu0
      %v5942 = vadd.f32 0.0, %v5941
      %v5943 = vpop.f32.mrf.mxu0
      %5944 = vmatprep.mubr.bf16.mxu0 0
      %5945 = vmatmul.mubr.bf16.gmra.mxu0 %v5191
      %v5946 = vpop.f32.mrf.mxu0
      %v5947 = vadd.f32 0.0, %v5946
      %v5948 = vpop.f32.mrf.mxu0
      %v5949 = vpop.f32.mrf.mxu0
      %v5950 = vadd.f32 0.0, %v5949
      %v5951 = vpop.f32.mrf.mxu0
      %5952 = vmatprep.mubr.bf16.mxu0 0
      %5953 = vmatmul.mubr.bf16.gmra.mxu0 %v5194
      %v5954 = vpop.f32.mrf.mxu0
      %v5955 = vadd.f32 0.0, %v5954
      %v5956 = vpop.f32.mrf.mxu0
      %v5957 = vpop.f32.mrf.mxu0
      %v5958 = vadd.f32 0.0, %v5957
      %v5959 = vpop.f32.mrf.mxu0
      %5960 = vmatprep.mubr.bf16.mxu0 0
      %5961 = vmatmul.mubr.bf16.gmra.mxu0 %v5197
      %v5962 = vpop.f32.mrf.mxu0
      %v5963 = vadd.f32 0.0, %v5962
      %v5964 = vpop.f32.mrf.mxu0
      %v5965 = vpop.f32.mrf.mxu0
      %v5966 = vadd.f32 0.0, %v5965
      %v5967 = vpop.f32.mrf.mxu0
      %5968 = vmatprep.mubr.bf16.mxu0 0
      %5969 = vmatmul.mubr.bf16.gmra.mxu0 %v5200
      %v5970 = vpop.f32.mrf.mxu0
      %v5971 = vadd.f32 0.0, %v5970
      %v5972 = vpop.f32.mrf.mxu0
      %v5973 = vpop.f32.mrf.mxu0
      %v5974 = vadd.f32 0.0, %v5973
      %v5975 = vpop.f32.mrf.mxu0
      %5976 = vmatprep.mubr.bf16.mxu0 0
      %5977 = vmatmul.mubr.bf16.gmra.mxu0 %v5203
      %v5978 = vpop.f32.mrf.mxu0
      %v5979 = vadd.f32 0.0, %v5978
      %v5980 = vpop.f32.mrf.mxu0
      %v5981 = vpop.f32.mrf.mxu0
      %v5982 = vadd.f32 0.0, %v5981
      %v5983 = vpop.f32.mrf.mxu0
      %5984 = vmatprep.mubr.bf16.mxu0 0
      %5985 = vmatmul.mubr.bf16.gmra.mxu0 %v5206
      %v5986 = vpop.f32.mrf.mxu0
      %v5987 = vadd.f32 0.0, %v5986
      %v5988 = vpop.f32.mrf.mxu0
      %v5989 = vpop.f32.mrf.mxu0
      %v5990 = vadd.f32 0.0, %v5989
      %v5991 = vpop.f32.mrf.mxu0
      %5992 = vmatprep.mubr.bf16.mxu0 0
      %5993 = vmatmul.mubr.bf16.gmra.mxu0 %v5209
      %v5994 = vpop.f32.mrf.mxu0
      %v5995 = vadd.f32 0.0, %v5994
      %v5996 = vpop.f32.mrf.mxu0
      %v5997 = vpop.f32.mrf.mxu0
      %v5998 = vadd.f32 0.0, %v5997
      %v5999 = vpop.f32.mrf.mxu0
      %6000 = vmatprep.mubr.bf16.mxu0 0
      %6001 = vmatmul.mubr.bf16.gmra.mxu0 %v5212
      %v6002 = vpop.f32.mrf.mxu0
      %v6003 = vadd.f32 0.0, %v6002
      %v6004 = vpop.f32.mrf.mxu0
      %v6005 = vpop.f32.mrf.mxu0
      %v6006 = vadd.f32 0.0, %v6005
      %v6007 = vpop.f32.mrf.mxu0
      %6008 = vmatprep.mubr.bf16.mxu0 0
      %6009 = vmatmul.mubr.bf16.gmra.mxu0 %v5215
      %v6010 = vpop.f32.mrf.mxu0
      %v6011 = vadd.f32 0.0, %v6010
      %v6012 = vpop.f32.mrf.mxu0
      %v6013 = vpop.f32.mrf.mxu0
      %v6014 = vadd.f32 0.0, %v6013
      %v6015 = vpop.f32.mrf.mxu0
      %6016 = vmatprep.mubr.bf16.mxu0 0
      %6017 = vmatmul.mubr.bf16.gmra.mxu0 %v5218
      %v6018 = vpop.f32.mrf.mxu0
      %v6019 = vadd.f32 0.0, %v6018
      %v6020 = vpop.f32.mrf.mxu0
      %v6021 = vpop.f32.mrf.mxu0
      %v6022 = vadd.f32 0.0, %v6021
      %v6023 = vpop.f32.mrf.mxu0
      %6024 = vmatprep.mubr.bf16.mxu0 0
      %6025 = vmatmul.mubr.bf16.gmra.mxu0 %v5221
      %v6026 = vpop.f32.mrf.mxu0
      %v6027 = vadd.f32 0.0, %v6026
      %v6028 = vpop.f32.mrf.mxu0
      %v6029 = vpop.f32.mrf.mxu0
      %v6030 = vadd.f32 0.0, %v6029
      %v6031 = vpop.f32.mrf.mxu0
      %6032 = vmatprep.mubr.bf16.mxu0 0
      %6033 = vmatmul.mubr.bf16.gmra.mxu0 %v5224
      %v6034 = vpop.f32.mrf.mxu0
      %v6035 = vadd.f32 0.0, %v6034
      %v6036 = vpop.f32.mrf.mxu0
      %v6037 = vpop.f32.mrf.mxu0
      %v6038 = vadd.f32 0.0, %v6037
      %v6039 = vpop.f32.mrf.mxu0
      %6040 = vmatprep.mubr.bf16.mxu0 0
      %6041 = vmatmul.mubr.bf16.gmra.mxu0 %v5227
      %v6042 = vpop.f32.mrf.mxu0
      %v6043 = vadd.f32 0.0, %v6042
      %v6044 = vpop.f32.mrf.mxu0
      %v6045 = vpop.f32.mrf.mxu0
      %v6046 = vadd.f32 0.0, %v6045
      %v6047 = vpop.f32.mrf.mxu0
      %6048 = vdwg.mxu0
      %v6049 = vpack.c.bf16 %v5926, %v5923
      %v6050 = vpack.c.bf16 %v5934, %v5931
      %v6051 = vpack.c.bf16 %v5942, %v5939
      %v6052 = vpack.c.bf16 %v5950, %v5947
      %v6053 = vpack.c.bf16 %v5958, %v5955
      %v6054 = vpack.c.bf16 %v5966, %v5963
      %v6055 = vpack.c.bf16 %v5974, %v5971
      %v6056 = vpack.c.bf16 %v5982, %v5979
      %v6057 = vpack.c.bf16 %v5990, %v5987
      %v6058 = vpack.c.bf16 %v5998, %v5995
      %v6059 = vpack.c.bf16 %v6006, %v6003
      %v6060 = vpack.c.bf16 %v6014, %v6011
      %v6061 = vpack.c.bf16 %v6022, %v6019
      %v6062 = vpack.c.bf16 %v6030, %v6027
      %v6063 = vpack.c.bf16 %v6038, %v6035
      %v6064 = vpack.c.bf16 %v6046, %v6043
      %6065 = vmatprep.subr.bf16.mxu0 0
      %6066 = vmatpush1.bf16.msra.mxu0 %v6056
      %6067 = vmatprep.subr.bf16.mxu0 0
      %6068 = vmatpush1.bf16.msra.mxu0 %v6055
      %6069 = vmatprep.subr.bf16.mxu0 0
      %6070 = vmatpush1.bf16.msra.mxu0 %v6054
      %6071 = vmatprep.subr.bf16.mxu0 0
      %6072 = vmatpush1.bf16.msra.mxu0 %v6053
      %6073 = vmatprep.subr.bf16.mxu0 0
      %6074 = vmatpush1.bf16.msra.mxu0 %v6052
      %6075 = vmatprep.subr.bf16.mxu0 0
      %6076 = vmatpush1.bf16.msra.mxu0 %v6051
      %6077 = vmatprep.subr.bf16.mxu0 0
      %6078 = vmatpush1.bf16.msra.mxu0 %v6050
      %6079 = vmatprep.subr.bf16.mxu0 0
      %6080 = vmatpush1.bf16.msra.mxu0 %v6049
      %6081 = vmatprep.subr.bf16.mxu0 0
      %6082 = vmatpush2.bf16.msra.mxu0 %v6064
      %6083 = vmatprep.subr.bf16.mxu0 0
      %6084 = vmatpush2.bf16.msra.mxu0 %v6063
      %6085 = vmatprep.subr.bf16.mxu0 0
      %6086 = vmatpush2.bf16.msra.mxu0 %v6062
      %6087 = vmatprep.subr.bf16.mxu0 0
      %6088 = vmatpush2.bf16.msra.mxu0 %v6061
      %6089 = vmatprep.subr.bf16.mxu0 0
      %6090 = vmatpush2.bf16.msra.mxu0 %v6060
      %6091 = vmatprep.subr.bf16.mxu0 0
      %6092 = vmatpush2.bf16.msra.mxu0 %v6059
      %6093 = vmatprep.subr.bf16.mxu0 0
      %6094 = vmatpush2.bf16.msra.mxu0 %v6058
      %6095 = vmatprep.subr.bf16.mxu0 0
      %6096 = vmatpush2.bf16.msra.mxu0 %v6057
      %6097 = vmatprep.mubr.bf16.mxu0 %v501
      %6098 = vmatmul.mubr.bf16.gmra.mxu0 %v500
      %v6099 = vpop.f32.mrf.mxu0
      %v6100 = vadd.f32 0.0, %v6099
      %v6101 = vpop.f32.mrf.mxu0
      %v6102 = vpop.f32.mrf.mxu0
      %v6103 = vadd.f32 0.0, %v6102
      %v6104 = vpop.f32.mrf.mxu0
      %6105 = vmatprep.mubr.bf16.mxu0 %v503
      %6106 = vmatmul.mubr.bf16.gmra.mxu0 %v502
      %v6107 = vpop.f32.mrf.mxu0
      %v6108 = vadd.f32 0.0, %v6107
      %v6109 = vpop.f32.mrf.mxu0
      %v6110 = vpop.f32.mrf.mxu0
      %v6111 = vadd.f32 0.0, %v6110
      %v6112 = vpop.f32.mrf.mxu0
      %6113 = vmatprep.mubr.bf16.mxu0 %v505
      %6114 = vmatmul.mubr.bf16.gmra.mxu0 %v504
      %v6115 = vpop.f32.mrf.mxu0
      %v6116 = vadd.f32 0.0, %v6115
      %v6117 = vpop.f32.mrf.mxu0
      %v6118 = vpop.f32.mrf.mxu0
      %v6119 = vadd.f32 0.0, %v6118
      %v6120 = vpop.f32.mrf.mxu0
      %6121 = vmatprep.mubr.bf16.mxu0 %v507
      %6122 = vmatmul.mubr.bf16.gmra.mxu0 %v506
      %v6123 = vpop.f32.mrf.mxu0
      %v6124 = vadd.f32 0.0, %v6123
      %v6125 = vpop.f32.mrf.mxu0
      %v6126 = vpop.f32.mrf.mxu0
      %v6127 = vadd.f32 0.0, %v6126
      %v6128 = vpop.f32.mrf.mxu0
      %6129 = vmatprep.mubr.bf16.mxu0 %v509
      %6130 = vmatmul.mubr.bf16.gmra.mxu0 %v508
      %v6131 = vpop.f32.mrf.mxu0
      %v6132 = vadd.f32 0.0, %v6131
      %v6133 = vpop.f32.mrf.mxu0
      %v6134 = vpop.f32.mrf.mxu0
      %v6135 = vadd.f32 0.0, %v6134
      %v6136 = vpop.f32.mrf.mxu0
      %6137 = vmatprep.mubr.bf16.mxu0 %v511
      %6138 = vmatmul.mubr.bf16.gmra.mxu0 %v510
      %v6139 = vpop.f32.mrf.mxu0
      %v6140 = vadd.f32 0.0, %v6139
      %v6141 = vpop.f32.mrf.mxu0
      %v6142 = vpop.f32.mrf.mxu0
      %v6143 = vadd.f32 0.0, %v6142
      %v6144 = vpop.f32.mrf.mxu0
      %6145 = vmatprep.mubr.bf16.mxu0 %v513
      %6146 = vmatmul.mubr.bf16.gmra.mxu0 %v512
      %v6147 = vpop.f32.mrf.mxu0
      %v6148 = vadd.f32 0.0, %v6147
      %v6149 = vpop.f32.mrf.mxu0
      %v6150 = vpop.f32.mrf.mxu0
      %v6151 = vadd.f32 0.0, %v6150
      %v6152 = vpop.f32.mrf.mxu0
      %6153 = vmatprep.mubr.bf16.mxu0 %v515
      %6154 = vmatmul.mubr.bf16.gmra.mxu0 %v514
      %v6155 = vpop.f32.mrf.mxu0
      %v6156 = vadd.f32 0.0, %v6155
      %v6157 = vpop.f32.mrf.mxu0
      %v6158 = vpop.f32.mrf.mxu0
      %v6159 = vadd.f32 0.0, %v6158
      %v6160 = vpop.f32.mrf.mxu0
      %6161 = vmatprep.mubr.bf16.mxu0 %v517
      %6162 = vmatmul.mubr.bf16.gmra.mxu0 %v516
      %v6163 = vpop.f32.mrf.mxu0
      %v6164 = vadd.f32 0.0, %v6163
      %v6165 = vpop.f32.mrf.mxu0
      %v6166 = vpop.f32.mrf.mxu0
      %v6167 = vadd.f32 0.0, %v6166
      %v6168 = vpop.f32.mrf.mxu0
      %6169 = vmatprep.mubr.bf16.mxu0 %v519
      %6170 = vmatmul.mubr.bf16.gmra.mxu0 %v518
      %v6171 = vpop.f32.mrf.mxu0
      %v6172 = vadd.f32 0.0, %v6171
      %v6173 = vpop.f32.mrf.mxu0
      %v6174 = vpop.f32.mrf.mxu0
      %v6175 = vadd.f32 0.0, %v6174
      %v6176 = vpop.f32.mrf.mxu0
      %6177 = vmatprep.mubr.bf16.mxu0 %v521
      %6178 = vmatmul.mubr.bf16.gmra.mxu0 %v520
      %v6179 = vpop.f32.mrf.mxu0
      %v6180 = vadd.f32 0.0, %v6179
      %v6181 = vpop.f32.mrf.mxu0
      %v6182 = vpop.f32.mrf.mxu0
      %v6183 = vadd.f32 0.0, %v6182
      %v6184 = vpop.f32.mrf.mxu0
      %6185 = vmatprep.mubr.bf16.mxu0 %v523
      %6186 = vmatmul.mubr.bf16.gmra.mxu0 %v522
      %v6187 = vpop.f32.mrf.mxu0
      %v6188 = vadd.f32 0.0, %v6187
      %v6189 = vpop.f32.mrf.mxu0
      %v6190 = vpop.f32.mrf.mxu0
      %v6191 = vadd.f32 0.0, %v6190
      %v6192 = vpop.f32.mrf.mxu0
      %6193 = vmatprep.mubr.bf16.mxu0 %v525
      %6194 = vmatmul.mubr.bf16.gmra.mxu0 %v524
      %v6195 = vpop.f32.mrf.mxu0
      %v6196 = vadd.f32 0.0, %v6195
      %v6197 = vpop.f32.mrf.mxu0
      %v6198 = vpop.f32.mrf.mxu0
      %v6199 = vadd.f32 0.0, %v6198
      %v6200 = vpop.f32.mrf.mxu0
      %6201 = vmatprep.mubr.bf16.mxu0 %v527
      %6202 = vmatmul.mubr.bf16.gmra.mxu0 %v526
      %v6203 = vpop.f32.mrf.mxu0
      %v6204 = vadd.f32 0.0, %v6203
      %v6205 = vpop.f32.mrf.mxu0
      %v6206 = vpop.f32.mrf.mxu0
      %v6207 = vadd.f32 0.0, %v6206
      %v6208 = vpop.f32.mrf.mxu0
      %6209 = vmatprep.mubr.bf16.mxu0 %v529
      %6210 = vmatmul.mubr.bf16.gmra.mxu0 %v528
      %v6211 = vpop.f32.mrf.mxu0
      %v6212 = vadd.f32 0.0, %v6211
      %v6213 = vpop.f32.mrf.mxu0
      %v6214 = vpop.f32.mrf.mxu0
      %v6215 = vadd.f32 0.0, %v6214
      %v6216 = vpop.f32.mrf.mxu0
      %6217 = vmatprep.mubr.bf16.mxu0 %v531
      %6218 = vmatmul.mubr.bf16.gmra.mxu0 %v530
      %v6219 = vpop.f32.mrf.mxu0
      %v6220 = vadd.f32 0.0, %v6219
      %v6221 = vpop.f32.mrf.mxu0
      %v6222 = vpop.f32.mrf.mxu0
      %v6223 = vadd.f32 0.0, %v6222
      %v6224 = vpop.f32.mrf.mxu0
      %6225 = vdwg.mxu0
      %v6226 = vmax.f32 %v6100, 0.0
      %v6227 = vmax.f32 %v6103, 0.0
      %v6228 = vmax.f32 %v6108, 0.0
      %v6229 = vmax.f32 %v6111, 0.0
      %v6230 = vmax.f32 %v6116, 0.0
      %v6231 = vmax.f32 %v6119, 0.0
      %v6232 = vmax.f32 %v6124, 0.0
      %v6233 = vmax.f32 %v6127, 0.0
      %v6234 = vmax.f32 %v6132, 0.0
      %v6235 = vmax.f32 %v6135, 0.0
      %v6236 = vmax.f32 %v6140, 0.0
      %v6237 = vmax.f32 %v6143, 0.0
      %v6238 = vmax.f32 %v6148, 0.0
      %v6239 = vmax.f32 %v6151, 0.0
      %v6240 = vmax.f32 %v6156, 0.0
      %v6241 = vmax.f32 %v6159, 0.0
      %v6242 = vmax.f32 %v6164, 0.0
      %v6243 = vmax.f32 %v6167, 0.0
      %v6244 = vmax.f32 %v6172, 0.0
      %v6245 = vmax.f32 %v6175, 0.0
      %v6246 = vmax.f32 %v6180, 0.0
      %v6247 = vmax.f32 %v6183, 0.0
      %v6248 = vmax.f32 %v6188, 0.0
      %v6249 = vmax.f32 %v6191, 0.0
      %v6250 = vmax.f32 %v6196, 0.0
      %v6251 = vmax.f32 %v6199, 0.0
      %v6252 = vmax.f32 %v6204, 0.0
      %v6253 = vmax.f32 %v6207, 0.0
      %v6254 = vmax.f32 %v6212, 0.0
      %v6255 = vmax.f32 %v6215, 0.0
      %v6256 = vmax.f32 %v6220, 0.0
      %v6257 = vmax.f32 %v6223, 0.0
      %v6258 = vmul.f32 %v6226, %v6226
      %v6259 = vmul.f32 %v6227, %v6227
      %v6260 = vmul.f32 %v6228, %v6228
      %v6261 = vmul.f32 %v6229, %v6229
      %v6262 = vmul.f32 %v6230, %v6230
      %v6263 = vmul.f32 %v6231, %v6231
      %v6264 = vmul.f32 %v6232, %v6232
      %v6265 = vmul.f32 %v6233, %v6233
      %v6266 = vmul.f32 %v6234, %v6234
      %v6267 = vmul.f32 %v6235, %v6235
      %v6268 = vmul.f32 %v6236, %v6236
      %v6269 = vmul.f32 %v6237, %v6237
      %v6270 = vmul.f32 %v6238, %v6238
      %v6271 = vmul.f32 %v6239, %v6239
      %v6272 = vmul.f32 %v6240, %v6240
      %v6273 = vmul.f32 %v6241, %v6241
      %v6274 = vmul.f32 %v6242, %v6242
      %v6275 = vmul.f32 %v6243, %v6243
      %v6276 = vmul.f32 %v6244, %v6244
      %v6277 = vmul.f32 %v6245, %v6245
      %v6278 = vmul.f32 %v6246, %v6246
      %v6279 = vmul.f32 %v6247, %v6247
      %v6280 = vmul.f32 %v6248, %v6248
      %v6281 = vmul.f32 %v6249, %v6249
      %v6282 = vmul.f32 %v6250, %v6250
      %v6283 = vmul.f32 %v6251, %v6251
      %v6284 = vmul.f32 %v6252, %v6252
      %v6285 = vmul.f32 %v6253, %v6253
      %v6286 = vmul.f32 %v6254, %v6254
      %v6287 = vmul.f32 %v6255, %v6255
      %v6288 = vmul.f32 %v6256, %v6256
      %v6289 = vmul.f32 %v6257, %v6257
      %v6290 = vsel %vm885, %v6258, 0.0
      %6291 = vadd.xlane.f32.xlu0 %v6290
      %v6292 = vpop.xlane.xlu0 %6291
      %v6293 = vsel %vm885, %v6259, 0.0
      %6294 = vadd.xlane.f32.xlu0 %v6293
      %v6295 = vpop.xlane.xlu0 %6294
      %v6296 = vsel %vm885, %v6260, 0.0
      %6297 = vadd.xlane.f32.xlu0 %v6296
      %v6298 = vpop.xlane.xlu0 %6297
      %v6299 = vsel %vm885, %v6261, 0.0
      %6300 = vadd.xlane.f32.xlu0 %v6299
      %v6301 = vpop.xlane.xlu0 %6300
      %v6302 = vsel %vm885, %v6262, 0.0
      %6303 = vadd.xlane.f32.xlu0 %v6302
      %v6304 = vpop.xlane.xlu0 %6303
      %v6305 = vsel %vm885, %v6263, 0.0
      %6306 = vadd.xlane.f32.xlu0 %v6305
      %v6307 = vpop.xlane.xlu0 %6306
      %v6308 = vsel %vm885, %v6264, 0.0
      %6309 = vadd.xlane.f32.xlu0 %v6308
      %v6310 = vpop.xlane.xlu0 %6309
      %v6311 = vsel %vm885, %v6265, 0.0
      %6312 = vadd.xlane.f32.xlu0 %v6311
      %v6313 = vpop.xlane.xlu0 %6312
      %v6314 = vsel %vm885, %v6266, 0.0
      %6315 = vadd.xlane.f32.xlu0 %v6314
      %v6316 = vpop.xlane.xlu0 %6315
      %v6317 = vsel %vm885, %v6267, 0.0
      %6318 = vadd.xlane.f32.xlu0 %v6317
      %v6319 = vpop.xlane.xlu0 %6318
      %v6320 = vsel %vm885, %v6268, 0.0
      %6321 = vadd.xlane.f32.xlu0 %v6320
      %v6322 = vpop.xlane.xlu0 %6321
      %v6323 = vsel %vm885, %v6269, 0.0
      %6324 = vadd.xlane.f32.xlu0 %v6323
      %v6325 = vpop.xlane.xlu0 %6324
      %v6326 = vsel %vm885, %v6270, 0.0
      %6327 = vadd.xlane.f32.xlu0 %v6326
      %v6328 = vpop.xlane.xlu0 %6327
      %v6329 = vsel %vm885, %v6271, 0.0
      %6330 = vadd.xlane.f32.xlu0 %v6329
      %v6331 = vpop.xlane.xlu0 %6330
      %v6332 = vsel %vm885, %v6272, 0.0
      %6333 = vadd.xlane.f32.xlu0 %v6332
      %v6334 = vpop.xlane.xlu0 %6333
      %v6335 = vsel %vm885, %v6273, 0.0
      %6336 = vadd.xlane.f32.xlu0 %v6335
      %v6337 = vpop.xlane.xlu0 %6336
      %v6338 = vsel %vm885, %v6274, 0.0
      %6339 = vadd.xlane.f32.xlu0 %v6338
      %v6340 = vpop.xlane.xlu0 %6339
      %v6341 = vsel %vm885, %v6275, 0.0
      %6342 = vadd.xlane.f32.xlu0 %v6341
      %v6343 = vpop.xlane.xlu0 %6342
      %v6344 = vsel %vm885, %v6276, 0.0
      %6345 = vadd.xlane.f32.xlu0 %v6344
      %v6346 = vpop.xlane.xlu0 %6345
      %v6347 = vsel %vm885, %v6277, 0.0
      %6348 = vadd.xlane.f32.xlu0 %v6347
      %v6349 = vpop.xlane.xlu0 %6348
      %v6350 = vsel %vm885, %v6278, 0.0
      %6351 = vadd.xlane.f32.xlu0 %v6350
      %v6352 = vpop.xlane.xlu0 %6351
      %v6353 = vsel %vm885, %v6279, 0.0
      %6354 = vadd.xlane.f32.xlu0 %v6353
      %v6355 = vpop.xlane.xlu0 %6354
      %v6356 = vsel %vm885, %v6280, 0.0
      %6357 = vadd.xlane.f32.xlu0 %v6356
      %v6358 = vpop.xlane.xlu0 %6357
      %v6359 = vsel %vm885, %v6281, 0.0
      %6360 = vadd.xlane.f32.xlu0 %v6359
      %v6361 = vpop.xlane.xlu0 %6360
      %v6362 = vsel %vm885, %v6282, 0.0
      %6363 = vadd.xlane.f32.xlu0 %v6362
      %v6364 = vpop.xlane.xlu0 %6363
      %v6365 = vsel %vm885, %v6283, 0.0
      %6366 = vadd.xlane.f32.xlu0 %v6365
      %v6367 = vpop.xlane.xlu0 %6366
      %v6368 = vsel %vm885, %v6284, 0.0
      %6369 = vadd.xlane.f32.xlu0 %v6368
      %v6370 = vpop.xlane.xlu0 %6369
      %v6371 = vsel %vm885, %v6285, 0.0
      %6372 = vadd.xlane.f32.xlu0 %v6371
      %v6373 = vpop.xlane.xlu0 %6372
      %v6374 = vsel %vm885, %v6286, 0.0
      %6375 = vadd.xlane.f32.xlu0 %v6374
      %v6376 = vpop.xlane.xlu0 %6375
      %v6377 = vsel %vm885, %v6287, 0.0
      %6378 = vadd.xlane.f32.xlu0 %v6377
      %v6379 = vpop.xlane.xlu0 %6378
      %v6380 = vsel %vm885, %v6288, 0.0
      %6381 = vadd.xlane.f32.xlu0 %v6380
      %v6382 = vpop.xlane.xlu0 %6381
      %v6383 = vsel %vm885, %v6289, 0.0
      %6384 = vadd.xlane.f32.xlu0 %v6383
      %v6385 = vpop.xlane.xlu0 %6384
      %v6386 = vmax.f32 %v6292, 1e-24
      %v6387 = vmax.f32 %v6295, 1e-24
      %v6388 = vmax.f32 %v6298, 1e-24
      %v6389 = vmax.f32 %v6301, 1e-24
      %v6390 = vmax.f32 %v6304, 1e-24
      %v6391 = vmax.f32 %v6307, 1e-24
      %v6392 = vmax.f32 %v6310, 1e-24
      %v6393 = vmax.f32 %v6313, 1e-24
      %v6394 = vmax.f32 %v6316, 1e-24
      %v6395 = vmax.f32 %v6319, 1e-24
      %v6396 = vmax.f32 %v6322, 1e-24
      %v6397 = vmax.f32 %v6325, 1e-24
      %v6398 = vmax.f32 %v6328, 1e-24
      %v6399 = vmax.f32 %v6331, 1e-24
      %v6400 = vmax.f32 %v6334, 1e-24
      %v6401 = vmax.f32 %v6337, 1e-24
      %v6402 = vmax.f32 %v6340, 1e-24
      %v6403 = vmax.f32 %v6343, 1e-24
      %v6404 = vmax.f32 %v6346, 1e-24
      %v6405 = vmax.f32 %v6349, 1e-24
      %v6406 = vmax.f32 %v6352, 1e-24
      %v6407 = vmax.f32 %v6355, 1e-24
      %v6408 = vmax.f32 %v6358, 1e-24
      %v6409 = vmax.f32 %v6361, 1e-24
      %v6410 = vmax.f32 %v6364, 1e-24
      %v6411 = vmax.f32 %v6367, 1e-24
      %v6412 = vmax.f32 %v6370, 1e-24
      %v6413 = vmax.f32 %v6373, 1e-24
      %v6414 = vmax.f32 %v6376, 1e-24
      %v6415 = vmax.f32 %v6379, 1e-24
      %v6416 = vmax.f32 %v6382, 1e-24
      %v6417 = vmax.f32 %v6385, 1e-24
      %v6418 = vrsqrt.pop %v6386
      %v6419 = vrsqrt.pop %v6387
      %v6420 = vrsqrt.pop %v6388
      %v6421 = vrsqrt.pop %v6389
      %v6422 = vrsqrt.pop %v6390
      %v6423 = vrsqrt.pop %v6391
      %v6424 = vrsqrt.pop %v6392
      %v6425 = vrsqrt.pop %v6393
      %v6426 = vrsqrt.pop %v6394
      %v6427 = vrsqrt.pop %v6395
      %v6428 = vrsqrt.pop %v6396
      %v6429 = vrsqrt.pop %v6397
      %v6430 = vrsqrt.pop %v6398
      %v6431 = vrsqrt.pop %v6399
      %v6432 = vrsqrt.pop %v6400
      %v6433 = vrsqrt.pop %v6401
      %v6434 = vrsqrt.pop %v6402
      %v6435 = vrsqrt.pop %v6403
      %v6436 = vrsqrt.pop %v6404
      %v6437 = vrsqrt.pop %v6405
      %v6438 = vrsqrt.pop %v6406
      %v6439 = vrsqrt.pop %v6407
      %v6440 = vrsqrt.pop %v6408
      %v6441 = vrsqrt.pop %v6409
      %v6442 = vrsqrt.pop %v6410
      %v6443 = vrsqrt.pop %v6411
      %v6444 = vrsqrt.pop %v6412
      %v6445 = vrsqrt.pop %v6413
      %v6446 = vrsqrt.pop %v6414
      %v6447 = vrsqrt.pop %v6415
      %v6448 = vrsqrt.pop %v6416
      %v6449 = vrsqrt.pop %v6417
      %v6450 = vmul.f32 %v6226, %v6418
      %v6451 = vmul.f32 %v6227, %v6419
      %v6452 = vmul.f32 %v6228, %v6420
      %v6453 = vmul.f32 %v6229, %v6421
      %v6454 = vmul.f32 %v6230, %v6422
      %v6455 = vmul.f32 %v6231, %v6423
      %v6456 = vmul.f32 %v6232, %v6424
      %v6457 = vmul.f32 %v6233, %v6425
      %v6458 = vmul.f32 %v6234, %v6426
      %v6459 = vmul.f32 %v6235, %v6427
      %v6460 = vmul.f32 %v6236, %v6428
      %v6461 = vmul.f32 %v6237, %v6429
      %v6462 = vmul.f32 %v6238, %v6430
      %v6463 = vmul.f32 %v6239, %v6431
      %v6464 = vmul.f32 %v6240, %v6432
      %v6465 = vmul.f32 %v6241, %v6433
      %v6466 = vmul.f32 %v6242, %v6434
      %v6467 = vmul.f32 %v6243, %v6435
      %v6468 = vmul.f32 %v6244, %v6436
      %v6469 = vmul.f32 %v6245, %v6437
      %v6470 = vmul.f32 %v6246, %v6438
      %v6471 = vmul.f32 %v6247, %v6439
      %v6472 = vmul.f32 %v6248, %v6440
      %v6473 = vmul.f32 %v6249, %v6441
      %v6474 = vmul.f32 %v6250, %v6442
      %v6475 = vmul.f32 %v6251, %v6443
      %v6476 = vmul.f32 %v6252, %v6444
      %v6477 = vmul.f32 %v6253, %v6445
      %v6478 = vmul.f32 %v6254, %v6446
      %v6479 = vmul.f32 %v6255, %v6447
      %v6480 = vmul.f32 %v6256, %v6448
      %v6481 = vmul.f32 %v6257, %v6449
      %v6482 = vadd.f32 %v5133, %v6450
      %v6483 = vadd.f32 %v5134, %v6451
      %v6484 = vadd.f32 %v5135, %v6452
      %v6485 = vadd.f32 %v5136, %v6453
      %v6486 = vadd.f32 %v5137, %v6454
      %v6487 = vadd.f32 %v5138, %v6455
      %v6488 = vadd.f32 %v5139, %v6456
      %v6489 = vadd.f32 %v5140, %v6457
      %v6490 = vadd.f32 %v5141, %v6458
      %v6491 = vadd.f32 %v5142, %v6459
      %v6492 = vadd.f32 %v5143, %v6460
      %v6493 = vadd.f32 %v5144, %v6461
      %v6494 = vadd.f32 %v5145, %v6462
      %v6495 = vadd.f32 %v5146, %v6463
      %v6496 = vadd.f32 %v5147, %v6464
      %v6497 = vadd.f32 %v5148, %v6465
      %v6498 = vadd.f32 %v5149, %v6466
      %v6499 = vadd.f32 %v5150, %v6467
      %v6500 = vadd.f32 %v5151, %v6468
      %v6501 = vadd.f32 %v5152, %v6469
      %v6502 = vadd.f32 %v5153, %v6470
      %v6503 = vadd.f32 %v5154, %v6471
      %v6504 = vadd.f32 %v5155, %v6472
      %v6505 = vadd.f32 %v5156, %v6473
      %v6506 = vadd.f32 %v5157, %v6474
      %v6507 = vadd.f32 %v5158, %v6475
      %v6508 = vadd.f32 %v5159, %v6476
      %v6509 = vadd.f32 %v5160, %v6477
      %v6510 = vadd.f32 %v5161, %v6478
      %v6511 = vadd.f32 %v5162, %v6479
      %v6512 = vadd.f32 %v5163, %v6480
      %v6513 = vadd.f32 %v5164, %v6481
      %v6514 = vpack.c.bf16 %v6451, %v6450
      %v6515 = vpack.c.bf16 %v6453, %v6452
      %v6516 = vpack.c.bf16 %v6455, %v6454
      %v6517 = vpack.c.bf16 %v6457, %v6456
      %v6518 = vpack.c.bf16 %v6459, %v6458
      %v6519 = vpack.c.bf16 %v6461, %v6460
      %v6520 = vpack.c.bf16 %v6463, %v6462
      %v6521 = vpack.c.bf16 %v6465, %v6464
      %v6522 = vpack.c.bf16 %v6467, %v6466
      %v6523 = vpack.c.bf16 %v6469, %v6468
      %v6524 = vpack.c.bf16 %v6471, %v6470
      %v6525 = vpack.c.bf16 %v6473, %v6472
      %v6526 = vpack.c.bf16 %v6475, %v6474
      %v6527 = vpack.c.bf16 %v6477, %v6476
      %v6528 = vpack.c.bf16 %v6479, %v6478
      %v6529 = vpack.c.bf16 %v6481, %v6480
      %v6531 = vsel %vm885, %v6514, 0
      %v6534 = vsel %vm885, %v6515, 0
      %v6537 = vsel %vm885, %v6516, 0
      %v6540 = vsel %vm885, %v6517, 0
      %v6543 = vsel %vm885, %v6518, 0
      %v6546 = vsel %vm885, %v6519, 0
      %v6549 = vsel %vm885, %v6520, 0
      %v6552 = vsel %vm885, %v6521, 0
      %v6555 = vsel %vm885, %v6522, 0
      %v6558 = vsel %vm885, %v6523, 0
      %v6561 = vsel %vm885, %v6524, 0
      %v6564 = vsel %vm885, %v6525, 0
      %v6567 = vsel %vm885, %v6526, 0
      %v6570 = vsel %vm885, %v6527, 0
      %v6573 = vsel %vm885, %v6528, 0
      %v6576 = vsel %vm885, %v6529, 0
      %6578 = vmatprep.subr.bf16.mxu0 0
      %6579 = vmatpush1.bf16.msra.mxu0 0
      %6580 = vmatprep.subr.bf16.mxu0 0
      %6581 = vmatpush1.bf16.msra.mxu0 0
      %6582 = vmatprep.subr.bf16.mxu0 0
      %6583 = vmatpush1.bf16.msra.mxu0 0
      %6584 = vmatprep.subr.bf16.mxu0 0
      %6585 = vmatpush1.bf16.msra.mxu0 0
      %6586 = vmatprep.subr.bf16.mxu0 0
      %6587 = vmatpush1.bf16.msra.mxu0 0
      %6588 = vmatprep.subr.bf16.mxu0 0
      %6589 = vmatpush1.bf16.msra.mxu0 0
      %6590 = vmatprep.subr.bf16.mxu0 0
      %6591 = vmatpush1.bf16.msra.mxu0 %v1113
      %6592 = vmatprep.subr.bf16.mxu0 0
      %6593 = vmatpush1.bf16.msra.mxu0 %v1112
      %6594 = vmatprep.subr.bf16.mxu0 0
      %6595 = vmatpush2.bf16.msra.mxu0 0
      %6596 = vmatprep.subr.bf16.mxu0 0
      %6597 = vmatpush2.bf16.msra.mxu0 0
      %6598 = vmatprep.subr.bf16.mxu0 0
      %6599 = vmatpush2.bf16.msra.mxu0 0
      %6600 = vmatprep.subr.bf16.mxu0 0
      %6601 = vmatpush2.bf16.msra.mxu0 0
      %6602 = vmatprep.subr.bf16.mxu0 0
      %6603 = vmatpush2.bf16.msra.mxu0 0
      %6604 = vmatprep.subr.bf16.mxu0 0
      %6605 = vmatpush2.bf16.msra.mxu0 0
      %6606 = vmatprep.subr.bf16.mxu0 0
      %6607 = vmatpush2.bf16.msra.mxu0 0
      %6608 = vmatprep.subr.bf16.mxu0 0
      %6609 = vmatpush2.bf16.msra.mxu0 0
      %6610 = vmatprep.mubr.bf16.mxu0 0
      %6611 = vmatmul.mubr.bf16.gmra.mxu0 %v6531
      %v6612 = vpop.f32.mrf.mxu0
      %v6613 = vadd.f32 %v1102, %v6612
      %v6614 = vpop.f32.mrf.mxu0
      %v6615 = vpop.f32.mrf.mxu0
      %v6616 = vadd.f32 %v1102, %v6615
      %v6617 = vpop.f32.mrf.mxu0
      %6618 = vmatprep.mubr.bf16.mxu0 0
      %6619 = vmatmul.mubr.bf16.gmra.mxu0 %v6534
      %v6620 = vpop.f32.mrf.mxu0
      %v6621 = vadd.f32 %v1102, %v6620
      %v6622 = vpop.f32.mrf.mxu0
      %v6623 = vpop.f32.mrf.mxu0
      %v6624 = vadd.f32 %v1102, %v6623
      %v6625 = vpop.f32.mrf.mxu0
      %6626 = vmatprep.mubr.bf16.mxu0 0
      %6627 = vmatmul.mubr.bf16.gmra.mxu0 %v6537
      %v6628 = vpop.f32.mrf.mxu0
      %v6629 = vadd.f32 %v1102, %v6628
      %v6630 = vpop.f32.mrf.mxu0
      %v6631 = vpop.f32.mrf.mxu0
      %v6632 = vadd.f32 %v1102, %v6631
      %v6633 = vpop.f32.mrf.mxu0
      %6634 = vmatprep.mubr.bf16.mxu0 0
      %6635 = vmatmul.mubr.bf16.gmra.mxu0 %v6540
      %v6636 = vpop.f32.mrf.mxu0
      %v6637 = vadd.f32 %v1102, %v6636
      %v6638 = vpop.f32.mrf.mxu0
      %v6639 = vpop.f32.mrf.mxu0
      %v6640 = vadd.f32 %v1102, %v6639
      %v6641 = vpop.f32.mrf.mxu0
      %6642 = vmatprep.mubr.bf16.mxu0 0
      %6643 = vmatmul.mubr.bf16.gmra.mxu0 %v6543
      %v6644 = vpop.f32.mrf.mxu0
      %v6645 = vadd.f32 %v1102, %v6644
      %v6646 = vpop.f32.mrf.mxu0
      %v6647 = vpop.f32.mrf.mxu0
      %v6648 = vadd.f32 %v1102, %v6647
      %v6649 = vpop.f32.mrf.mxu0
      %6650 = vmatprep.mubr.bf16.mxu0 0
      %6651 = vmatmul.mubr.bf16.gmra.mxu0 %v6546
      %v6652 = vpop.f32.mrf.mxu0
      %v6653 = vadd.f32 %v1102, %v6652
      %v6654 = vpop.f32.mrf.mxu0
      %v6655 = vpop.f32.mrf.mxu0
      %v6656 = vadd.f32 %v1102, %v6655
      %v6657 = vpop.f32.mrf.mxu0
      %6658 = vmatprep.mubr.bf16.mxu0 0
      %6659 = vmatmul.mubr.bf16.gmra.mxu0 %v6549
      %v6660 = vpop.f32.mrf.mxu0
      %v6661 = vadd.f32 %v1102, %v6660
      %v6662 = vpop.f32.mrf.mxu0
      %v6663 = vpop.f32.mrf.mxu0
      %v6664 = vadd.f32 %v1102, %v6663
      %v6665 = vpop.f32.mrf.mxu0
      %6666 = vmatprep.mubr.bf16.mxu0 0
      %6667 = vmatmul.mubr.bf16.gmra.mxu0 %v6552
      %v6668 = vpop.f32.mrf.mxu0
      %v6669 = vadd.f32 %v1102, %v6668
      %v6670 = vpop.f32.mrf.mxu0
      %v6671 = vpop.f32.mrf.mxu0
      %v6672 = vadd.f32 %v1102, %v6671
      %v6673 = vpop.f32.mrf.mxu0
      %6674 = vmatprep.mubr.bf16.mxu0 0
      %6675 = vmatmul.mubr.bf16.gmra.mxu0 %v6555
      %v6676 = vpop.f32.mrf.mxu0
      %v6677 = vadd.f32 %v1102, %v6676
      %v6678 = vpop.f32.mrf.mxu0
      %v6679 = vpop.f32.mrf.mxu0
      %v6680 = vadd.f32 %v1102, %v6679
      %v6681 = vpop.f32.mrf.mxu0
      %6682 = vmatprep.mubr.bf16.mxu0 0
      %6683 = vmatmul.mubr.bf16.gmra.mxu0 %v6558
      %v6684 = vpop.f32.mrf.mxu0
      %v6685 = vadd.f32 %v1102, %v6684
      %v6686 = vpop.f32.mrf.mxu0
      %v6687 = vpop.f32.mrf.mxu0
      %v6688 = vadd.f32 %v1102, %v6687
      %v6689 = vpop.f32.mrf.mxu0
      %6690 = vmatprep.mubr.bf16.mxu0 0
      %6691 = vmatmul.mubr.bf16.gmra.mxu0 %v6561
      %v6692 = vpop.f32.mrf.mxu0
      %v6693 = vadd.f32 %v1102, %v6692
      %v6694 = vpop.f32.mrf.mxu0
      %v6695 = vpop.f32.mrf.mxu0
      %v6696 = vadd.f32 %v1102, %v6695
      %v6697 = vpop.f32.mrf.mxu0
      %6698 = vmatprep.mubr.bf16.mxu0 0
      %6699 = vmatmul.mubr.bf16.gmra.mxu0 %v6564
      %v6700 = vpop.f32.mrf.mxu0
      %v6701 = vadd.f32 %v1102, %v6700
      %v6702 = vpop.f32.mrf.mxu0
      %v6703 = vpop.f32.mrf.mxu0
      %v6704 = vadd.f32 %v1102, %v6703
      %v6705 = vpop.f32.mrf.mxu0
      %6706 = vmatprep.mubr.bf16.mxu0 0
      %6707 = vmatmul.mubr.bf16.gmra.mxu0 %v6567
      %v6708 = vpop.f32.mrf.mxu0
      %v6709 = vadd.f32 %v1102, %v6708
      %v6710 = vpop.f32.mrf.mxu0
      %v6711 = vpop.f32.mrf.mxu0
      %v6712 = vadd.f32 %v1102, %v6711
      %v6713 = vpop.f32.mrf.mxu0
      %6714 = vmatprep.mubr.bf16.mxu0 0
      %6715 = vmatmul.mubr.bf16.gmra.mxu0 %v6570
      %v6716 = vpop.f32.mrf.mxu0
      %v6717 = vadd.f32 %v1102, %v6716
      %v6718 = vpop.f32.mrf.mxu0
      %v6719 = vpop.f32.mrf.mxu0
      %v6720 = vadd.f32 %v1102, %v6719
      %v6721 = vpop.f32.mrf.mxu0
      %6722 = vmatprep.mubr.bf16.mxu0 0
      %6723 = vmatmul.mubr.bf16.gmra.mxu0 %v6573
      %v6724 = vpop.f32.mrf.mxu0
      %v6725 = vadd.f32 %v1102, %v6724
      %v6726 = vpop.f32.mrf.mxu0
      %v6727 = vpop.f32.mrf.mxu0
      %v6728 = vadd.f32 %v1102, %v6727
      %v6729 = vpop.f32.mrf.mxu0
      %6730 = vmatprep.mubr.bf16.mxu0 0
      %6731 = vmatmul.mubr.bf16.gmra.mxu0 %v6576
      %v6732 = vpop.f32.mrf.mxu0
      %v6733 = vadd.f32 %v1102, %v6732
      %v6734 = vpop.f32.mrf.mxu0
      %v6735 = vpop.f32.mrf.mxu0
      %v6736 = vadd.f32 %v1102, %v6735
      %v6737 = vpop.f32.mrf.mxu0
      %6738 = vdwg.mxu0
      %v6739 = vmax.f32 %v6613, 0.0
      %v6740 = vmax.f32 %v6616, 0.0
      %v6741 = vmax.f32 %v6621, 0.0
      %v6742 = vmax.f32 %v6624, 0.0
      %v6743 = vmax.f32 %v6629, 0.0
      %v6744 = vmax.f32 %v6632, 0.0
      %v6745 = vmax.f32 %v6637, 0.0
      %v6746 = vmax.f32 %v6640, 0.0
      %v6747 = vmax.f32 %v6645, 0.0
      %v6748 = vmax.f32 %v6648, 0.0
      %v6749 = vmax.f32 %v6653, 0.0
      %v6750 = vmax.f32 %v6656, 0.0
      %v6751 = vmax.f32 %v6661, 0.0
      %v6752 = vmax.f32 %v6664, 0.0
      %v6753 = vmax.f32 %v6669, 0.0
      %v6754 = vmax.f32 %v6672, 0.0
      %v6755 = vmax.f32 %v6677, 0.0
      %v6756 = vmax.f32 %v6680, 0.0
      %v6757 = vmax.f32 %v6685, 0.0
      %v6758 = vmax.f32 %v6688, 0.0
      %v6759 = vmax.f32 %v6693, 0.0
      %v6760 = vmax.f32 %v6696, 0.0
      %v6761 = vmax.f32 %v6701, 0.0
      %v6762 = vmax.f32 %v6704, 0.0
      %v6763 = vmax.f32 %v6709, 0.0
      %v6764 = vmax.f32 %v6712, 0.0
      %v6765 = vmax.f32 %v6717, 0.0
      %v6766 = vmax.f32 %v6720, 0.0
      %v6767 = vmax.f32 %v6725, 0.0
      %v6768 = vmax.f32 %v6728, 0.0
      %v6769 = vmax.f32 %v6733, 0.0
      %v6770 = vmax.f32 %v6736, 0.0
      %v6771 = vpack.c.bf16 %v6740, %v6739
      %v6772 = vpack.c.bf16 %v6742, %v6741
      %v6773 = vpack.c.bf16 %v6744, %v6743
      %v6774 = vpack.c.bf16 %v6746, %v6745
      %v6775 = vpack.c.bf16 %v6748, %v6747
      %v6776 = vpack.c.bf16 %v6750, %v6749
      %v6777 = vpack.c.bf16 %v6752, %v6751
      %v6778 = vpack.c.bf16 %v6754, %v6753
      %v6779 = vpack.c.bf16 %v6756, %v6755
      %v6780 = vpack.c.bf16 %v6758, %v6757
      %v6781 = vpack.c.bf16 %v6760, %v6759
      %v6782 = vpack.c.bf16 %v6762, %v6761
      %v6783 = vpack.c.bf16 %v6764, %v6763
      %v6784 = vpack.c.bf16 %v6766, %v6765
      %v6785 = vpack.c.bf16 %v6768, %v6767
      %v6786 = vpack.c.bf16 %v6770, %v6769
      %v6788 = vsel %vm1411, %v6771, 0
      %v6791 = vsel %vm1411, %v6772, 0
      %v6794 = vsel %vm1411, %v6773, 0
      %v6797 = vsel %vm1411, %v6774, 0
      %v6800 = vsel %vm1411, %v6775, 0
      %v6803 = vsel %vm1411, %v6776, 0
      %v6806 = vsel %vm1411, %v6777, 0
      %v6809 = vsel %vm1411, %v6778, 0
      %v6812 = vsel %vm1411, %v6779, 0
      %v6815 = vsel %vm1411, %v6780, 0
      %v6818 = vsel %vm1411, %v6781, 0
      %v6821 = vsel %vm1411, %v6782, 0
      %v6824 = vsel %vm1411, %v6783, 0
      %v6827 = vsel %vm1411, %v6784, 0
      %v6830 = vsel %vm1411, %v6785, 0
      %v6833 = vsel %vm1411, %v6786, 0
      %6835 = vmatprep.subr.bf16.mxu0 0
      %6836 = vmatpush1.bf16.msra.mxu0 0
      %6837 = vmatprep.subr.bf16.mxu0 0
      %6838 = vmatpush1.bf16.msra.mxu0 0
      %6839 = vmatprep.subr.bf16.mxu0 0
      %6840 = vmatpush1.bf16.msra.mxu0 0
      %6841 = vmatprep.subr.bf16.mxu0 0
      %6842 = vmatpush1.bf16.msra.mxu0 0
      %6843 = vmatprep.subr.bf16.mxu0 0
      %6844 = vmatpush1.bf16.msra.mxu0 %v1406
      %6845 = vmatprep.subr.bf16.mxu0 0
      %6846 = vmatpush1.bf16.msra.mxu0 %v1405
      %6847 = vmatprep.subr.bf16.mxu0 0
      %6848 = vmatpush1.bf16.msra.mxu0 %v1404
      %6849 = vmatprep.subr.bf16.mxu0 0
      %6850 = vmatpush1.bf16.msra.mxu0 %v1403
      %6851 = vmatprep.subr.bf16.mxu0 0
      %6852 = vmatpush2.bf16.msra.mxu0 0
      %6853 = vmatprep.subr.bf16.mxu0 0
      %6854 = vmatpush2.bf16.msra.mxu0 0
      %6855 = vmatprep.subr.bf16.mxu0 0
      %6856 = vmatpush2.bf16.msra.mxu0 0
      %6857 = vmatprep.subr.bf16.mxu0 0
      %6858 = vmatpush2.bf16.msra.mxu0 0
      %6859 = vmatprep.subr.bf16.mxu0 0
      %6860 = vmatpush2.bf16.msra.mxu0 0
      %6861 = vmatprep.subr.bf16.mxu0 0
      %6862 = vmatpush2.bf16.msra.mxu0 0
      %6863 = vmatprep.subr.bf16.mxu0 0
      %6864 = vmatpush2.bf16.msra.mxu0 0
      %6865 = vmatprep.subr.bf16.mxu0 0
      %6866 = vmatpush2.bf16.msra.mxu0 0
      %6867 = vmatprep.mubr.bf16.mxu0 0
      %6868 = vmatmul.mubr.bf16.gmra.mxu0 %v6788
      %v6869 = vpop.f32.mrf.mxu0
      %v6870 = vadd.f32 %v1385, %v6869
      %v6871 = vpop.f32.mrf.mxu0
      %v6872 = vpop.f32.mrf.mxu0
      %v6873 = vadd.f32 %v1385, %v6872
      %v6874 = vpop.f32.mrf.mxu0
      %6875 = vmatprep.mubr.bf16.mxu0 0
      %6876 = vmatmul.mubr.bf16.gmra.mxu0 %v6791
      %v6877 = vpop.f32.mrf.mxu0
      %v6878 = vadd.f32 %v1385, %v6877
      %v6879 = vpop.f32.mrf.mxu0
      %v6880 = vpop.f32.mrf.mxu0
      %v6881 = vadd.f32 %v1385, %v6880
      %v6882 = vpop.f32.mrf.mxu0
      %6883 = vmatprep.mubr.bf16.mxu0 0
      %6884 = vmatmul.mubr.bf16.gmra.mxu0 %v6794
      %v6885 = vpop.f32.mrf.mxu0
      %v6886 = vadd.f32 %v1385, %v6885
      %v6887 = vpop.f32.mrf.mxu0
      %v6888 = vpop.f32.mrf.mxu0
      %v6889 = vadd.f32 %v1385, %v6888
      %v6890 = vpop.f32.mrf.mxu0
      %6891 = vmatprep.mubr.bf16.mxu0 0
      %6892 = vmatmul.mubr.bf16.gmra.mxu0 %v6797
      %v6893 = vpop.f32.mrf.mxu0
      %v6894 = vadd.f32 %v1385, %v6893
      %v6895 = vpop.f32.mrf.mxu0
      %v6896 = vpop.f32.mrf.mxu0
      %v6897 = vadd.f32 %v1385, %v6896
      %v6898 = vpop.f32.mrf.mxu0
      %6899 = vmatprep.mubr.bf16.mxu0 0
      %6900 = vmatmul.mubr.bf16.gmra.mxu0 %v6800
      %v6901 = vpop.f32.mrf.mxu0
      %v6902 = vadd.f32 %v1385, %v6901
      %v6903 = vpop.f32.mrf.mxu0
      %v6904 = vpop.f32.mrf.mxu0
      %v6905 = vadd.f32 %v1385, %v6904
      %v6906 = vpop.f32.mrf.mxu0
      %6907 = vmatprep.mubr.bf16.mxu0 0
      %6908 = vmatmul.mubr.bf16.gmra.mxu0 %v6803
      %v6909 = vpop.f32.mrf.mxu0
      %v6910 = vadd.f32 %v1385, %v6909
      %v6911 = vpop.f32.mrf.mxu0
      %v6912 = vpop.f32.mrf.mxu0
      %v6913 = vadd.f32 %v1385, %v6912
      %v6914 = vpop.f32.mrf.mxu0
      %6915 = vmatprep.mubr.bf16.mxu0 0
      %6916 = vmatmul.mubr.bf16.gmra.mxu0 %v6806
      %v6917 = vpop.f32.mrf.mxu0
      %v6918 = vadd.f32 %v1385, %v6917
      %v6919 = vpop.f32.mrf.mxu0
      %v6920 = vpop.f32.mrf.mxu0
      %v6921 = vadd.f32 %v1385, %v6920
      %v6922 = vpop.f32.mrf.mxu0
      %6923 = vmatprep.mubr.bf16.mxu0 0
      %6924 = vmatmul.mubr.bf16.gmra.mxu0 %v6809
      %v6925 = vpop.f32.mrf.mxu0
      %v6926 = vadd.f32 %v1385, %v6925
      %v6927 = vpop.f32.mrf.mxu0
      %v6928 = vpop.f32.mrf.mxu0
      %v6929 = vadd.f32 %v1385, %v6928
      %v6930 = vpop.f32.mrf.mxu0
      %6931 = vmatprep.mubr.bf16.mxu0 0
      %6932 = vmatmul.mubr.bf16.gmra.mxu0 %v6812
      %v6933 = vpop.f32.mrf.mxu0
      %v6934 = vadd.f32 %v1385, %v6933
      %v6935 = vpop.f32.mrf.mxu0
      %v6936 = vpop.f32.mrf.mxu0
      %v6937 = vadd.f32 %v1385, %v6936
      %v6938 = vpop.f32.mrf.mxu0
      %6939 = vmatprep.mubr.bf16.mxu0 0
      %6940 = vmatmul.mubr.bf16.gmra.mxu0 %v6815
      %v6941 = vpop.f32.mrf.mxu0
      %v6942 = vadd.f32 %v1385, %v6941
      %v6943 = vpop.f32.mrf.mxu0
      %v6944 = vpop.f32.mrf.mxu0
      %v6945 = vadd.f32 %v1385, %v6944
      %v6946 = vpop.f32.mrf.mxu0
      %6947 = vmatprep.mubr.bf16.mxu0 0
      %6948 = vmatmul.mubr.bf16.gmra.mxu0 %v6818
      %v6949 = vpop.f32.mrf.mxu0
      %v6950 = vadd.f32 %v1385, %v6949
      %v6951 = vpop.f32.mrf.mxu0
      %v6952 = vpop.f32.mrf.mxu0
      %v6953 = vadd.f32 %v1385, %v6952
      %v6954 = vpop.f32.mrf.mxu0
      %6955 = vmatprep.mubr.bf16.mxu0 0
      %6956 = vmatmul.mubr.bf16.gmra.mxu0 %v6821
      %v6957 = vpop.f32.mrf.mxu0
      %v6958 = vadd.f32 %v1385, %v6957
      %v6959 = vpop.f32.mrf.mxu0
      %v6960 = vpop.f32.mrf.mxu0
      %v6961 = vadd.f32 %v1385, %v6960
      %v6962 = vpop.f32.mrf.mxu0
      %6963 = vmatprep.mubr.bf16.mxu0 0
      %6964 = vmatmul.mubr.bf16.gmra.mxu0 %v6824
      %v6965 = vpop.f32.mrf.mxu0
      %v6966 = vadd.f32 %v1385, %v6965
      %v6967 = vpop.f32.mrf.mxu0
      %v6968 = vpop.f32.mrf.mxu0
      %v6969 = vadd.f32 %v1385, %v6968
      %v6970 = vpop.f32.mrf.mxu0
      %6971 = vmatprep.mubr.bf16.mxu0 0
      %6972 = vmatmul.mubr.bf16.gmra.mxu0 %v6827
      %v6973 = vpop.f32.mrf.mxu0
      %v6974 = vadd.f32 %v1385, %v6973
      %v6975 = vpop.f32.mrf.mxu0
      %v6976 = vpop.f32.mrf.mxu0
      %v6977 = vadd.f32 %v1385, %v6976
      %v6978 = vpop.f32.mrf.mxu0
      %6979 = vmatprep.mubr.bf16.mxu0 0
      %6980 = vmatmul.mubr.bf16.gmra.mxu0 %v6830
      %v6981 = vpop.f32.mrf.mxu0
      %v6982 = vadd.f32 %v1385, %v6981
      %v6983 = vpop.f32.mrf.mxu0
      %v6984 = vpop.f32.mrf.mxu0
      %v6985 = vadd.f32 %v1385, %v6984
      %v6986 = vpop.f32.mrf.mxu0
      %6987 = vmatprep.mubr.bf16.mxu0 0
      %6988 = vmatmul.mubr.bf16.gmra.mxu0 %v6833
      %v6989 = vpop.f32.mrf.mxu0
      %v6990 = vadd.f32 %v1385, %v6989
      %v6991 = vpop.f32.mrf.mxu0
      %v6992 = vpop.f32.mrf.mxu0
      %v6993 = vadd.f32 %v1385, %v6992
      %v6994 = vpop.f32.mrf.mxu0
      %6995 = vdwg.mxu0
      %v6996 = vmax.f32 %v6870, 0.0
      %v6997 = vmax.f32 %v6873, 0.0
      %v6998 = vmax.f32 %v6878, 0.0
      %v6999 = vmax.f32 %v6881, 0.0
      %v7000 = vmax.f32 %v6886, 0.0
      %v7001 = vmax.f32 %v6889, 0.0
      %v7002 = vmax.f32 %v6894, 0.0
      %v7003 = vmax.f32 %v6897, 0.0
      %v7004 = vmax.f32 %v6902, 0.0
      %v7005 = vmax.f32 %v6905, 0.0
      %v7006 = vmax.f32 %v6910, 0.0
      %v7007 = vmax.f32 %v6913, 0.0
      %v7008 = vmax.f32 %v6918, 0.0
      %v7009 = vmax.f32 %v6921, 0.0
      %v7010 = vmax.f32 %v6926, 0.0
      %v7011 = vmax.f32 %v6929, 0.0
      %v7012 = vmax.f32 %v6934, 0.0
      %v7013 = vmax.f32 %v6937, 0.0
      %v7014 = vmax.f32 %v6942, 0.0
      %v7015 = vmax.f32 %v6945, 0.0
      %v7016 = vmax.f32 %v6950, 0.0
      %v7017 = vmax.f32 %v6953, 0.0
      %v7018 = vmax.f32 %v6958, 0.0
      %v7019 = vmax.f32 %v6961, 0.0
      %v7020 = vmax.f32 %v6966, 0.0
      %v7021 = vmax.f32 %v6969, 0.0
      %v7022 = vmax.f32 %v6974, 0.0
      %v7023 = vmax.f32 %v6977, 0.0
      %v7024 = vmax.f32 %v6982, 0.0
      %v7025 = vmax.f32 %v6985, 0.0
      %v7026 = vmax.f32 %v6990, 0.0
      %v7027 = vmax.f32 %v6993, 0.0
      %v7028 = vmul.f32 %v6996, %v1657
      %v7029 = vmul.f32 %v6997, %v1657
      %v7030 = vmul.f32 %v6998, %v1657
      %v7031 = vmul.f32 %v6999, %v1657
      %v7032 = vmul.f32 %v7000, %v1657
      %v7033 = vmul.f32 %v7001, %v1657
      %v7034 = vmul.f32 %v7002, %v1657
      %v7035 = vmul.f32 %v7003, %v1657
      %v7036 = vmul.f32 %v7004, %v1657
      %v7037 = vmul.f32 %v7005, %v1657
      %v7038 = vmul.f32 %v7006, %v1657
      %v7039 = vmul.f32 %v7007, %v1657
      %v7040 = vmul.f32 %v7008, %v1657
      %v7041 = vmul.f32 %v7009, %v1657
      %v7042 = vmul.f32 %v7010, %v1657
      %v7043 = vmul.f32 %v7011, %v1657
      %v7044 = vmul.f32 %v7012, %v1657
      %v7045 = vmul.f32 %v7013, %v1657
      %v7046 = vmul.f32 %v7014, %v1657
      %v7047 = vmul.f32 %v7015, %v1657
      %v7048 = vmul.f32 %v7016, %v1657
      %v7049 = vmul.f32 %v7017, %v1657
      %v7050 = vmul.f32 %v7018, %v1657
      %v7051 = vmul.f32 %v7019, %v1657
      %v7052 = vmul.f32 %v7020, %v1657
      %v7053 = vmul.f32 %v7021, %v1657
      %v7054 = vmul.f32 %v7022, %v1657
      %v7055 = vmul.f32 %v7023, %v1657
      %v7056 = vmul.f32 %v7024, %v1657
      %v7057 = vmul.f32 %v7025, %v1657
      %v7058 = vmul.f32 %v7026, %v1657
      %v7059 = vmul.f32 %v7027, %v1657
      %v7060 = vsel %vm1411, %v7028, 0.0
      %7061 = vadd.xlane.f32.xlu0 %v7060
      %v7062 = vpop.xlane.xlu0 %7061
      %v7063 = vsel %vm1411, %v7029, 0.0
      %7064 = vadd.xlane.f32.xlu0 %v7063
      %v7065 = vpop.xlane.xlu0 %7064
      %v7066 = vsel %vm1411, %v7030, 0.0
      %7067 = vadd.xlane.f32.xlu0 %v7066
      %v7068 = vpop.xlane.xlu0 %7067
      %v7069 = vsel %vm1411, %v7031, 0.0
      %7070 = vadd.xlane.f32.xlu0 %v7069
      %v7071 = vpop.xlane.xlu0 %7070
      %v7072 = vsel %vm1411, %v7032, 0.0
      %7073 = vadd.xlane.f32.xlu0 %v7072
      %v7074 = vpop.xlane.xlu0 %7073
      %v7075 = vsel %vm1411, %v7033, 0.0
      %7076 = vadd.xlane.f32.xlu0 %v7075
      %v7077 = vpop.xlane.xlu0 %7076
      %v7078 = vsel %vm1411, %v7034, 0.0
      %7079 = vadd.xlane.f32.xlu0 %v7078
      %v7080 = vpop.xlane.xlu0 %7079
      %v7081 = vsel %vm1411, %v7035, 0.0
      %7082 = vadd.xlane.f32.xlu0 %v7081
      %v7083 = vpop.xlane.xlu0 %7082
      %v7084 = vsel %vm1411, %v7036, 0.0
      %7085 = vadd.xlane.f32.xlu0 %v7084
      %v7086 = vpop.xlane.xlu0 %7085
      %v7087 = vsel %vm1411, %v7037, 0.0
      %7088 = vadd.xlane.f32.xlu0 %v7087
      %v7089 = vpop.xlane.xlu0 %7088
      %v7090 = vsel %vm1411, %v7038, 0.0
      %7091 = vadd.xlane.f32.xlu0 %v7090
      %v7092 = vpop.xlane.xlu0 %7091
      %v7093 = vsel %vm1411, %v7039, 0.0
      %7094 = vadd.xlane.f32.xlu0 %v7093
      %v7095 = vpop.xlane.xlu0 %7094
      %v7096 = vsel %vm1411, %v7040, 0.0
      %7097 = vadd.xlane.f32.xlu0 %v7096
      %v7098 = vpop.xlane.xlu0 %7097
      %v7099 = vsel %vm1411, %v7041, 0.0
      %7100 = vadd.xlane.f32.xlu0 %v7099
      %v7101 = vpop.xlane.xlu0 %7100
      %v7102 = vsel %vm1411, %v7042, 0.0
      %7103 = vadd.xlane.f32.xlu0 %v7102
      %v7104 = vpop.xlane.xlu0 %7103
      %v7105 = vsel %vm1411, %v7043, 0.0
      %7106 = vadd.xlane.f32.xlu0 %v7105
      %v7107 = vpop.xlane.xlu0 %7106
      %v7108 = vsel %vm1411, %v7044, 0.0
      %7109 = vadd.xlane.f32.xlu0 %v7108
      %v7110 = vpop.xlane.xlu0 %7109
      %v7111 = vsel %vm1411, %v7045, 0.0
      %7112 = vadd.xlane.f32.xlu0 %v7111
      %v7113 = vpop.xlane.xlu0 %7112
      %v7114 = vsel %vm1411, %v7046, 0.0
      %7115 = vadd.xlane.f32.xlu0 %v7114
      %v7116 = vpop.xlane.xlu0 %7115
      %v7117 = vsel %vm1411, %v7047, 0.0
      %7118 = vadd.xlane.f32.xlu0 %v7117
      %v7119 = vpop.xlane.xlu0 %7118
      %v7120 = vsel %vm1411, %v7048, 0.0
      %7121 = vadd.xlane.f32.xlu0 %v7120
      %v7122 = vpop.xlane.xlu0 %7121
      %v7123 = vsel %vm1411, %v7049, 0.0
      %7124 = vadd.xlane.f32.xlu0 %v7123
      %v7125 = vpop.xlane.xlu0 %7124
      %v7126 = vsel %vm1411, %v7050, 0.0
      %7127 = vadd.xlane.f32.xlu0 %v7126
      %v7128 = vpop.xlane.xlu0 %7127
      %v7129 = vsel %vm1411, %v7051, 0.0
      %7130 = vadd.xlane.f32.xlu0 %v7129
      %v7131 = vpop.xlane.xlu0 %7130
      %v7132 = vsel %vm1411, %v7052, 0.0
      %7133 = vadd.xlane.f32.xlu0 %v7132
      %v7134 = vpop.xlane.xlu0 %7133
      %v7135 = vsel %vm1411, %v7053, 0.0
      %7136 = vadd.xlane.f32.xlu0 %v7135
      %v7137 = vpop.xlane.xlu0 %7136
      %v7138 = vsel %vm1411, %v7054, 0.0
      %7139 = vadd.xlane.f32.xlu0 %v7138
      %v7140 = vpop.xlane.xlu0 %7139
      %v7141 = vsel %vm1411, %v7055, 0.0
      %7142 = vadd.xlane.f32.xlu0 %v7141
      %v7143 = vpop.xlane.xlu0 %7142
      %v7144 = vsel %vm1411, %v7056, 0.0
      %7145 = vadd.xlane.f32.xlu0 %v7144
      %v7146 = vpop.xlane.xlu0 %7145
      %v7147 = vsel %vm1411, %v7057, 0.0
      %7148 = vadd.xlane.f32.xlu0 %v7147
      %v7149 = vpop.xlane.xlu0 %7148
      %v7150 = vsel %vm1411, %v7058, 0.0
      %7151 = vadd.xlane.f32.xlu0 %v7150
      %v7152 = vpop.xlane.xlu0 %7151
      %v7153 = vsel %vm1411, %v7059, 0.0
      %7154 = vadd.xlane.f32.xlu0 %v7153
      %v7155 = vpop.xlane.xlu0 %7154
      %v7156 = vadd.f32 %v7062, %v1791
      %v7157 = vadd.f32 %v7065, %v1791
      %v7158 = vadd.f32 %v7068, %v1791
      %v7159 = vadd.f32 %v7071, %v1791
      %v7160 = vadd.f32 %v7074, %v1791
      %v7161 = vadd.f32 %v7077, %v1791
      %v7162 = vadd.f32 %v7080, %v1791
      %v7163 = vadd.f32 %v7083, %v1791
      %v7164 = vadd.f32 %v7086, %v1791
      %v7165 = vadd.f32 %v7089, %v1791
      %v7166 = vadd.f32 %v7092, %v1791
      %v7167 = vadd.f32 %v7095, %v1791
      %v7168 = vadd.f32 %v7098, %v1791
      %v7169 = vadd.f32 %v7101, %v1791
      %v7170 = vadd.f32 %v7104, %v1791
      %v7171 = vadd.f32 %v7107, %v1791
      %v7172 = vadd.f32 %v7110, %v1791
      %v7173 = vadd.f32 %v7113, %v1791
      %v7174 = vadd.f32 %v7116, %v1791
      %v7175 = vadd.f32 %v7119, %v1791
      %v7176 = vadd.f32 %v7122, %v1791
      %v7177 = vadd.f32 %v7125, %v1791
      %v7178 = vadd.f32 %v7128, %v1791
      %v7179 = vadd.f32 %v7131, %v1791
      %v7180 = vadd.f32 %v7134, %v1791
      %v7181 = vadd.f32 %v7137, %v1791
      %v7182 = vadd.f32 %v7140, %v1791
      %v7183 = vadd.f32 %v7143, %v1791
      %v7184 = vadd.f32 %v7146, %v1791
      %v7185 = vadd.f32 %v7149, %v1791
      %v7186 = vadd.f32 %v7152, %v1791
      %v7187 = vadd.f32 %v7155, %v1791
      %v7188 = vadd.f32 %v5839, %v7156
      %v7189 = vadd.f32 %v5840, %v7157
      %v7190 = vadd.f32 %v5841, %v7158
      %v7191 = vadd.f32 %v5842, %v7159
      %v7192 = vadd.f32 %v5843, %v7160
      %v7193 = vadd.f32 %v5844, %v7161
      %v7194 = vadd.f32 %v5845, %v7162
      %v7195 = vadd.f32 %v5846, %v7163
      %v7196 = vadd.f32 %v5847, %v7164
      %v7197 = vadd.f32 %v5848, %v7165
      %v7198 = vadd.f32 %v5849, %v7166
      %v7199 = vadd.f32 %v5850, %v7167
      %v7200 = vadd.f32 %v5851, %v7168
      %v7201 = vadd.f32 %v5852, %v7169
      %v7202 = vadd.f32 %v5853, %v7170
      %v7203 = vadd.f32 %v5854, %v7171
      %v7204 = vadd.f32 %v5855, %v7172
      %v7205 = vadd.f32 %v5856, %v7173
      %v7206 = vadd.f32 %v5857, %v7174
      %v7207 = vadd.f32 %v5858, %v7175
      %v7208 = vadd.f32 %v5859, %v7176
      %v7209 = vadd.f32 %v5860, %v7177
      %v7210 = vadd.f32 %v5861, %v7178
      %v7211 = vadd.f32 %v5862, %v7179
      %v7212 = vadd.f32 %v5863, %v7180
      %v7213 = vadd.f32 %v5864, %v7181
      %v7214 = vadd.f32 %v5865, %v7182
      %v7215 = vadd.f32 %v5866, %v7183
      %v7216 = vadd.f32 %v5867, %v7184
      %v7217 = vadd.f32 %v5868, %v7185
      %v7218 = vadd.f32 %v5869, %v7186
      %v7219 = vadd.f32 %v5870, %v7187
      %s7220 = scalar_lea.vmem %s2, 64
      %v7221 = vld [vmem:[%s7220] sm:$0xf]
      %v7222 = vld [vmem:[%s7220 + $0x4] sm:$0xf]
      %v7223 = vld [vmem:[%s7220 + $0x8] sm:$0xf]
      %v7224 = vld [vmem:[%s7220 + $0xc] sm:$0xf]
      %v7229 = vunpack.c.l.b16 %v7221
      %v7230 = vunpack.c.l.b16 %v7222
      %v7231 = vunpack.c.l.b16 %v7223
      %v7232 = vunpack.c.l.b16 %v7224
      %v7233 = vpack.c.b16 %v7230, %v7229
      %v7234 = vpack.c.b16 %v7232, %v7231
      %7237 = vmatprep.subr.bf16.mxu0 0
      %7238 = vmatpush1.bf16.msra.mxu0 0
      %7239 = vmatprep.subr.bf16.mxu0 0
      %7240 = vmatpush1.bf16.msra.mxu0 0
      %7241 = vmatprep.subr.bf16.mxu0 0
      %7242 = vmatpush1.bf16.msra.mxu0 0
      %7243 = vmatprep.subr.bf16.mxu0 0
      %7244 = vmatpush1.bf16.msra.mxu0 0
      %7245 = vmatprep.subr.bf16.mxu0 0
      %7246 = vmatpush1.bf16.msra.mxu0 0
      %7247 = vmatprep.subr.bf16.mxu0 0
      %7248 = vmatpush1.bf16.msra.mxu0 0
      %7249 = vmatprep.subr.bf16.mxu0 0
      %7250 = vmatpush1.bf16.msra.mxu0 %v7234
      %7251 = vmatprep.subr.bf16.mxu0 0
      %7252 = vmatpush1.bf16.msra.mxu0 %v7233
      %7253 = vmatprep.subr.bf16.mxu0 0
      %7254 = vmatpush2.bf16.msra.mxu0 0
      %7255 = vmatprep.subr.bf16.mxu0 0
      %7256 = vmatpush2.bf16.msra.mxu0 0
      %7257 = vmatprep.subr.bf16.mxu0 0
      %7258 = vmatpush2.bf16.msra.mxu0 0
      %7259 = vmatprep.subr.bf16.mxu0 0
      %7260 = vmatpush2.bf16.msra.mxu0 0
      %7261 = vmatprep.subr.bf16.mxu0 0
      %7262 = vmatpush2.bf16.msra.mxu0 0
      %7263 = vmatprep.subr.bf16.mxu0 0
      %7264 = vmatpush2.bf16.msra.mxu0 0
      %7265 = vmatprep.subr.bf16.mxu0 0
      %7266 = vmatpush2.bf16.msra.mxu0 0
      %7267 = vmatprep.subr.bf16.mxu0 0
      %7268 = vmatpush2.bf16.msra.mxu0 0
      %7269 = vmatprep.mubr.bf16.mxu0 0
      %7270 = vmatmul.mubr.bf16.gmra.mxu0 %v6531
      %v7271 = vpop.f32.mrf.mxu0
      %v7272 = vadd.f32 0.0, %v7271
      %v7273 = vpop.f32.mrf.mxu0
      %v7274 = vpop.f32.mrf.mxu0
      %v7275 = vadd.f32 0.0, %v7274
      %v7276 = vpop.f32.mrf.mxu0
      %7277 = vmatprep.mubr.bf16.mxu0 0
      %7278 = vmatmul.mubr.bf16.gmra.mxu0 %v6534
      %v7279 = vpop.f32.mrf.mxu0
      %v7280 = vadd.f32 0.0, %v7279
      %v7281 = vpop.f32.mrf.mxu0
      %v7282 = vpop.f32.mrf.mxu0
      %v7283 = vadd.f32 0.0, %v7282
      %v7284 = vpop.f32.mrf.mxu0
      %7285 = vmatprep.mubr.bf16.mxu0 0
      %7286 = vmatmul.mubr.bf16.gmra.mxu0 %v6537
      %v7287 = vpop.f32.mrf.mxu0
      %v7288 = vadd.f32 0.0, %v7287
      %v7289 = vpop.f32.mrf.mxu0
      %v7290 = vpop.f32.mrf.mxu0
      %v7291 = vadd.f32 0.0, %v7290
      %v7292 = vpop.f32.mrf.mxu0
      %7293 = vmatprep.mubr.bf16.mxu0 0
      %7294 = vmatmul.mubr.bf16.gmra.mxu0 %v6540
      %v7295 = vpop.f32.mrf.mxu0
      %v7296 = vadd.f32 0.0, %v7295
      %v7297 = vpop.f32.mrf.mxu0
      %v7298 = vpop.f32.mrf.mxu0
      %v7299 = vadd.f32 0.0, %v7298
      %v7300 = vpop.f32.mrf.mxu0
      %7301 = vmatprep.mubr.bf16.mxu0 0
      %7302 = vmatmul.mubr.bf16.gmra.mxu0 %v6543
      %v7303 = vpop.f32.mrf.mxu0
      %v7304 = vadd.f32 0.0, %v7303
      %v7305 = vpop.f32.mrf.mxu0
      %v7306 = vpop.f32.mrf.mxu0
      %v7307 = vadd.f32 0.0, %v7306
      %v7308 = vpop.f32.mrf.mxu0
      %7309 = vmatprep.mubr.bf16.mxu0 0
      %7310 = vmatmul.mubr.bf16.gmra.mxu0 %v6546
      %v7311 = vpop.f32.mrf.mxu0
      %v7312 = vadd.f32 0.0, %v7311
      %v7313 = vpop.f32.mrf.mxu0
      %v7314 = vpop.f32.mrf.mxu0
      %v7315 = vadd.f32 0.0, %v7314
      %v7316 = vpop.f32.mrf.mxu0
      %7317 = vmatprep.mubr.bf16.mxu0 0
      %7318 = vmatmul.mubr.bf16.gmra.mxu0 %v6549
      %v7319 = vpop.f32.mrf.mxu0
      %v7320 = vadd.f32 0.0, %v7319
      %v7321 = vpop.f32.mrf.mxu0
      %v7322 = vpop.f32.mrf.mxu0
      %v7323 = vadd.f32 0.0, %v7322
      %v7324 = vpop.f32.mrf.mxu0
      %7325 = vmatprep.mubr.bf16.mxu0 0
      %7326 = vmatmul.mubr.bf16.gmra.mxu0 %v6552
      %v7327 = vpop.f32.mrf.mxu0
      %v7328 = vadd.f32 0.0, %v7327
      %v7329 = vpop.f32.mrf.mxu0
      %v7330 = vpop.f32.mrf.mxu0
      %v7331 = vadd.f32 0.0, %v7330
      %v7332 = vpop.f32.mrf.mxu0
      %7333 = vmatprep.mubr.bf16.mxu0 0
      %7334 = vmatmul.mubr.bf16.gmra.mxu0 %v6555
      %v7335 = vpop.f32.mrf.mxu0
      %v7336 = vadd.f32 0.0, %v7335
      %v7337 = vpop.f32.mrf.mxu0
      %v7338 = vpop.f32.mrf.mxu0
      %v7339 = vadd.f32 0.0, %v7338
      %v7340 = vpop.f32.mrf.mxu0
      %7341 = vmatprep.mubr.bf16.mxu0 0
      %7342 = vmatmul.mubr.bf16.gmra.mxu0 %v6558
      %v7343 = vpop.f32.mrf.mxu0
      %v7344 = vadd.f32 0.0, %v7343
      %v7345 = vpop.f32.mrf.mxu0
      %v7346 = vpop.f32.mrf.mxu0
      %v7347 = vadd.f32 0.0, %v7346
      %v7348 = vpop.f32.mrf.mxu0
      %7349 = vmatprep.mubr.bf16.mxu0 0
      %7350 = vmatmul.mubr.bf16.gmra.mxu0 %v6561
      %v7351 = vpop.f32.mrf.mxu0
      %v7352 = vadd.f32 0.0, %v7351
      %v7353 = vpop.f32.mrf.mxu0
      %v7354 = vpop.f32.mrf.mxu0
      %v7355 = vadd.f32 0.0, %v7354
      %v7356 = vpop.f32.mrf.mxu0
      %7357 = vmatprep.mubr.bf16.mxu0 0
      %7358 = vmatmul.mubr.bf16.gmra.mxu0 %v6564
      %v7359 = vpop.f32.mrf.mxu0
      %v7360 = vadd.f32 0.0, %v7359
      %v7361 = vpop.f32.mrf.mxu0
      %v7362 = vpop.f32.mrf.mxu0
      %v7363 = vadd.f32 0.0, %v7362
      %v7364 = vpop.f32.mrf.mxu0
      %7365 = vmatprep.mubr.bf16.mxu0 0
      %7366 = vmatmul.mubr.bf16.gmra.mxu0 %v6567
      %v7367 = vpop.f32.mrf.mxu0
      %v7368 = vadd.f32 0.0, %v7367
      %v7369 = vpop.f32.mrf.mxu0
      %v7370 = vpop.f32.mrf.mxu0
      %v7371 = vadd.f32 0.0, %v7370
      %v7372 = vpop.f32.mrf.mxu0
      %7373 = vmatprep.mubr.bf16.mxu0 0
      %7374 = vmatmul.mubr.bf16.gmra.mxu0 %v6570
      %v7375 = vpop.f32.mrf.mxu0
      %v7376 = vadd.f32 0.0, %v7375
      %v7377 = vpop.f32.mrf.mxu0
      %v7378 = vpop.f32.mrf.mxu0
      %v7379 = vadd.f32 0.0, %v7378
      %v7380 = vpop.f32.mrf.mxu0
      %7381 = vmatprep.mubr.bf16.mxu0 0
      %7382 = vmatmul.mubr.bf16.gmra.mxu0 %v6573
      %v7383 = vpop.f32.mrf.mxu0
      %v7384 = vadd.f32 0.0, %v7383
      %v7385 = vpop.f32.mrf.mxu0
      %v7386 = vpop.f32.mrf.mxu0
      %v7387 = vadd.f32 0.0, %v7386
      %v7388 = vpop.f32.mrf.mxu0
      %7389 = vmatprep.mubr.bf16.mxu0 0
      %7390 = vmatmul.mubr.bf16.gmra.mxu0 %v6576
      %v7391 = vpop.f32.mrf.mxu0
      %v7392 = vadd.f32 0.0, %v7391
      %v7393 = vpop.f32.mrf.mxu0
      %v7394 = vpop.f32.mrf.mxu0
      %v7395 = vadd.f32 0.0, %v7394
      %v7396 = vpop.f32.mrf.mxu0
      %7397 = vdwg.mxu0
      %v7398 = vpack.c.bf16 %v7275, %v7272
      %v7399 = vpack.c.bf16 %v7283, %v7280
      %v7400 = vpack.c.bf16 %v7291, %v7288
      %v7401 = vpack.c.bf16 %v7299, %v7296
      %v7402 = vpack.c.bf16 %v7307, %v7304
      %v7403 = vpack.c.bf16 %v7315, %v7312
      %v7404 = vpack.c.bf16 %v7323, %v7320
      %v7405 = vpack.c.bf16 %v7331, %v7328
      %v7406 = vpack.c.bf16 %v7339, %v7336
      %v7407 = vpack.c.bf16 %v7347, %v7344
      %v7408 = vpack.c.bf16 %v7355, %v7352
      %v7409 = vpack.c.bf16 %v7363, %v7360
      %v7410 = vpack.c.bf16 %v7371, %v7368
      %v7411 = vpack.c.bf16 %v7379, %v7376
      %v7412 = vpack.c.bf16 %v7387, %v7384
      %v7413 = vpack.c.bf16 %v7395, %v7392
      %7414 = vmatprep.subr.bf16.mxu0 0
      %7415 = vmatpush1.bf16.msra.mxu0 %v7405
      %7416 = vmatprep.subr.bf16.mxu0 0
      %7417 = vmatpush1.bf16.msra.mxu0 %v7404
      %7418 = vmatprep.subr.bf16.mxu0 0
      %7419 = vmatpush1.bf16.msra.mxu0 %v7403
      %7420 = vmatprep.subr.bf16.mxu0 0
      %7421 = vmatpush1.bf16.msra.mxu0 %v7402
      %7422 = vmatprep.subr.bf16.mxu0 0
      %7423 = vmatpush1.bf16.msra.mxu0 %v7401
      %7424 = vmatprep.subr.bf16.mxu0 0
      %7425 = vmatpush1.bf16.msra.mxu0 %v7400
      %7426 = vmatprep.subr.bf16.mxu0 0
      %7427 = vmatpush1.bf16.msra.mxu0 %v7399
      %7428 = vmatprep.subr.bf16.mxu0 0
      %7429 = vmatpush1.bf16.msra.mxu0 %v7398
      %7430 = vmatprep.subr.bf16.mxu0 0
      %7431 = vmatpush2.bf16.msra.mxu0 %v7413
      %7432 = vmatprep.subr.bf16.mxu0 0
      %7433 = vmatpush2.bf16.msra.mxu0 %v7412
      %7434 = vmatprep.subr.bf16.mxu0 0
      %7435 = vmatpush2.bf16.msra.mxu0 %v7411
      %7436 = vmatprep.subr.bf16.mxu0 0
      %7437 = vmatpush2.bf16.msra.mxu0 %v7410
      %7438 = vmatprep.subr.bf16.mxu0 0
      %7439 = vmatpush2.bf16.msra.mxu0 %v7409
      %7440 = vmatprep.subr.bf16.mxu0 0
      %7441 = vmatpush2.bf16.msra.mxu0 %v7408
      %7442 = vmatprep.subr.bf16.mxu0 0
      %7443 = vmatpush2.bf16.msra.mxu0 %v7407
      %7444 = vmatprep.subr.bf16.mxu0 0
      %7445 = vmatpush2.bf16.msra.mxu0 %v7406
      %7446 = vmatprep.mubr.bf16.mxu0 %v501
      %7447 = vmatmul.mubr.bf16.gmra.mxu0 %v500
      %v7448 = vpop.f32.mrf.mxu0
      %v7449 = vadd.f32 0.0, %v7448
      %v7450 = vpop.f32.mrf.mxu0
      %v7451 = vpop.f32.mrf.mxu0
      %v7452 = vadd.f32 0.0, %v7451
      %v7453 = vpop.f32.mrf.mxu0
      %7454 = vmatprep.mubr.bf16.mxu0 %v503
      %7455 = vmatmul.mubr.bf16.gmra.mxu0 %v502
      %v7456 = vpop.f32.mrf.mxu0
      %v7457 = vadd.f32 0.0, %v7456
      %v7458 = vpop.f32.mrf.mxu0
      %v7459 = vpop.f32.mrf.mxu0
      %v7460 = vadd.f32 0.0, %v7459
      %v7461 = vpop.f32.mrf.mxu0
      %7462 = vmatprep.mubr.bf16.mxu0 %v505
      %7463 = vmatmul.mubr.bf16.gmra.mxu0 %v504
      %v7464 = vpop.f32.mrf.mxu0
      %v7465 = vadd.f32 0.0, %v7464
      %v7466 = vpop.f32.mrf.mxu0
      %v7467 = vpop.f32.mrf.mxu0
      %v7468 = vadd.f32 0.0, %v7467
      %v7469 = vpop.f32.mrf.mxu0
      %7470 = vmatprep.mubr.bf16.mxu0 %v507
      %7471 = vmatmul.mubr.bf16.gmra.mxu0 %v506
      %v7472 = vpop.f32.mrf.mxu0
      %v7473 = vadd.f32 0.0, %v7472
      %v7474 = vpop.f32.mrf.mxu0
      %v7475 = vpop.f32.mrf.mxu0
      %v7476 = vadd.f32 0.0, %v7475
      %v7477 = vpop.f32.mrf.mxu0
      %7478 = vmatprep.mubr.bf16.mxu0 %v509
      %7479 = vmatmul.mubr.bf16.gmra.mxu0 %v508
      %v7480 = vpop.f32.mrf.mxu0
      %v7481 = vadd.f32 0.0, %v7480
      %v7482 = vpop.f32.mrf.mxu0
      %v7483 = vpop.f32.mrf.mxu0
      %v7484 = vadd.f32 0.0, %v7483
      %v7485 = vpop.f32.mrf.mxu0
      %7486 = vmatprep.mubr.bf16.mxu0 %v511
      %7487 = vmatmul.mubr.bf16.gmra.mxu0 %v510
      %v7488 = vpop.f32.mrf.mxu0
      %v7489 = vadd.f32 0.0, %v7488
      %v7490 = vpop.f32.mrf.mxu0
      %v7491 = vpop.f32.mrf.mxu0
      %v7492 = vadd.f32 0.0, %v7491
      %v7493 = vpop.f32.mrf.mxu0
      %7494 = vmatprep.mubr.bf16.mxu0 %v513
      %7495 = vmatmul.mubr.bf16.gmra.mxu0 %v512
      %v7496 = vpop.f32.mrf.mxu0
      %v7497 = vadd.f32 0.0, %v7496
      %v7498 = vpop.f32.mrf.mxu0
      %v7499 = vpop.f32.mrf.mxu0
      %v7500 = vadd.f32 0.0, %v7499
      %v7501 = vpop.f32.mrf.mxu0
      %7502 = vmatprep.mubr.bf16.mxu0 %v515
      %7503 = vmatmul.mubr.bf16.gmra.mxu0 %v514
      %v7504 = vpop.f32.mrf.mxu0
      %v7505 = vadd.f32 0.0, %v7504
      %v7506 = vpop.f32.mrf.mxu0
      %v7507 = vpop.f32.mrf.mxu0
      %v7508 = vadd.f32 0.0, %v7507
      %v7509 = vpop.f32.mrf.mxu0
      %7510 = vmatprep.mubr.bf16.mxu0 %v517
      %7511 = vmatmul.mubr.bf16.gmra.mxu0 %v516
      %v7512 = vpop.f32.mrf.mxu0
      %v7513 = vadd.f32 0.0, %v7512
      %v7514 = vpop.f32.mrf.mxu0
      %v7515 = vpop.f32.mrf.mxu0
      %v7516 = vadd.f32 0.0, %v7515
      %v7517 = vpop.f32.mrf.mxu0
      %7518 = vmatprep.mubr.bf16.mxu0 %v519
      %7519 = vmatmul.mubr.bf16.gmra.mxu0 %v518
      %v7520 = vpop.f32.mrf.mxu0
      %v7521 = vadd.f32 0.0, %v7520
      %v7522 = vpop.f32.mrf.mxu0
      %v7523 = vpop.f32.mrf.mxu0
      %v7524 = vadd.f32 0.0, %v7523
      %v7525 = vpop.f32.mrf.mxu0
      %7526 = vmatprep.mubr.bf16.mxu0 %v521
      %7527 = vmatmul.mubr.bf16.gmra.mxu0 %v520
      %v7528 = vpop.f32.mrf.mxu0
      %v7529 = vadd.f32 0.0, %v7528
      %v7530 = vpop.f32.mrf.mxu0
      %v7531 = vpop.f32.mrf.mxu0
      %v7532 = vadd.f32 0.0, %v7531
      %v7533 = vpop.f32.mrf.mxu0
      %7534 = vmatprep.mubr.bf16.mxu0 %v523
      %7535 = vmatmul.mubr.bf16.gmra.mxu0 %v522
      %v7536 = vpop.f32.mrf.mxu0
      %v7537 = vadd.f32 0.0, %v7536
      %v7538 = vpop.f32.mrf.mxu0
      %v7539 = vpop.f32.mrf.mxu0
      %v7540 = vadd.f32 0.0, %v7539
      %v7541 = vpop.f32.mrf.mxu0
      %7542 = vmatprep.mubr.bf16.mxu0 %v525
      %7543 = vmatmul.mubr.bf16.gmra.mxu0 %v524
      %v7544 = vpop.f32.mrf.mxu0
      %v7545 = vadd.f32 0.0, %v7544
      %v7546 = vpop.f32.mrf.mxu0
      %v7547 = vpop.f32.mrf.mxu0
      %v7548 = vadd.f32 0.0, %v7547
      %v7549 = vpop.f32.mrf.mxu0
      %7550 = vmatprep.mubr.bf16.mxu0 %v527
      %7551 = vmatmul.mubr.bf16.gmra.mxu0 %v526
      %v7552 = vpop.f32.mrf.mxu0
      %v7553 = vadd.f32 0.0, %v7552
      %v7554 = vpop.f32.mrf.mxu0
      %v7555 = vpop.f32.mrf.mxu0
      %v7556 = vadd.f32 0.0, %v7555
      %v7557 = vpop.f32.mrf.mxu0
      %7558 = vmatprep.mubr.bf16.mxu0 %v529
      %7559 = vmatmul.mubr.bf16.gmra.mxu0 %v528
      %v7560 = vpop.f32.mrf.mxu0
      %v7561 = vadd.f32 0.0, %v7560
      %v7562 = vpop.f32.mrf.mxu0
      %v7563 = vpop.f32.mrf.mxu0
      %v7564 = vadd.f32 0.0, %v7563
      %v7565 = vpop.f32.mrf.mxu0
      %7566 = vmatprep.mubr.bf16.mxu0 %v531
      %7567 = vmatmul.mubr.bf16.gmra.mxu0 %v530
      %v7568 = vpop.f32.mrf.mxu0
      %v7569 = vadd.f32 0.0, %v7568
      %v7570 = vpop.f32.mrf.mxu0
      %v7571 = vpop.f32.mrf.mxu0
      %v7572 = vadd.f32 0.0, %v7571
      %v7573 = vpop.f32.mrf.mxu0
      %7574 = vdwg.mxu0
      %v7575 = vmax.f32 %v7449, 0.0
      %v7576 = vmax.f32 %v7452, 0.0
      %v7577 = vmax.f32 %v7457, 0.0
      %v7578 = vmax.f32 %v7460, 0.0
      %v7579 = vmax.f32 %v7465, 0.0
      %v7580 = vmax.f32 %v7468, 0.0
      %v7581 = vmax.f32 %v7473, 0.0
      %v7582 = vmax.f32 %v7476, 0.0
      %v7583 = vmax.f32 %v7481, 0.0
      %v7584 = vmax.f32 %v7484, 0.0
      %v7585 = vmax.f32 %v7489, 0.0
      %v7586 = vmax.f32 %v7492, 0.0
      %v7587 = vmax.f32 %v7497, 0.0
      %v7588 = vmax.f32 %v7500, 0.0
      %v7589 = vmax.f32 %v7505, 0.0
      %v7590 = vmax.f32 %v7508, 0.0
      %v7591 = vmax.f32 %v7513, 0.0
      %v7592 = vmax.f32 %v7516, 0.0
      %v7593 = vmax.f32 %v7521, 0.0
      %v7594 = vmax.f32 %v7524, 0.0
      %v7595 = vmax.f32 %v7529, 0.0
      %v7596 = vmax.f32 %v7532, 0.0
      %v7597 = vmax.f32 %v7537, 0.0
      %v7598 = vmax.f32 %v7540, 0.0
      %v7599 = vmax.f32 %v7545, 0.0
      %v7600 = vmax.f32 %v7548, 0.0
      %v7601 = vmax.f32 %v7553, 0.0
      %v7602 = vmax.f32 %v7556, 0.0
      %v7603 = vmax.f32 %v7561, 0.0
      %v7604 = vmax.f32 %v7564, 0.0
      %v7605 = vmax.f32 %v7569, 0.0
      %v7606 = vmax.f32 %v7572, 0.0
      %v7607 = vadd.f32 %v6482, %v7575
      %v7608 = vadd.f32 %v6483, %v7576
      %v7609 = vadd.f32 %v6484, %v7577
      %v7610 = vadd.f32 %v6485, %v7578
      %v7611 = vadd.f32 %v6486, %v7579
      %v7612 = vadd.f32 %v6487, %v7580
      %v7613 = vadd.f32 %v6488, %v7581
      %v7614 = vadd.f32 %v6489, %v7582
      %v7615 = vadd.f32 %v6490, %v7583
      %v7616 = vadd.f32 %v6491, %v7584
      %v7617 = vadd.f32 %v6492, %v7585
      %v7618 = vadd.f32 %v6493, %v7586
      %v7619 = vadd.f32 %v6494, %v7587
      %v7620 = vadd.f32 %v6495, %v7588
      %v7621 = vadd.f32 %v6496, %v7589
      %v7622 = vadd.f32 %v6497, %v7590
      %v7623 = vadd.f32 %v6498, %v7591
      %v7624 = vadd.f32 %v6499, %v7592
      %v7625 = vadd.f32 %v6500, %v7593
      %v7626 = vadd.f32 %v6501, %v7594
      %v7627 = vadd.f32 %v6502, %v7595
      %v7628 = vadd.f32 %v6503, %v7596
      %v7629 = vadd.f32 %v6504, %v7597
      %v7630 = vadd.f32 %v6505, %v7598
      %v7631 = vadd.f32 %v6506, %v7599
      %v7632 = vadd.f32 %v6507, %v7600
      %v7633 = vadd.f32 %v6508, %v7601
      %v7634 = vadd.f32 %v6509, %v7602
      %v7635 = vadd.f32 %v6510, %v7603
      %v7636 = vadd.f32 %v6511, %v7604
      %v7637 = vadd.f32 %v6512, %v7605
      %v7638 = vadd.f32 %v6513, %v7606
      %v7639 = vpack.c.bf16 %v7576, %v7575
      %v7640 = vpack.c.bf16 %v7578, %v7577
      %v7641 = vpack.c.bf16 %v7580, %v7579
      %v7642 = vpack.c.bf16 %v7582, %v7581
      %v7643 = vpack.c.bf16 %v7584, %v7583
      %v7644 = vpack.c.bf16 %v7586, %v7585
      %v7645 = vpack.c.bf16 %v7588, %v7587
      %v7646 = vpack.c.bf16 %v7590, %v7589
      %v7647 = vpack.c.bf16 %v7592, %v7591
      %v7648 = vpack.c.bf16 %v7594, %v7593
      %v7649 = vpack.c.bf16 %v7596, %v7595
      %v7650 = vpack.c.bf16 %v7598, %v7597
      %v7651 = vpack.c.bf16 %v7600, %v7599
      %v7652 = vpack.c.bf16 %v7602, %v7601
      %v7653 = vpack.c.bf16 %v7604, %v7603
      %v7654 = vpack.c.bf16 %v7606, %v7605
      %v7656 = vsel %vm885, %v7639, 0
      %v7659 = vsel %vm885, %v7640, 0
      %v7662 = vsel %vm885, %v7641, 0
      %v7665 = vsel %vm885, %v7642, 0
      %v7668 = vsel %vm885, %v7643, 0
      %v7671 = vsel %vm885, %v7644, 0
      %v7674 = vsel %vm885, %v7645, 0
      %v7677 = vsel %vm885, %v7646, 0
      %v7680 = vsel %vm885, %v7647, 0
      %v7683 = vsel %vm885, %v7648, 0
      %v7686 = vsel %vm885, %v7649, 0
      %v7689 = vsel %vm885, %v7650, 0
      %v7692 = vsel %vm885, %v7651, 0
      %v7695 = vsel %vm885, %v7652, 0
      %v7698 = vsel %vm885, %v7653, 0
      %v7701 = vsel %vm885, %v7654, 0
      %7703 = vmatprep.subr.bf16.mxu0 0
      %7704 = vmatpush1.bf16.msra.mxu0 0
      %7705 = vmatprep.subr.bf16.mxu0 0
      %7706 = vmatpush1.bf16.msra.mxu0 0
      %7707 = vmatprep.subr.bf16.mxu0 0
      %7708 = vmatpush1.bf16.msra.mxu0 0
      %7709 = vmatprep.subr.bf16.mxu0 0
      %7710 = vmatpush1.bf16.msra.mxu0 0
      %7711 = vmatprep.subr.bf16.mxu0 0
      %7712 = vmatpush1.bf16.msra.mxu0 0
      %7713 = vmatprep.subr.bf16.mxu0 0
      %7714 = vmatpush1.bf16.msra.mxu0 0
      %7715 = vmatprep.subr.bf16.mxu0 0
      %7716 = vmatpush1.bf16.msra.mxu0 %v1113
      %7717 = vmatprep.subr.bf16.mxu0 0
      %7718 = vmatpush1.bf16.msra.mxu0 %v1112
      %7719 = vmatprep.subr.bf16.mxu0 0
      %7720 = vmatpush2.bf16.msra.mxu0 0
      %7721 = vmatprep.subr.bf16.mxu0 0
      %7722 = vmatpush2.bf16.msra.mxu0 0
      %7723 = vmatprep.subr.bf16.mxu0 0
      %7724 = vmatpush2.bf16.msra.mxu0 0
      %7725 = vmatprep.subr.bf16.mxu0 0
      %7726 = vmatpush2.bf16.msra.mxu0 0
      %7727 = vmatprep.subr.bf16.mxu0 0
      %7728 = vmatpush2.bf16.msra.mxu0 0
      %7729 = vmatprep.subr.bf16.mxu0 0
      %7730 = vmatpush2.bf16.msra.mxu0 0
      %7731 = vmatprep.subr.bf16.mxu0 0
      %7732 = vmatpush2.bf16.msra.mxu0 0
      %7733 = vmatprep.subr.bf16.mxu0 0
      %7734 = vmatpush2.bf16.msra.mxu0 0
      %7735 = vmatprep.mubr.bf16.mxu0 0
      %7736 = vmatmul.mubr.bf16.gmra.mxu0 %v7656
      %v7737 = vpop.f32.mrf.mxu0
      %v7738 = vadd.f32 %v1102, %v7737
      %v7739 = vpop.f32.mrf.mxu0
      %v7740 = vpop.f32.mrf.mxu0
      %v7741 = vadd.f32 %v1102, %v7740
      %v7742 = vpop.f32.mrf.mxu0
      %7743 = vmatprep.mubr.bf16.mxu0 0
      %7744 = vmatmul.mubr.bf16.gmra.mxu0 %v7659
      %v7745 = vpop.f32.mrf.mxu0
      %v7746 = vadd.f32 %v1102, %v7745
      %v7747 = vpop.f32.mrf.mxu0
      %v7748 = vpop.f32.mrf.mxu0
      %v7749 = vadd.f32 %v1102, %v7748
      %v7750 = vpop.f32.mrf.mxu0
      %7751 = vmatprep.mubr.bf16.mxu0 0
      %7752 = vmatmul.mubr.bf16.gmra.mxu0 %v7662
      %v7753 = vpop.f32.mrf.mxu0
      %v7754 = vadd.f32 %v1102, %v7753
      %v7755 = vpop.f32.mrf.mxu0
      %v7756 = vpop.f32.mrf.mxu0
      %v7757 = vadd.f32 %v1102, %v7756
      %v7758 = vpop.f32.mrf.mxu0
      %7759 = vmatprep.mubr.bf16.mxu0 0
      %7760 = vmatmul.mubr.bf16.gmra.mxu0 %v7665
      %v7761 = vpop.f32.mrf.mxu0
      %v7762 = vadd.f32 %v1102, %v7761
      %v7763 = vpop.f32.mrf.mxu0
      %v7764 = vpop.f32.mrf.mxu0
      %v7765 = vadd.f32 %v1102, %v7764
      %v7766 = vpop.f32.mrf.mxu0
      %7767 = vmatprep.mubr.bf16.mxu0 0
      %7768 = vmatmul.mubr.bf16.gmra.mxu0 %v7668
      %v7769 = vpop.f32.mrf.mxu0
      %v7770 = vadd.f32 %v1102, %v7769
      %v7771 = vpop.f32.mrf.mxu0
      %v7772 = vpop.f32.mrf.mxu0
      %v7773 = vadd.f32 %v1102, %v7772
      %v7774 = vpop.f32.mrf.mxu0
      %7775 = vmatprep.mubr.bf16.mxu0 0
      %7776 = vmatmul.mubr.bf16.gmra.mxu0 %v7671
      %v7777 = vpop.f32.mrf.mxu0
      %v7778 = vadd.f32 %v1102, %v7777
      %v7779 = vpop.f32.mrf.mxu0
      %v7780 = vpop.f32.mrf.mxu0
      %v7781 = vadd.f32 %v1102, %v7780
      %v7782 = vpop.f32.mrf.mxu0
      %7783 = vmatprep.mubr.bf16.mxu0 0
      %7784 = vmatmul.mubr.bf16.gmra.mxu0 %v7674
      %v7785 = vpop.f32.mrf.mxu0
      %v7786 = vadd.f32 %v1102, %v7785
      %v7787 = vpop.f32.mrf.mxu0
      %v7788 = vpop.f32.mrf.mxu0
      %v7789 = vadd.f32 %v1102, %v7788
      %v7790 = vpop.f32.mrf.mxu0
      %7791 = vmatprep.mubr.bf16.mxu0 0
      %7792 = vmatmul.mubr.bf16.gmra.mxu0 %v7677
      %v7793 = vpop.f32.mrf.mxu0
      %v7794 = vadd.f32 %v1102, %v7793
      %v7795 = vpop.f32.mrf.mxu0
      %v7796 = vpop.f32.mrf.mxu0
      %v7797 = vadd.f32 %v1102, %v7796
      %v7798 = vpop.f32.mrf.mxu0
      %7799 = vmatprep.mubr.bf16.mxu0 0
      %7800 = vmatmul.mubr.bf16.gmra.mxu0 %v7680
      %v7801 = vpop.f32.mrf.mxu0
      %v7802 = vadd.f32 %v1102, %v7801
      %v7803 = vpop.f32.mrf.mxu0
      %v7804 = vpop.f32.mrf.mxu0
      %v7805 = vadd.f32 %v1102, %v7804
      %v7806 = vpop.f32.mrf.mxu0
      %7807 = vmatprep.mubr.bf16.mxu0 0
      %7808 = vmatmul.mubr.bf16.gmra.mxu0 %v7683
      %v7809 = vpop.f32.mrf.mxu0
      %v7810 = vadd.f32 %v1102, %v7809
      %v7811 = vpop.f32.mrf.mxu0
      %v7812 = vpop.f32.mrf.mxu0
      %v7813 = vadd.f32 %v1102, %v7812
      %v7814 = vpop.f32.mrf.mxu0
      %7815 = vmatprep.mubr.bf16.mxu0 0
      %7816 = vmatmul.mubr.bf16.gmra.mxu0 %v7686
      %v7817 = vpop.f32.mrf.mxu0
      %v7818 = vadd.f32 %v1102, %v7817
      %v7819 = vpop.f32.mrf.mxu0
      %v7820 = vpop.f32.mrf.mxu0
      %v7821 = vadd.f32 %v1102, %v7820
      %v7822 = vpop.f32.mrf.mxu0
      %7823 = vmatprep.mubr.bf16.mxu0 0
      %7824 = vmatmul.mubr.bf16.gmra.mxu0 %v7689
      %v7825 = vpop.f32.mrf.mxu0
      %v7826 = vadd.f32 %v1102, %v7825
      %v7827 = vpop.f32.mrf.mxu0
      %v7828 = vpop.f32.mrf.mxu0
      %v7829 = vadd.f32 %v1102, %v7828
      %v7830 = vpop.f32.mrf.mxu0
      %7831 = vmatprep.mubr.bf16.mxu0 0
      %7832 = vmatmul.mubr.bf16.gmra.mxu0 %v7692
      %v7833 = vpop.f32.mrf.mxu0
      %v7834 = vadd.f32 %v1102, %v7833
      %v7835 = vpop.f32.mrf.mxu0
      %v7836 = vpop.f32.mrf.mxu0
      %v7837 = vadd.f32 %v1102, %v7836
      %v7838 = vpop.f32.mrf.mxu0
      %7839 = vmatprep.mubr.bf16.mxu0 0
      %7840 = vmatmul.mubr.bf16.gmra.mxu0 %v7695
      %v7841 = vpop.f32.mrf.mxu0
      %v7842 = vadd.f32 %v1102, %v7841
      %v7843 = vpop.f32.mrf.mxu0
      %v7844 = vpop.f32.mrf.mxu0
      %v7845 = vadd.f32 %v1102, %v7844
      %v7846 = vpop.f32.mrf.mxu0
      %7847 = vmatprep.mubr.bf16.mxu0 0
      %7848 = vmatmul.mubr.bf16.gmra.mxu0 %v7698
      %v7849 = vpop.f32.mrf.mxu0
      %v7850 = vadd.f32 %v1102, %v7849
      %v7851 = vpop.f32.mrf.mxu0
      %v7852 = vpop.f32.mrf.mxu0
      %v7853 = vadd.f32 %v1102, %v7852
      %v7854 = vpop.f32.mrf.mxu0
      %7855 = vmatprep.mubr.bf16.mxu0 0
      %7856 = vmatmul.mubr.bf16.gmra.mxu0 %v7701
      %v7857 = vpop.f32.mrf.mxu0
      %v7858 = vadd.f32 %v1102, %v7857
      %v7859 = vpop.f32.mrf.mxu0
      %v7860 = vpop.f32.mrf.mxu0
      %v7861 = vadd.f32 %v1102, %v7860
      %v7862 = vpop.f32.mrf.mxu0
      %7863 = vdwg.mxu0
      %v7864 = vmax.f32 %v7738, 0.0
      %v7865 = vmax.f32 %v7741, 0.0
      %v7866 = vmax.f32 %v7746, 0.0
      %v7867 = vmax.f32 %v7749, 0.0
      %v7868 = vmax.f32 %v7754, 0.0
      %v7869 = vmax.f32 %v7757, 0.0
      %v7870 = vmax.f32 %v7762, 0.0
      %v7871 = vmax.f32 %v7765, 0.0
      %v7872 = vmax.f32 %v7770, 0.0
      %v7873 = vmax.f32 %v7773, 0.0
      %v7874 = vmax.f32 %v7778, 0.0
      %v7875 = vmax.f32 %v7781, 0.0
      %v7876 = vmax.f32 %v7786, 0.0
      %v7877 = vmax.f32 %v7789, 0.0
      %v7878 = vmax.f32 %v7794, 0.0
      %v7879 = vmax.f32 %v7797, 0.0
      %v7880 = vmax.f32 %v7802, 0.0
      %v7881 = vmax.f32 %v7805, 0.0
      %v7882 = vmax.f32 %v7810, 0.0
      %v7883 = vmax.f32 %v7813, 0.0
      %v7884 = vmax.f32 %v7818, 0.0
      %v7885 = vmax.f32 %v7821, 0.0
      %v7886 = vmax.f32 %v7826, 0.0
      %v7887 = vmax.f32 %v7829, 0.0
      %v7888 = vmax.f32 %v7834, 0.0
      %v7889 = vmax.f32 %v7837, 0.0
      %v7890 = vmax.f32 %v7842, 0.0
      %v7891 = vmax.f32 %v7845, 0.0
      %v7892 = vmax.f32 %v7850, 0.0
      %v7893 = vmax.f32 %v7853, 0.0
      %v7894 = vmax.f32 %v7858, 0.0
      %v7895 = vmax.f32 %v7861, 0.0
      %v7896 = vpack.c.bf16 %v7865, %v7864
      %v7897 = vpack.c.bf16 %v7867, %v7866
      %v7898 = vpack.c.bf16 %v7869, %v7868
      %v7899 = vpack.c.bf16 %v7871, %v7870
      %v7900 = vpack.c.bf16 %v7873, %v7872
      %v7901 = vpack.c.bf16 %v7875, %v7874
      %v7902 = vpack.c.bf16 %v7877, %v7876
      %v7903 = vpack.c.bf16 %v7879, %v7878
      %v7904 = vpack.c.bf16 %v7881, %v7880
      %v7905 = vpack.c.bf16 %v7883, %v7882
      %v7906 = vpack.c.bf16 %v7885, %v7884
      %v7907 = vpack.c.bf16 %v7887, %v7886
      %v7908 = vpack.c.bf16 %v7889, %v7888
      %v7909 = vpack.c.bf16 %v7891, %v7890
      %v7910 = vpack.c.bf16 %v7893, %v7892
      %v7911 = vpack.c.bf16 %v7895, %v7894
      %v7913 = vsel %vm1411, %v7896, 0
      %v7916 = vsel %vm1411, %v7897, 0
      %v7919 = vsel %vm1411, %v7898, 0
      %v7922 = vsel %vm1411, %v7899, 0
      %v7925 = vsel %vm1411, %v7900, 0
      %v7928 = vsel %vm1411, %v7901, 0
      %v7931 = vsel %vm1411, %v7902, 0
      %v7934 = vsel %vm1411, %v7903, 0
      %v7937 = vsel %vm1411, %v7904, 0
      %v7940 = vsel %vm1411, %v7905, 0
      %v7943 = vsel %vm1411, %v7906, 0
      %v7946 = vsel %vm1411, %v7907, 0
      %v7949 = vsel %vm1411, %v7908, 0
      %v7952 = vsel %vm1411, %v7909, 0
      %v7955 = vsel %vm1411, %v7910, 0
      %v7958 = vsel %vm1411, %v7911, 0
      %7960 = vmatprep.subr.bf16.mxu0 0
      %7961 = vmatpush1.bf16.msra.mxu0 0
      %7962 = vmatprep.subr.bf16.mxu0 0
      %7963 = vmatpush1.bf16.msra.mxu0 0
      %7964 = vmatprep.subr.bf16.mxu0 0
      %7965 = vmatpush1.bf16.msra.mxu0 0
      %7966 = vmatprep.subr.bf16.mxu0 0
      %7967 = vmatpush1.bf16.msra.mxu0 0
      %7968 = vmatprep.subr.bf16.mxu0 0
      %7969 = vmatpush1.bf16.msra.mxu0 %v1406
      %7970 = vmatprep.subr.bf16.mxu0 0
      %7971 = vmatpush1.bf16.msra.mxu0 %v1405
      %7972 = vmatprep.subr.bf16.mxu0 0
      %7973 = vmatpush1.bf16.msra.mxu0 %v1404
      %7974 = vmatprep.subr.bf16.mxu0 0
      %7975 = vmatpush1.bf16.msra.mxu0 %v1403
      %7976 = vmatprep.subr.bf16.mxu0 0
      %7977 = vmatpush2.bf16.msra.mxu0 0
      %7978 = vmatprep.subr.bf16.mxu0 0
      %7979 = vmatpush2.bf16.msra.mxu0 0
      %7980 = vmatprep.subr.bf16.mxu0 0
      %7981 = vmatpush2.bf16.msra.mxu0 0
      %7982 = vmatprep.subr.bf16.mxu0 0
      %7983 = vmatpush2.bf16.msra.mxu0 0
      %7984 = vmatprep.subr.bf16.mxu0 0
      %7985 = vmatpush2.bf16.msra.mxu0 0
      %7986 = vmatprep.subr.bf16.mxu0 0
      %7987 = vmatpush2.bf16.msra.mxu0 0
      %7988 = vmatprep.subr.bf16.mxu0 0
      %7989 = vmatpush2.bf16.msra.mxu0 0
      %7990 = vmatprep.subr.bf16.mxu0 0
      %7991 = vmatpush2.bf16.msra.mxu0 0
      %7992 = vmatprep.mubr.bf16.mxu0 0
      %7993 = vmatmul.mubr.bf16.gmra.mxu0 %v7913
      %v7994 = vpop.f32.mrf.mxu0
      %v7995 = vadd.f32 %v1385, %v7994
      %v7996 = vpop.f32.mrf.mxu0
      %v7997 = vpop.f32.mrf.mxu0
      %v7998 = vadd.f32 %v1385, %v7997
      %v7999 = vpop.f32.mrf.mxu0
      %8000 = vmatprep.mubr.bf16.mxu0 0
      %8001 = vmatmul.mubr.bf16.gmra.mxu0 %v7916
      %v8002 = vpop.f32.mrf.mxu0
      %v8003 = vadd.f32 %v1385, %v8002
      %v8004 = vpop.f32.mrf.mxu0
      %v8005 = vpop.f32.mrf.mxu0
      %v8006 = vadd.f32 %v1385, %v8005
      %v8007 = vpop.f32.mrf.mxu0
      %8008 = vmatprep.mubr.bf16.mxu0 0
      %8009 = vmatmul.mubr.bf16.gmra.mxu0 %v7919
      %v8010 = vpop.f32.mrf.mxu0
      %v8011 = vadd.f32 %v1385, %v8010
      %v8012 = vpop.f32.mrf.mxu0
      %v8013 = vpop.f32.mrf.mxu0
      %v8014 = vadd.f32 %v1385, %v8013
      %v8015 = vpop.f32.mrf.mxu0
      %8016 = vmatprep.mubr.bf16.mxu0 0
      %8017 = vmatmul.mubr.bf16.gmra.mxu0 %v7922
      %v8018 = vpop.f32.mrf.mxu0
      %v8019 = vadd.f32 %v1385, %v8018
      %v8020 = vpop.f32.mrf.mxu0
      %v8021 = vpop.f32.mrf.mxu0
      %v8022 = vadd.f32 %v1385, %v8021
      %v8023 = vpop.f32.mrf.mxu0
      %8024 = vmatprep.mubr.bf16.mxu0 0
      %8025 = vmatmul.mubr.bf16.gmra.mxu0 %v7925
      %v8026 = vpop.f32.mrf.mxu0
      %v8027 = vadd.f32 %v1385, %v8026
      %v8028 = vpop.f32.mrf.mxu0
      %v8029 = vpop.f32.mrf.mxu0
      %v8030 = vadd.f32 %v1385, %v8029
      %v8031 = vpop.f32.mrf.mxu0
      %8032 = vmatprep.mubr.bf16.mxu0 0
      %8033 = vmatmul.mubr.bf16.gmra.mxu0 %v7928
      %v8034 = vpop.f32.mrf.mxu0
      %v8035 = vadd.f32 %v1385, %v8034
      %v8036 = vpop.f32.mrf.mxu0
      %v8037 = vpop.f32.mrf.mxu0
      %v8038 = vadd.f32 %v1385, %v8037
      %v8039 = vpop.f32.mrf.mxu0
      %8040 = vmatprep.mubr.bf16.mxu0 0
      %8041 = vmatmul.mubr.bf16.gmra.mxu0 %v7931
      %v8042 = vpop.f32.mrf.mxu0
      %v8043 = vadd.f32 %v1385, %v8042
      %v8044 = vpop.f32.mrf.mxu0
      %v8045 = vpop.f32.mrf.mxu0
      %v8046 = vadd.f32 %v1385, %v8045
      %v8047 = vpop.f32.mrf.mxu0
      %8048 = vmatprep.mubr.bf16.mxu0 0
      %8049 = vmatmul.mubr.bf16.gmra.mxu0 %v7934
      %v8050 = vpop.f32.mrf.mxu0
      %v8051 = vadd.f32 %v1385, %v8050
      %v8052 = vpop.f32.mrf.mxu0
      %v8053 = vpop.f32.mrf.mxu0
      %v8054 = vadd.f32 %v1385, %v8053
      %v8055 = vpop.f32.mrf.mxu0
      %8056 = vmatprep.mubr.bf16.mxu0 0
      %8057 = vmatmul.mubr.bf16.gmra.mxu0 %v7937
      %v8058 = vpop.f32.mrf.mxu0
      %v8059 = vadd.f32 %v1385, %v8058
      %v8060 = vpop.f32.mrf.mxu0
      %v8061 = vpop.f32.mrf.mxu0
      %v8062 = vadd.f32 %v1385, %v8061
      %v8063 = vpop.f32.mrf.mxu0
      %8064 = vmatprep.mubr.bf16.mxu0 0
      %8065 = vmatmul.mubr.bf16.gmra.mxu0 %v7940
      %v8066 = vpop.f32.mrf.mxu0
      %v8067 = vadd.f32 %v1385, %v8066
      %v8068 = vpop.f32.mrf.mxu0
      %v8069 = vpop.f32.mrf.mxu0
      %v8070 = vadd.f32 %v1385, %v8069
      %v8071 = vpop.f32.mrf.mxu0
      %8072 = vmatprep.mubr.bf16.mxu0 0
      %8073 = vmatmul.mubr.bf16.gmra.mxu0 %v7943
      %v8074 = vpop.f32.mrf.mxu0
      %v8075 = vadd.f32 %v1385, %v8074
      %v8076 = vpop.f32.mrf.mxu0
      %v8077 = vpop.f32.mrf.mxu0
      %v8078 = vadd.f32 %v1385, %v8077
      %v8079 = vpop.f32.mrf.mxu0
      %8080 = vmatprep.mubr.bf16.mxu0 0
      %8081 = vmatmul.mubr.bf16.gmra.mxu0 %v7946
      %v8082 = vpop.f32.mrf.mxu0
      %v8083 = vadd.f32 %v1385, %v8082
      %v8084 = vpop.f32.mrf.mxu0
      %v8085 = vpop.f32.mrf.mxu0
      %v8086 = vadd.f32 %v1385, %v8085
      %v8087 = vpop.f32.mrf.mxu0
      %8088 = vmatprep.mubr.bf16.mxu0 0
      %8089 = vmatmul.mubr.bf16.gmra.mxu0 %v7949
      %v8090 = vpop.f32.mrf.mxu0
      %v8091 = vadd.f32 %v1385, %v8090
      %v8092 = vpop.f32.mrf.mxu0
      %v8093 = vpop.f32.mrf.mxu0
      %v8094 = vadd.f32 %v1385, %v8093
      %v8095 = vpop.f32.mrf.mxu0
      %8096 = vmatprep.mubr.bf16.mxu0 0
      %8097 = vmatmul.mubr.bf16.gmra.mxu0 %v7952
      %v8098 = vpop.f32.mrf.mxu0
      %v8099 = vadd.f32 %v1385, %v8098
      %v8100 = vpop.f32.mrf.mxu0
      %v8101 = vpop.f32.mrf.mxu0
      %v8102 = vadd.f32 %v1385, %v8101
      %v8103 = vpop.f32.mrf.mxu0
      %8104 = vmatprep.mubr.bf16.mxu0 0
      %8105 = vmatmul.mubr.bf16.gmra.mxu0 %v7955
      %v8106 = vpop.f32.mrf.mxu0
      %v8107 = vadd.f32 %v1385, %v8106
      %v8108 = vpop.f32.mrf.mxu0
      %v8109 = vpop.f32.mrf.mxu0
      %v8110 = vadd.f32 %v1385, %v8109
      %v8111 = vpop.f32.mrf.mxu0
      %8112 = vmatprep.mubr.bf16.mxu0 0
      %8113 = vmatmul.mubr.bf16.gmra.mxu0 %v7958
      %v8114 = vpop.f32.mrf.mxu0
      %v8115 = vadd.f32 %v1385, %v8114
      %v8116 = vpop.f32.mrf.mxu0
      %v8117 = vpop.f32.mrf.mxu0
      %v8118 = vadd.f32 %v1385, %v8117
      %v8119 = vpop.f32.mrf.mxu0
      %8120 = vdwg.mxu0
      %v8121 = vmax.f32 %v7995, 0.0
      %v8122 = vmax.f32 %v7998, 0.0
      %v8123 = vmax.f32 %v8003, 0.0
      %v8124 = vmax.f32 %v8006, 0.0
      %v8125 = vmax.f32 %v8011, 0.0
      %v8126 = vmax.f32 %v8014, 0.0
      %v8127 = vmax.f32 %v8019, 0.0
      %v8128 = vmax.f32 %v8022, 0.0
      %v8129 = vmax.f32 %v8027, 0.0
      %v8130 = vmax.f32 %v8030, 0.0
      %v8131 = vmax.f32 %v8035, 0.0
      %v8132 = vmax.f32 %v8038, 0.0
      %v8133 = vmax.f32 %v8043, 0.0
      %v8134 = vmax.f32 %v8046, 0.0
      %v8135 = vmax.f32 %v8051, 0.0
      %v8136 = vmax.f32 %v8054, 0.0
      %v8137 = vmax.f32 %v8059, 0.0
      %v8138 = vmax.f32 %v8062, 0.0
      %v8139 = vmax.f32 %v8067, 0.0
      %v8140 = vmax.f32 %v8070, 0.0
      %v8141 = vmax.f32 %v8075, 0.0
      %v8142 = vmax.f32 %v8078, 0.0
      %v8143 = vmax.f32 %v8083, 0.0
      %v8144 = vmax.f32 %v8086, 0.0
      %v8145 = vmax.f32 %v8091, 0.0
      %v8146 = vmax.f32 %v8094, 0.0
      %v8147 = vmax.f32 %v8099, 0.0
      %v8148 = vmax.f32 %v8102, 0.0
      %v8149 = vmax.f32 %v8107, 0.0
      %v8150 = vmax.f32 %v8110, 0.0
      %v8151 = vmax.f32 %v8115, 0.0
      %v8152 = vmax.f32 %v8118, 0.0
      %v8153 = vmul.f32 %v8121, %v1657
      %v8154 = vmul.f32 %v8122, %v1657
      %v8155 = vmul.f32 %v8123, %v1657
      %v8156 = vmul.f32 %v8124, %v1657
      %v8157 = vmul.f32 %v8125, %v1657
      %v8158 = vmul.f32 %v8126, %v1657
      %v8159 = vmul.f32 %v8127, %v1657
      %v8160 = vmul.f32 %v8128, %v1657
      %v8161 = vmul.f32 %v8129, %v1657
      %v8162 = vmul.f32 %v8130, %v1657
      %v8163 = vmul.f32 %v8131, %v1657
      %v8164 = vmul.f32 %v8132, %v1657
      %v8165 = vmul.f32 %v8133, %v1657
      %v8166 = vmul.f32 %v8134, %v1657
      %v8167 = vmul.f32 %v8135, %v1657
      %v8168 = vmul.f32 %v8136, %v1657
      %v8169 = vmul.f32 %v8137, %v1657
      %v8170 = vmul.f32 %v8138, %v1657
      %v8171 = vmul.f32 %v8139, %v1657
      %v8172 = vmul.f32 %v8140, %v1657
      %v8173 = vmul.f32 %v8141, %v1657
      %v8174 = vmul.f32 %v8142, %v1657
      %v8175 = vmul.f32 %v8143, %v1657
      %v8176 = vmul.f32 %v8144, %v1657
      %v8177 = vmul.f32 %v8145, %v1657
      %v8178 = vmul.f32 %v8146, %v1657
      %v8179 = vmul.f32 %v8147, %v1657
      %v8180 = vmul.f32 %v8148, %v1657
      %v8181 = vmul.f32 %v8149, %v1657
      %v8182 = vmul.f32 %v8150, %v1657
      %v8183 = vmul.f32 %v8151, %v1657
      %v8184 = vmul.f32 %v8152, %v1657
      %v8185 = vsel %vm1411, %v8153, 0.0
      %8186 = vadd.xlane.f32.xlu0 %v8185
      %v8187 = vpop.xlane.xlu0 %8186
      %v8188 = vsel %vm1411, %v8154, 0.0
      %8189 = vadd.xlane.f32.xlu0 %v8188
      %v8190 = vpop.xlane.xlu0 %8189
      %v8191 = vsel %vm1411, %v8155, 0.0
      %8192 = vadd.xlane.f32.xlu0 %v8191
      %v8193 = vpop.xlane.xlu0 %8192
      %v8194 = vsel %vm1411, %v8156, 0.0
      %8195 = vadd.xlane.f32.xlu0 %v8194
      %v8196 = vpop.xlane.xlu0 %8195
      %v8197 = vsel %vm1411, %v8157, 0.0
      %8198 = vadd.xlane.f32.xlu0 %v8197
      %v8199 = vpop.xlane.xlu0 %8198
      %v8200 = vsel %vm1411, %v8158, 0.0
      %8201 = vadd.xlane.f32.xlu0 %v8200
      %v8202 = vpop.xlane.xlu0 %8201
      %v8203 = vsel %vm1411, %v8159, 0.0
      %8204 = vadd.xlane.f32.xlu0 %v8203
      %v8205 = vpop.xlane.xlu0 %8204
      %v8206 = vsel %vm1411, %v8160, 0.0
      %8207 = vadd.xlane.f32.xlu0 %v8206
      %v8208 = vpop.xlane.xlu0 %8207
      %v8209 = vsel %vm1411, %v8161, 0.0
      %8210 = vadd.xlane.f32.xlu0 %v8209
      %v8211 = vpop.xlane.xlu0 %8210
      %v8212 = vsel %vm1411, %v8162, 0.0
      %8213 = vadd.xlane.f32.xlu0 %v8212
      %v8214 = vpop.xlane.xlu0 %8213
      %v8215 = vsel %vm1411, %v8163, 0.0
      %8216 = vadd.xlane.f32.xlu0 %v8215
      %v8217 = vpop.xlane.xlu0 %8216
      %v8218 = vsel %vm1411, %v8164, 0.0
      %8219 = vadd.xlane.f32.xlu0 %v8218
      %v8220 = vpop.xlane.xlu0 %8219
      %v8221 = vsel %vm1411, %v8165, 0.0
      %8222 = vadd.xlane.f32.xlu0 %v8221
      %v8223 = vpop.xlane.xlu0 %8222
      %v8224 = vsel %vm1411, %v8166, 0.0
      %8225 = vadd.xlane.f32.xlu0 %v8224
      %v8226 = vpop.xlane.xlu0 %8225
      %v8227 = vsel %vm1411, %v8167, 0.0
      %8228 = vadd.xlane.f32.xlu0 %v8227
      %v8229 = vpop.xlane.xlu0 %8228
      %v8230 = vsel %vm1411, %v8168, 0.0
      %8231 = vadd.xlane.f32.xlu0 %v8230
      %v8232 = vpop.xlane.xlu0 %8231
      %v8233 = vsel %vm1411, %v8169, 0.0
      %8234 = vadd.xlane.f32.xlu0 %v8233
      %v8235 = vpop.xlane.xlu0 %8234
      %v8236 = vsel %vm1411, %v8170, 0.0
      %8237 = vadd.xlane.f32.xlu0 %v8236
      %v8238 = vpop.xlane.xlu0 %8237
      %v8239 = vsel %vm1411, %v8171, 0.0
      %8240 = vadd.xlane.f32.xlu0 %v8239
      %v8241 = vpop.xlane.xlu0 %8240
      %v8242 = vsel %vm1411, %v8172, 0.0
      %8243 = vadd.xlane.f32.xlu0 %v8242
      %v8244 = vpop.xlane.xlu0 %8243
      %v8245 = vsel %vm1411, %v8173, 0.0
      %8246 = vadd.xlane.f32.xlu0 %v8245
      %v8247 = vpop.xlane.xlu0 %8246
      %v8248 = vsel %vm1411, %v8174, 0.0
      %8249 = vadd.xlane.f32.xlu0 %v8248
      %v8250 = vpop.xlane.xlu0 %8249
      %v8251 = vsel %vm1411, %v8175, 0.0
      %8252 = vadd.xlane.f32.xlu0 %v8251
      %v8253 = vpop.xlane.xlu0 %8252
      %v8254 = vsel %vm1411, %v8176, 0.0
      %8255 = vadd.xlane.f32.xlu0 %v8254
      %v8256 = vpop.xlane.xlu0 %8255
      %v8257 = vsel %vm1411, %v8177, 0.0
      %8258 = vadd.xlane.f32.xlu0 %v8257
      %v8259 = vpop.xlane.xlu0 %8258
      %v8260 = vsel %vm1411, %v8178, 0.0
      %8261 = vadd.xlane.f32.xlu0 %v8260
      %v8262 = vpop.xlane.xlu0 %8261
      %v8263 = vsel %vm1411, %v8179, 0.0
      %8264 = vadd.xlane.f32.xlu0 %v8263
      %v8265 = vpop.xlane.xlu0 %8264
      %v8266 = vsel %vm1411, %v8180, 0.0
      %8267 = vadd.xlane.f32.xlu0 %v8266
      %v8268 = vpop.xlane.xlu0 %8267
      %v8269 = vsel %vm1411, %v8181, 0.0
      %8270 = vadd.xlane.f32.xlu0 %v8269
      %v8271 = vpop.xlane.xlu0 %8270
      %v8272 = vsel %vm1411, %v8182, 0.0
      %8273 = vadd.xlane.f32.xlu0 %v8272
      %v8274 = vpop.xlane.xlu0 %8273
      %v8275 = vsel %vm1411, %v8183, 0.0
      %8276 = vadd.xlane.f32.xlu0 %v8275
      %v8277 = vpop.xlane.xlu0 %8276
      %v8278 = vsel %vm1411, %v8184, 0.0
      %8279 = vadd.xlane.f32.xlu0 %v8278
      %v8280 = vpop.xlane.xlu0 %8279
      %v8281 = vadd.f32 %v8187, %v1791
      %v8282 = vadd.f32 %v8190, %v1791
      %v8283 = vadd.f32 %v8193, %v1791
      %v8284 = vadd.f32 %v8196, %v1791
      %v8285 = vadd.f32 %v8199, %v1791
      %v8286 = vadd.f32 %v8202, %v1791
      %v8287 = vadd.f32 %v8205, %v1791
      %v8288 = vadd.f32 %v8208, %v1791
      %v8289 = vadd.f32 %v8211, %v1791
      %v8290 = vadd.f32 %v8214, %v1791
      %v8291 = vadd.f32 %v8217, %v1791
      %v8292 = vadd.f32 %v8220, %v1791
      %v8293 = vadd.f32 %v8223, %v1791
      %v8294 = vadd.f32 %v8226, %v1791
      %v8295 = vadd.f32 %v8229, %v1791
      %v8296 = vadd.f32 %v8232, %v1791
      %v8297 = vadd.f32 %v8235, %v1791
      %v8298 = vadd.f32 %v8238, %v1791
      %v8299 = vadd.f32 %v8241, %v1791
      %v8300 = vadd.f32 %v8244, %v1791
      %v8301 = vadd.f32 %v8247, %v1791
      %v8302 = vadd.f32 %v8250, %v1791
      %v8303 = vadd.f32 %v8253, %v1791
      %v8304 = vadd.f32 %v8256, %v1791
      %v8305 = vadd.f32 %v8259, %v1791
      %v8306 = vadd.f32 %v8262, %v1791
      %v8307 = vadd.f32 %v8265, %v1791
      %v8308 = vadd.f32 %v8268, %v1791
      %v8309 = vadd.f32 %v8271, %v1791
      %v8310 = vadd.f32 %v8274, %v1791
      %v8311 = vadd.f32 %v8277, %v1791
      %v8312 = vadd.f32 %v8280, %v1791
      %v8313 = vadd.f32 %v7188, %v8281
      %v8314 = vadd.f32 %v7189, %v8282
      %v8315 = vadd.f32 %v7190, %v8283
      %v8316 = vadd.f32 %v7191, %v8284
      %v8317 = vadd.f32 %v7192, %v8285
      %v8318 = vadd.f32 %v7193, %v8286
      %v8319 = vadd.f32 %v7194, %v8287
      %v8320 = vadd.f32 %v7195, %v8288
      %v8321 = vadd.f32 %v7196, %v8289
      %v8322 = vadd.f32 %v7197, %v8290
      %v8323 = vadd.f32 %v7198, %v8291
      %v8324 = vadd.f32 %v7199, %v8292
      %v8325 = vadd.f32 %v7200, %v8293
      %v8326 = vadd.f32 %v7201, %v8294
      %v8327 = vadd.f32 %v7202, %v8295
      %v8328 = vadd.f32 %v7203, %v8296
      %v8329 = vadd.f32 %v7204, %v8297
      %v8330 = vadd.f32 %v7205, %v8298
      %v8331 = vadd.f32 %v7206, %v8299
      %v8332 = vadd.f32 %v7207, %v8300
      %v8333 = vadd.f32 %v7208, %v8301
      %v8334 = vadd.f32 %v7209, %v8302
      %v8335 = vadd.f32 %v7210, %v8303
      %v8336 = vadd.f32 %v7211, %v8304
      %v8337 = vadd.f32 %v7212, %v8305
      %v8338 = vadd.f32 %v7213, %v8306
      %v8339 = vadd.f32 %v7214, %v8307
      %v8340 = vadd.f32 %v7215, %v8308
      %v8341 = vadd.f32 %v7216, %v8309
      %v8342 = vadd.f32 %v7217, %v8310
      %v8343 = vadd.f32 %v7218, %v8311
      %v8344 = vadd.f32 %v7219, %v8312
      %v8345 = vpack.c.bf16 %v7608, %v7607
      %v8346 = vpack.c.bf16 %v7610, %v7609
      %v8347 = vpack.c.bf16 %v7612, %v7611
      %v8348 = vpack.c.bf16 %v7614, %v7613
      %v8349 = vpack.c.bf16 %v7616, %v7615
      %v8350 = vpack.c.bf16 %v7618, %v7617
      %v8351 = vpack.c.bf16 %v7620, %v7619
      %v8352 = vpack.c.bf16 %v7622, %v7621
      %v8353 = vpack.c.bf16 %v7624, %v7623
      %v8354 = vpack.c.bf16 %v7626, %v7625
      %v8355 = vpack.c.bf16 %v7628, %v7627
      %v8356 = vpack.c.bf16 %v7630, %v7629
      %v8357 = vpack.c.bf16 %v7632, %v7631
      %v8358 = vpack.c.bf16 %v7634, %v7633
      %v8359 = vpack.c.bf16 %v7636, %v7635
      %v8360 = vpack.c.bf16 %v7638, %v7637
      %v8362 = vsel %vm885, %v8345, 0
      %v8365 = vsel %vm885, %v8346, 0
      %v8368 = vsel %vm885, %v8347, 0
      %v8371 = vsel %vm885, %v8348, 0
      %v8374 = vsel %vm885, %v8349, 0
      %v8377 = vsel %vm885, %v8350, 0
      %v8380 = vsel %vm885, %v8351, 0
      %v8383 = vsel %vm885, %v8352, 0
      %v8386 = vsel %vm885, %v8353, 0
      %v8389 = vsel %vm885, %v8354, 0
      %v8392 = vsel %vm885, %v8355, 0
      %v8395 = vsel %vm885, %v8356, 0
      %v8398 = vsel %vm885, %v8357, 0
      %v8401 = vsel %vm885, %v8358, 0
      %v8404 = vsel %vm885, %v8359, 0
      %v8407 = vsel %vm885, %v8360, 0
      %8409 = vmatprep.subr.bf16.mxu0 0
      %8410 = vmatpush1.bf16.msra.mxu0 0
      %8411 = vmatprep.subr.bf16.mxu0 0
      %8412 = vmatpush1.bf16.msra.mxu0 0
      %8413 = vmatprep.subr.bf16.mxu0 0
      %8414 = vmatpush1.bf16.msra.mxu0 0
      %8415 = vmatprep.subr.bf16.mxu0 0
      %8416 = vmatpush1.bf16.msra.mxu0 0
      %8417 = vmatprep.subr.bf16.mxu0 0
      %8418 = vmatpush1.bf16.msra.mxu0 0
      %8419 = vmatprep.subr.bf16.mxu0 0
      %8420 = vmatpush1.bf16.msra.mxu0 0
      %8421 = vmatprep.subr.bf16.mxu0 0
      %8422 = vmatpush1.bf16.msra.mxu0 %v1113
      %8423 = vmatprep.subr.bf16.mxu0 0
      %8424 = vmatpush1.bf16.msra.mxu0 %v1112
      %8425 = vmatprep.subr.bf16.mxu0 0
      %8426 = vmatpush2.bf16.msra.mxu0 0
      %8427 = vmatprep.subr.bf16.mxu0 0
      %8428 = vmatpush2.bf16.msra.mxu0 0
      %8429 = vmatprep.subr.bf16.mxu0 0
      %8430 = vmatpush2.bf16.msra.mxu0 0
      %8431 = vmatprep.subr.bf16.mxu0 0
      %8432 = vmatpush2.bf16.msra.mxu0 0
      %8433 = vmatprep.subr.bf16.mxu0 0
      %8434 = vmatpush2.bf16.msra.mxu0 0
      %8435 = vmatprep.subr.bf16.mxu0 0
      %8436 = vmatpush2.bf16.msra.mxu0 0
      %8437 = vmatprep.subr.bf16.mxu0 0
      %8438 = vmatpush2.bf16.msra.mxu0 0
      %8439 = vmatprep.subr.bf16.mxu0 0
      %8440 = vmatpush2.bf16.msra.mxu0 0
      %8441 = vmatprep.mubr.bf16.mxu0 0
      %8442 = vmatmul.mubr.bf16.gmra.mxu0 %v8362
      %v8443 = vpop.f32.mrf.mxu0
      %v8444 = vadd.f32 %v1102, %v8443
      %v8445 = vpop.f32.mrf.mxu0
      %v8446 = vpop.f32.mrf.mxu0
      %v8447 = vadd.f32 %v1102, %v8446
      %v8448 = vpop.f32.mrf.mxu0
      %8449 = vmatprep.mubr.bf16.mxu0 0
      %8450 = vmatmul.mubr.bf16.gmra.mxu0 %v8365
      %v8451 = vpop.f32.mrf.mxu0
      %v8452 = vadd.f32 %v1102, %v8451
      %v8453 = vpop.f32.mrf.mxu0
      %v8454 = vpop.f32.mrf.mxu0
      %v8455 = vadd.f32 %v1102, %v8454
      %v8456 = vpop.f32.mrf.mxu0
      %8457 = vmatprep.mubr.bf16.mxu0 0
      %8458 = vmatmul.mubr.bf16.gmra.mxu0 %v8368
      %v8459 = vpop.f32.mrf.mxu0
      %v8460 = vadd.f32 %v1102, %v8459
      %v8461 = vpop.f32.mrf.mxu0
      %v8462 = vpop.f32.mrf.mxu0
      %v8463 = vadd.f32 %v1102, %v8462
      %v8464 = vpop.f32.mrf.mxu0
      %8465 = vmatprep.mubr.bf16.mxu0 0
      %8466 = vmatmul.mubr.bf16.gmra.mxu0 %v8371
      %v8467 = vpop.f32.mrf.mxu0
      %v8468 = vadd.f32 %v1102, %v8467
      %v8469 = vpop.f32.mrf.mxu0
      %v8470 = vpop.f32.mrf.mxu0
      %v8471 = vadd.f32 %v1102, %v8470
      %v8472 = vpop.f32.mrf.mxu0
      %8473 = vmatprep.mubr.bf16.mxu0 0
      %8474 = vmatmul.mubr.bf16.gmra.mxu0 %v8374
      %v8475 = vpop.f32.mrf.mxu0
      %v8476 = vadd.f32 %v1102, %v8475
      %v8477 = vpop.f32.mrf.mxu0
      %v8478 = vpop.f32.mrf.mxu0
      %v8479 = vadd.f32 %v1102, %v8478
      %v8480 = vpop.f32.mrf.mxu0
      %8481 = vmatprep.mubr.bf16.mxu0 0
      %8482 = vmatmul.mubr.bf16.gmra.mxu0 %v8377
      %v8483 = vpop.f32.mrf.mxu0
      %v8484 = vadd.f32 %v1102, %v8483
      %v8485 = vpop.f32.mrf.mxu0
      %v8486 = vpop.f32.mrf.mxu0
      %v8487 = vadd.f32 %v1102, %v8486
      %v8488 = vpop.f32.mrf.mxu0
      %8489 = vmatprep.mubr.bf16.mxu0 0
      %8490 = vmatmul.mubr.bf16.gmra.mxu0 %v8380
      %v8491 = vpop.f32.mrf.mxu0
      %v8492 = vadd.f32 %v1102, %v8491
      %v8493 = vpop.f32.mrf.mxu0
      %v8494 = vpop.f32.mrf.mxu0
      %v8495 = vadd.f32 %v1102, %v8494
      %v8496 = vpop.f32.mrf.mxu0
      %8497 = vmatprep.mubr.bf16.mxu0 0
      %8498 = vmatmul.mubr.bf16.gmra.mxu0 %v8383
      %v8499 = vpop.f32.mrf.mxu0
      %v8500 = vadd.f32 %v1102, %v8499
      %v8501 = vpop.f32.mrf.mxu0
      %v8502 = vpop.f32.mrf.mxu0
      %v8503 = vadd.f32 %v1102, %v8502
      %v8504 = vpop.f32.mrf.mxu0
      %8505 = vmatprep.mubr.bf16.mxu0 0
      %8506 = vmatmul.mubr.bf16.gmra.mxu0 %v8386
      %v8507 = vpop.f32.mrf.mxu0
      %v8508 = vadd.f32 %v1102, %v8507
      %v8509 = vpop.f32.mrf.mxu0
      %v8510 = vpop.f32.mrf.mxu0
      %v8511 = vadd.f32 %v1102, %v8510
      %v8512 = vpop.f32.mrf.mxu0
      %8513 = vmatprep.mubr.bf16.mxu0 0
      %8514 = vmatmul.mubr.bf16.gmra.mxu0 %v8389
      %v8515 = vpop.f32.mrf.mxu0
      %v8516 = vadd.f32 %v1102, %v8515
      %v8517 = vpop.f32.mrf.mxu0
      %v8518 = vpop.f32.mrf.mxu0
      %v8519 = vadd.f32 %v1102, %v8518
      %v8520 = vpop.f32.mrf.mxu0
      %8521 = vmatprep.mubr.bf16.mxu0 0
      %8522 = vmatmul.mubr.bf16.gmra.mxu0 %v8392
      %v8523 = vpop.f32.mrf.mxu0
      %v8524 = vadd.f32 %v1102, %v8523
      %v8525 = vpop.f32.mrf.mxu0
      %v8526 = vpop.f32.mrf.mxu0
      %v8527 = vadd.f32 %v1102, %v8526
      %v8528 = vpop.f32.mrf.mxu0
      %8529 = vmatprep.mubr.bf16.mxu0 0
      %8530 = vmatmul.mubr.bf16.gmra.mxu0 %v8395
      %v8531 = vpop.f32.mrf.mxu0
      %v8532 = vadd.f32 %v1102, %v8531
      %v8533 = vpop.f32.mrf.mxu0
      %v8534 = vpop.f32.mrf.mxu0
      %v8535 = vadd.f32 %v1102, %v8534
      %v8536 = vpop.f32.mrf.mxu0
      %8537 = vmatprep.mubr.bf16.mxu0 0
      %8538 = vmatmul.mubr.bf16.gmra.mxu0 %v8398
      %v8539 = vpop.f32.mrf.mxu0
      %v8540 = vadd.f32 %v1102, %v8539
      %v8541 = vpop.f32.mrf.mxu0
      %v8542 = vpop.f32.mrf.mxu0
      %v8543 = vadd.f32 %v1102, %v8542
      %v8544 = vpop.f32.mrf.mxu0
      %8545 = vmatprep.mubr.bf16.mxu0 0
      %8546 = vmatmul.mubr.bf16.gmra.mxu0 %v8401
      %v8547 = vpop.f32.mrf.mxu0
      %v8548 = vadd.f32 %v1102, %v8547
      %v8549 = vpop.f32.mrf.mxu0
      %v8550 = vpop.f32.mrf.mxu0
      %v8551 = vadd.f32 %v1102, %v8550
      %v8552 = vpop.f32.mrf.mxu0
      %8553 = vmatprep.mubr.bf16.mxu0 0
      %8554 = vmatmul.mubr.bf16.gmra.mxu0 %v8404
      %v8555 = vpop.f32.mrf.mxu0
      %v8556 = vadd.f32 %v1102, %v8555
      %v8557 = vpop.f32.mrf.mxu0
      %v8558 = vpop.f32.mrf.mxu0
      %v8559 = vadd.f32 %v1102, %v8558
      %v8560 = vpop.f32.mrf.mxu0
      %8561 = vmatprep.mubr.bf16.mxu0 0
      %8562 = vmatmul.mubr.bf16.gmra.mxu0 %v8407
      %v8563 = vpop.f32.mrf.mxu0
      %v8564 = vadd.f32 %v1102, %v8563
      %v8565 = vpop.f32.mrf.mxu0
      %v8566 = vpop.f32.mrf.mxu0
      %v8567 = vadd.f32 %v1102, %v8566
      %v8568 = vpop.f32.mrf.mxu0
      %8569 = vdwg.mxu0
      %v8570 = vmax.f32 %v8444, 0.0
      %v8571 = vmax.f32 %v8447, 0.0
      %v8572 = vmax.f32 %v8452, 0.0
      %v8573 = vmax.f32 %v8455, 0.0
      %v8574 = vmax.f32 %v8460, 0.0
      %v8575 = vmax.f32 %v8463, 0.0
      %v8576 = vmax.f32 %v8468, 0.0
      %v8577 = vmax.f32 %v8471, 0.0
      %v8578 = vmax.f32 %v8476, 0.0
      %v8579 = vmax.f32 %v8479, 0.0
      %v8580 = vmax.f32 %v8484, 0.0
      %v8581 = vmax.f32 %v8487, 0.0
      %v8582 = vmax.f32 %v8492, 0.0
      %v8583 = vmax.f32 %v8495, 0.0
      %v8584 = vmax.f32 %v8500, 0.0
      %v8585 = vmax.f32 %v8503, 0.0
      %v8586 = vmax.f32 %v8508, 0.0
      %v8587 = vmax.f32 %v8511, 0.0
      %v8588 = vmax.f32 %v8516, 0.0
      %v8589 = vmax.f32 %v8519, 0.0
      %v8590 = vmax.f32 %v8524, 0.0
      %v8591 = vmax.f32 %v8527, 0.0
      %v8592 = vmax.f32 %v8532, 0.0
      %v8593 = vmax.f32 %v8535, 0.0
      %v8594 = vmax.f32 %v8540, 0.0
      %v8595 = vmax.f32 %v8543, 0.0
      %v8596 = vmax.f32 %v8548, 0.0
      %v8597 = vmax.f32 %v8551, 0.0
      %v8598 = vmax.f32 %v8556, 0.0
      %v8599 = vmax.f32 %v8559, 0.0
      %v8600 = vmax.f32 %v8564, 0.0
      %v8601 = vmax.f32 %v8567, 0.0
      %v8602 = vpack.c.bf16 %v8571, %v8570
      %v8603 = vpack.c.bf16 %v8573, %v8572
      %v8604 = vpack.c.bf16 %v8575, %v8574
      %v8605 = vpack.c.bf16 %v8577, %v8576
      %v8606 = vpack.c.bf16 %v8579, %v8578
      %v8607 = vpack.c.bf16 %v8581, %v8580
      %v8608 = vpack.c.bf16 %v8583, %v8582
      %v8609 = vpack.c.bf16 %v8585, %v8584
      %v8610 = vpack.c.bf16 %v8587, %v8586
      %v8611 = vpack.c.bf16 %v8589, %v8588
      %v8612 = vpack.c.bf16 %v8591, %v8590
      %v8613 = vpack.c.bf16 %v8593, %v8592
      %v8614 = vpack.c.bf16 %v8595, %v8594
      %v8615 = vpack.c.bf16 %v8597, %v8596
      %v8616 = vpack.c.bf16 %v8599, %v8598
      %v8617 = vpack.c.bf16 %v8601, %v8600
      %v8619 = vsel %vm1411, %v8602, 0
      %v8622 = vsel %vm1411, %v8603, 0
      %v8625 = vsel %vm1411, %v8604, 0
      %v8628 = vsel %vm1411, %v8605, 0
      %v8631 = vsel %vm1411, %v8606, 0
      %v8634 = vsel %vm1411, %v8607, 0
      %v8637 = vsel %vm1411, %v8608, 0
      %v8640 = vsel %vm1411, %v8609, 0
      %v8643 = vsel %vm1411, %v8610, 0
      %v8646 = vsel %vm1411, %v8611, 0
      %v8649 = vsel %vm1411, %v8612, 0
      %v8652 = vsel %vm1411, %v8613, 0
      %v8655 = vsel %vm1411, %v8614, 0
      %v8658 = vsel %vm1411, %v8615, 0
      %v8661 = vsel %vm1411, %v8616, 0
      %v8664 = vsel %vm1411, %v8617, 0
      %8666 = vmatprep.subr.bf16.mxu0 0
      %8667 = vmatpush1.bf16.msra.mxu0 0
      %8668 = vmatprep.subr.bf16.mxu0 0
      %8669 = vmatpush1.bf16.msra.mxu0 0
      %8670 = vmatprep.subr.bf16.mxu0 0
      %8671 = vmatpush1.bf16.msra.mxu0 0
      %8672 = vmatprep.subr.bf16.mxu0 0
      %8673 = vmatpush1.bf16.msra.mxu0 0
      %8674 = vmatprep.subr.bf16.mxu0 0
      %8675 = vmatpush1.bf16.msra.mxu0 %v1406
      %8676 = vmatprep.subr.bf16.mxu0 0
      %8677 = vmatpush1.bf16.msra.mxu0 %v1405
      %8678 = vmatprep.subr.bf16.mxu0 0
      %8679 = vmatpush1.bf16.msra.mxu0 %v1404
      %8680 = vmatprep.subr.bf16.mxu0 0
      %8681 = vmatpush1.bf16.msra.mxu0 %v1403
      %8682 = vmatprep.subr.bf16.mxu0 0
      %8683 = vmatpush2.bf16.msra.mxu0 0
      %8684 = vmatprep.subr.bf16.mxu0 0
      %8685 = vmatpush2.bf16.msra.mxu0 0
      %8686 = vmatprep.subr.bf16.mxu0 0
      %8687 = vmatpush2.bf16.msra.mxu0 0
      %8688 = vmatprep.subr.bf16.mxu0 0
      %8689 = vmatpush2.bf16.msra.mxu0 0
      %8690 = vmatprep.subr.bf16.mxu0 0
      %8691 = vmatpush2.bf16.msra.mxu0 0
      %8692 = vmatprep.subr.bf16.mxu0 0
      %8693 = vmatpush2.bf16.msra.mxu0 0
      %8694 = vmatprep.subr.bf16.mxu0 0
      %8695 = vmatpush2.bf16.msra.mxu0 0
      %8696 = vmatprep.subr.bf16.mxu0 0
      %8697 = vmatpush2.bf16.msra.mxu0 0
      %8698 = vmatprep.mubr.bf16.mxu0 0
      %8699 = vmatmul.mubr.bf16.gmra.mxu0 %v8619
      %v8700 = vpop.f32.mrf.mxu0
      %v8701 = vadd.f32 %v1385, %v8700
      %v8702 = vpop.f32.mrf.mxu0
      %v8703 = vpop.f32.mrf.mxu0
      %v8704 = vadd.f32 %v1385, %v8703
      %v8705 = vpop.f32.mrf.mxu0
      %8706 = vmatprep.mubr.bf16.mxu0 0
      %8707 = vmatmul.mubr.bf16.gmra.mxu0 %v8622
      %v8708 = vpop.f32.mrf.mxu0
      %v8709 = vadd.f32 %v1385, %v8708
      %v8710 = vpop.f32.mrf.mxu0
      %v8711 = vpop.f32.mrf.mxu0
      %v8712 = vadd.f32 %v1385, %v8711
      %v8713 = vpop.f32.mrf.mxu0
      %8714 = vmatprep.mubr.bf16.mxu0 0
      %8715 = vmatmul.mubr.bf16.gmra.mxu0 %v8625
      %v8716 = vpop.f32.mrf.mxu0
      %v8717 = vadd.f32 %v1385, %v8716
      %v8718 = vpop.f32.mrf.mxu0
      %v8719 = vpop.f32.mrf.mxu0
      %v8720 = vadd.f32 %v1385, %v8719
      %v8721 = vpop.f32.mrf.mxu0
      %8722 = vmatprep.mubr.bf16.mxu0 0
      %8723 = vmatmul.mubr.bf16.gmra.mxu0 %v8628
      %v8724 = vpop.f32.mrf.mxu0
      %v8725 = vadd.f32 %v1385, %v8724
      %v8726 = vpop.f32.mrf.mxu0
      %v8727 = vpop.f32.mrf.mxu0
      %v8728 = vadd.f32 %v1385, %v8727
      %v8729 = vpop.f32.mrf.mxu0
      %8730 = vmatprep.mubr.bf16.mxu0 0
      %8731 = vmatmul.mubr.bf16.gmra.mxu0 %v8631
      %v8732 = vpop.f32.mrf.mxu0
      %v8733 = vadd.f32 %v1385, %v8732
      %v8734 = vpop.f32.mrf.mxu0
      %v8735 = vpop.f32.mrf.mxu0
      %v8736 = vadd.f32 %v1385, %v8735
      %v8737 = vpop.f32.mrf.mxu0
      %8738 = vmatprep.mubr.bf16.mxu0 0
      %8739 = vmatmul.mubr.bf16.gmra.mxu0 %v8634
      %v8740 = vpop.f32.mrf.mxu0
      %v8741 = vadd.f32 %v1385, %v8740
      %v8742 = vpop.f32.mrf.mxu0
      %v8743 = vpop.f32.mrf.mxu0
      %v8744 = vadd.f32 %v1385, %v8743
      %v8745 = vpop.f32.mrf.mxu0
      %8746 = vmatprep.mubr.bf16.mxu0 0
      %8747 = vmatmul.mubr.bf16.gmra.mxu0 %v8637
      %v8748 = vpop.f32.mrf.mxu0
      %v8749 = vadd.f32 %v1385, %v8748
      %v8750 = vpop.f32.mrf.mxu0
      %v8751 = vpop.f32.mrf.mxu0
      %v8752 = vadd.f32 %v1385, %v8751
      %v8753 = vpop.f32.mrf.mxu0
      %8754 = vmatprep.mubr.bf16.mxu0 0
      %8755 = vmatmul.mubr.bf16.gmra.mxu0 %v8640
      %v8756 = vpop.f32.mrf.mxu0
      %v8757 = vadd.f32 %v1385, %v8756
      %v8758 = vpop.f32.mrf.mxu0
      %v8759 = vpop.f32.mrf.mxu0
      %v8760 = vadd.f32 %v1385, %v8759
      %v8761 = vpop.f32.mrf.mxu0
      %8762 = vmatprep.mubr.bf16.mxu0 0
      %8763 = vmatmul.mubr.bf16.gmra.mxu0 %v8643
      %v8764 = vpop.f32.mrf.mxu0
      %v8765 = vadd.f32 %v1385, %v8764
      %v8766 = vpop.f32.mrf.mxu0
      %v8767 = vpop.f32.mrf.mxu0
      %v8768 = vadd.f32 %v1385, %v8767
      %v8769 = vpop.f32.mrf.mxu0
      %8770 = vmatprep.mubr.bf16.mxu0 0
      %8771 = vmatmul.mubr.bf16.gmra.mxu0 %v8646
      %v8772 = vpop.f32.mrf.mxu0
      %v8773 = vadd.f32 %v1385, %v8772
      %v8774 = vpop.f32.mrf.mxu0
      %v8775 = vpop.f32.mrf.mxu0
      %v8776 = vadd.f32 %v1385, %v8775
      %v8777 = vpop.f32.mrf.mxu0
      %8778 = vmatprep.mubr.bf16.mxu0 0
      %8779 = vmatmul.mubr.bf16.gmra.mxu0 %v8649
      %v8780 = vpop.f32.mrf.mxu0
      %v8781 = vadd.f32 %v1385, %v8780
      %v8782 = vpop.f32.mrf.mxu0
      %v8783 = vpop.f32.mrf.mxu0
      %v8784 = vadd.f32 %v1385, %v8783
      %v8785 = vpop.f32.mrf.mxu0
      %8786 = vmatprep.mubr.bf16.mxu0 0
      %8787 = vmatmul.mubr.bf16.gmra.mxu0 %v8652
      %v8788 = vpop.f32.mrf.mxu0
      %v8789 = vadd.f32 %v1385, %v8788
      %v8790 = vpop.f32.mrf.mxu0
      %v8791 = vpop.f32.mrf.mxu0
      %v8792 = vadd.f32 %v1385, %v8791
      %v8793 = vpop.f32.mrf.mxu0
      %8794 = vmatprep.mubr.bf16.mxu0 0
      %8795 = vmatmul.mubr.bf16.gmra.mxu0 %v8655
      %v8796 = vpop.f32.mrf.mxu0
      %v8797 = vadd.f32 %v1385, %v8796
      %v8798 = vpop.f32.mrf.mxu0
      %v8799 = vpop.f32.mrf.mxu0
      %v8800 = vadd.f32 %v1385, %v8799
      %v8801 = vpop.f32.mrf.mxu0
      %8802 = vmatprep.mubr.bf16.mxu0 0
      %8803 = vmatmul.mubr.bf16.gmra.mxu0 %v8658
      %v8804 = vpop.f32.mrf.mxu0
      %v8805 = vadd.f32 %v1385, %v8804
      %v8806 = vpop.f32.mrf.mxu0
      %v8807 = vpop.f32.mrf.mxu0
      %v8808 = vadd.f32 %v1385, %v8807
      %v8809 = vpop.f32.mrf.mxu0
      %8810 = vmatprep.mubr.bf16.mxu0 0
      %8811 = vmatmul.mubr.bf16.gmra.mxu0 %v8661
      %v8812 = vpop.f32.mrf.mxu0
      %v8813 = vadd.f32 %v1385, %v8812
      %v8814 = vpop.f32.mrf.mxu0
      %v8815 = vpop.f32.mrf.mxu0
      %v8816 = vadd.f32 %v1385, %v8815
      %v8817 = vpop.f32.mrf.mxu0
      %8818 = vmatprep.mubr.bf16.mxu0 0
      %8819 = vmatmul.mubr.bf16.gmra.mxu0 %v8664
      %v8820 = vpop.f32.mrf.mxu0
      %v8821 = vadd.f32 %v1385, %v8820
      %v8822 = vpop.f32.mrf.mxu0
      %v8823 = vpop.f32.mrf.mxu0
      %v8824 = vadd.f32 %v1385, %v8823
      %v8825 = vpop.f32.mrf.mxu0
      %8826 = vdwg.mxu0
      %v8827 = vmax.f32 %v8701, 0.0
      %v8828 = vmax.f32 %v8704, 0.0
      %v8829 = vmax.f32 %v8709, 0.0
      %v8830 = vmax.f32 %v8712, 0.0
      %v8831 = vmax.f32 %v8717, 0.0
      %v8832 = vmax.f32 %v8720, 0.0
      %v8833 = vmax.f32 %v8725, 0.0
      %v8834 = vmax.f32 %v8728, 0.0
      %v8835 = vmax.f32 %v8733, 0.0
      %v8836 = vmax.f32 %v8736, 0.0
      %v8837 = vmax.f32 %v8741, 0.0
      %v8838 = vmax.f32 %v8744, 0.0
      %v8839 = vmax.f32 %v8749, 0.0
      %v8840 = vmax.f32 %v8752, 0.0
      %v8841 = vmax.f32 %v8757, 0.0
      %v8842 = vmax.f32 %v8760, 0.0
      %v8843 = vmax.f32 %v8765, 0.0
      %v8844 = vmax.f32 %v8768, 0.0
      %v8845 = vmax.f32 %v8773, 0.0
      %v8846 = vmax.f32 %v8776, 0.0
      %v8847 = vmax.f32 %v8781, 0.0
      %v8848 = vmax.f32 %v8784, 0.0
      %v8849 = vmax.f32 %v8789, 0.0
      %v8850 = vmax.f32 %v8792, 0.0
      %v8851 = vmax.f32 %v8797, 0.0
      %v8852 = vmax.f32 %v8800, 0.0
      %v8853 = vmax.f32 %v8805, 0.0
      %v8854 = vmax.f32 %v8808, 0.0
      %v8855 = vmax.f32 %v8813, 0.0
      %v8856 = vmax.f32 %v8816, 0.0
      %v8857 = vmax.f32 %v8821, 0.0
      %v8858 = vmax.f32 %v8824, 0.0
      %v8859 = vmul.f32 %v8827, %v1657
      %v8860 = vmul.f32 %v8828, %v1657
      %v8861 = vmul.f32 %v8829, %v1657
      %v8862 = vmul.f32 %v8830, %v1657
      %v8863 = vmul.f32 %v8831, %v1657
      %v8864 = vmul.f32 %v8832, %v1657
      %v8865 = vmul.f32 %v8833, %v1657
      %v8866 = vmul.f32 %v8834, %v1657
      %v8867 = vmul.f32 %v8835, %v1657
      %v8868 = vmul.f32 %v8836, %v1657
      %v8869 = vmul.f32 %v8837, %v1657
      %v8870 = vmul.f32 %v8838, %v1657
      %v8871 = vmul.f32 %v8839, %v1657
      %v8872 = vmul.f32 %v8840, %v1657
      %v8873 = vmul.f32 %v8841, %v1657
      %v8874 = vmul.f32 %v8842, %v1657
      %v8875 = vmul.f32 %v8843, %v1657
      %v8876 = vmul.f32 %v8844, %v1657
      %v8877 = vmul.f32 %v8845, %v1657
      %v8878 = vmul.f32 %v8846, %v1657
      %v8879 = vmul.f32 %v8847, %v1657
      %v8880 = vmul.f32 %v8848, %v1657
      %v8881 = vmul.f32 %v8849, %v1657
      %v8882 = vmul.f32 %v8850, %v1657
      %v8883 = vmul.f32 %v8851, %v1657
      %v8884 = vmul.f32 %v8852, %v1657
      %v8885 = vmul.f32 %v8853, %v1657
      %v8886 = vmul.f32 %v8854, %v1657
      %v8887 = vmul.f32 %v8855, %v1657
      %v8888 = vmul.f32 %v8856, %v1657
      %v8889 = vmul.f32 %v8857, %v1657
      %v8890 = vmul.f32 %v8858, %v1657
      %v8891 = vsel %vm1411, %v8859, 0.0
      %8892 = vadd.xlane.f32.xlu0 %v8891
      %v8893 = vpop.xlane.xlu0 %8892
      %v8894 = vsel %vm1411, %v8860, 0.0
      %8895 = vadd.xlane.f32.xlu0 %v8894
      %v8896 = vpop.xlane.xlu0 %8895
      %v8897 = vsel %vm1411, %v8861, 0.0
      %8898 = vadd.xlane.f32.xlu0 %v8897
      %v8899 = vpop.xlane.xlu0 %8898
      %v8900 = vsel %vm1411, %v8862, 0.0
      %8901 = vadd.xlane.f32.xlu0 %v8900
      %v8902 = vpop.xlane.xlu0 %8901
      %v8903 = vsel %vm1411, %v8863, 0.0
      %8904 = vadd.xlane.f32.xlu0 %v8903
      %v8905 = vpop.xlane.xlu0 %8904
      %v8906 = vsel %vm1411, %v8864, 0.0
      %8907 = vadd.xlane.f32.xlu0 %v8906
      %v8908 = vpop.xlane.xlu0 %8907
      %v8909 = vsel %vm1411, %v8865, 0.0
      %8910 = vadd.xlane.f32.xlu0 %v8909
      %v8911 = vpop.xlane.xlu0 %8910
      %v8912 = vsel %vm1411, %v8866, 0.0
      %8913 = vadd.xlane.f32.xlu0 %v8912
      %v8914 = vpop.xlane.xlu0 %8913
      %v8915 = vsel %vm1411, %v8867, 0.0
      %8916 = vadd.xlane.f32.xlu0 %v8915
      %v8917 = vpop.xlane.xlu0 %8916
      %v8918 = vsel %vm1411, %v8868, 0.0
      %8919 = vadd.xlane.f32.xlu0 %v8918
      %v8920 = vpop.xlane.xlu0 %8919
      %v8921 = vsel %vm1411, %v8869, 0.0
      %8922 = vadd.xlane.f32.xlu0 %v8921
      %v8923 = vpop.xlane.xlu0 %8922
      %v8924 = vsel %vm1411, %v8870, 0.0
      %8925 = vadd.xlane.f32.xlu0 %v8924
      %v8926 = vpop.xlane.xlu0 %8925
      %v8927 = vsel %vm1411, %v8871, 0.0
      %8928 = vadd.xlane.f32.xlu0 %v8927
      %v8929 = vpop.xlane.xlu0 %8928
      %v8930 = vsel %vm1411, %v8872, 0.0
      %8931 = vadd.xlane.f32.xlu0 %v8930
      %v8932 = vpop.xlane.xlu0 %8931
      %v8933 = vsel %vm1411, %v8873, 0.0
      %8934 = vadd.xlane.f32.xlu0 %v8933
      %v8935 = vpop.xlane.xlu0 %8934
      %v8936 = vsel %vm1411, %v8874, 0.0
      %8937 = vadd.xlane.f32.xlu0 %v8936
      %v8938 = vpop.xlane.xlu0 %8937
      %v8939 = vsel %vm1411, %v8875, 0.0
      %8940 = vadd.xlane.f32.xlu0 %v8939
      %v8941 = vpop.xlane.xlu0 %8940
      %v8942 = vsel %vm1411, %v8876, 0.0
      %8943 = vadd.xlane.f32.xlu0 %v8942
      %v8944 = vpop.xlane.xlu0 %8943
      %v8945 = vsel %vm1411, %v8877, 0.0
      %8946 = vadd.xlane.f32.xlu0 %v8945
      %v8947 = vpop.xlane.xlu0 %8946
      %v8948 = vsel %vm1411, %v8878, 0.0
      %8949 = vadd.xlane.f32.xlu0 %v8948
      %v8950 = vpop.xlane.xlu0 %8949
      %v8951 = vsel %vm1411, %v8879, 0.0
      %8952 = vadd.xlane.f32.xlu0 %v8951
      %v8953 = vpop.xlane.xlu0 %8952
      %v8954 = vsel %vm1411, %v8880, 0.0
      %8955 = vadd.xlane.f32.xlu0 %v8954
      %v8956 = vpop.xlane.xlu0 %8955
      %v8957 = vsel %vm1411, %v8881, 0.0
      %8958 = vadd.xlane.f32.xlu0 %v8957
      %v8959 = vpop.xlane.xlu0 %8958
      %v8960 = vsel %vm1411, %v8882, 0.0
      %8961 = vadd.xlane.f32.xlu0 %v8960
      %v8962 = vpop.xlane.xlu0 %8961
      %v8963 = vsel %vm1411, %v8883, 0.0
      %8964 = vadd.xlane.f32.xlu0 %v8963
      %v8965 = vpop.xlane.xlu0 %8964
      %v8966 = vsel %vm1411, %v8884, 0.0
      %8967 = vadd.xlane.f32.xlu0 %v8966
      %v8968 = vpop.xlane.xlu0 %8967
      %v8969 = vsel %vm1411, %v8885, 0.0
      %8970 = vadd.xlane.f32.xlu0 %v8969
      %v8971 = vpop.xlane.xlu0 %8970
      %v8972 = vsel %vm1411, %v8886, 0.0
      %8973 = vadd.xlane.f32.xlu0 %v8972
      %v8974 = vpop.xlane.xlu0 %8973
      %v8975 = vsel %vm1411, %v8887, 0.0
      %8976 = vadd.xlane.f32.xlu0 %v8975
      %v8977 = vpop.xlane.xlu0 %8976
      %v8978 = vsel %vm1411, %v8888, 0.0
      %8979 = vadd.xlane.f32.xlu0 %v8978
      %v8980 = vpop.xlane.xlu0 %8979
      %v8981 = vsel %vm1411, %v8889, 0.0
      %8982 = vadd.xlane.f32.xlu0 %v8981
      %v8983 = vpop.xlane.xlu0 %8982
      %v8984 = vsel %vm1411, %v8890, 0.0
      %8985 = vadd.xlane.f32.xlu0 %v8984
      %v8986 = vpop.xlane.xlu0 %8985
      %v8987 = vadd.f32 %v8893, %v1791
      %v8988 = vadd.f32 %v8896, %v1791
      %v8989 = vadd.f32 %v8899, %v1791
      %v8990 = vadd.f32 %v8902, %v1791
      %v8991 = vadd.f32 %v8905, %v1791
      %v8992 = vadd.f32 %v8908, %v1791
      %v8993 = vadd.f32 %v8911, %v1791
      %v8994 = vadd.f32 %v8914, %v1791
      %v8995 = vadd.f32 %v8917, %v1791
      %v8996 = vadd.f32 %v8920, %v1791
      %v8997 = vadd.f32 %v8923, %v1791
      %v8998 = vadd.f32 %v8926, %v1791
      %v8999 = vadd.f32 %v8929, %v1791
      %v9000 = vadd.f32 %v8932, %v1791
      %v9001 = vadd.f32 %v8935, %v1791
      %v9002 = vadd.f32 %v8938, %v1791
      %v9003 = vadd.f32 %v8941, %v1791
      %v9004 = vadd.f32 %v8944, %v1791
      %v9005 = vadd.f32 %v8947, %v1791
      %v9006 = vadd.f32 %v8950, %v1791
      %v9007 = vadd.f32 %v8953, %v1791
      %v9008 = vadd.f32 %v8956, %v1791
      %v9009 = vadd.f32 %v8959, %v1791
      %v9010 = vadd.f32 %v8962, %v1791
      %v9011 = vadd.f32 %v8965, %v1791
      %v9012 = vadd.f32 %v8968, %v1791
      %v9013 = vadd.f32 %v8971, %v1791
      %v9014 = vadd.f32 %v8974, %v1791
      %v9015 = vadd.f32 %v8977, %v1791
      %v9016 = vadd.f32 %v8980, %v1791
      %v9017 = vadd.f32 %v8983, %v1791
      %v9018 = vadd.f32 %v8986, %v1791
      %v9019 = vadd.f32 %v8313, %v8987
      %v9020 = vadd.f32 %v8314, %v8988
      %v9021 = vadd.f32 %v8315, %v8989
      %v9022 = vadd.f32 %v8316, %v8990
      %v9023 = vadd.f32 %v8317, %v8991
      %v9024 = vadd.f32 %v8318, %v8992
      %v9025 = vadd.f32 %v8319, %v8993
      %v9026 = vadd.f32 %v8320, %v8994
      %v9027 = vadd.f32 %v8321, %v8995
      %v9028 = vadd.f32 %v8322, %v8996
      %v9029 = vadd.f32 %v8323, %v8997
      %v9030 = vadd.f32 %v8324, %v8998
      %v9031 = vadd.f32 %v8325, %v8999
      %v9032 = vadd.f32 %v8326, %v9000
      %v9033 = vadd.f32 %v8327, %v9001
      %v9034 = vadd.f32 %v8328, %v9002
      %v9035 = vadd.f32 %v8329, %v9003
      %v9036 = vadd.f32 %v8330, %v9004
      %v9037 = vadd.f32 %v8331, %v9005
      %v9038 = vadd.f32 %v8332, %v9006
      %v9039 = vadd.f32 %v8333, %v9007
      %v9040 = vadd.f32 %v8334, %v9008
      %v9041 = vadd.f32 %v8335, %v9009
      %v9042 = vadd.f32 %v8336, %v9010
      %v9043 = vadd.f32 %v8337, %v9011
      %v9044 = vadd.f32 %v8338, %v9012
      %v9045 = vadd.f32 %v8339, %v9013
      %v9046 = vadd.f32 %v8340, %v9014
      %v9047 = vadd.f32 %v8341, %v9015
      %v9048 = vadd.f32 %v8342, %v9016
      %v9049 = vadd.f32 %v8343, %v9017
      %v9050 = vadd.f32 %v8344, %v9018
      %v9051 = vmul.f32 %v9019, 0.14285715
      %v9052 = vmul.f32 %v9020, 0.14285715
      %v9053 = vmul.f32 %v9021, 0.14285715
      %v9054 = vmul.f32 %v9022, 0.14285715
      %v9055 = vmul.f32 %v9023, 0.14285715
      %v9056 = vmul.f32 %v9024, 0.14285715
      %v9057 = vmul.f32 %v9025, 0.14285715
      %v9058 = vmul.f32 %v9026, 0.14285715
      %v9059 = vmul.f32 %v9027, 0.14285715
      %v9060 = vmul.f32 %v9028, 0.14285715
      %v9061 = vmul.f32 %v9029, 0.14285715
      %v9062 = vmul.f32 %v9030, 0.14285715
      %v9063 = vmul.f32 %v9031, 0.14285715
      %v9064 = vmul.f32 %v9032, 0.14285715
      %v9065 = vmul.f32 %v9033, 0.14285715
      %v9066 = vmul.f32 %v9034, 0.14285715
      %v9067 = vmul.f32 %v9035, 0.14285715
      %v9068 = vmul.f32 %v9036, 0.14285715
      %v9069 = vmul.f32 %v9037, 0.14285715
      %v9070 = vmul.f32 %v9038, 0.14285715
      %v9071 = vmul.f32 %v9039, 0.14285715
      %v9072 = vmul.f32 %v9040, 0.14285715
      %v9073 = vmul.f32 %v9041, 0.14285715
      %v9074 = vmul.f32 %v9042, 0.14285715
      %v9075 = vmul.f32 %v9043, 0.14285715
      %v9076 = vmul.f32 %v9044, 0.14285715
      %v9077 = vmul.f32 %v9045, 0.14285715
      %v9078 = vmul.f32 %v9046, 0.14285715
      %v9079 = vmul.f32 %v9047, 0.14285715
      %v9080 = vmul.f32 %v9048, 0.14285715
      %v9081 = vmul.f32 %v9049, 0.14285715
      %v9082 = vmul.f32 %v9050, 0.14285715
      %vm9083 = vcmask 7168
      %9084 = vst.msk [vmem:[%s334] sm:$0xff] %vm9083, %v9051
      %9085 = vst.msk [vmem:[%s334 + $0x8] sm:$0xff] %vm9083, %v9052
      %9086 = vst.msk [vmem:[%s334 + $0x10] sm:$0xff] %vm9083, %v9053
      %9087 = vst.msk [vmem:[%s334 + $0x18] sm:$0xff] %vm9083, %v9054
      %9088 = vst.msk [vmem:[%s334 + $0x20] sm:$0xff] %vm9083, %v9055
      %9089 = vst.msk [vmem:[%s334 + $0x28] sm:$0xff] %vm9083, %v9056
      %9090 = vst.msk [vmem:[%s334 + $0x30] sm:$0xff] %vm9083, %v9057
      %9091 = vst.msk [vmem:[%s334 + $0x38] sm:$0xff] %vm9083, %v9058
      %9092 = vst.msk [vmem:[%s334 + $0x40] sm:$0xff] %vm9083, %v9059
      %9093 = vst.msk [vmem:[%s334 + $0x48] sm:$0xff] %vm9083, %v9060
      %9094 = vst.msk [vmem:[%s334 + $0x50] sm:$0xff] %vm9083, %v9061
      %9095 = vst.msk [vmem:[%s334 + $0x58] sm:$0xff] %vm9083, %v9062
      %9096 = vst.msk [vmem:[%s334 + $0x60] sm:$0xff] %vm9083, %v9063
      %9097 = vst.msk [vmem:[%s334 + $0x68] sm:$0xff] %vm9083, %v9064
      %9098 = vst.msk [vmem:[%s334 + $0x70] sm:$0xff] %vm9083, %v9065
      %9099 = vst.msk [vmem:[%s334 + $0x78] sm:$0xff] %vm9083, %v9066
      %9100 = vst.msk [vmem:[%s334 + $0x80] sm:$0xff] %vm9083, %v9067
      %9101 = vst.msk [vmem:[%s334 + $0x88] sm:$0xff] %vm9083, %v9068
      %9102 = vst.msk [vmem:[%s334 + $0x90] sm:$0xff] %vm9083, %v9069
      %9103 = vst.msk [vmem:[%s334 + $0x98] sm:$0xff] %vm9083, %v9070
      %9104 = vst.msk [vmem:[%s334 + $0xa0] sm:$0xff] %vm9083, %v9071
      %9105 = vst.msk [vmem:[%s334 + $0xa8] sm:$0xff] %vm9083, %v9072
      %9106 = vst.msk [vmem:[%s334 + $0xb0] sm:$0xff] %vm9083, %v9073
      %9107 = vst.msk [vmem:[%s334 + $0xb8] sm:$0xff] %vm9083, %v9074
      %9108 = vst.msk [vmem:[%s334 + $0xc0] sm:$0xff] %vm9083, %v9075
      %9109 = vst.msk [vmem:[%s334 + $0xc8] sm:$0xff] %vm9083, %v9076
      %9110 = vst.msk [vmem:[%s334 + $0xd0] sm:$0xff] %vm9083, %v9077
      %9111 = vst.msk [vmem:[%s334 + $0xd8] sm:$0xff] %vm9083, %v9078
      %9112 = vst.msk [vmem:[%s334 + $0xe0] sm:$0xff] %vm9083, %v9079
      %9113 = vst.msk [vmem:[%s334 + $0xe8] sm:$0xff] %vm9083, %v9080
      %9114 = vst.msk [vmem:[%s334 + $0xf0] sm:$0xff] %vm9083, %v9081
      %9115 = vst.msk [vmem:[%s334 + $0xf8] sm:$0xff] %vm9083, %v9082
      %p9116 = scmp.lt.s32.totalorder %s22, 1
      %s9117 = scalar_select %p9116, %s22, 1
      %s9118 = smul.addr %s9117, 32
      %s9119 = smul.addr %s9118, 8
      %s9120 = scalar_lea.vmem %s9, %s9119
      // Predicated region
      $region57: #{gnn_bet_forward.1} parent=55 // pred_check
        %p9121 = pneg %p234
      $region58: #{gnn_bet_forward.1} parent=55 // pred_check_branch
        %9123 = sbr.rel (%p9121) target = $region60
      $region59: #{gnn_bet_forward.1} parent=55 // pred_region
        _
      $region60: #{gnn_bet_forward.1} parent=55 // pred_fallthru
        _
    $region56: #{gnn_bet_forward.1} parent=5 // pred_fallthru
      _
    %p9124 = scmp.le.s32.totalorder 2, %s17
    // Predicated region
    $region61: #{gnn_bet_forward.1} parent=5 // pred_check
      %p9125 = pneg %p9124
    $region62: #{gnn_bet_forward.1} parent=5 // pred_check_branch
      %9127 = sbr.rel (%p9125) target = $region64
    $region63: #{gnn_bet_forward.1} parent=5 // pred_region
      %s9128 = ssub.s32 %s17, 2
      // Predicated region
      $region65: #{gnn_bet_forward.1} parent=63 // pred_check
        %p9129 = pneg %p240
      $region66: #{gnn_bet_forward.1} parent=63 // pred_check_branch
        %9131 = sbr.rel (%p9129) target = $region68
      $region67: #{gnn_bet_forward.1} parent=63 // pred_region
        %p9132 = scmp.lt.s32.totalorder %s23, 1
        %s9133 = scalar_select %p9132, %s23, 1
        %s9134 = smul.addr %s9133, 32
        %s9135 = smul.addr %s9134, 8
        %s9136 = scalar_lea.vmem %s9, %s9135
      $region68: #{gnn_bet_forward.1} parent=63 // pred_fallthru
        _
    $region64: #{gnn_bet_forward.1} parent=5 // pred_fallthru
      _
  $region6: #{gnn_bet_forward.1} parent=0 // loop_footer
    %s21 = sadd.s32 1, %s17
  $region7: #{gnn_bet_forward.1} parent=0 // loop_footer_branch
    %16 = sbr.rel target = $region3
  $region8: #{gnn_bet_forward.1} parent=0 // loop_exit
    _

</llo_original>
